<compile_context>
chip_gen: v7x
topology: tpu7x:2x2x1
jax: 0.10.0
libtpu: 0.0.40
codegen_flags: <defaults>
</compile_context>

<pallas_src>
import jax
import jax.numpy as jnp
from jax.experimental import pallas as pl
from jax.experimental.pallas import tpu as pltpu

# ----- module hyper-parameters (SatGNN.__init__ defaults, hidden shrunk for a small test) -----
N_VAR_FEATS, N_CON_FEATS, N_SOC_FEATS = 7, 4, 6
N_H_FEATS = 32
N_PASSES = 1          # default
N_CONVS = 2           # conv1 = conv2 = SAGEConv('pool'); conv3 = None
_SAGE_NW = 5          # (wpool, bpool, wneigh, wself, bias) per SAGEConv
SRC_TILE = 512        # src-block for the masked max (multiple of 128 -> aligned lane slices)
# single_conv_for_both_passes = False -> separate forward / backward SAGEConv modules
# n_output_layers = 3 -> [Linear(H,H), ReLU] * 2 (SAME Linear object, list-mult quirk) + Linear(H,1)


# ------------------------------------------------------------------ helpers
def _full_spec(shape):
    n = len(shape)
    return pl.BlockSpec(shape, lambda i, _n=n: (0,) * _n)


def _round8(n):
    return -(-n // 8) * 8


def _pad_rows(x, rows):
    return jnp.pad(x, ((0, rows - x.shape[0]), (0, 0)))


def _pad2(a, rows, cols):
    return jnp.pad(a, ((0, rows - a.shape[0]), (0, cols - a.shape[1])))


# ------------------------------------------------------------------ fused forward kernel
def _fused_forward_kernel(*refs):
    """Entire SatGNN forward in one kernel invocation.

    Hidden states stay on-chip between layers; every input / weight is loaded
    into VMEM exactly once per forward.
    """
    it = iter(refs)

    def take(n):
        return [next(it)[...] for _ in range(n)]

    var_x, con_x, soc_x = take(3)
    a_v2c, a_s2c, a_c2v, a_c2s = take(4)
    var_emb, con_emb, soc_emb = take(4), take(4), take(4)
    convs = [(take(_SAGE_NW), take(_SAGE_NW)) for _ in range(N_CONVS)]   # (fwd, bwd)
    wA, bA, wout_row, bout = take(4)
    o_ref = next(it)

    f32 = jnp.float32
    nv = var_x.shape[0]                      # padded var-node count (multiple of 8)
    relu = lambda x: jnp.maximum(x, 0.0)

    def mxu(a, w):
        # bf16 MXU operands, f32 accumulation.  Weights are pre-cast to bf16 in the wrapper.
        return jnp.dot(a.astype(jnp.bfloat16), w, preferred_element_type=f32)

    def emb(x, p):
        # PreNormLayer: (x - beta) / sigma  ->  Linear  ->  ReLU
        # TODO(synk): fold the 3 embedding matmuls into one block-stacked [*,17]@[17,H] matmul.
        beta, sigma, w, b = p
        return relu(mxu((x - beta) / sigma, w) + b)

    def masked_max(adj, pooled_t):
        # adj: [D, S] in {0,1};  pooled_t: [H, S] (src on lanes -> full-width vregs).
        # Exact masked max because pooled >= 0 (post-ReLU) and adj in {0,1}; zero-in-degree
        # rows yield 0, matching DGL's fill value.  If edge weights are ever consumed or the
        # fc_pool ReLU is removed, switch to a -inf mask + degree check.
        D, S = adj.shape
        H = pooled_t.shape[0]
        acc = jnp.zeros((D, H), f32)
        for s0 in range(0, S, SRC_TILE):     # blocked src axis bounds live VMEM at real sizes
            s1 = min(s0 + SRC_TILE, S)
            blk = adj[:, s0:s1][:, None, :] * pooled_t[None, :, s0:s1]   # [D, H, ts]
            acc = jnp.maximum(acc, jnp.max(blk, axis=-1))                # lane reduce -> XLU
        return acc

    def conv_con(h_vs, h_con, w):
        # HeteroGraphConv(aggregate='sum') over v2c & s2c, which share ONE SAGEConv module:
        #   fc_self(h_con)+bias is applied once per relation  -> 2x factor (matches DGL);
        #   fc_neigh is linear, bias-free -> fc_neigh(nv)+fc_neigh(ns) == fc_neigh(nv+ns).
        wpool, bpool, wneigh, wself, bias = w
        pooled = relu(mxu(h_vs, wpool) + bpool)          # ONE fc_pool for var+soc (M-stacked)
        neigh = (masked_max(a_v2c, pooled[:nv].T) +       # [H, S] lane-dense layouts
                 masked_max(a_s2c, pooled[nv:].T))
        rst = 2.0 * (mxu(h_con, wself) + bias) + mxu(neigh, wneigh)
        return relu(rst)                                  # F.relu after the hetero conv

    def conv_back(h_con, h_vs, w):
        # c2v & c2s share ONE SAGEConv: fc_pool(h_con) hoisted (computed once),
        # fc_self / fc_neigh run once on the row-stacked var+soc tensors.
        wpool, bpool, wneigh, wself, bias = w
        pooled_t = relu(mxu(h_con, wpool) + bpool).T      # [H, n_con]
        neigh_vs = jnp.concatenate(
            [masked_max(a_c2v, pooled_t), masked_max(a_c2s, pooled_t)], axis=0)
        rst = mxu(h_vs, wself) + bias + mxu(neigh_vs, wneigh)
        return relu(rst)

    h_var = emb(var_x, var_emb)
    h_con = emb(con_x, con_emb)
    h_soc = emb(soc_x, soc_emb)
    # var+soc stay row-stacked (sublane-aligned) across all layers.
    h_vs = jnp.concatenate([h_var, h_soc], axis=0)

    for _ in range(N_PASSES):
        # first loop: update 'con' nodes (sum of v2c and s2c relation outputs), then F.relu
        for fwd, _bwd in convs:
            h_con = conv_con(h_vs, h_con, fwd)
        # second loop: update 'var' and 'soc' nodes from 'con' (c2v / c2s), then F.relu
        for _fwd, bwd in convs:
            h_vs = conv_back(h_con, h_vs, bwd)

    # output Sequential: Linear_A -> ReLU -> Linear_A (same weights, list-mult quirk)
    #                    -> ReLU -> Linear(H, 1)
    h = relu(mxu(h_vs[:nv], wA) + bA)
    h = relu(mxu(h, wA) + bA)
    # H->1 projection as VPU multiply + lane reduce (an N=1 MXU matmul is all padding).
    logit = jnp.sum(h * wout_row, axis=-1, keepdims=True) + bout          # [nv, 1]
    # Lane-dense store: broadcast across 128 lanes; wrapper slices column 0.
    o_ref[...] = jnp.broadcast_to(logit, o_ref.shape)


# ------------------------------------------------------------------ pallas wrapper
def sat_gnn_forward(params, var_x, con_x, soc_x, adj):
    n_var = var_x.shape[0]
    nv, nc, ns = (_round8(var_x.shape[0]), _round8(con_x.shape[0]), _round8(soc_x.shape[0]))
    bf16 = jnp.bfloat16

    def emb_args(p):
        beta, sigma, w, b = p
        return [beta, sigma, w.astype(bf16), b]

    def sage_args(w):
        wpool, bpool, wneigh, wself, bias = w
        return [wpool.astype(bf16), bpool, wneigh.astype(bf16), wself.astype(bf16), bias]

    # zero-pad node counts to multiples of 8 (sublane-aligned concats / slices); padded
    # rows/cols of the adjacency are zero so phantom nodes never influence real nodes.
    args = [_pad_rows(var_x, nv), _pad_rows(con_x, nc), _pad_rows(soc_x, ns),
            _pad2(adj["v2c"], nc, nv), _pad2(adj["s2c"], nc, ns),
            _pad2(adj["c2v"], nv, nc), _pad2(adj["c2s"], ns, nc)]
    args += emb_args(params["var_emb"]) + emb_args(params["con_emb"]) + emb_args(params["soc_emb"])
    for conv in params["convs"]:
        args += sage_args(conv["fwd"]) + sage_args(conv["bwd"])
    wA, bA, wout, bout = params["output"]
    args += [wA.astype(bf16), bA, wout.T, bout]     # wout as a [1, H] row (lane-reduce projection)

    out_shape = (nv, 128)
    out = pl.pallas_call(
        _fused_forward_kernel,
        grid=(1,),
        in_specs=[_full_spec(a.shape) for a in args],
        out_specs=_full_spec(out_shape),
        out_shape=jax.ShapeDtypeStruct(out_shape, jnp.float32),
        compiler_params=pltpu.CompilerParams(dimension_semantics=("arbitrary",)),
    )(*args)
    return out[:n_var, :1]


# ------------------------------------------------------------------ pure-JAX reference (correctness check)
def ref_forward(params, var_x, con_x, soc_x, adj):
    hi = jax.lax.Precision.HIGHEST

    def emb(x, p):
        beta, sigma, w, b = p
        return jax.nn.relu(jnp.dot((x - beta) / sigma, w, precision=hi) + b)

    def sage(src, A, dst, w):
        wpool, bpool, wneigh, wself, bias = w
        pooled = jax.nn.relu(jnp.dot(src, wpool, precision=hi) + bpool)
        masked = jnp.where(A[:, :, None] > 0, pooled[None, :, :], -jnp.inf)
        neigh = jnp.max(masked, axis=1)
        neigh = jnp.where(A.sum(axis=1, keepdims=True) > 0, neigh, 0.0)
        return (jnp.dot(dst, wself, precision=hi)
                + jnp.dot(neigh, wneigh, precision=hi) + bias)

    h_var = emb(var_x, params["var_emb"])
    h_con = emb(con_x, params["con_emb"])
    h_soc = emb(soc_x, params["soc_emb"])
    for _ in range(N_PASSES):
        for conv in params["convs"]:
            h_con = jax.nn.relu(sage(h_var, adj["v2c"], h_con, conv["fwd"])
                                + sage(h_soc, adj["s2c"], h_con, conv["fwd"]))
        for conv in params["convs"]:
            new_var = jax.nn.relu(sage(h_con, adj["c2v"], h_var, conv["bwd"]))
            new_soc = jax.nn.relu(sage(h_con, adj["c2s"], h_soc, conv["bwd"]))
            h_var, h_soc = new_var, new_soc
    wA, bA, wout, bout = params["output"]
    h = jax.nn.relu(jnp.dot(h_var, wA, precision=hi) + bA)
    h = jax.nn.relu(jnp.dot(h, wA, precision=hi) + bA)
    return jnp.dot(h, wout, precision=hi) + bout


# ------------------------------------------------------------------ deterministic parameter init
def _normal(key, shape, scale):
    return scale * jax.random.normal(key, shape, dtype=jnp.float32)


def _init_linear(key, fan_in, fan_out):
    kw, kb = jax.random.split(key)
    return _normal(kw, (fan_in, fan_out), 0.2), _normal(kb, (1, fan_out), 0.05)


def _init_sage(key, h):
    k1, k2, k3, k4 = jax.random.split(key, 4)
    wpool, bpool = _init_linear(k1, h, h)           # fc_pool (has bias)
    wneigh = _normal(k2, (h, h), 0.2)               # fc_neigh (bias=False in DGL)
    wself = _normal(k3, (h, h), 0.2)                # fc_self  (bias=False in DGL)
    bias = _normal(k4, (1, h), 0.05)                # SAGEConv bias term
    return (wpool, bpool, wneigh, wself, bias)


def init_params(key):
    keys = jax.random.split(key, 9)

    def emb(k, f_in):
        w, b = _init_linear(k, f_in, N_H_FEATS)
        beta = jnp.zeros((1, f_in), jnp.float32)    # PreNormLayer beta  (zeros)
        sigma = jnp.ones((1, f_in), jnp.float32)    # PreNormLayer sigma (ones)
        return (beta, sigma, w, b)

    params = {
        "var_emb": emb(keys[0], N_VAR_FEATS),
        "con_emb": emb(keys[1], N_CON_FEATS),
        "soc_emb": emb(keys[2], N_SOC_FEATS),
        "convs": [
            {"fwd": _init_sage(keys[3], N_H_FEATS), "bwd": _init_sage(keys[4], N_H_FEATS)},  # conv1
            {"fwd": _init_sage(keys[5], N_H_FEATS), "bwd": _init_sage(keys[6], N_H_FEATS)},  # conv2
        ],
    }
    wA, bA = _init_linear(keys[7], N_H_FEATS, N_H_FEATS)   # reused twice ([Linear,ReLU]*2 quirk)
    wout, bout = _init_linear(keys[8], N_H_FEATS, 1)
    params["output"] = (wA, bA, wout, bout)
    return params


# ------------------------------------------------------------------ main
if __name__ == "__main__":
    key = jax.random.PRNGKey(0)
    k_feat, k_adj, k_param = jax.random.split(key, 3)

    n_var, n_con, n_soc = 12, 10, 6
    kv, kc, ks = jax.random.split(k_feat, 3)
    var_x = jax.random.normal(kv, (n_var, N_VAR_FEATS), jnp.float32)
    con_x = jax.random.normal(kc, (n_con, N_CON_FEATS), jnp.float32)
    soc_x = jax.random.normal(ks, (n_soc, N_SOC_FEATS), jnp.float32)

    ka, kb = jax.random.split(k_adj)
    A_v2c = jax.random.bernoulli(ka, 0.5, (n_con, n_var)).astype(jnp.float32)
    A_s2c = jax.random.bernoulli(kb, 0.5, (n_con, n_soc)).astype(jnp.float32)
    # guarantee >=1 in-neighbour per node in every relation (DGL SAGEConv rejects zero-in-degree)
    A_v2c = A_v2c.at[:, 0].set(1.0).at[0, :].set(1.0)
    A_s2c = A_s2c.at[:, 0].set(1.0).at[0, :].set(1.0)
    adj = {"v2c": A_v2c, "s2c": A_s2c, "c2v": A_v2c.T, "c2s": A_s2c.T}
    # NOTE: g.edata['A'] (edge weights) exists in the PyTorch graph but is never consumed:
    # HeteroGraphConv's mod_kwargs is keyed by edge type, so {'edge_weights','efeats'} match
    # no edge type and SAGEConv runs without edge weights.

    params = init_params(k_param)

    logits = jax.block_until_ready(sat_gnn_forward(params, var_x, con_x, soc_x, adj))
    ref = ref_forward(params, var_x, con_x, soc_x, adj)

    assert logits.shape == (n_var, 1)
    # Kernel uses bf16 MXU inputs / f32 accumulation (vs f32-HIGHEST reference, f64 torch),
    # so the tolerance is loosened slightly vs the pure-f32 version.
    assert jnp.allclose(logits, ref, rtol=5e-2, atol=5e-2)
    print("KERNEL_OK")
</pallas_src>

<mosaic_0001>
module attributes {stable_mosaic.version = 11 : i64} {
  func.func @_fused_forward_kernel(%arg0: i32, %arg1: memref<16x7xf32, #tpu.memory_space<vmem>>, %arg2: memref<16x4xf32, #tpu.memory_space<vmem>>, %arg3: memref<8x6xf32, #tpu.memory_space<vmem>>, %arg4: memref<16x16xf32, #tpu.memory_space<vmem>>, %arg5: memref<16x8xf32, #tpu.memory_space<vmem>>, %arg6: memref<16x16xf32, #tpu.memory_space<vmem>>, %arg7: memref<8x16xf32, #tpu.memory_space<vmem>>, %arg8: memref<1x7xf32, #tpu.memory_space<vmem>>, %arg9: memref<1x7xf32, #tpu.memory_space<vmem>>, %arg10: memref<7x32xbf16, #tpu.memory_space<vmem>>, %arg11: memref<1x32xf32, #tpu.memory_space<vmem>>, %arg12: memref<1x4xf32, #tpu.memory_space<vmem>>, %arg13: memref<1x4xf32, #tpu.memory_space<vmem>>, %arg14: memref<4x32xbf16, #tpu.memory_space<vmem>>, %arg15: memref<1x32xf32, #tpu.memory_space<vmem>>, %arg16: memref<1x6xf32, #tpu.memory_space<vmem>>, %arg17: memref<1x6xf32, #tpu.memory_space<vmem>>, %arg18: memref<6x32xbf16, #tpu.memory_space<vmem>>, %arg19: memref<1x32xf32, #tpu.memory_space<vmem>>, %arg20: memref<32x32xbf16, #tpu.memory_space<vmem>>, %arg21: memref<1x32xf32, #tpu.memory_space<vmem>>, %arg22: memref<32x32xbf16, #tpu.memory_space<vmem>>, %arg23: memref<32x32xbf16, #tpu.memory_space<vmem>>, %arg24: memref<1x32xf32, #tpu.memory_space<vmem>>, %arg25: memref<32x32xbf16, #tpu.memory_space<vmem>>, %arg26: memref<1x32xf32, #tpu.memory_space<vmem>>, %arg27: memref<32x32xbf16, #tpu.memory_space<vmem>>, %arg28: memref<32x32xbf16, #tpu.memory_space<vmem>>, %arg29: memref<1x32xf32, #tpu.memory_space<vmem>>, %arg30: memref<32x32xbf16, #tpu.memory_space<vmem>>, %arg31: memref<1x32xf32, #tpu.memory_space<vmem>>, %arg32: memref<32x32xbf16, #tpu.memory_space<vmem>>, %arg33: memref<32x32xbf16, #tpu.memory_space<vmem>>, %arg34: memref<1x32xf32, #tpu.memory_space<vmem>>, %arg35: memref<32x32xbf16, #tpu.memory_space<vmem>>, %arg36: memref<1x32xf32, #tpu.memory_space<vmem>>, %arg37: memref<32x32xbf16, #tpu.memory_space<vmem>>, %arg38: memref<32x32xbf16, #tpu.memory_space<vmem>>, %arg39: memref<1x32xf32, #tpu.memory_space<vmem>>, %arg40: memref<32x32xbf16, #tpu.memory_space<vmem>>, %arg41: memref<1x32xf32, #tpu.memory_space<vmem>>, %arg42: memref<1x32xf32, #tpu.memory_space<vmem>>, %arg43: memref<1x1xf32, #tpu.memory_space<vmem>>, %arg44: memref<16x128xf32, #tpu.memory_space<vmem>>) attributes {dimension_semantics = [#tpu.dimension_semantics<arbitrary>], iteration_bounds = array<i64: 1>, scalar_prefetch = 0 : i64, scratch_operands = 0 : i64, tpu.core_type = #tpu.core_type<tc>, window_params = [{pipeline_mode = #tpu.pipeline_mode<synchronous>, transform_indices = @transform_0, window_bounds = array<i64: 16, 7>}, {pipeline_mode = #tpu.pipeline_mode<synchronous>, transform_indices = @transform_1, window_bounds = array<i64: 16, 4>}, {pipeline_mode = #tpu.pipeline_mode<synchronous>, transform_indices = @transform_2, window_bounds = array<i64: 8, 6>}, {pipeline_mode = #tpu.pipeline_mode<synchronous>, transform_indices = @transform_3, window_bounds = array<i64: 16, 16>}, {pipeline_mode = #tpu.pipeline_mode<synchronous>, transform_indices = @transform_4, window_bounds = array<i64: 16, 8>}, {pipeline_mode = #tpu.pipeline_mode<synchronous>, transform_indices = @transform_5, window_bounds = array<i64: 16, 16>}, {pipeline_mode = #tpu.pipeline_mode<synchronous>, transform_indices = @transform_6, window_bounds = array<i64: 8, 16>}, {pipeline_mode = #tpu.pipeline_mode<synchronous>, transform_indices = @transform_7, window_bounds = array<i64: 1, 7>}, {pipeline_mode = #tpu.pipeline_mode<synchronous>, transform_indices = @transform_8, window_bounds = array<i64: 1, 7>}, {pipeline_mode = #tpu.pipeline_mode<synchronous>, transform_indices = @transform_9, window_bounds = array<i64: 7, 32>}, {pipeline_mode = #tpu.pipeline_mode<synchronous>, transform_indices = @transform_10, window_bounds = array<i64: 1, 32>}, {pipeline_mode = #tpu.pipeline_mode<synchronous>, transform_indices = @transform_11, window_bounds = array<i64: 1, 4>}, {pipeline_mode = #tpu.pipeline_mode<synchronous>, transform_indices = @transform_12, window_bounds = array<i64: 1, 4>}, {pipeline_mode = #tpu.pipeline_mode<synchronous>, transform_indices = @transform_13, window_bounds = array<i64: 4, 32>}, {pipeline_mode = #tpu.pipeline_mode<synchronous>, transform_indices = @transform_14, window_bounds = array<i64: 1, 32>}, {pipeline_mode = #tpu.pipeline_mode<synchronous>, transform_indices = @transform_15, window_bounds = array<i64: 1, 6>}, {pipeline_mode = #tpu.pipeline_mode<synchronous>, transform_indices = @transform_16, window_bounds = array<i64: 1, 6>}, {pipeline_mode = #tpu.pipeline_mode<synchronous>, transform_indices = @transform_17, window_bounds = array<i64: 6, 32>}, {pipeline_mode = #tpu.pipeline_mode<synchronous>, transform_indices = @transform_18, window_bounds = array<i64: 1, 32>}, {pipeline_mode = #tpu.pipeline_mode<synchronous>, transform_indices = @transform_19, window_bounds = array<i64: 32, 32>}, {pipeline_mode = #tpu.pipeline_mode<synchronous>, transform_indices = @transform_20, window_bounds = array<i64: 1, 32>}, {pipeline_mode = #tpu.pipeline_mode<synchronous>, transform_indices = @transform_21, window_bounds = array<i64: 32, 32>}, {pipeline_mode = #tpu.pipeline_mode<synchronous>, transform_indices = @transform_22, window_bounds = array<i64: 32, 32>}, {pipeline_mode = #tpu.pipeline_mode<synchronous>, transform_indices = @transform_23, window_bounds = array<i64: 1, 32>}, {pipeline_mode = #tpu.pipeline_mode<synchronous>, transform_indices = @transform_24, window_bounds = array<i64: 32, 32>}, {pipeline_mode = #tpu.pipeline_mode<synchronous>, transform_indices = @transform_25, window_bounds = array<i64: 1, 32>}, {pipeline_mode = #tpu.pipeline_mode<synchronous>, transform_indices = @transform_26, window_bounds = array<i64: 32, 32>}, {pipeline_mode = #tpu.pipeline_mode<synchronous>, transform_indices = @transform_27, window_bounds = array<i64: 32, 32>}, {pipeline_mode = #tpu.pipeline_mode<synchronous>, transform_indices = @transform_28, window_bounds = array<i64: 1, 32>}, {pipeline_mode = #tpu.pipeline_mode<synchronous>, transform_indices = @transform_29, window_bounds = array<i64: 32, 32>}, {pipeline_mode = #tpu.pipeline_mode<synchronous>, transform_indices = @transform_30, window_bounds = array<i64: 1, 32>}, {pipeline_mode = #tpu.pipeline_mode<synchronous>, transform_indices = @transform_31, window_bounds = array<i64: 32, 32>}, {pipeline_mode = #tpu.pipeline_mode<synchronous>, transform_indices = @transform_32, window_bounds = array<i64: 32, 32>}, {pipeline_mode = #tpu.pipeline_mode<synchronous>, transform_indices = @transform_33, window_bounds = array<i64: 1, 32>}, {pipeline_mode = #tpu.pipeline_mode<synchronous>, transform_indices = @transform_34, window_bounds = array<i64: 32, 32>}, {pipeline_mode = #tpu.pipeline_mode<synchronous>, transform_indices = @transform_35, window_bounds = array<i64: 1, 32>}, {pipeline_mode = #tpu.pipeline_mode<synchronous>, transform_indices = @transform_36, window_bounds = array<i64: 32, 32>}, {pipeline_mode = #tpu.pipeline_mode<synchronous>, transform_indices = @transform_37, window_bounds = array<i64: 32, 32>}, {pipeline_mode = #tpu.pipeline_mode<synchronous>, transform_indices = @transform_38, window_bounds = array<i64: 1, 32>}, {pipeline_mode = #tpu.pipeline_mode<synchronous>, transform_indices = @transform_39, window_bounds = array<i64: 32, 32>}, {pipeline_mode = #tpu.pipeline_mode<synchronous>, transform_indices = @transform_40, window_bounds = array<i64: 1, 32>}, {pipeline_mode = #tpu.pipeline_mode<synchronous>, transform_indices = @transform_41, window_bounds = array<i64: 1, 32>}, {pipeline_mode = #tpu.pipeline_mode<synchronous>, transform_indices = @transform_42, window_bounds = array<i64: 1, 1>}, {pipeline_mode = #tpu.pipeline_mode<synchronous>, transform_indices = @transform_43, window_bounds = array<i64: 16, 128>}]} {
    %c0 = arith.constant 0 : index
    %c0_0 = arith.constant 0 : index
    %0 = vector.load %arg1[%c0, %c0_0] : memref<16x7xf32, #tpu.memory_space<vmem>>, vector<16x7xf32>
    %c0_1 = arith.constant 0 : index
    %c0_2 = arith.constant 0 : index
    %1 = vector.load %arg2[%c0_1, %c0_2] : memref<16x4xf32, #tpu.memory_space<vmem>>, vector<16x4xf32>
    %c0_3 = arith.constant 0 : index
    %c0_4 = arith.constant 0 : index
    %2 = vector.load %arg3[%c0_3, %c0_4] : memref<8x6xf32, #tpu.memory_space<vmem>>, vector<8x6xf32>
    %c0_5 = arith.constant 0 : index
    %c0_6 = arith.constant 0 : index
    %3 = vector.load %arg4[%c0_5, %c0_6] : memref<16x16xf32, #tpu.memory_space<vmem>>, vector<16x16xf32>
    %c0_7 = arith.constant 0 : index
    %c0_8 = arith.constant 0 : index
    %4 = vector.load %arg5[%c0_7, %c0_8] : memref<16x8xf32, #tpu.memory_space<vmem>>, vector<16x8xf32>
    %c0_9 = arith.constant 0 : index
    %c0_10 = arith.constant 0 : index
    %5 = vector.load %arg6[%c0_9, %c0_10] : memref<16x16xf32, #tpu.memory_space<vmem>>, vector<16x16xf32>
    %c0_11 = arith.constant 0 : index
    %c0_12 = arith.constant 0 : index
    %6 = vector.load %arg7[%c0_11, %c0_12] : memref<8x16xf32, #tpu.memory_space<vmem>>, vector<8x16xf32>
    %c0_13 = arith.constant 0 : index
    %c0_14 = arith.constant 0 : index
    %7 = vector.load %arg8[%c0_13, %c0_14] : memref<1x7xf32, #tpu.memory_space<vmem>>, vector<1x7xf32>
    %c0_15 = arith.constant 0 : index
    %c0_16 = arith.constant 0 : index
    %8 = vector.load %arg9[%c0_15, %c0_16] : memref<1x7xf32, #tpu.memory_space<vmem>>, vector<1x7xf32>
    %c0_17 = arith.constant 0 : index
    %c0_18 = arith.constant 0 : index
    %9 = vector.load %arg10[%c0_17, %c0_18] : memref<7x32xbf16, #tpu.memory_space<vmem>>, vector<7x32xbf16>
    %c0_19 = arith.constant 0 : index
    %c0_20 = arith.constant 0 : index
    %10 = vector.load %arg11[%c0_19, %c0_20] : memref<1x32xf32, #tpu.memory_space<vmem>>, vector<1x32xf32>
    %c0_21 = arith.constant 0 : index
    %c0_22 = arith.constant 0 : index
    %11 = vector.load %arg12[%c0_21, %c0_22] : memref<1x4xf32, #tpu.memory_space<vmem>>, vector<1x4xf32>
    %c0_23 = arith.constant 0 : index
    %c0_24 = arith.constant 0 : index
    %12 = vector.load %arg13[%c0_23, %c0_24] : memref<1x4xf32, #tpu.memory_space<vmem>>, vector<1x4xf32>
    %c0_25 = arith.constant 0 : index
    %c0_26 = arith.constant 0 : index
    %13 = vector.load %arg14[%c0_25, %c0_26] : memref<4x32xbf16, #tpu.memory_space<vmem>>, vector<4x32xbf16>
    %c0_27 = arith.constant 0 : index
    %c0_28 = arith.constant 0 : index
    %14 = vector.load %arg15[%c0_27, %c0_28] : memref<1x32xf32, #tpu.memory_space<vmem>>, vector<1x32xf32>
    %c0_29 = arith.constant 0 : index
    %c0_30 = arith.constant 0 : index
    %15 = vector.load %arg16[%c0_29, %c0_30] : memref<1x6xf32, #tpu.memory_space<vmem>>, vector<1x6xf32>
    %c0_31 = arith.constant 0 : index
    %c0_32 = arith.constant 0 : index
    %16 = vector.load %arg17[%c0_31, %c0_32] : memref<1x6xf32, #tpu.memory_space<vmem>>, vector<1x6xf32>
    %c0_33 = arith.constant 0 : index
    %c0_34 = arith.constant 0 : index
    %17 = vector.load %arg18[%c0_33, %c0_34] : memref<6x32xbf16, #tpu.memory_space<vmem>>, vector<6x32xbf16>
    %c0_35 = arith.constant 0 : index
    %c0_36 = arith.constant 0 : index
    %18 = vector.load %arg19[%c0_35, %c0_36] : memref<1x32xf32, #tpu.memory_space<vmem>>, vector<1x32xf32>
    %c0_37 = arith.constant 0 : index
    %c0_38 = arith.constant 0 : index
    %19 = vector.load %arg20[%c0_37, %c0_38] : memref<32x32xbf16, #tpu.memory_space<vmem>>, vector<32x32xbf16>
    %c0_39 = arith.constant 0 : index
    %c0_40 = arith.constant 0 : index
    %20 = vector.load %arg21[%c0_39, %c0_40] : memref<1x32xf32, #tpu.memory_space<vmem>>, vector<1x32xf32>
    %c0_41 = arith.constant 0 : index
    %c0_42 = arith.constant 0 : index
    %21 = vector.load %arg22[%c0_41, %c0_42] : memref<32x32xbf16, #tpu.memory_space<vmem>>, vector<32x32xbf16>
    %c0_43 = arith.constant 0 : index
    %c0_44 = arith.constant 0 : index
    %22 = vector.load %arg23[%c0_43, %c0_44] : memref<32x32xbf16, #tpu.memory_space<vmem>>, vector<32x32xbf16>
    %c0_45 = arith.constant 0 : index
    %c0_46 = arith.constant 0 : index
    %23 = vector.load %arg24[%c0_45, %c0_46] : memref<1x32xf32, #tpu.memory_space<vmem>>, vector<1x32xf32>
    %c0_47 = arith.constant 0 : index
    %c0_48 = arith.constant 0 : index
    %24 = vector.load %arg25[%c0_47, %c0_48] : memref<32x32xbf16, #tpu.memory_space<vmem>>, vector<32x32xbf16>
    %c0_49 = arith.constant 0 : index
    %c0_50 = arith.constant 0 : index
    %25 = vector.load %arg26[%c0_49, %c0_50] : memref<1x32xf32, #tpu.memory_space<vmem>>, vector<1x32xf32>
    %c0_51 = arith.constant 0 : index
    %c0_52 = arith.constant 0 : index
    %26 = vector.load %arg27[%c0_51, %c0_52] : memref<32x32xbf16, #tpu.memory_space<vmem>>, vector<32x32xbf16>
    %c0_53 = arith.constant 0 : index
    %c0_54 = arith.constant 0 : index
    %27 = vector.load %arg28[%c0_53, %c0_54] : memref<32x32xbf16, #tpu.memory_space<vmem>>, vector<32x32xbf16>
    %c0_55 = arith.constant 0 : index
    %c0_56 = arith.constant 0 : index
    %28 = vector.load %arg29[%c0_55, %c0_56] : memref<1x32xf32, #tpu.memory_space<vmem>>, vector<1x32xf32>
    %c0_57 = arith.constant 0 : index
    %c0_58 = arith.constant 0 : index
    %29 = vector.load %arg30[%c0_57, %c0_58] : memref<32x32xbf16, #tpu.memory_space<vmem>>, vector<32x32xbf16>
    %c0_59 = arith.constant 0 : index
    %c0_60 = arith.constant 0 : index
    %30 = vector.load %arg31[%c0_59, %c0_60] : memref<1x32xf32, #tpu.memory_space<vmem>>, vector<1x32xf32>
    %c0_61 = arith.constant 0 : index
    %c0_62 = arith.constant 0 : index
    %31 = vector.load %arg32[%c0_61, %c0_62] : memref<32x32xbf16, #tpu.memory_space<vmem>>, vector<32x32xbf16>
    %c0_63 = arith.constant 0 : index
    %c0_64 = arith.constant 0 : index
    %32 = vector.load %arg33[%c0_63, %c0_64] : memref<32x32xbf16, #tpu.memory_space<vmem>>, vector<32x32xbf16>
    %c0_65 = arith.constant 0 : index
    %c0_66 = arith.constant 0 : index
    %33 = vector.load %arg34[%c0_65, %c0_66] : memref<1x32xf32, #tpu.memory_space<vmem>>, vector<1x32xf32>
    %c0_67 = arith.constant 0 : index
    %c0_68 = arith.constant 0 : index
    %34 = vector.load %arg35[%c0_67, %c0_68] : memref<32x32xbf16, #tpu.memory_space<vmem>>, vector<32x32xbf16>
    %c0_69 = arith.constant 0 : index
    %c0_70 = arith.constant 0 : index
    %35 = vector.load %arg36[%c0_69, %c0_70] : memref<1x32xf32, #tpu.memory_space<vmem>>, vector<1x32xf32>
    %c0_71 = arith.constant 0 : index
    %c0_72 = arith.constant 0 : index
    %36 = vector.load %arg37[%c0_71, %c0_72] : memref<32x32xbf16, #tpu.memory_space<vmem>>, vector<32x32xbf16>
    %c0_73 = arith.constant 0 : index
    %c0_74 = arith.constant 0 : index
    %37 = vector.load %arg38[%c0_73, %c0_74] : memref<32x32xbf16, #tpu.memory_space<vmem>>, vector<32x32xbf16>
    %c0_75 = arith.constant 0 : index
    %c0_76 = arith.constant 0 : index
    %38 = vector.load %arg39[%c0_75, %c0_76] : memref<1x32xf32, #tpu.memory_space<vmem>>, vector<1x32xf32>
    %c0_77 = arith.constant 0 : index
    %c0_78 = arith.constant 0 : index
    %39 = vector.load %arg40[%c0_77, %c0_78] : memref<32x32xbf16, #tpu.memory_space<vmem>>, vector<32x32xbf16>
    %c0_79 = arith.constant 0 : index
    %c0_80 = arith.constant 0 : index
    %40 = vector.load %arg41[%c0_79, %c0_80] : memref<1x32xf32, #tpu.memory_space<vmem>>, vector<1x32xf32>
    %c0_81 = arith.constant 0 : index
    %c0_82 = arith.constant 0 : index
    %41 = vector.load %arg42[%c0_81, %c0_82] : memref<1x32xf32, #tpu.memory_space<vmem>>, vector<1x32xf32>
    %c0_83 = arith.constant 0 : index
    %c0_84 = arith.constant 0 : index
    %42 = vector.load %arg43[%c0_83, %c0_84] : memref<1x1xf32, #tpu.memory_space<vmem>>, vector<1x1xf32>
    %43 = vector.broadcast %7 : vector<1x7xf32> to vector<16x7xf32>
    %44 = arith.subf %0, %43 : vector<16x7xf32>
    %45 = vector.broadcast %8 : vector<1x7xf32> to vector<16x7xf32>
    %46 = arith.divf %44, %45 : vector<16x7xf32>
    %47 = arith.truncf %46 : vector<16x7xf32> to vector<16x7xbf16>
    %cst = arith.constant dense<0.000000e+00> : vector<16x32xf32>
    %48 = tpu.matmul %47, %9, %cst {dimension_numbers = #tpu.dot_dimension_numbers<[1], [0], [0], [1], [0, 0, 1, 1], [], []>} : vector<16x7xbf16>, vector<7x32xbf16>, vector<16x32xf32> -> vector<16x32xf32>
    %49 = vector.broadcast %10 : vector<1x32xf32> to vector<16x32xf32>
    %50 = arith.addf %48, %49 : vector<16x32xf32>
    %cst_85 = arith.constant 0.000000e+00 : f32
    %51 = vector.broadcast %cst_85 : f32 to vector<16x32xf32>
    %52 = arith.maximumf %50, %51 : vector<16x32xf32>
    %53 = vector.broadcast %11 : vector<1x4xf32> to vector<16x4xf32>
    %54 = arith.subf %1, %53 : vector<16x4xf32>
    %55 = vector.broadcast %12 : vector<1x4xf32> to vector<16x4xf32>
    %56 = arith.divf %54, %55 : vector<16x4xf32>
    %57 = arith.truncf %56 : vector<16x4xf32> to vector<16x4xbf16>
    %cst_86 = arith.constant dense<0.000000e+00> : vector<16x32xf32>
    %58 = tpu.matmul %57, %13, %cst_86 {dimension_numbers = #tpu.dot_dimension_numbers<[1], [0], [0], [1], [0, 0, 1, 1], [], []>} : vector<16x4xbf16>, vector<4x32xbf16>, vector<16x32xf32> -> vector<16x32xf32>
    %59 = vector.broadcast %14 : vector<1x32xf32> to vector<16x32xf32>
    %60 = arith.addf %58, %59 : vector<16x32xf32>
    %cst_87 = arith.constant 0.000000e+00 : f32
    %61 = vector.broadcast %cst_87 : f32 to vector<16x32xf32>
    %62 = arith.maximumf %60, %61 : vector<16x32xf32>
    %63 = vector.broadcast %15 : vector<1x6xf32> to vector<8x6xf32>
    %64 = arith.subf %2, %63 : vector<8x6xf32>
    %65 = vector.broadcast %16 : vector<1x6xf32> to vector<8x6xf32>
    %66 = arith.divf %64, %65 : vector<8x6xf32>
    %67 = arith.truncf %66 : vector<8x6xf32> to vector<8x6xbf16>
    %cst_88 = arith.constant dense<0.000000e+00> : vector<8x32xf32>
    %68 = tpu.matmul %67, %17, %cst_88 {dimension_numbers = #tpu.dot_dimension_numbers<[1], [0], [0], [1], [0, 0, 1, 1], [], []>} : vector<8x6xbf16>, vector<6x32xbf16>, vector<8x32xf32> -> vector<8x32xf32>
    %69 = vector.broadcast %18 : vector<1x32xf32> to vector<8x32xf32>
    %70 = arith.addf %68, %69 : vector<8x32xf32>
    %cst_89 = arith.constant 0.000000e+00 : f32
    %71 = vector.broadcast %cst_89 : f32 to vector<8x32xf32>
    %72 = arith.maximumf %70, %71 : vector<8x32xf32>
    %73 = tpu.concatenate %52, %72 in 0 : vector<16x32xf32>, vector<8x32xf32> -> vector<24x32xf32>
    %74 = arith.truncf %73 : vector<24x32xf32> to vector<24x32xbf16>
    %cst_90 = arith.constant dense<0.000000e+00> : vector<24x32xf32>
    %75 = tpu.matmul %74, %19, %cst_90 {dimension_numbers = #tpu.dot_dimension_numbers<[1], [0], [0], [1], [0, 0, 1, 1], [], []>} : vector<24x32xbf16>, vector<32x32xbf16>, vector<24x32xf32> -> vector<24x32xf32>
    %76 = vector.broadcast %20 : vector<1x32xf32> to vector<24x32xf32>
    %77 = arith.addf %75, %76 : vector<24x32xf32>
    %cst_91 = arith.constant 0.000000e+00 : f32
    %78 = vector.broadcast %cst_91 : f32 to vector<24x32xf32>
    %79 = arith.maximumf %77, %78 : vector<24x32xf32>
    %80 = vector.extract_strided_slice %79 {offsets = [0, 0], sizes = [16, 32], strides = [1, 1]} : vector<24x32xf32> to vector<16x32xf32>
    %81 = tpu.transpose %80, [1, 0] : vector<16x32xf32> -> vector<32x16xf32>
    %cst_92 = arith.constant 0.000000e+00 : f32
    %82 = vector.broadcast %cst_92 : f32 to vector<16x32xf32>
    %83 = vector.shape_cast %3 : vector<16x16xf32> to vector<16x1x16xf32>
    %84 = vector.shape_cast %81 : vector<32x16xf32> to vector<1x32x16xf32>
    %85 = vector.broadcast %83 : vector<16x1x16xf32> to vector<16x32x16xf32>
    %86 = vector.broadcast %84 : vector<1x32x16xf32> to vector<16x32x16xf32>
    %87 = arith.mulf %85, %86 : vector<16x32x16xf32>
    %cst_93 = arith.constant dense<0xFF800000> : vector<16x32xf32>
    %88 = vector.multi_reduction <maximumf>, %87, %cst_93 [2] : vector<16x32x16xf32> to vector<16x32xf32>
    %89 = arith.maximumf %82, %88 : vector<16x32xf32>
    %90 = vector.extract_strided_slice %79 {offsets = [16, 0], sizes = [8, 32], strides = [1, 1]} : vector<24x32xf32> to vector<8x32xf32>
    %91 = tpu.transpose %90, [1, 0] : vector<8x32xf32> -> vector<32x8xf32>
    %cst_94 = arith.constant 0.000000e+00 : f32
    %92 = vector.broadcast %cst_94 : f32 to vector<16x32xf32>
    %93 = vector.shape_cast %4 : vector<16x8xf32> to vector<16x1x8xf32>
    %94 = vector.shape_cast %91 : vector<32x8xf32> to vector<1x32x8xf32>
    %95 = vector.broadcast %93 : vector<16x1x8xf32> to vector<16x32x8xf32>
    %96 = vector.broadcast %94 : vector<1x32x8xf32> to vector<16x32x8xf32>
    %97 = arith.mulf %95, %96 : vector<16x32x8xf32>
    %cst_95 = arith.constant dense<0xFF800000> : vector<16x32xf32>
    %98 = vector.multi_reduction <maximumf>, %97, %cst_95 [2] : vector<16x32x8xf32> to vector<16x32xf32>
    %99 = arith.maximumf %92, %98 : vector<16x32xf32>
    %100 = arith.addf %89, %99 : vector<16x32xf32>
    %101 = arith.truncf %62 : vector<16x32xf32> to vector<16x32xbf16>
    %cst_96 = arith.constant dense<0.000000e+00> : vector<16x32xf32>
    %102 = tpu.matmul %101, %22, %cst_96 {dimension_numbers = #tpu.dot_dimension_numbers<[1], [0], [0], [1], [0, 0, 1, 1], [], []>} : vector<16x32xbf16>, vector<32x32xbf16>, vector<16x32xf32> -> vector<16x32xf32>
    %103 = vector.broadcast %23 : vector<1x32xf32> to vector<16x32xf32>
    %104 = arith.addf %102, %103 : vector<16x32xf32>
    %cst_97 = arith.constant 2.000000e+00 : f32
    %105 = vector.broadcast %cst_97 : f32 to vector<16x32xf32>
    %106 = arith.mulf %105, %104 : vector<16x32xf32>
    %107 = arith.truncf %100 : vector<16x32xf32> to vector<16x32xbf16>
    %cst_98 = arith.constant dense<0.000000e+00> : vector<16x32xf32>
    %108 = tpu.matmul %107, %21, %cst_98 {dimension_numbers = #tpu.dot_dimension_numbers<[1], [0], [0], [1], [0, 0, 1, 1], [], []>} : vector<16x32xbf16>, vector<32x32xbf16>, vector<16x32xf32> -> vector<16x32xf32>
    %109 = arith.addf %106, %108 : vector<16x32xf32>
    %cst_99 = arith.constant 0.000000e+00 : f32
    %110 = vector.broadcast %cst_99 : f32 to vector<16x32xf32>
    %111 = arith.maximumf %109, %110 : vector<16x32xf32>
    %112 = arith.truncf %73 : vector<24x32xf32> to vector<24x32xbf16>
    %cst_100 = arith.constant dense<0.000000e+00> : vector<24x32xf32>
    %113 = tpu.matmul %112, %29, %cst_100 {dimension_numbers = #tpu.dot_dimension_numbers<[1], [0], [0], [1], [0, 0, 1, 1], [], []>} : vector<24x32xbf16>, vector<32x32xbf16>, vector<24x32xf32> -> vector<24x32xf32>
    %114 = vector.broadcast %30 : vector<1x32xf32> to vector<24x32xf32>
    %115 = arith.addf %113, %114 : vector<24x32xf32>
    %cst_101 = arith.constant 0.000000e+00 : f32
    %116 = vector.broadcast %cst_101 : f32 to vector<24x32xf32>
    %117 = arith.maximumf %115, %116 : vector<24x32xf32>
    %118 = vector.extract_strided_slice %117 {offsets = [0, 0], sizes = [16, 32], strides = [1, 1]} : vector<24x32xf32> to vector<16x32xf32>
    %119 = tpu.transpose %118, [1, 0] : vector<16x32xf32> -> vector<32x16xf32>
    %cst_102 = arith.constant 0.000000e+00 : f32
    %120 = vector.broadcast %cst_102 : f32 to vector<16x32xf32>
    %121 = vector.shape_cast %3 : vector<16x16xf32> to vector<16x1x16xf32>
    %122 = vector.shape_cast %119 : vector<32x16xf32> to vector<1x32x16xf32>
    %123 = vector.broadcast %121 : vector<16x1x16xf32> to vector<16x32x16xf32>
    %124 = vector.broadcast %122 : vector<1x32x16xf32> to vector<16x32x16xf32>
    %125 = arith.mulf %123, %124 : vector<16x32x16xf32>
    %cst_103 = arith.constant dense<0xFF800000> : vector<16x32xf32>
    %126 = vector.multi_reduction <maximumf>, %125, %cst_103 [2] : vector<16x32x16xf32> to vector<16x32xf32>
    %127 = arith.maximumf %120, %126 : vector<16x32xf32>
    %128 = vector.extract_strided_slice %117 {offsets = [16, 0], sizes = [8, 32], strides = [1, 1]} : vector<24x32xf32> to vector<8x32xf32>
    %129 = tpu.transpose %128, [1, 0] : vector<8x32xf32> -> vector<32x8xf32>
    %cst_104 = arith.constant 0.000000e+00 : f32
    %130 = vector.broadcast %cst_104 : f32 to vector<16x32xf32>
    %131 = vector.shape_cast %4 : vector<16x8xf32> to vector<16x1x8xf32>
    %132 = vector.shape_cast %129 : vector<32x8xf32> to vector<1x32x8xf32>
    %133 = vector.broadcast %131 : vector<16x1x8xf32> to vector<16x32x8xf32>
    %134 = vector.broadcast %132 : vector<1x32x8xf32> to vector<16x32x8xf32>
    %135 = arith.mulf %133, %134 : vector<16x32x8xf32>
    %cst_105 = arith.constant dense<0xFF800000> : vector<16x32xf32>
    %136 = vector.multi_reduction <maximumf>, %135, %cst_105 [2] : vector<16x32x8xf32> to vector<16x32xf32>
    %137 = arith.maximumf %130, %136 : vector<16x32xf32>
    %138 = arith.addf %127, %137 : vector<16x32xf32>
    %139 = arith.truncf %111 : vector<16x32xf32> to vector<16x32xbf16>
    %cst_106 = arith.constant dense<0.000000e+00> : vector<16x32xf32>
    %140 = tpu.matmul %139, %32, %cst_106 {dimension_numbers = #tpu.dot_dimension_numbers<[1], [0], [0], [1], [0, 0, 1, 1], [], []>} : vector<16x32xbf16>, vector<32x32xbf16>, vector<16x32xf32> -> vector<16x32xf32>
    %141 = vector.broadcast %33 : vector<1x32xf32> to vector<16x32xf32>
    %142 = arith.addf %140, %141 : vector<16x32xf32>
    %cst_107 = arith.constant 2.000000e+00 : f32
    %143 = vector.broadcast %cst_107 : f32 to vector<16x32xf32>
    %144 = arith.mulf %143, %142 : vector<16x32xf32>
    %145 = arith.truncf %138 : vector<16x32xf32> to vector<16x32xbf16>
    %cst_108 = arith.constant dense<0.000000e+00> : vector<16x32xf32>
    %146 = tpu.matmul %145, %31, %cst_108 {dimension_numbers = #tpu.dot_dimension_numbers<[1], [0], [0], [1], [0, 0, 1, 1], [], []>} : vector<16x32xbf16>, vector<32x32xbf16>, vector<16x32xf32> -> vector<16x32xf32>
    %147 = arith.addf %144, %146 : vector<16x32xf32>
    %cst_109 = arith.constant 0.000000e+00 : f32
    %148 = vector.broadcast %cst_109 : f32 to vector<16x32xf32>
    %149 = arith.maximumf %147, %148 : vector<16x32xf32>
    %150 = arith.truncf %149 : vector<16x32xf32> to vector<16x32xbf16>
    %cst_110 = arith.constant dense<0.000000e+00> : vector<16x32xf32>
    %151 = tpu.matmul %150, %24, %cst_110 {dimension_numbers = #tpu.dot_dimension_numbers<[1], [0], [0], [1], [0, 0, 1, 1], [], []>} : vector<16x32xbf16>, vector<32x32xbf16>, vector<16x32xf32> -> vector<16x32xf32>
    %152 = vector.broadcast %25 : vector<1x32xf32> to vector<16x32xf32>
    %153 = arith.addf %151, %152 : vector<16x32xf32>
    %cst_111 = arith.constant 0.000000e+00 : f32
    %154 = vector.broadcast %cst_111 : f32 to vector<16x32xf32>
    %155 = arith.maximumf %153, %154 : vector<16x32xf32>
    %156 = tpu.transpose %155, [1, 0] : vector<16x32xf32> -> vector<32x16xf32>
    %cst_112 = arith.constant 0.000000e+00 : f32
    %157 = vector.broadcast %cst_112 : f32 to vector<16x32xf32>
    %158 = vector.shape_cast %5 : vector<16x16xf32> to vector<16x1x16xf32>
    %159 = vector.shape_cast %156 : vector<32x16xf32> to vector<1x32x16xf32>
    %160 = vector.broadcast %158 : vector<16x1x16xf32> to vector<16x32x16xf32>
    %161 = vector.broadcast %159 : vector<1x32x16xf32> to vector<16x32x16xf32>
    %162 = arith.mulf %160, %161 : vector<16x32x16xf32>
    %cst_113 = arith.constant dense<0xFF800000> : vector<16x32xf32>
    %163 = vector.multi_reduction <maximumf>, %162, %cst_113 [2] : vector<16x32x16xf32> to vector<16x32xf32>
    %164 = arith.maximumf %157, %163 : vector<16x32xf32>
    %cst_114 = arith.constant 0.000000e+00 : f32
    %165 = vector.broadcast %cst_114 : f32 to vector<8x32xf32>
    %166 = vector.shape_cast %6 : vector<8x16xf32> to vector<8x1x16xf32>
    %167 = vector.shape_cast %156 : vector<32x16xf32> to vector<1x32x16xf32>
    %168 = vector.broadcast %166 : vector<8x1x16xf32> to vector<8x32x16xf32>
    %169 = vector.broadcast %167 : vector<1x32x16xf32> to vector<8x32x16xf32>
    %170 = arith.mulf %168, %169 : vector<8x32x16xf32>
    %cst_115 = arith.constant dense<0xFF800000> : vector<8x32xf32>
    %171 = vector.multi_reduction <maximumf>, %170, %cst_115 [2] : vector<8x32x16xf32> to vector<8x32xf32>
    %172 = arith.maximumf %165, %171 : vector<8x32xf32>
    %173 = tpu.concatenate %164, %172 in 0 : vector<16x32xf32>, vector<8x32xf32> -> vector<24x32xf32>
    %174 = arith.truncf %73 : vector<24x32xf32> to vector<24x32xbf16>
    %cst_116 = arith.constant dense<0.000000e+00> : vector<24x32xf32>
    %175 = tpu.matmul %174, %27, %cst_116 {dimension_numbers = #tpu.dot_dimension_numbers<[1], [0], [0], [1], [0, 0, 1, 1], [], []>} : vector<24x32xbf16>, vector<32x32xbf16>, vector<24x32xf32> -> vector<24x32xf32>
    %176 = vector.broadcast %28 : vector<1x32xf32> to vector<24x32xf32>
    %177 = arith.addf %175, %176 : vector<24x32xf32>
    %178 = arith.truncf %173 : vector<24x32xf32> to vector<24x32xbf16>
    %cst_117 = arith.constant dense<0.000000e+00> : vector<24x32xf32>
    %179 = tpu.matmul %178, %26, %cst_117 {dimension_numbers = #tpu.dot_dimension_numbers<[1], [0], [0], [1], [0, 0, 1, 1], [], []>} : vector<24x32xbf16>, vector<32x32xbf16>, vector<24x32xf32> -> vector<24x32xf32>
    %180 = arith.addf %177, %179 : vector<24x32xf32>
    %cst_118 = arith.constant 0.000000e+00 : f32
    %181 = vector.broadcast %cst_118 : f32 to vector<24x32xf32>
    %182 = arith.maximumf %180, %181 : vector<24x32xf32>
    %183 = arith.truncf %149 : vector<16x32xf32> to vector<16x32xbf16>
    %cst_119 = arith.constant dense<0.000000e+00> : vector<16x32xf32>
    %184 = tpu.matmul %183, %34, %cst_119 {dimension_numbers = #tpu.dot_dimension_numbers<[1], [0], [0], [1], [0, 0, 1, 1], [], []>} : vector<16x32xbf16>, vector<32x32xbf16>, vector<16x32xf32> -> vector<16x32xf32>
    %185 = vector.broadcast %35 : vector<1x32xf32> to vector<16x32xf32>
    %186 = arith.addf %184, %185 : vector<16x32xf32>
    %cst_120 = arith.constant 0.000000e+00 : f32
    %187 = vector.broadcast %cst_120 : f32 to vector<16x32xf32>
    %188 = arith.maximumf %186, %187 : vector<16x32xf32>
    %189 = tpu.transpose %188, [1, 0] : vector<16x32xf32> -> vector<32x16xf32>
    %cst_121 = arith.constant 0.000000e+00 : f32
    %190 = vector.broadcast %cst_121 : f32 to vector<16x32xf32>
    %191 = vector.shape_cast %5 : vector<16x16xf32> to vector<16x1x16xf32>
    %192 = vector.shape_cast %189 : vector<32x16xf32> to vector<1x32x16xf32>
    %193 = vector.broadcast %191 : vector<16x1x16xf32> to vector<16x32x16xf32>
    %194 = vector.broadcast %192 : vector<1x32x16xf32> to vector<16x32x16xf32>
    %195 = arith.mulf %193, %194 : vector<16x32x16xf32>
    %cst_122 = arith.constant dense<0xFF800000> : vector<16x32xf32>
    %196 = vector.multi_reduction <maximumf>, %195, %cst_122 [2] : vector<16x32x16xf32> to vector<16x32xf32>
    %197 = arith.maximumf %190, %196 : vector<16x32xf32>
    %cst_123 = arith.constant 0.000000e+00 : f32
    %198 = vector.broadcast %cst_123 : f32 to vector<8x32xf32>
    %199 = vector.shape_cast %6 : vector<8x16xf32> to vector<8x1x16xf32>
    %200 = vector.shape_cast %189 : vector<32x16xf32> to vector<1x32x16xf32>
    %201 = vector.broadcast %199 : vector<8x1x16xf32> to vector<8x32x16xf32>
    %202 = vector.broadcast %200 : vector<1x32x16xf32> to vector<8x32x16xf32>
    %203 = arith.mulf %201, %202 : vector<8x32x16xf32>
    %cst_124 = arith.constant dense<0xFF800000> : vector<8x32xf32>
    %204 = vector.multi_reduction <maximumf>, %203, %cst_124 [2] : vector<8x32x16xf32> to vector<8x32xf32>
    %205 = arith.maximumf %198, %204 : vector<8x32xf32>
    %206 = tpu.concatenate %197, %205 in 0 : vector<16x32xf32>, vector<8x32xf32> -> vector<24x32xf32>
    %207 = arith.truncf %182 : vector<24x32xf32> to vector<24x32xbf16>
    %cst_125 = arith.constant dense<0.000000e+00> : vector<24x32xf32>
    %208 = tpu.matmul %207, %37, %cst_125 {dimension_numbers = #tpu.dot_dimension_numbers<[1], [0], [0], [1], [0, 0, 1, 1], [], []>} : vector<24x32xbf16>, vector<32x32xbf16>, vector<24x32xf32> -> vector<24x32xf32>
    %209 = vector.broadcast %38 : vector<1x32xf32> to vector<24x32xf32>
    %210 = arith.addf %208, %209 : vector<24x32xf32>
    %211 = arith.truncf %206 : vector<24x32xf32> to vector<24x32xbf16>
    %cst_126 = arith.constant dense<0.000000e+00> : vector<24x32xf32>
    %212 = tpu.matmul %211, %36, %cst_126 {dimension_numbers = #tpu.dot_dimension_numbers<[1], [0], [0], [1], [0, 0, 1, 1], [], []>} : vector<24x32xbf16>, vector<32x32xbf16>, vector<24x32xf32> -> vector<24x32xf32>
    %213 = arith.addf %210, %212 : vector<24x32xf32>
    %cst_127 = arith.constant 0.000000e+00 : f32
    %214 = vector.broadcast %cst_127 : f32 to vector<24x32xf32>
    %215 = arith.maximumf %213, %214 : vector<24x32xf32>
    %216 = vector.extract_strided_slice %215 {offsets = [0, 0], sizes = [16, 32], strides = [1, 1]} : vector<24x32xf32> to vector<16x32xf32>
    %217 = arith.truncf %216 : vector<16x32xf32> to vector<16x32xbf16>
    %cst_128 = arith.constant dense<0.000000e+00> : vector<16x32xf32>
    %218 = tpu.matmul %217, %39, %cst_128 {dimension_numbers = #tpu.dot_dimension_numbers<[1], [0], [0], [1], [0, 0, 1, 1], [], []>} : vector<16x32xbf16>, vector<32x32xbf16>, vector<16x32xf32> -> vector<16x32xf32>
    %219 = vector.broadcast %40 : vector<1x32xf32> to vector<16x32xf32>
    %220 = arith.addf %218, %219 : vector<16x32xf32>
    %cst_129 = arith.constant 0.000000e+00 : f32
    %221 = vector.broadcast %cst_129 : f32 to vector<16x32xf32>
    %222 = arith.maximumf %220, %221 : vector<16x32xf32>
    %223 = arith.truncf %222 : vector<16x32xf32> to vector<16x32xbf16>
    %cst_130 = arith.constant dense<0.000000e+00> : vector<16x32xf32>
    %224 = tpu.matmul %223, %39, %cst_130 {dimension_numbers = #tpu.dot_dimension_numbers<[1], [0], [0], [1], [0, 0, 1, 1], [], []>} : vector<16x32xbf16>, vector<32x32xbf16>, vector<16x32xf32> -> vector<16x32xf32>
    %225 = vector.broadcast %40 : vector<1x32xf32> to vector<16x32xf32>
    %226 = arith.addf %224, %225 : vector<16x32xf32>
    %cst_131 = arith.constant 0.000000e+00 : f32
    %227 = vector.broadcast %cst_131 : f32 to vector<16x32xf32>
    %228 = arith.maximumf %226, %227 : vector<16x32xf32>
    %229 = vector.broadcast %41 : vector<1x32xf32> to vector<16x32xf32>
    %230 = arith.mulf %228, %229 : vector<16x32xf32>
    %cst_132 = arith.constant dense<0.000000e+00> : vector<16xf32>
    %231 = vector.multi_reduction <add>, %230, %cst_132 [1] : vector<16x32xf32> to vector<16xf32>
    %232 = vector.shape_cast %231 : vector<16xf32> to vector<16x1xf32>
    %233 = vector.broadcast %42 : vector<1x1xf32> to vector<16x1xf32>
    %234 = arith.addf %232, %233 : vector<16x1xf32>
    %235 = vector.shape_cast %234 : vector<16x1xf32> to vector<16x1xf32>
    %236 = vector.broadcast %235 : vector<16x1xf32> to vector<16x128xf32>
    %c0_133 = arith.constant 0 : index
    %c0_134 = arith.constant 0 : index
    %237 = vector.load %arg44[%c0_133, %c0_134] : memref<16x128xf32, #tpu.memory_space<vmem>>, vector<16x128xf32>
    tpu.vector_store %arg44[%c0_133, %c0_134], %236 {strides = array<i32>} : memref<16x128xf32, #tpu.memory_space<vmem>>, vector<16x128xf32>,
    return
  }
  func.func @transform_0(%arg0: i32) -> (i32, i32) {
    %c0_i32 = arith.constant 0 : i32
    %c0_i32_0 = arith.constant 0 : i32
    %c0_i32_1 = arith.constant 0 : i32
    return %c0_i32, %c0_i32_0 : i32, i32
  }
  func.func @transform_1(%arg0: i32) -> (i32, i32) {
    %c0_i32 = arith.constant 0 : i32
    %c0_i32_0 = arith.constant 0 : i32
    %c0_i32_1 = arith.constant 0 : i32
    return %c0_i32, %c0_i32_0 : i32, i32
  }
  func.func @transform_2(%arg0: i32) -> (i32, i32) {
    %c0_i32 = arith.constant 0 : i32
    %c0_i32_0 = arith.constant 0 : i32
    %c0_i32_1 = arith.constant 0 : i32
    return %c0_i32, %c0_i32_0 : i32, i32
  }
  func.func @transform_3(%arg0: i32) -> (i32, i32) {
    %c0_i32 = arith.constant 0 : i32
    %c0_i32_0 = arith.constant 0 : i32
    %c0_i32_1 = arith.constant 0 : i32
    return %c0_i32, %c0_i32_0 : i32, i32
  }
  func.func @transform_4(%arg0: i32) -> (i32, i32) {
    %c0_i32 = arith.constant 0 : i32
    %c0_i32_0 = arith.constant 0 : i32
    %c0_i32_1 = arith.constant 0 : i32
    return %c0_i32, %c0_i32_0 : i32, i32
  }
  func.func @transform_5(%arg0: i32) -> (i32, i32) {
    %c0_i32 = arith.constant 0 : i32
    %c0_i32_0 = arith.constant 0 : i32
    %c0_i32_1 = arith.constant 0 : i32
    return %c0_i32, %c0_i32_0 : i32, i32
  }
  func.func @transform_6(%arg0: i32) -> (i32, i32) {
    %c0_i32 = arith.constant 0 : i32
    %c0_i32_0 = arith.constant 0 : i32
    %c0_i32_1 = arith.constant 0 : i32
    return %c0_i32, %c0_i32_0 : i32, i32
  }
  func.func @transform_7(%arg0: i32) -> (i32, i32) {
    %c0_i32 = arith.constant 0 : i32
    %c0_i32_0 = arith.constant 0 : i32
    %c0_i32_1 = arith.constant 0 : i32
    return %c0_i32, %c0_i32_0 : i32, i32
  }
  func.func @transform_8(%arg0: i32) -> (i32, i32) {
    %c0_i32 = arith.constant 0 : i32
    %c0_i32_0 = arith.constant 0 : i32
    %c0_i32_1 = arith.constant 0 : i32
    return %c0_i32, %c0_i32_0 : i32, i32
  }
  func.func @transform_9(%arg0: i32) -> (i32, i32) {
    %c0_i32 = arith.constant 0 : i32
    %c0_i32_0 = arith.constant 0 : i32
    %c0_i32_1 = arith.constant 0 : i32
    return %c0_i32, %c0_i32_0 : i32, i32
  }
  func.func @transform_10(%arg0: i32) -> (i32, i32) {
    %c0_i32 = arith.constant 0 : i32
    %c0_i32_0 = arith.constant 0 : i32
    %c0_i32_1 = arith.constant 0 : i32
    return %c0_i32, %c0_i32_0 : i32, i32
  }
  func.func @transform_11(%arg0: i32) -> (i32, i32) {
    %c0_i32 = arith.constant 0 : i32
    %c0_i32_0 = arith.constant 0 : i32
    %c0_i32_1 = arith.constant 0 : i32
    return %c0_i32, %c0_i32_0 : i32, i32
  }
  func.func @transform_12(%arg0: i32) -> (i32, i32) {
    %c0_i32 = arith.constant 0 : i32
    %c0_i32_0 = arith.constant 0 : i32
    %c0_i32_1 = arith.constant 0 : i32
    return %c0_i32, %c0_i32_0 : i32, i32
  }
  func.func @transform_13(%arg0: i32) -> (i32, i32) {
    %c0_i32 = arith.constant 0 : i32
    %c0_i32_0 = arith.constant 0 : i32
    %c0_i32_1 = arith.constant 0 : i32
    return %c0_i32, %c0_i32_0 : i32, i32
  }
  func.func @transform_14(%arg0: i32) -> (i32, i32) {
    %c0_i32 = arith.constant 0 : i32
    %c0_i32_0 = arith.constant 0 : i32
    %c0_i32_1 = arith.constant 0 : i32
    return %c0_i32, %c0_i32_0 : i32, i32
  }
  func.func @transform_15(%arg0: i32) -> (i32, i32) {
    %c0_i32 = arith.constant 0 : i32
    %c0_i32_0 = arith.constant 0 : i32
    %c0_i32_1 = arith.constant 0 : i32
    return %c0_i32, %c0_i32_0 : i32, i32
  }
  func.func @transform_16(%arg0: i32) -> (i32, i32) {
    %c0_i32 = arith.constant 0 : i32
    %c0_i32_0 = arith.constant 0 : i32
    %c0_i32_1 = arith.constant 0 : i32
    return %c0_i32, %c0_i32_0 : i32, i32
  }
  func.func @transform_17(%arg0: i32) -> (i32, i32) {
    %c0_i32 = arith.constant 0 : i32
    %c0_i32_0 = arith.constant 0 : i32
    %c0_i32_1 = arith.constant 0 : i32
    return %c0_i32, %c0_i32_0 : i32, i32
  }
  func.func @transform_18(%arg0: i32) -> (i32, i32) {
    %c0_i32 = arith.constant 0 : i32
    %c0_i32_0 = arith.constant 0 : i32
    %c0_i32_1 = arith.constant 0 : i32
    return %c0_i32, %c0_i32_0 : i32, i32
  }
  func.func @transform_19(%arg0: i32) -> (i32, i32) {
    %c0_i32 = arith.constant 0 : i32
    %c0_i32_0 = arith.constant 0 : i32
    %c0_i32_1 = arith.constant 0 : i32
    return %c0_i32, %c0_i32_0 : i32, i32
  }
  func.func @transform_20(%arg0: i32) -> (i32, i32) {
    %c0_i32 = arith.constant 0 : i32
    %c0_i32_0 = arith.constant 0 : i32
    %c0_i32_1 = arith.constant 0 : i32
    return %c0_i32, %c0_i32_0 : i32, i32
  }
  func.func @transform_21(%arg0: i32) -> (i32, i32) {
    %c0_i32 = arith.constant 0 : i32
    %c0_i32_0 = arith.constant 0 : i32
    %c0_i32_1 = arith.constant 0 : i32
    return %c0_i32, %c0_i32_0 : i32, i32
  }
  func.func @transform_22(%arg0: i32) -> (i32, i32) {
    %c0_i32 = arith.constant 0 : i32
    %c0_i32_0 = arith.constant 0 : i32
    %c0_i32_1 = arith.constant 0 : i32
    return %c0_i32, %c0_i32_0 : i32, i32
  }
  func.func @transform_23(%arg0: i32) -> (i32, i32) {
    %c0_i32 = arith.constant 0 : i32
    %c0_i32_0 = arith.constant 0 : i32
    %c0_i32_1 = arith.constant 0 : i32
    return %c0_i32, %c0_i32_0 : i32, i32
  }
  func.func @transform_24(%arg0: i32) -> (i32, i32) {
    %c0_i32 = arith.constant 0 : i32
    %c0_i32_0 = arith.constant 0 : i32
    %c0_i32_1 = arith.constant 0 : i32
    return %c0_i32, %c0_i32_0 : i32, i32
  }
  func.func @transform_25(%arg0: i32) -> (i32, i32) {
    %c0_i32 = arith.constant 0 : i32
    %c0_i32_0 = arith.constant 0 : i32
    %c0_i32_1 = arith.constant 0 : i32
    return %c0_i32, %c0_i32_0 : i32, i32
  }
  func.func @transform_26(%arg0: i32) -> (i32, i32) {
    %c0_i32 = arith.constant 0 : i32
    %c0_i32_0 = arith.constant 0 : i32
    %c0_i32_1 = arith.constant 0 : i32
    return %c0_i32, %c0_i32_0 : i32, i32
  }
  func.func @transform_27(%arg0: i32) -> (i32, i32) {
    %c0_i32 = arith.constant 0 : i32
    %c0_i32_0 = arith.constant 0 : i32
    %c0_i32_1 = arith.constant 0 : i32
    return %c0_i32, %c0_i32_0 : i32, i32
  }
  func.func @transform_28(%arg0: i32) -> (i32, i32) {
    %c0_i32 = arith.constant 0 : i32
    %c0_i32_0 = arith.constant 0 : i32
    %c0_i32_1 = arith.constant 0 : i32
    return %c0_i32, %c0_i32_0 : i32, i32
  }
  func.func @transform_29(%arg0: i32) -> (i32, i32) {
    %c0_i32 = arith.constant 0 : i32
    %c0_i32_0 = arith.constant 0 : i32
    %c0_i32_1 = arith.constant 0 : i32
    return %c0_i32, %c0_i32_0 : i32, i32
  }
  func.func @transform_30(%arg0: i32) -> (i32, i32) {
    %c0_i32 = arith.constant 0 : i32
    %c0_i32_0 = arith.constant 0 : i32
    %c0_i32_1 = arith.constant 0 : i32
    return %c0_i32, %c0_i32_0 : i32, i32
  }
  func.func @transform_31(%arg0: i32) -> (i32, i32) {
    %c0_i32 = arith.constant 0 : i32
    %c0_i32_0 = arith.constant 0 : i32
    %c0_i32_1 = arith.constant 0 : i32
    return %c0_i32, %c0_i32_0 : i32, i32
  }
  func.func @transform_32(%arg0: i32) -> (i32, i32) {
    %c0_i32 = arith.constant 0 : i32
    %c0_i32_0 = arith.constant 0 : i32
    %c0_i32_1 = arith.constant 0 : i32
    return %c0_i32, %c0_i32_0 : i32, i32
  }
  func.func @transform_33(%arg0: i32) -> (i32, i32) {
    %c0_i32 = arith.constant 0 : i32
    %c0_i32_0 = arith.constant 0 : i32
    %c0_i32_1 = arith.constant 0 : i32
    return %c0_i32, %c0_i32_0 : i32, i32
  }
  func.func @transform_34(%arg0: i32) -> (i32, i32) {
    %c0_i32 = arith.constant 0 : i32
    %c0_i32_0 = arith.constant 0 : i32
    %c0_i32_1 = arith.constant 0 : i32
    return %c0_i32, %c0_i32_0 : i32, i32
  }
  func.func @transform_35(%arg0: i32) -> (i32, i32) {
    %c0_i32 = arith.constant 0 : i32
    %c0_i32_0 = arith.constant 0 : i32
    %c0_i32_1 = arith.constant 0 : i32
    return %c0_i32, %c0_i32_0 : i32, i32
  }
  func.func @transform_36(%arg0: i32) -> (i32, i32) {
    %c0_i32 = arith.constant 0 : i32
    %c0_i32_0 = arith.constant 0 : i32
    %c0_i32_1 = arith.constant 0 : i32
    return %c0_i32, %c0_i32_0 : i32, i32
  }
  func.func @transform_37(%arg0: i32) -> (i32, i32) {
    %c0_i32 = arith.constant 0 : i32
    %c0_i32_0 = arith.constant 0 : i32
    %c0_i32_1 = arith.constant 0 : i32
    return %c0_i32, %c0_i32_0 : i32, i32
  }
  func.func @transform_38(%arg0: i32) -> (i32, i32) {
    %c0_i32 = arith.constant 0 : i32
    %c0_i32_0 = arith.constant 0 : i32
    %c0_i32_1 = arith.constant 0 : i32
    return %c0_i32, %c0_i32_0 : i32, i32
  }
  func.func @transform_39(%arg0: i32) -> (i32, i32) {
    %c0_i32 = arith.constant 0 : i32
    %c0_i32_0 = arith.constant 0 : i32
    %c0_i32_1 = arith.constant 0 : i32
    return %c0_i32, %c0_i32_0 : i32, i32
  }
  func.func @transform_40(%arg0: i32) -> (i32, i32) {
    %c0_i32 = arith.constant 0 : i32
    %c0_i32_0 = arith.constant 0 : i32
    %c0_i32_1 = arith.constant 0 : i32
    return %c0_i32, %c0_i32_0 : i32, i32
  }
  func.func @transform_41(%arg0: i32) -> (i32, i32) {
    %c0_i32 = arith.constant 0 : i32
    %c0_i32_0 = arith.constant 0 : i32
    %c0_i32_1 = arith.constant 0 : i32
    return %c0_i32, %c0_i32_0 : i32, i32
  }
  func.func @transform_42(%arg0: i32) -> (i32, i32) {
    %c0_i32 = arith.constant 0 : i32
    %c0_i32_0 = arith.constant 0 : i32
    %c0_i32_1 = arith.constant 0 : i32
    return %c0_i32, %c0_i32_0 : i32, i32
  }
  func.func @transform_43(%arg0: i32) -> (i32, i32) {
    %c0_i32 = arith.constant 0 : i32
    %c0_i32_0 = arith.constant 0 : i32
    %c0_i32_1 = arith.constant 0 : i32
    return %c0_i32, %c0_i32_0 : i32, i32
  }
}

</mosaic_0001>

<llo_original>
// kernel: tpu_custom_call.1
$region0: #{tpu_custom_call.1}
  #allocation0 [shape = 'u32[]', space=smem, size = 0x4, offset = 0x4, fixed_abs, tag = 'smem constant byte address 0x4 - core index']
  #allocation1 [shape = 'u32[144,128]{1,0:T(1,128)}', space=vmem, size = 0x12000, scoped, tag = 'internal scratch']
  #allocation2 [shape = 'f32[1,1]{1,0:T(1,128)S(1)}', space=vmem, size = 0x200, scoped, tag = 'scoped memory for tpu_custom_call.1']
  %s0 = inlined_call_operand.smem [shape: u32[44], index: -1, kind: input, shape index: {}]
  %s1 = sld [smem:[%s0]]
  %s2 = scalar_lea.smem %s0, 1
  %s3 = sld [smem:[%s2]]
  %s4 = scalar_lea.smem %s0, 2
  %s5 = sld [smem:[%s4]]
  %s6 = scalar_lea.smem %s0, 3
  %s7 = sld [smem:[%s6]]
  %s8 = scalar_lea.smem %s0, 4
  %s9 = sld [smem:[%s8]]
  %s10 = scalar_lea.smem %s0, 5
  %s11 = sld [smem:[%s10]]
  %s12 = scalar_lea.smem %s0, 6
  %s13 = sld [smem:[%s12]]
  %s14 = scalar_lea.smem %s0, 7
  %s15 = sld [smem:[%s14]]
  %s16 = scalar_lea.smem %s0, 8
  %s17 = sld [smem:[%s16]]
  %s18 = scalar_lea.smem %s0, 9
  %s19 = sld [smem:[%s18]]
  %s20 = scalar_lea.smem %s0, 10
  %s21 = sld [smem:[%s20]]
  %s22 = scalar_lea.smem %s0, 11
  %s23 = sld [smem:[%s22]]
  %s24 = scalar_lea.smem %s0, 12
  %s25 = sld [smem:[%s24]]
  %s26 = scalar_lea.smem %s0, 13
  %s27 = sld [smem:[%s26]]
  %s28 = scalar_lea.smem %s0, 14
  %s29 = sld [smem:[%s28]]
  %s30 = scalar_lea.smem %s0, 15
  %s31 = sld [smem:[%s30]]
  %s32 = scalar_lea.smem %s0, 16
  %s33 = sld [smem:[%s32]]
  %s34 = scalar_lea.smem %s0, 17
  %s35 = sld [smem:[%s34]]
  %s36 = scalar_lea.smem %s0, 18
  %s37 = sld [smem:[%s36]]
  %s38 = scalar_lea.smem %s0, 19
  %s39 = sld [smem:[%s38]]
  %s40 = scalar_lea.smem %s0, 20
  %s41 = sld [smem:[%s40]]
  %s42 = scalar_lea.smem %s0, 21
  %s43 = sld [smem:[%s42]]
  %s44 = scalar_lea.smem %s0, 22
  %s45 = sld [smem:[%s44]]
  %s46 = scalar_lea.smem %s0, 23
  %s47 = sld [smem:[%s46]]
  %s48 = scalar_lea.smem %s0, 24
  %s49 = sld [smem:[%s48]]
  %s50 = scalar_lea.smem %s0, 25
  %s51 = sld [smem:[%s50]]
  %s52 = scalar_lea.smem %s0, 26
  %s53 = sld [smem:[%s52]]
  %s54 = scalar_lea.smem %s0, 27
  %s55 = sld [smem:[%s54]]
  %s56 = scalar_lea.smem %s0, 28
  %s57 = sld [smem:[%s56]]
  %s58 = scalar_lea.smem %s0, 29
  %s59 = sld [smem:[%s58]]
  %s60 = scalar_lea.smem %s0, 30
  %s61 = sld [smem:[%s60]]
  %s62 = scalar_lea.smem %s0, 31
  %s63 = sld [smem:[%s62]]
  %s64 = scalar_lea.smem %s0, 32
  %s65 = sld [smem:[%s64]]
  %s66 = scalar_lea.smem %s0, 33
  %s67 = sld [smem:[%s66]]
  %s68 = scalar_lea.smem %s0, 34
  %s69 = sld [smem:[%s68]]
  %s70 = scalar_lea.smem %s0, 35
  %s71 = sld [smem:[%s70]]
  %s72 = scalar_lea.smem %s0, 36
  %s73 = sld [smem:[%s72]]
  %s74 = scalar_lea.smem %s0, 37
  %s75 = sld [smem:[%s74]]
  %s76 = scalar_lea.smem %s0, 38
  %s77 = sld [smem:[%s76]]
  %s78 = scalar_lea.smem %s0, 39
  %s79 = sld [smem:[%s78]]
  %s80 = scalar_lea.smem %s0, 40
  %s81 = sld [smem:[%s80]]
  %s82 = scalar_lea.smem %s0, 41
  %s83 = sld [smem:[%s82]]
  %s84 = scalar_lea.smem %s0, 42
  %s85 = sld [smem:[%s84]]
  %s86 = scalar_lea.smem %s0, 43
  %s87 = sld [smem:[%s86]]
  %s88 = sld [smem:[#allocation0]]
  $region274: #{tpu_custom_call.1} parent=0
    _
  %s90 = ssub.s32 1, %s88
  %s91 = scalar_select 0, %s90, %s88
  %v92 = vstv %s85
  %93 = vst [vmem:[#allocation2] sm:$0x1] %v92
  $region1: #{tpu_custom_call.1} parent=0
    #allocation3 [shape = 'u8[4096]{0}', space=vmem, size = 0x1000, scoped, tag = 'input window, operand 2, single buffered']
    #allocation4 [shape = 's32[1]{0}', space=sflag, size = 0x4, scoped, tag = 'scoped memory for tpu_custom_call.1']
    #allocation5 [shape = 's32[1]{0}', space=sflag, size = 0x4, scoped, tag = 'scoped memory for tpu_custom_call.1']
    #allocation6 [shape = 'u8[4096]{0}', space=vmem, size = 0x1000, scoped, tag = 'input window, operand 6, single buffered']
    #allocation7 [shape = 's32[1]{0}', space=sflag, size = 0x4, scoped, tag = 'scoped memory for tpu_custom_call.1']
    #allocation8 [shape = 'u8[512]{0}', space=vmem, size = 0x400, scoped, tag = 'input window, operand 7, single buffered']
    #allocation9 [shape = 'u8[512]{0}', space=vmem, size = 0x400, scoped, tag = 'input window, operand 8, single buffered']
    #allocation10 [shape = 's32[1]{0}', space=sflag, size = 0x4, scoped, tag = 'scoped memory for tpu_custom_call.1']
    #allocation11 [shape = 'u8[2048]{0}', space=vmem, size = 0x800, scoped, tag = 'input window, operand 9, single buffered']
    #allocation12 [shape = 'u8[512]{0}', space=vmem, size = 0x400, scoped, tag = 'input window, operand 10, single buffered']
    #allocation13 [shape = 's32[1]{0}', space=sflag, size = 0x4, scoped, tag = 'scoped memory for tpu_custom_call.1']
    #allocation14 [shape = 'u8[512]{0}', space=vmem, size = 0x400, scoped, tag = 'input window, operand 11, single buffered']
    #allocation15 [shape = 'u8[512]{0}', space=vmem, size = 0x400, scoped, tag = 'input window, operand 12, single buffered']
    #allocation16 [shape = 's32[1]{0}', space=sflag, size = 0x4, scoped, tag = 'scoped memory for tpu_custom_call.1']
    #allocation17 [shape = 'u8[1024]{0}', space=vmem, size = 0x400, scoped, tag = 'input window, operand 13, single buffered']
    #allocation18 [shape = 'u8[512]{0}', space=vmem, size = 0x400, scoped, tag = 'input window, operand 14, single buffered']
    #allocation19 [shape = 's32[1]{0}', space=sflag, size = 0x4, scoped, tag = 'scoped memory for tpu_custom_call.1']
    #allocation20 [shape = 'u8[512]{0}', space=vmem, size = 0x400, scoped, tag = 'input window, operand 15, single buffered']
    #allocation21 [shape = 'u8[512]{0}', space=vmem, size = 0x400, scoped, tag = 'input window, operand 16, single buffered']
    #allocation22 [shape = 's32[1]{0}', space=sflag, size = 0x4, scoped, tag = 'scoped memory for tpu_custom_call.1']
    #allocation23 [shape = 'u8[2048]{0}', space=vmem, size = 0x800, scoped, tag = 'input window, operand 17, single buffered']
    #allocation24 [shape = 'u8[512]{0}', space=vmem, size = 0x400, scoped, tag = 'input window, operand 18, single buffered']
    #allocation25 [shape = 's32[1]{0}', space=sflag, size = 0x4, scoped, tag = 'scoped memory for tpu_custom_call.1']
    #allocation26 [shape = 'u8[512]{0}', space=vmem, size = 0x400, scoped, tag = 'input window, operand 20, single buffered']
    #allocation27 [shape = 'u8[512]{0}', space=vmem, size = 0x400, scoped, tag = 'input window, operand 23, single buffered']
    #allocation28 [shape = 's32[1]{0}', space=sflag, size = 0x4, scoped, tag = 'scoped memory for tpu_custom_call.1']
    #allocation29 [shape = 'u8[512]{0}', space=vmem, size = 0x400, scoped, tag = 'input window, operand 25, single buffered']
    #allocation30 [shape = 'u8[512]{0}', space=vmem, size = 0x400, scoped, tag = 'input window, operand 28, single buffered']
    #allocation31 [shape = 's32[1]{0}', space=sflag, size = 0x4, scoped, tag = 'scoped memory for tpu_custom_call.1']
    #allocation32 [shape = 'u8[512]{0}', space=vmem, size = 0x400, scoped, tag = 'input window, operand 30, single buffered']
    #allocation33 [shape = 'u8[512]{0}', space=vmem, size = 0x400, scoped, tag = 'input window, operand 33, single buffered']
    #allocation34 [shape = 's32[1]{0}', space=sflag, size = 0x4, scoped, tag = 'scoped memory for tpu_custom_call.1']
    #allocation35 [shape = 'u8[512]{0}', space=vmem, size = 0x400, scoped, tag = 'input window, operand 35, single buffered']
    #allocation36 [shape = 'u8[8192]{0}', space=vmem, size = 0x2000, scoped, tag = 'input window, operand 37, single buffered']
    #allocation37 [shape = 's32[1]{0}', space=sflag, size = 0x4, scoped, tag = 'scoped memory for tpu_custom_call.1']
    #allocation38 [shape = 'u8[8192]{0}', space=vmem, size = 0x2000, scoped, tag = 'input window, operand 39, single buffered']
    #allocation39 [shape = 'u8[8192]{0}', space=vmem, size = 0x2000, scoped, tag = 'output window, operand 0, single buffered']
    %94 = vsyncpa [#allocation4], 0
    %95 = vsyncpa [#allocation7], 0
    %96 = vsyncpa [#allocation10], 0
    %97 = vsyncpa [#allocation13], 0
    %98 = vsyncpa [#allocation16], 0
    %99 = vsyncpa [#allocation19], 0
    %100 = vsyncpa [#allocation22], 0
    %101 = vsyncpa [#allocation25], 0
    %102 = vsyncpa [#allocation28], 0
    %103 = vsyncpa [#allocation31], 0
    %104 = vsyncpa [#allocation34], 0
    %105 = vsyncpa [#allocation37], 0
    %106 = vsyncpa [#allocation5], 0
    // Predicated region
    $region2: #{tpu_custom_call.1} parent=1 // pred_check
      _
    $region3: #{tpu_custom_call.1} parent=1 // pred_check_branch
      %108 = sbr.rel (0) target = $region5
    $region4: #{tpu_custom_call.1} parent=1 // pred_region
      _
    $region5: #{tpu_custom_call.1} parent=1 // pred_fallthru
      _
    // Predicated region
    $region6: #{tpu_custom_call.1} parent=1 // pred_check
      _
    $region7: #{tpu_custom_call.1} parent=1 // pred_check_branch
      %110 = sbr.rel (0) target = $region9
    $region8: #{tpu_custom_call.1} parent=1 // pred_region
      _
    $region9: #{tpu_custom_call.1} parent=1 // pred_fallthru
      _
    // Predicated region
    $region10: #{tpu_custom_call.1} parent=1 // pred_check
      _
    $region11: #{tpu_custom_call.1} parent=1 // pred_check_branch
      %112 = sbr.rel (0) target = $region13
    $region12: #{tpu_custom_call.1} parent=1 // pred_region
      %s114 = ssub.s32 128, 128
      %115 = vsyncadd [#allocation4], %s114
      %s117 = sshll.u32 [#allocation3], 4
      %s118 = int_to_ptr.vmem [resolvable:$true] %s117
      %120 = dma.hbm_to_vmem [thread:$0]  %s5, 128, %s118, [#allocation4]
    $region13: #{tpu_custom_call.1} parent=1 // pred_fallthru
      _
    // Predicated region
    $region14: #{tpu_custom_call.1} parent=1 // pred_check
      _
    $region15: #{tpu_custom_call.1} parent=1 // pred_check_branch
      %122 = sbr.rel (0) target = $region17
    $region16: #{tpu_custom_call.1} parent=1 // pred_region
      _
    $region17: #{tpu_custom_call.1} parent=1 // pred_fallthru
      _
    // Predicated region
    $region18: #{tpu_custom_call.1} parent=1 // pred_check
      _
    $region19: #{tpu_custom_call.1} parent=1 // pred_check_branch
      %124 = sbr.rel (0) target = $region21
    $region20: #{tpu_custom_call.1} parent=1 // pred_region
      _
    $region21: #{tpu_custom_call.1} parent=1 // pred_fallthru
      _
    // Predicated region
    $region22: #{tpu_custom_call.1} parent=1 // pred_check
      _
    $region23: #{tpu_custom_call.1} parent=1 // pred_check_branch
      %126 = sbr.rel (0) target = $region25
    $region24: #{tpu_custom_call.1} parent=1 // pred_region
      _
    $region25: #{tpu_custom_call.1} parent=1 // pred_fallthru
      _
    // Predicated region
    $region26: #{tpu_custom_call.1} parent=1 // pred_check
      _
    $region27: #{tpu_custom_call.1} parent=1 // pred_check_branch
      %128 = sbr.rel (0) target = $region29
    $region28: #{tpu_custom_call.1} parent=1 // pred_region
      %s130 = ssub.s32 128, 128
      %131 = vsyncadd [#allocation7], %s130
      %s133 = sshll.u32 [#allocation6], 4
      %s134 = int_to_ptr.vmem [resolvable:$true] %s133
      %136 = dma.hbm_to_vmem [thread:$0]  %s13, 128, %s134, [#allocation7]
    $region29: #{tpu_custom_call.1} parent=1 // pred_fallthru
      _
    // Predicated region
    $region30: #{tpu_custom_call.1} parent=1 // pred_check
      _
    $region31: #{tpu_custom_call.1} parent=1 // pred_check_branch
      %138 = sbr.rel (0) target = $region33
    $region32: #{tpu_custom_call.1} parent=1 // pred_region
      %s140 = ssub.s32 16, 16
      %141 = vsyncadd [#allocation7], %s140
      %s143 = sshll.u32 [#allocation8], 4
      %s144 = int_to_ptr.vmem [resolvable:$true] %s143
      %146 = dma.hbm_to_vmem [thread:$0]  %s15, 16, %s144, [#allocation7]
    $region33: #{tpu_custom_call.1} parent=1 // pred_fallthru
      _
    // Predicated region
    $region34: #{tpu_custom_call.1} parent=1 // pred_check
      _
    $region35: #{tpu_custom_call.1} parent=1 // pred_check_branch
      %148 = sbr.rel (0) target = $region37
    $region36: #{tpu_custom_call.1} parent=1 // pred_region
      %s150 = ssub.s32 16, 16
      %151 = vsyncadd [#allocation10], %s150
      %s153 = sshll.u32 [#allocation9], 4
      %s154 = int_to_ptr.vmem [resolvable:$true] %s153
      %156 = dma.hbm_to_vmem [thread:$0]  %s17, 16, %s154, [#allocation10]
    $region37: #{tpu_custom_call.1} parent=1 // pred_fallthru
      _
    // Predicated region
    $region38: #{tpu_custom_call.1} parent=1 // pred_check
      _
    $region39: #{tpu_custom_call.1} parent=1 // pred_check_branch
      %158 = sbr.rel (0) target = $region41
    $region40: #{tpu_custom_call.1} parent=1 // pred_region
      %s160 = ssub.s32 64, 64
      %161 = vsyncadd [#allocation10], %s160
      %s163 = sshll.u32 [#allocation11], 4
      %s164 = int_to_ptr.vmem [resolvable:$true] %s163
      %166 = dma.hbm_to_vmem [thread:$0]  %s19, 64, %s164, [#allocation10]
    $region41: #{tpu_custom_call.1} parent=1 // pred_fallthru
      _
    // Predicated region
    $region42: #{tpu_custom_call.1} parent=1 // pred_check
      _
    $region43: #{tpu_custom_call.1} parent=1 // pred_check_branch
      %168 = sbr.rel (0) target = $region45
    $region44: #{tpu_custom_call.1} parent=1 // pred_region
      %s170 = ssub.s32 16, 16
      %171 = vsyncadd [#allocation13], %s170
      %s173 = sshll.u32 [#allocation12], 4
      %s174 = int_to_ptr.vmem [resolvable:$true] %s173
      %176 = dma.hbm_to_vmem [thread:$0]  %s21, 16, %s174, [#allocation13]
    $region45: #{tpu_custom_call.1} parent=1 // pred_fallthru
      _
    // Predicated region
    $region46: #{tpu_custom_call.1} parent=1 // pred_check
      _
    $region47: #{tpu_custom_call.1} parent=1 // pred_check_branch
      %178 = sbr.rel (0) target = $region49
    $region48: #{tpu_custom_call.1} parent=1 // pred_region
      %s180 = ssub.s32 16, 16
      %181 = vsyncadd [#allocation13], %s180
      %s183 = sshll.u32 [#allocation14], 4
      %s184 = int_to_ptr.vmem [resolvable:$true] %s183
      %186 = dma.hbm_to_vmem [thread:$0]  %s23, 16, %s184, [#allocation13]
    $region49: #{tpu_custom_call.1} parent=1 // pred_fallthru
      _
    // Predicated region
    $region50: #{tpu_custom_call.1} parent=1 // pred_check
      _
    $region51: #{tpu_custom_call.1} parent=1 // pred_check_branch
      %188 = sbr.rel (0) target = $region53
    $region52: #{tpu_custom_call.1} parent=1 // pred_region
      %s190 = ssub.s32 16, 16
      %191 = vsyncadd [#allocation16], %s190
      %s193 = sshll.u32 [#allocation15], 4
      %s194 = int_to_ptr.vmem [resolvable:$true] %s193
      %196 = dma.hbm_to_vmem [thread:$0]  %s25, 16, %s194, [#allocation16]
    $region53: #{tpu_custom_call.1} parent=1 // pred_fallthru
      _
    // Predicated region
    $region54: #{tpu_custom_call.1} parent=1 // pred_check
      _
    $region55: #{tpu_custom_call.1} parent=1 // pred_check_branch
      %198 = sbr.rel (0) target = $region57
    $region56: #{tpu_custom_call.1} parent=1 // pred_region
      %s200 = ssub.s32 32, 32
      %201 = vsyncadd [#allocation16], %s200
      %s203 = sshll.u32 [#allocation17], 4
      %s204 = int_to_ptr.vmem [resolvable:$true] %s203
      %206 = dma.hbm_to_vmem [thread:$0]  %s27, 32, %s204, [#allocation16]
    $region57: #{tpu_custom_call.1} parent=1 // pred_fallthru
      _
    // Predicated region
    $region58: #{tpu_custom_call.1} parent=1 // pred_check
      _
    $region59: #{tpu_custom_call.1} parent=1 // pred_check_branch
      %208 = sbr.rel (0) target = $region61
    $region60: #{tpu_custom_call.1} parent=1 // pred_region
      %s210 = ssub.s32 16, 16
      %211 = vsyncadd [#allocation19], %s210
      %s213 = sshll.u32 [#allocation18], 4
      %s214 = int_to_ptr.vmem [resolvable:$true] %s213
      %216 = dma.hbm_to_vmem [thread:$0]  %s29, 16, %s214, [#allocation19]
    $region61: #{tpu_custom_call.1} parent=1 // pred_fallthru
      _
    // Predicated region
    $region62: #{tpu_custom_call.1} parent=1 // pred_check
      _
    $region63: #{tpu_custom_call.1} parent=1 // pred_check_branch
      %218 = sbr.rel (0) target = $region65
    $region64: #{tpu_custom_call.1} parent=1 // pred_region
      %s220 = ssub.s32 16, 16
      %221 = vsyncadd [#allocation19], %s220
      %s223 = sshll.u32 [#allocation20], 4
      %s224 = int_to_ptr.vmem [resolvable:$true] %s223
      %226 = dma.hbm_to_vmem [thread:$0]  %s31, 16, %s224, [#allocation19]
    $region65: #{tpu_custom_call.1} parent=1 // pred_fallthru
      _
    // Predicated region
    $region66: #{tpu_custom_call.1} parent=1 // pred_check
      _
    $region67: #{tpu_custom_call.1} parent=1 // pred_check_branch
      %228 = sbr.rel (0) target = $region69
    $region68: #{tpu_custom_call.1} parent=1 // pred_region
      %s230 = ssub.s32 16, 16
      %231 = vsyncadd [#allocation22], %s230
      %s233 = sshll.u32 [#allocation21], 4
      %s234 = int_to_ptr.vmem [resolvable:$true] %s233
      %236 = dma.hbm_to_vmem [thread:$0]  %s33, 16, %s234, [#allocation22]
    $region69: #{tpu_custom_call.1} parent=1 // pred_fallthru
      _
    // Predicated region
    $region70: #{tpu_custom_call.1} parent=1 // pred_check
      _
    $region71: #{tpu_custom_call.1} parent=1 // pred_check_branch
      %238 = sbr.rel (0) target = $region73
    $region72: #{tpu_custom_call.1} parent=1 // pred_region
      %s240 = ssub.s32 64, 64
      %241 = vsyncadd [#allocation22], %s240
      %s243 = sshll.u32 [#allocation23], 4
      %s244 = int_to_ptr.vmem [resolvable:$true] %s243
      %246 = dma.hbm_to_vmem [thread:$0]  %s35, 64, %s244, [#allocation22]
    $region73: #{tpu_custom_call.1} parent=1 // pred_fallthru
      _
    // Predicated region
    $region74: #{tpu_custom_call.1} parent=1 // pred_check
      _
    $region75: #{tpu_custom_call.1} parent=1 // pred_check_branch
      %248 = sbr.rel (0) target = $region77
    $region76: #{tpu_custom_call.1} parent=1 // pred_region
      %s250 = ssub.s32 16, 16
      %251 = vsyncadd [#allocation25], %s250
      %s253 = sshll.u32 [#allocation24], 4
      %s254 = int_to_ptr.vmem [resolvable:$true] %s253
      %256 = dma.hbm_to_vmem [thread:$0]  %s37, 16, %s254, [#allocation25]
    $region77: #{tpu_custom_call.1} parent=1 // pred_fallthru
      _
    // Predicated region
    $region78: #{tpu_custom_call.1} parent=1 // pred_check
      _
    $region79: #{tpu_custom_call.1} parent=1 // pred_check_branch
      %258 = sbr.rel (0) target = $region81
    $region80: #{tpu_custom_call.1} parent=1 // pred_region
      _
    $region81: #{tpu_custom_call.1} parent=1 // pred_fallthru
      _
    // Predicated region
    $region82: #{tpu_custom_call.1} parent=1 // pred_check
      _
    $region83: #{tpu_custom_call.1} parent=1 // pred_check_branch
      %260 = sbr.rel (0) target = $region85
    $region84: #{tpu_custom_call.1} parent=1 // pred_region
      %s262 = ssub.s32 16, 16
      %263 = vsyncadd [#allocation25], %s262
      %s265 = sshll.u32 [#allocation26], 4
      %s266 = int_to_ptr.vmem [resolvable:$true] %s265
      %268 = dma.hbm_to_vmem [thread:$0]  %s41, 16, %s266, [#allocation25]
    $region85: #{tpu_custom_call.1} parent=1 // pred_fallthru
      _
    // Predicated region
    $region86: #{tpu_custom_call.1} parent=1 // pred_check
      _
    $region87: #{tpu_custom_call.1} parent=1 // pred_check_branch
      %270 = sbr.rel (0) target = $region89
    $region88: #{tpu_custom_call.1} parent=1 // pred_region
      _
    $region89: #{tpu_custom_call.1} parent=1 // pred_fallthru
      _
    // Predicated region
    $region90: #{tpu_custom_call.1} parent=1 // pred_check
      _
    $region91: #{tpu_custom_call.1} parent=1 // pred_check_branch
      %272 = sbr.rel (0) target = $region93
    $region92: #{tpu_custom_call.1} parent=1 // pred_region
      _
    $region93: #{tpu_custom_call.1} parent=1 // pred_fallthru
      _
    // Predicated region
    $region94: #{tpu_custom_call.1} parent=1 // pred_check
      _
    $region95: #{tpu_custom_call.1} parent=1 // pred_check_branch
      %274 = sbr.rel (0) target = $region97
    $region96: #{tpu_custom_call.1} parent=1 // pred_region
      %s276 = ssub.s32 16, 16
      %277 = vsyncadd [#allocation28], %s276
      %s279 = sshll.u32 [#allocation27], 4
      %s280 = int_to_ptr.vmem [resolvable:$true] %s279
      %282 = dma.hbm_to_vmem [thread:$0]  %s47, 16, %s280, [#allocation28]
    $region97: #{tpu_custom_call.1} parent=1 // pred_fallthru
      _
    // Predicated region
    $region98: #{tpu_custom_call.1} parent=1 // pred_check
      _
    $region99: #{tpu_custom_call.1} parent=1 // pred_check_branch
      %284 = sbr.rel (0) target = $region101
    $region100: #{tpu_custom_call.1} parent=1 // pred_region
      _
    $region101: #{tpu_custom_call.1} parent=1 // pred_fallthru
      _
    // Predicated region
    $region102: #{tpu_custom_call.1} parent=1 // pred_check
      _
    $region103: #{tpu_custom_call.1} parent=1 // pred_check_branch
      %286 = sbr.rel (0) target = $region105
    $region104: #{tpu_custom_call.1} parent=1 // pred_region
      %s288 = ssub.s32 16, 16
      %289 = vsyncadd [#allocation28], %s288
      %s291 = sshll.u32 [#allocation29], 4
      %s292 = int_to_ptr.vmem [resolvable:$true] %s291
      %294 = dma.hbm_to_vmem [thread:$0]  %s51, 16, %s292, [#allocation28]
    $region105: #{tpu_custom_call.1} parent=1 // pred_fallthru
      _
    // Predicated region
    $region106: #{tpu_custom_call.1} parent=1 // pred_check
      _
    $region107: #{tpu_custom_call.1} parent=1 // pred_check_branch
      %296 = sbr.rel (0) target = $region109
    $region108: #{tpu_custom_call.1} parent=1 // pred_region
      _
    $region109: #{tpu_custom_call.1} parent=1 // pred_fallthru
      _
    // Predicated region
    $region110: #{tpu_custom_call.1} parent=1 // pred_check
      _
    $region111: #{tpu_custom_call.1} parent=1 // pred_check_branch
      %298 = sbr.rel (0) target = $region113
    $region112: #{tpu_custom_call.1} parent=1 // pred_region
      _
    $region113: #{tpu_custom_call.1} parent=1 // pred_fallthru
      _
    // Predicated region
    $region114: #{tpu_custom_call.1} parent=1 // pred_check
      _
    $region115: #{tpu_custom_call.1} parent=1 // pred_check_branch
      %300 = sbr.rel (0) target = $region117
    $region116: #{tpu_custom_call.1} parent=1 // pred_region
      %s302 = ssub.s32 16, 16
      %303 = vsyncadd [#allocation31], %s302
      %s305 = sshll.u32 [#allocation30], 4
      %s306 = int_to_ptr.vmem [resolvable:$true] %s305
      %308 = dma.hbm_to_vmem [thread:$0]  %s57, 16, %s306, [#allocation31]
    $region117: #{tpu_custom_call.1} parent=1 // pred_fallthru
      _
    // Predicated region
    $region118: #{tpu_custom_call.1} parent=1 // pred_check
      _
    $region119: #{tpu_custom_call.1} parent=1 // pred_check_branch
      %310 = sbr.rel (0) target = $region121
    $region120: #{tpu_custom_call.1} parent=1 // pred_region
      _
    $region121: #{tpu_custom_call.1} parent=1 // pred_fallthru
      _
    // Predicated region
    $region122: #{tpu_custom_call.1} parent=1 // pred_check
      _
    $region123: #{tpu_custom_call.1} parent=1 // pred_check_branch
      %312 = sbr.rel (0) target = $region125
    $region124: #{tpu_custom_call.1} parent=1 // pred_region
      %s314 = ssub.s32 16, 16
      %315 = vsyncadd [#allocation31], %s314
      %s317 = sshll.u32 [#allocation32], 4
      %s318 = int_to_ptr.vmem [resolvable:$true] %s317
      %320 = dma.hbm_to_vmem [thread:$0]  %s61, 16, %s318, [#allocation31]
    $region125: #{tpu_custom_call.1} parent=1 // pred_fallthru
      _
    // Predicated region
    $region126: #{tpu_custom_call.1} parent=1 // pred_check
      _
    $region127: #{tpu_custom_call.1} parent=1 // pred_check_branch
      %322 = sbr.rel (0) target = $region129
    $region128: #{tpu_custom_call.1} parent=1 // pred_region
      _
    $region129: #{tpu_custom_call.1} parent=1 // pred_fallthru
      _
    // Predicated region
    $region130: #{tpu_custom_call.1} parent=1 // pred_check
      _
    $region131: #{tpu_custom_call.1} parent=1 // pred_check_branch
      %324 = sbr.rel (0) target = $region133
    $region132: #{tpu_custom_call.1} parent=1 // pred_region
      _
    $region133: #{tpu_custom_call.1} parent=1 // pred_fallthru
      _
    // Predicated region
    $region134: #{tpu_custom_call.1} parent=1 // pred_check
      _
    $region135: #{tpu_custom_call.1} parent=1 // pred_check_branch
      %326 = sbr.rel (0) target = $region137
    $region136: #{tpu_custom_call.1} parent=1 // pred_region
      %s328 = ssub.s32 16, 16
      %329 = vsyncadd [#allocation34], %s328
      %s331 = sshll.u32 [#allocation33], 4
      %s332 = int_to_ptr.vmem [resolvable:$true] %s331
      %334 = dma.hbm_to_vmem [thread:$0]  %s67, 16, %s332, [#allocation34]
    $region137: #{tpu_custom_call.1} parent=1 // pred_fallthru
      _
    // Predicated region
    $region138: #{tpu_custom_call.1} parent=1 // pred_check
      _
    $region139: #{tpu_custom_call.1} parent=1 // pred_check_branch
      %336 = sbr.rel (0) target = $region141
    $region140: #{tpu_custom_call.1} parent=1 // pred_region
      _
    $region141: #{tpu_custom_call.1} parent=1 // pred_fallthru
      _
    // Predicated region
    $region142: #{tpu_custom_call.1} parent=1 // pred_check
      _
    $region143: #{tpu_custom_call.1} parent=1 // pred_check_branch
      %338 = sbr.rel (0) target = $region145
    $region144: #{tpu_custom_call.1} parent=1 // pred_region
      %s340 = ssub.s32 16, 16
      %341 = vsyncadd [#allocation34], %s340
      %s343 = sshll.u32 [#allocation35], 4
      %s344 = int_to_ptr.vmem [resolvable:$true] %s343
      %346 = dma.hbm_to_vmem [thread:$0]  %s71, 16, %s344, [#allocation34]
    $region145: #{tpu_custom_call.1} parent=1 // pred_fallthru
      _
    // Predicated region
    $region146: #{tpu_custom_call.1} parent=1 // pred_check
      _
    $region147: #{tpu_custom_call.1} parent=1 // pred_check_branch
      %348 = sbr.rel (0) target = $region149
    $region148: #{tpu_custom_call.1} parent=1 // pred_region
      _
    $region149: #{tpu_custom_call.1} parent=1 // pred_fallthru
      _
    // Predicated region
    $region150: #{tpu_custom_call.1} parent=1 // pred_check
      _
    $region151: #{tpu_custom_call.1} parent=1 // pred_check_branch
      %350 = sbr.rel (0) target = $region153
    $region152: #{tpu_custom_call.1} parent=1 // pred_region
      %s352 = ssub.s32 256, 256
      %353 = vsyncadd [#allocation37], %s352
      %s354 = sshll.u32 [#allocation36], 4
      %s355 = int_to_ptr.vmem [resolvable:$true] %s354
      %360 = dma.hbm_to_vmem [thread:$0]  %s75, 256, %s355, [#allocation37], 64, 64, 4
    $region153: #{tpu_custom_call.1} parent=1 // pred_fallthru
      _
    // Predicated region
    $region154: #{tpu_custom_call.1} parent=1 // pred_check
      _
    $region155: #{tpu_custom_call.1} parent=1 // pred_check_branch
      %362 = sbr.rel (0) target = $region157
    $region156: #{tpu_custom_call.1} parent=1 // pred_region
      _
    $region157: #{tpu_custom_call.1} parent=1 // pred_fallthru
      _
    // Predicated region
    $region158: #{tpu_custom_call.1} parent=1 // pred_check
      _
    $region159: #{tpu_custom_call.1} parent=1 // pred_check_branch
      %364 = sbr.rel (0) target = $region161
    $region160: #{tpu_custom_call.1} parent=1 // pred_region
      %s366 = ssub.s32 256, 256
      %367 = vsyncadd [#allocation37], %s366
      %s368 = sshll.u32 [#allocation38], 4
      %s369 = int_to_ptr.vmem [resolvable:$true] %s368
      %374 = dma.hbm_to_vmem [thread:$0]  %s79, 256, %s369, [#allocation37], 64, 64, 4
    $region161: #{tpu_custom_call.1} parent=1 // pred_fallthru
      _
    // Predicated region
    $region162: #{tpu_custom_call.1} parent=1 // pred_check
      _
    $region163: #{tpu_custom_call.1} parent=1 // pred_check_branch
      %376 = sbr.rel (0) target = $region165
    $region164: #{tpu_custom_call.1} parent=1 // pred_region
      _
    $region165: #{tpu_custom_call.1} parent=1 // pred_fallthru
      _
    // Predicated region
    $region166: #{tpu_custom_call.1} parent=1 // pred_check
      _
    $region167: #{tpu_custom_call.1} parent=1 // pred_check_branch
      %378 = sbr.rel (0) target = $region169
    $region168: #{tpu_custom_call.1} parent=1 // pred_region
      _
    $region169: #{tpu_custom_call.1} parent=1 // pred_fallthru
      _
    // Predicated region
    $region170: #{tpu_custom_call.1} parent=1 // pred_check
      _
    $region171: #{tpu_custom_call.1} parent=1 // pred_check_branch
      %380 = sbr.rel (0) target = $region173
    $region172: #{tpu_custom_call.1} parent=1 // pred_region
      _
    $region173: #{tpu_custom_call.1} parent=1 // pred_fallthru
      _
    // Predicated region
    $region174: #{tpu_custom_call.1} parent=1 // pred_check
      _
    $region175: #{tpu_custom_call.1} parent=1 // pred_check_branch
      %382 = sbr.rel (0) target = $region177
    $region176: #{tpu_custom_call.1} parent=1 // pred_region
      %383 = dma.done [#allocation4], 128
    $region177: #{tpu_custom_call.1} parent=1 // pred_fallthru
      _
    // Predicated region
    $region178: #{tpu_custom_call.1} parent=1 // pred_check
      _
    $region179: #{tpu_custom_call.1} parent=1 // pred_check_branch
      %385 = sbr.rel (0) target = $region181
    $region180: #{tpu_custom_call.1} parent=1 // pred_region
      %386 = dma.done [#allocation7], 128
    $region181: #{tpu_custom_call.1} parent=1 // pred_fallthru
      _
    // Predicated region
    $region182: #{tpu_custom_call.1} parent=1 // pred_check
      _
    $region183: #{tpu_custom_call.1} parent=1 // pred_check_branch
      %388 = sbr.rel (0) target = $region185
    $region184: #{tpu_custom_call.1} parent=1 // pred_region
      %389 = dma.done [#allocation7], 16
    $region185: #{tpu_custom_call.1} parent=1 // pred_fallthru
      _
    // Predicated region
    $region186: #{tpu_custom_call.1} parent=1 // pred_check
      _
    $region187: #{tpu_custom_call.1} parent=1 // pred_check_branch
      %391 = sbr.rel (0) target = $region189
    $region188: #{tpu_custom_call.1} parent=1 // pred_region
      %392 = dma.done [#allocation10], 16
    $region189: #{tpu_custom_call.1} parent=1 // pred_fallthru
      _
    // Predicated region
    $region190: #{tpu_custom_call.1} parent=1 // pred_check
      _
    $region191: #{tpu_custom_call.1} parent=1 // pred_check_branch
      %394 = sbr.rel (0) target = $region193
    $region192: #{tpu_custom_call.1} parent=1 // pred_region
      %395 = dma.done [#allocation10], 64
    $region193: #{tpu_custom_call.1} parent=1 // pred_fallthru
      _
    // Predicated region
    $region194: #{tpu_custom_call.1} parent=1 // pred_check
      _
    $region195: #{tpu_custom_call.1} parent=1 // pred_check_branch
      %397 = sbr.rel (0) target = $region197
    $region196: #{tpu_custom_call.1} parent=1 // pred_region
      %398 = dma.done [#allocation13], 16
    $region197: #{tpu_custom_call.1} parent=1 // pred_fallthru
      _
    // Predicated region
    $region198: #{tpu_custom_call.1} parent=1 // pred_check
      _
    $region199: #{tpu_custom_call.1} parent=1 // pred_check_branch
      %400 = sbr.rel (0) target = $region201
    $region200: #{tpu_custom_call.1} parent=1 // pred_region
      %401 = dma.done [#allocation13], 16
    $region201: #{tpu_custom_call.1} parent=1 // pred_fallthru
      _
    // Predicated region
    $region202: #{tpu_custom_call.1} parent=1 // pred_check
      _
    $region203: #{tpu_custom_call.1} parent=1 // pred_check_branch
      %403 = sbr.rel (0) target = $region205
    $region204: #{tpu_custom_call.1} parent=1 // pred_region
      %404 = dma.done [#allocation16], 16
    $region205: #{tpu_custom_call.1} parent=1 // pred_fallthru
      _
    // Predicated region
    $region206: #{tpu_custom_call.1} parent=1 // pred_check
      _
    $region207: #{tpu_custom_call.1} parent=1 // pred_check_branch
      %406 = sbr.rel (0) target = $region209
    $region208: #{tpu_custom_call.1} parent=1 // pred_region
      %407 = dma.done [#allocation16], 32
    $region209: #{tpu_custom_call.1} parent=1 // pred_fallthru
      _
    // Predicated region
    $region210: #{tpu_custom_call.1} parent=1 // pred_check
      _
    $region211: #{tpu_custom_call.1} parent=1 // pred_check_branch
      %409 = sbr.rel (0) target = $region213
    $region212: #{tpu_custom_call.1} parent=1 // pred_region
      %410 = dma.done [#allocation19], 16
    $region213: #{tpu_custom_call.1} parent=1 // pred_fallthru
      _
    // Predicated region
    $region214: #{tpu_custom_call.1} parent=1 // pred_check
      _
    $region215: #{tpu_custom_call.1} parent=1 // pred_check_branch
      %412 = sbr.rel (0) target = $region217
    $region216: #{tpu_custom_call.1} parent=1 // pred_region
      %413 = dma.done [#allocation19], 16
    $region217: #{tpu_custom_call.1} parent=1 // pred_fallthru
      _
    // Predicated region
    $region218: #{tpu_custom_call.1} parent=1 // pred_check
      _
    $region219: #{tpu_custom_call.1} parent=1 // pred_check_branch
      %415 = sbr.rel (0) target = $region221
    $region220: #{tpu_custom_call.1} parent=1 // pred_region
      %416 = dma.done [#allocation22], 16
    $region221: #{tpu_custom_call.1} parent=1 // pred_fallthru
      _
    // Predicated region
    $region222: #{tpu_custom_call.1} parent=1 // pred_check
      _
    $region223: #{tpu_custom_call.1} parent=1 // pred_check_branch
      %418 = sbr.rel (0) target = $region225
    $region224: #{tpu_custom_call.1} parent=1 // pred_region
      %419 = dma.done [#allocation22], 64
    $region225: #{tpu_custom_call.1} parent=1 // pred_fallthru
      _
    // Predicated region
    $region226: #{tpu_custom_call.1} parent=1 // pred_check
      _
    $region227: #{tpu_custom_call.1} parent=1 // pred_check_branch
      %421 = sbr.rel (0) target = $region229
    $region228: #{tpu_custom_call.1} parent=1 // pred_region
      %422 = dma.done [#allocation25], 16
    $region229: #{tpu_custom_call.1} parent=1 // pred_fallthru
      _
    // Predicated region
    $region230: #{tpu_custom_call.1} parent=1 // pred_check
      _
    $region231: #{tpu_custom_call.1} parent=1 // pred_check_branch
      %424 = sbr.rel (0) target = $region233
    $region232: #{tpu_custom_call.1} parent=1 // pred_region
      %425 = dma.done [#allocation25], 16
    $region233: #{tpu_custom_call.1} parent=1 // pred_fallthru
      _
    // Predicated region
    $region234: #{tpu_custom_call.1} parent=1 // pred_check
      _
    $region235: #{tpu_custom_call.1} parent=1 // pred_check_branch
      %427 = sbr.rel (0) target = $region237
    $region236: #{tpu_custom_call.1} parent=1 // pred_region
      %428 = dma.done [#allocation28], 16
    $region237: #{tpu_custom_call.1} parent=1 // pred_fallthru
      _
    // Predicated region
    $region238: #{tpu_custom_call.1} parent=1 // pred_check
      _
    $region239: #{tpu_custom_call.1} parent=1 // pred_check_branch
      %430 = sbr.rel (0) target = $region241
    $region240: #{tpu_custom_call.1} parent=1 // pred_region
      %431 = dma.done [#allocation28], 16
    $region241: #{tpu_custom_call.1} parent=1 // pred_fallthru
      _
    // Predicated region
    $region242: #{tpu_custom_call.1} parent=1 // pred_check
      _
    $region243: #{tpu_custom_call.1} parent=1 // pred_check_branch
      %433 = sbr.rel (0) target = $region245
    $region244: #{tpu_custom_call.1} parent=1 // pred_region
      %434 = dma.done [#allocation31], 16
    $region245: #{tpu_custom_call.1} parent=1 // pred_fallthru
      _
    // Predicated region
    $region246: #{tpu_custom_call.1} parent=1 // pred_check
      _
    $region247: #{tpu_custom_call.1} parent=1 // pred_check_branch
      %436 = sbr.rel (0) target = $region249
    $region248: #{tpu_custom_call.1} parent=1 // pred_region
      %437 = dma.done [#allocation31], 16
    $region249: #{tpu_custom_call.1} parent=1 // pred_fallthru
      _
    // Predicated region
    $region250: #{tpu_custom_call.1} parent=1 // pred_check
      _
    $region251: #{tpu_custom_call.1} parent=1 // pred_check_branch
      %439 = sbr.rel (0) target = $region253
    $region252: #{tpu_custom_call.1} parent=1 // pred_region
      %440 = dma.done [#allocation34], 16
    $region253: #{tpu_custom_call.1} parent=1 // pred_fallthru
      _
    // Predicated region
    $region254: #{tpu_custom_call.1} parent=1 // pred_check
      _
    $region255: #{tpu_custom_call.1} parent=1 // pred_check_branch
      %442 = sbr.rel (0) target = $region257
    $region256: #{tpu_custom_call.1} parent=1 // pred_region
      %443 = dma.done [#allocation34], 16
    $region257: #{tpu_custom_call.1} parent=1 // pred_fallthru
      _
    // Predicated region
    $region258: #{tpu_custom_call.1} parent=1 // pred_check
      _
    $region259: #{tpu_custom_call.1} parent=1 // pred_check_branch
      %445 = sbr.rel (0) target = $region261
    $region260: #{tpu_custom_call.1} parent=1 // pred_region
      %446 = dma.done [#allocation37], 256
    $region261: #{tpu_custom_call.1} parent=1 // pred_fallthru
      _
    // Predicated region
    $region262: #{tpu_custom_call.1} parent=1 // pred_check
      _
    $region263: #{tpu_custom_call.1} parent=1 // pred_check_branch
      %448 = sbr.rel (0) target = $region265
    $region264: #{tpu_custom_call.1} parent=1 // pred_region
      %449 = dma.done [#allocation37], 256
    $region265: #{tpu_custom_call.1} parent=1 // pred_fallthru
      _
    %v451 = vld [vmem:[%s1] sm:$0xff]
    %v452 = vld [vmem:[%s1 + $0x8] sm:$0xff]
    %v453 = vld [vmem:[%s3] sm:$0xff]
    %v454 = vld [vmem:[%s3 + $0x8] sm:$0xff]
    %v455 = vld [vmem:[#allocation3] sm:$0xff]
    %v456 = vld [vmem:[%s7] sm:$0xff]
    %v457 = vld [vmem:[%s7 + $0x8] sm:$0xff]
    %v458 = vld [vmem:[%s9] sm:$0xff]
    %v459 = vld [vmem:[%s9 + $0x8] sm:$0xff]
    %v460 = vld [vmem:[%s11] sm:$0xff]
    %v461 = vld [vmem:[%s11 + $0x8] sm:$0xff]
    %v462 = vld [vmem:[#allocation6] sm:$0xff]
    %v463 = vld [vmem:[#allocation8] sm:$0x1]
    %v464 = vld [vmem:[#allocation9] sm:$0x1]
    %v465 = vld [vmem:[#allocation11] sm:$0xf]
    %v466 = vld [vmem:[#allocation12] sm:$0x1]
    %v467 = vld [vmem:[#allocation14] sm:$0x1]
    %v468 = vld [vmem:[#allocation15] sm:$0x1]
    %v469 = vld [vmem:[#allocation17] sm:$0x3]
    %v470 = vld [vmem:[#allocation18] sm:$0x1]
    %v471 = vld [vmem:[#allocation20] sm:$0x1]
    %v472 = vld [vmem:[#allocation21] sm:$0x1]
    %v473 = vld [vmem:[#allocation23] sm:$0x7]
    %v474 = vld [vmem:[#allocation24] sm:$0x1]
    %v475 = vld [vmem:[%s39] sm:$0xf]
    %v476 = vld [vmem:[%s39 + $0x4] sm:$0xf]
    %v477 = vld [vmem:[%s39 + $0x8] sm:$0xf]
    %v478 = vld [vmem:[%s39 + $0xc] sm:$0xf]
    %v479 = vld [vmem:[#allocation26] sm:$0x1]
    %v480 = vld [vmem:[%s43] sm:$0xf]
    %v481 = vld [vmem:[%s43 + $0x4] sm:$0xf]
    %v482 = vld [vmem:[%s43 + $0x8] sm:$0xf]
    %v483 = vld [vmem:[%s43 + $0xc] sm:$0xf]
    %v484 = vld [vmem:[%s45] sm:$0xf]
    %v485 = vld [vmem:[%s45 + $0x4] sm:$0xf]
    %v486 = vld [vmem:[%s45 + $0x8] sm:$0xf]
    %v487 = vld [vmem:[%s45 + $0xc] sm:$0xf]
    %v488 = vld [vmem:[#allocation27] sm:$0x1]
    %v489 = vld [vmem:[%s49] sm:$0xf]
    %v490 = vld [vmem:[%s49 + $0x4] sm:$0xf]
    %v491 = vld [vmem:[%s49 + $0x8] sm:$0xf]
    %v492 = vld [vmem:[%s49 + $0xc] sm:$0xf]
    %v493 = vld [vmem:[#allocation29] sm:$0x1]
    %v494 = vld [vmem:[%s53] sm:$0xf]
    %v495 = vld [vmem:[%s53 + $0x4] sm:$0xf]
    %v496 = vld [vmem:[%s53 + $0x8] sm:$0xf]
    %v497 = vld [vmem:[%s53 + $0xc] sm:$0xf]
    %v498 = vld [vmem:[%s55] sm:$0xf]
    %v499 = vld [vmem:[%s55 + $0x4] sm:$0xf]
    %v500 = vld [vmem:[%s55 + $0x8] sm:$0xf]
    %v501 = vld [vmem:[%s55 + $0xc] sm:$0xf]
    %v502 = vld [vmem:[#allocation30] sm:$0x1]
    %v503 = vld [vmem:[%s59] sm:$0xf]
    %v504 = vld [vmem:[%s59 + $0x4] sm:$0xf]
    %v505 = vld [vmem:[%s59 + $0x8] sm:$0xf]
    %v506 = vld [vmem:[%s59 + $0xc] sm:$0xf]
    %v507 = vld [vmem:[#allocation32] sm:$0x1]
    %v508 = vld [vmem:[%s63] sm:$0xf]
    %v509 = vld [vmem:[%s63 + $0x4] sm:$0xf]
    %v510 = vld [vmem:[%s63 + $0x8] sm:$0xf]
    %v511 = vld [vmem:[%s63 + $0xc] sm:$0xf]
    %v512 = vld [vmem:[%s65] sm:$0xf]
    %v513 = vld [vmem:[%s65 + $0x4] sm:$0xf]
    %v514 = vld [vmem:[%s65 + $0x8] sm:$0xf]
    %v515 = vld [vmem:[%s65 + $0xc] sm:$0xf]
    %v516 = vld [vmem:[#allocation33] sm:$0x1]
    %v517 = vld [vmem:[%s69] sm:$0xf]
    %v518 = vld [vmem:[%s69 + $0x4] sm:$0xf]
    %v519 = vld [vmem:[%s69 + $0x8] sm:$0xf]
    %v520 = vld [vmem:[%s69 + $0xc] sm:$0xf]
    %v521 = vld [vmem:[#allocation35] sm:$0x1]
    %v522 = vld [vmem:[%s73] sm:$0xf]
    %v523 = vld [vmem:[%s73 + $0x4] sm:$0xf]
    %v524 = vld [vmem:[%s73 + $0x8] sm:$0xf]
    %v525 = vld [vmem:[%s73 + $0xc] sm:$0xf]
    %v526 = vld [vmem:[#allocation36] sm:$0xf]
    %v527 = vld [vmem:[#allocation36 + $0x4] sm:$0xf]
    %v528 = vld [vmem:[#allocation36 + $0x8] sm:$0xf]
    %v529 = vld [vmem:[#allocation36 + $0xc] sm:$0xf]
    %v530 = vld [vmem:[%s77] sm:$0x1]
    %v531 = vld [vmem:[#allocation38] sm:$0xf]
    %v532 = vld [vmem:[#allocation38 + $0x4] sm:$0xf]
    %v533 = vld [vmem:[#allocation38 + $0x8] sm:$0xf]
    %v534 = vld [vmem:[#allocation38 + $0xc] sm:$0xf]
    %v535 = vld [vmem:[%s81] sm:$0x1]
    %v536 = vld [vmem:[%s83] sm:$0x1]
    %v537 = vld [vmem:[#allocation2] sm:$0x1]
    %v539 = vlaneseq
    %v540 = vshrl.u32 %v539, 7
    %v541 = vsub.s32 0, %v540
    %v542 = vrot.slane %v463, %v541
    %v544 = vsub.f32 %v451, %v542
    %v545 = vsub.f32 %v452, %v542
    %v547 = vlaneseq
    %v548 = vshrl.u32 %v547, 7
    %v549 = vsub.s32 0, %v548
    %v550 = vrot.slane %v464, %v549
    %v552 = vrcp.pop %v550
    %v553 = vmul.f32 %v544, %v552
    %v554 = vmul.f32 %v545, %v552
    %v555 = vpack.c.bf16 %v554, %v553
    %v557 = vlaneseq
    %v558 = vshrl.u32 %v557, 7
    %v559 = vsub.s32 0, %v558
    %v560 = vrot.slane %v466, %v559
    %vm562 = vcmask 56320
    %v564 = vsel %vm562, %v555, 0
    %vm566 = vcmask 1042432
    %vm567 = vcmask 1043456
    %v568 = vsel %vm566, 4294967295, 65535
    %v569 = vsel %vm567, %v568, 0
    %v571 = vand.u32 %v465, %v569
    %573 = vmatprep.subr.bf16.mxu0 0
    %574 = vmatpush1.bf16.msra.mxu0 %v571
    %575 = vmatprep.subr.bf16.mxu0 0
    %576 = vmatpush1.bf16.msra.mxu0 0
    %577 = vmatprep.subr.bf16.mxu0 0
    %578 = vmatpush1.bf16.msra.mxu0 0
    %579 = vmatprep.subr.bf16.mxu0 0
    %580 = vmatpush1.bf16.msra.mxu0 0
    %581 = vmatprep.subr.bf16.mxu0 0
    %582 = vmatpush1.bf16.msra.mxu0 0
    %583 = vmatprep.subr.bf16.mxu0 0
    %584 = vmatpush1.bf16.msra.mxu0 0
    %585 = vmatprep.subr.bf16.mxu0 0
    %586 = vmatpush1.bf16.msra.mxu0 0
    %587 = vmatprep.subr.bf16.mxu0 0
    %588 = vmatpush1.bf16.msra.mxu0 0
    %589 = vmatprep.subr.bf16.mxu0 0
    %590 = vmatpush1.bf16.msra.mxu0 0
    %591 = vmatprep.subr.bf16.mxu0 0
    %592 = vmatpush1.bf16.msra.mxu0 0
    %593 = vmatprep.subr.bf16.mxu0 0
    %594 = vmatpush1.bf16.msra.mxu0 0
    %595 = vmatprep.subr.bf16.mxu0 0
    %596 = vmatpush1.bf16.msra.mxu0 0
    %597 = vmatprep.subr.bf16.mxu0 0
    %598 = vmatpush1.bf16.msra.mxu0 0
    %599 = vmatprep.subr.bf16.mxu0 0
    %600 = vmatpush1.bf16.msra.mxu0 0
    %601 = vmatprep.subr.bf16.mxu0 0
    %602 = vmatpush1.bf16.msra.mxu0 0
    %603 = vmatprep.subr.bf16.mxu0 0
    %604 = vmatpush1.bf16.msra.mxu0 0
    %605 = vmatprep.mubr.bf16.mxu0 0
    %606 = vmatmul.mubr.bf16.gmra.mrb[0].mxu0 %v564
    %v607 = vpop.f32.mrb[0].mxu0
    %v608 = vadd.f32 %v560, %v607
    %v609 = vpop.f32.mrb[0].mxu0
    %v610 = vpop.f32.mrb[0].mxu0
    %v611 = vadd.f32 %v560, %v610
    %v612 = vpop.f32.mrb[0].mxu0
    %613 = vdwg.mxu0
    %v614 = vmax.f32 %v608, 0.0
    %v615 = vmax.f32 %v611, 0.0
    %v617 = vlaneseq
    %v618 = vshrl.u32 %v617, 7
    %v619 = vsub.s32 0, %v618
    %v620 = vrot.slane %v467, %v619
    %v622 = vsub.f32 %v453, %v620
    %v623 = vsub.f32 %v454, %v620
    %v625 = vlaneseq
    %v626 = vshrl.u32 %v625, 7
    %v627 = vsub.s32 0, %v626
    %v628 = vrot.slane %v468, %v627
    %v630 = vrcp.pop %v628
    %v631 = vmul.f32 %v622, %v630
    %v632 = vmul.f32 %v623, %v630
    %v633 = vpack.c.bf16 %v632, %v631
    %v635 = vlaneseq
    %v636 = vshrl.u32 %v635, 7
    %v637 = vsub.s32 0, %v636
    %v638 = vrot.slane %v470, %v637
    %vm640 = vcmask 31744
    %v642 = vsel %vm640, %v633, 0
    %vm644 = vcmask 1041408
    %v646 = vsel %vm644, %v469, 0
    %648 = vmatprep.subr.bf16.mxu0 0
    %649 = vmatpush1.bf16.msra.mxu0 %v646
    %650 = vmatprep.subr.bf16.mxu0 0
    %651 = vmatpush1.bf16.msra.mxu0 0
    %652 = vmatprep.subr.bf16.mxu0 0
    %653 = vmatpush1.bf16.msra.mxu0 0
    %654 = vmatprep.subr.bf16.mxu0 0
    %655 = vmatpush1.bf16.msra.mxu0 0
    %656 = vmatprep.subr.bf16.mxu0 0
    %657 = vmatpush1.bf16.msra.mxu0 0
    %658 = vmatprep.subr.bf16.mxu0 0
    %659 = vmatpush1.bf16.msra.mxu0 0
    %660 = vmatprep.subr.bf16.mxu0 0
    %661 = vmatpush1.bf16.msra.mxu0 0
    %662 = vmatprep.subr.bf16.mxu0 0
    %663 = vmatpush1.bf16.msra.mxu0 0
    %664 = vmatprep.subr.bf16.mxu0 0
    %665 = vmatpush1.bf16.msra.mxu0 0
    %666 = vmatprep.subr.bf16.mxu0 0
    %667 = vmatpush1.bf16.msra.mxu0 0
    %668 = vmatprep.subr.bf16.mxu0 0
    %669 = vmatpush1.bf16.msra.mxu0 0
    %670 = vmatprep.subr.bf16.mxu0 0
    %671 = vmatpush1.bf16.msra.mxu0 0
    %672 = vmatprep.subr.bf16.mxu0 0
    %673 = vmatpush1.bf16.msra.mxu0 0
    %674 = vmatprep.subr.bf16.mxu0 0
    %675 = vmatpush1.bf16.msra.mxu0 0
    %676 = vmatprep.subr.bf16.mxu0 0
    %677 = vmatpush1.bf16.msra.mxu0 0
    %678 = vmatprep.subr.bf16.mxu0 0
    %679 = vmatpush1.bf16.msra.mxu0 0
    %680 = vmatprep.mubr.bf16.mxu0 0
    %681 = vmatmul.mubr.bf16.gmra.mrb[0].mxu0 %v642
    %v682 = vpop.f32.mrb[0].mxu0
    %v683 = vadd.f32 %v638, %v682
    %v684 = vpop.f32.mrb[0].mxu0
    %v685 = vpop.f32.mrb[0].mxu0
    %v686 = vadd.f32 %v638, %v685
    %v687 = vpop.f32.mrb[0].mxu0
    %688 = vdwg.mxu0
    %v689 = vmax.f32 %v683, 0.0
    %v690 = vmax.f32 %v686, 0.0
    %v692 = vlaneseq
    %v693 = vshrl.u32 %v692, 7
    %v694 = vsub.s32 0, %v693
    %v695 = vrot.slane %v471, %v694
    %v697 = vsub.f32 %v455, %v695
    %v699 = vlaneseq
    %v700 = vshrl.u32 %v699, 7
    %v701 = vsub.s32 0, %v700
    %v702 = vrot.slane %v472, %v701
    %v704 = vrcp.pop %v702
    %v705 = vmul.f32 %v697, %v704
    %v706 = vpack.c.bf16 %v705, %v705
    %v708 = vlaneseq
    %v709 = vshrl.u32 %v708, 7
    %v710 = vsub.s32 0, %v709
    %v711 = vrot.slane %v474, %v710
    %vm713 = vcmask 48128
    %v715 = vsel %vm713, %v706, 0
    %v718 = vsel %vm566, %v473, 0
    %720 = vmatprep.subr.bf16.mxu0 0
    %721 = vmatpush1.bf16.msra.mxu0 %v718
    %722 = vmatprep.subr.bf16.mxu0 0
    %723 = vmatpush1.bf16.msra.mxu0 0
    %724 = vmatprep.subr.bf16.mxu0 0
    %725 = vmatpush1.bf16.msra.mxu0 0
    %726 = vmatprep.subr.bf16.mxu0 0
    %727 = vmatpush1.bf16.msra.mxu0 0
    %728 = vmatprep.subr.bf16.mxu0 0
    %729 = vmatpush1.bf16.msra.mxu0 0
    %730 = vmatprep.subr.bf16.mxu0 0
    %731 = vmatpush1.bf16.msra.mxu0 0
    %732 = vmatprep.subr.bf16.mxu0 0
    %733 = vmatpush1.bf16.msra.mxu0 0
    %734 = vmatprep.subr.bf16.mxu0 0
    %735 = vmatpush1.bf16.msra.mxu0 0
    %736 = vmatprep.subr.bf16.mxu0 0
    %737 = vmatpush1.bf16.msra.mxu0 0
    %738 = vmatprep.subr.bf16.mxu0 0
    %739 = vmatpush1.bf16.msra.mxu0 0
    %740 = vmatprep.subr.bf16.mxu0 0
    %741 = vmatpush1.bf16.msra.mxu0 0
    %742 = vmatprep.subr.bf16.mxu0 0
    %743 = vmatpush1.bf16.msra.mxu0 0
    %744 = vmatprep.subr.bf16.mxu0 0
    %745 = vmatpush1.bf16.msra.mxu0 0
    %746 = vmatprep.subr.bf16.mxu0 0
    %747 = vmatpush1.bf16.msra.mxu0 0
    %748 = vmatprep.subr.bf16.mxu0 0
    %749 = vmatpush1.bf16.msra.mxu0 0
    %750 = vmatprep.subr.bf16.mxu0 0
    %751 = vmatpush1.bf16.msra.mxu0 0
    %752 = vmatprep.mubr.bf16.mxu0 0
    %753 = vmatmul.mubr.bf16.gmra.mrb[0].mxu0 %v715
    %v754 = vpop.f32.mrb[0].mxu0
    %v755 = vadd.f32 %v711, %v754
    %v756 = vpop.f32.mrb[0].mxu0
    %v757 = vpop.f32.mrb[0].mxu0
    %v758 = vpop.f32.mrb[0].mxu0
    %759 = vdwg.mxu0
    %v760 = vmax.f32 %v755, 0.0
    %v761 = vpack.c.bf16 %v615, %v614
    %v762 = vpack.c.bf16 %v760, %v760
    %v764 = vlaneseq
    %v765 = vshrl.u32 %v764, 7
    %v766 = vsub.s32 0, %v765
    %v767 = vrot.slane %v479, %v766
    %v773 = vunpack.c.l.b16 %v475
    %v774 = vunpack.c.l.b16 %v476
    %v775 = vunpack.c.l.b16 %v477
    %v776 = vunpack.c.l.b16 %v478
    %v777 = vpack.c.b16 %v774, %v773
    %v778 = vpack.c.b16 %v776, %v775
    %vm781 = vcmask 261120
    %v783 = vsel %vm781, %v761, 0
    %v786 = vsel %vm781, %v762, 0
    %788 = vmatprep.subr.bf16.mxu0 0
    %789 = vmatpush1.bf16.msra.mxu0 %v777
    %790 = vmatprep.subr.bf16.mxu0 0
    %791 = vmatpush1.bf16.msra.mxu0 %v778
    %792 = vmatprep.subr.bf16.mxu0 0
    %793 = vmatpush1.bf16.msra.mxu0 0
    %794 = vmatprep.subr.bf16.mxu0 0
    %795 = vmatpush1.bf16.msra.mxu0 0
    %796 = vmatprep.subr.bf16.mxu0 0
    %797 = vmatpush1.bf16.msra.mxu0 0
    %798 = vmatprep.subr.bf16.mxu0 0
    %799 = vmatpush1.bf16.msra.mxu0 0
    %800 = vmatprep.subr.bf16.mxu0 0
    %801 = vmatpush1.bf16.msra.mxu0 0
    %802 = vmatprep.subr.bf16.mxu0 0
    %803 = vmatpush1.bf16.msra.mxu0 0
    %804 = vmatprep.subr.bf16.mxu0 0
    %805 = vmatpush1.bf16.msra.mxu0 0
    %806 = vmatprep.subr.bf16.mxu0 0
    %807 = vmatpush1.bf16.msra.mxu0 0
    %808 = vmatprep.subr.bf16.mxu0 0
    %809 = vmatpush1.bf16.msra.mxu0 0
    %810 = vmatprep.subr.bf16.mxu0 0
    %811 = vmatpush1.bf16.msra.mxu0 0
    %812 = vmatprep.subr.bf16.mxu0 0
    %813 = vmatpush1.bf16.msra.mxu0 0
    %814 = vmatprep.subr.bf16.mxu0 0
    %815 = vmatpush1.bf16.msra.mxu0 0
    %816 = vmatprep.subr.bf16.mxu0 0
    %817 = vmatpush1.bf16.msra.mxu0 0
    %818 = vmatprep.subr.bf16.mxu0 0
    %819 = vmatpush1.bf16.msra.mxu0 0
    %820 = vmatprep.mubr.bf16.mxu0 0
    %821 = vmatmul.mubr.bf16.gmra.mrb[0].mxu0 %v783
    %v822 = vpop.f32.mrb[0].mxu0
    %v823 = vadd.f32 %v767, %v822
    %v824 = vpop.f32.mrb[0].mxu0
    %v825 = vpop.f32.mrb[0].mxu0
    %v826 = vadd.f32 %v767, %v825
    %v827 = vpop.f32.mrb[0].mxu0
    %828 = vmatprep.mubr.bf16.mxu0 0
    %829 = vmatmul.mubr.bf16.gmra.mrb[0].mxu0 %v786
    %v830 = vpop.f32.mrb[0].mxu0
    %v831 = vadd.f32 %v767, %v830
    %v832 = vpop.f32.mrb[0].mxu0
    %v833 = vpop.f32.mrb[0].mxu0
    %v834 = vpop.f32.mrb[0].mxu0
    %835 = vdwg.mxu0
    %v836 = vmax.f32 %v823, 0.0
    %v837 = vmax.f32 %v826, 0.0
    %v838 = vmax.f32 %v831, 0.0
    %839 = vxpose.xlu0.b32.start [1/16] %v836, 128
    %840 = vxpose.xlu0.b32.cont [2/16] %v837, 128
    %841 = vxpose.xlu0.b32.cont [3/16] 0.0, 128
    %842 = vxpose.xlu0.b32.cont [4/16] 0.0, 128
    %843 = vxpose.xlu0.b32.cont [5/16] 0.0, 128
    %844 = vxpose.xlu0.b32.cont [6/16] 0.0, 128
    %845 = vxpose.xlu0.b32.cont [7/16] 0.0, 128
    %846 = vxpose.xlu0.b32.cont [8/16] 0.0, 128
    %847 = vxpose.xlu0.b32.cont [9/16] 0.0, 128
    %848 = vxpose.xlu0.b32.cont [10/16] 0.0, 128
    %849 = vxpose.xlu0.b32.cont [11/16] 0.0, 128
    %850 = vxpose.xlu0.b32.cont [12/16] 0.0, 128
    %851 = vxpose.xlu0.b32.cont [13/16] 0.0, 128
    %852 = vxpose.xlu0.b32.cont [14/16] 0.0, 128
    %853 = vxpose.xlu0.b32.cont [15/16] 0.0, 128
    %854 = vxpose.xlu0.b32.end [16/16] 0.0, 128
    %v855 = vpop.trf.xlu0
    %v856 = vpop.trf.xlu0
    %v857 = vpop.trf.xlu0
    %v858 = vpop.trf.xlu0
    %v859 = vpop.trf.xlu0
    %v860 = vpop.trf.xlu0
    %v861 = vpop.trf.xlu0
    %v862 = vpop.trf.xlu0
    %v863 = vpop.trf.xlu0
    %v864 = vpop.trf.xlu0
    %v865 = vpop.trf.xlu0
    %v866 = vpop.trf.xlu0
    %v867 = vpop.trf.xlu0
    %v868 = vpop.trf.xlu0
    %v869 = vpop.trf.xlu0
    %v870 = vpop.trf.xlu0
    %v873 = vcombine.high %v456, %v456
    %v875 = vunpack.c.l.s4 1966171168
    %v876 = vunpack.c.0.s8 %v875
    %v877 = vlaneseq
    %v878 = vshrl.u32 %v877, 7
    %v879 = vsub.s32 %v876, %v878
    %v880 = vrot.slane %v456, %v879
    %v882 = vunpack.c.l.s4 1966171168
    %v883 = vunpack.c.0.s8 %v882
    %v884 = vlaneseq
    %v885 = vshrl.u32 %v884, 7
    %v886 = vsub.s32 %v883, %v885
    %v887 = vrot.slane %v873, %v886
    %v888 = vcombine.high %v880, %v880
    %v889 = vcombine.high %v887, %v887
    %v891 = vunpack.c.l.s4 1966171168
    %v892 = vunpack.c.0.s8 %v891
    %v893 = vlaneseq
    %v894 = vshrl.u32 %v893, 7
    %v895 = vsub.s32 %v892, %v894
    %v896 = vrot.slane %v880, %v895
    %v898 = vunpack.c.l.s4 1966171168
    %v899 = vunpack.c.0.s8 %v898
    %v900 = vlaneseq
    %v901 = vshrl.u32 %v900, 7
    %v902 = vsub.s32 %v899, %v901
    %v903 = vrot.slane %v887, %v902
    %v905 = vunpack.c.l.s4 1966171168
    %v906 = vunpack.c.0.s8 %v905
    %v907 = vlaneseq
    %v908 = vshrl.u32 %v907, 7
    %v909 = vsub.s32 %v906, %v908
    %v910 = vrot.slane %v888, %v909
    %v912 = vunpack.c.l.s4 1966171168
    %v913 = vunpack.c.0.s8 %v912
    %v914 = vlaneseq
    %v915 = vshrl.u32 %v914, 7
    %v916 = vsub.s32 %v913, %v915
    %v917 = vrot.slane %v889, %v916
    %v918 = vcombine.high %v896, %v896
    %v919 = vcombine.high %v903, %v903
    %v920 = vcombine.high %v910, %v910
    %v921 = vcombine.high %v917, %v917
    %v922 = vcombine.high %v457, %v457
    %v924 = vunpack.c.l.s4 1966171168
    %v925 = vunpack.c.0.s8 %v924
    %v926 = vlaneseq
    %v927 = vshrl.u32 %v926, 7
    %v928 = vsub.s32 %v925, %v927
    %v929 = vrot.slane %v457, %v928
    %v931 = vunpack.c.l.s4 1966171168
    %v932 = vunpack.c.0.s8 %v931
    %v933 = vlaneseq
    %v934 = vshrl.u32 %v933, 7
    %v935 = vsub.s32 %v932, %v934
    %v936 = vrot.slane %v922, %v935
    %v937 = vcombine.high %v929, %v929
    %v938 = vcombine.high %v936, %v936
    %v940 = vunpack.c.l.s4 1966171168
    %v941 = vunpack.c.0.s8 %v940
    %v942 = vlaneseq
    %v943 = vshrl.u32 %v942, 7
    %v944 = vsub.s32 %v941, %v943
    %v945 = vrot.slane %v929, %v944
    %v947 = vunpack.c.l.s4 1966171168
    %v948 = vunpack.c.0.s8 %v947
    %v949 = vlaneseq
    %v950 = vshrl.u32 %v949, 7
    %v951 = vsub.s32 %v948, %v950
    %v952 = vrot.slane %v936, %v951
    %v954 = vunpack.c.l.s4 1966171168
    %v955 = vunpack.c.0.s8 %v954
    %v956 = vlaneseq
    %v957 = vshrl.u32 %v956, 7
    %v958 = vsub.s32 %v955, %v957
    %v959 = vrot.slane %v937, %v958
    %v961 = vunpack.c.l.s4 1966171168
    %v962 = vunpack.c.0.s8 %v961
    %v963 = vlaneseq
    %v964 = vshrl.u32 %v963, 7
    %v965 = vsub.s32 %v962, %v964
    %v966 = vrot.slane %v938, %v965
    %v967 = vcombine.high %v945, %v945
    %v968 = vcombine.high %v952, %v952
    %v969 = vcombine.high %v959, %v959
    %v970 = vcombine.high %v966, %v966
    %v971 = vlaneseq
    %v972 = vshrl.u32 %v971, 7
    %v973 = vsub.s32 0, %v972
    %v974 = vrot.slane %v896, %v973
    %v975 = vlaneseq
    %v976 = vshrl.u32 %v975, 7
    %v977 = vsub.s32 0, %v976
    %v978 = vrot.slane %v910, %v977
    %v979 = vlaneseq
    %v980 = vshrl.u32 %v979, 7
    %v981 = vsub.s32 0, %v980
    %v982 = vrot.slane %v918, %v981
    %v983 = vlaneseq
    %v984 = vshrl.u32 %v983, 7
    %v985 = vsub.s32 0, %v984
    %v986 = vrot.slane %v920, %v985
    %v987 = vlaneseq
    %v988 = vshrl.u32 %v987, 7
    %v989 = vsub.s32 0, %v988
    %v990 = vrot.slane %v903, %v989
    %v991 = vlaneseq
    %v992 = vshrl.u32 %v991, 7
    %v993 = vsub.s32 0, %v992
    %v994 = vrot.slane %v917, %v993
    %v995 = vlaneseq
    %v996 = vshrl.u32 %v995, 7
    %v997 = vsub.s32 0, %v996
    %v998 = vrot.slane %v919, %v997
    %v999 = vlaneseq
    %v1000 = vshrl.u32 %v999, 7
    %v1001 = vsub.s32 0, %v1000
    %v1002 = vrot.slane %v921, %v1001
    %v1003 = vlaneseq
    %v1004 = vshrl.u32 %v1003, 7
    %v1005 = vsub.s32 0, %v1004
    %v1006 = vrot.slane %v945, %v1005
    %v1007 = vlaneseq
    %v1008 = vshrl.u32 %v1007, 7
    %v1009 = vsub.s32 0, %v1008
    %v1010 = vrot.slane %v959, %v1009
    %v1011 = vlaneseq
    %v1012 = vshrl.u32 %v1011, 7
    %v1013 = vsub.s32 0, %v1012
    %v1014 = vrot.slane %v967, %v1013
    %v1015 = vlaneseq
    %v1016 = vshrl.u32 %v1015, 7
    %v1017 = vsub.s32 0, %v1016
    %v1018 = vrot.slane %v969, %v1017
    %v1019 = vlaneseq
    %v1020 = vshrl.u32 %v1019, 7
    %v1021 = vsub.s32 0, %v1020
    %v1022 = vrot.slane %v952, %v1021
    %v1023 = vlaneseq
    %v1024 = vshrl.u32 %v1023, 7
    %v1025 = vsub.s32 0, %v1024
    %v1026 = vrot.slane %v966, %v1025
    %v1027 = vlaneseq
    %v1028 = vshrl.u32 %v1027, 7
    %v1029 = vsub.s32 0, %v1028
    %v1030 = vrot.slane %v968, %v1029
    %v1031 = vlaneseq
    %v1032 = vshrl.u32 %v1031, 7
    %v1033 = vsub.s32 0, %v1032
    %v1034 = vrot.slane %v970, %v1033
    %v1051 = vmul.f32 %v974, %v855
    %v1052 = vmul.f32 %v974, %v856
    %v1053 = vmul.f32 %v974, %v857
    %v1054 = vmul.f32 %v974, %v858
    %v1055 = vmul.f32 %v978, %v855
    %v1056 = vmul.f32 %v978, %v856
    %v1057 = vmul.f32 %v978, %v857
    %v1058 = vmul.f32 %v978, %v858
    %v1059 = vmul.f32 %v982, %v855
    %v1060 = vmul.f32 %v982, %v856
    %v1061 = vmul.f32 %v982, %v857
    %v1062 = vmul.f32 %v982, %v858
    %v1063 = vmul.f32 %v986, %v855
    %v1064 = vmul.f32 %v986, %v856
    %v1065 = vmul.f32 %v986, %v857
    %v1066 = vmul.f32 %v986, %v858
    %v1067 = vmul.f32 %v990, %v855
    %v1068 = vmul.f32 %v990, %v856
    %v1069 = vmul.f32 %v990, %v857
    %v1070 = vmul.f32 %v990, %v858
    %v1071 = vmul.f32 %v994, %v855
    %v1072 = vmul.f32 %v994, %v856
    %v1073 = vmul.f32 %v994, %v857
    %v1074 = vmul.f32 %v994, %v858
    %v1075 = vmul.f32 %v998, %v855
    %v1076 = vmul.f32 %v998, %v856
    %v1077 = vmul.f32 %v998, %v857
    %v1078 = vmul.f32 %v998, %v858
    %v1079 = vmul.f32 %v1002, %v855
    %v1080 = vmul.f32 %v1002, %v856
    %v1081 = vmul.f32 %v1002, %v857
    %v1082 = vmul.f32 %v1002, %v858
    %v1083 = vmul.f32 %v1006, %v855
    %v1084 = vmul.f32 %v1006, %v856
    %v1085 = vmul.f32 %v1006, %v857
    %v1086 = vmul.f32 %v1006, %v858
    %v1087 = vmul.f32 %v1010, %v855
    %v1088 = vmul.f32 %v1010, %v856
    %v1089 = vmul.f32 %v1010, %v857
    %v1090 = vmul.f32 %v1010, %v858
    %v1091 = vmul.f32 %v1014, %v855
    %v1092 = vmul.f32 %v1014, %v856
    %v1093 = vmul.f32 %v1014, %v857
    %v1094 = vmul.f32 %v1014, %v858
    %v1095 = vmul.f32 %v1018, %v855
    %v1096 = vmul.f32 %v1018, %v856
    %v1097 = vmul.f32 %v1018, %v857
    %v1098 = vmul.f32 %v1018, %v858
    %v1099 = vmul.f32 %v1022, %v855
    %v1100 = vmul.f32 %v1022, %v856
    %v1101 = vmul.f32 %v1022, %v857
    %v1102 = vmul.f32 %v1022, %v858
    %v1103 = vmul.f32 %v1026, %v855
    %v1104 = vmul.f32 %v1026, %v856
    %v1105 = vmul.f32 %v1026, %v857
    %v1106 = vmul.f32 %v1026, %v858
    %v1107 = vmul.f32 %v1030, %v855
    %v1108 = vmul.f32 %v1030, %v856
    %v1109 = vmul.f32 %v1030, %v857
    %v1110 = vmul.f32 %v1030, %v858
    %v1111 = vmul.f32 %v1034, %v855
    %v1112 = vmul.f32 %v1034, %v856
    %v1113 = vmul.f32 %v1034, %v857
    %v1114 = vmul.f32 %v1034, %v858
    %vm1115 = vcmask 130048
    %v1116 = vsel %vm1115, %v1051, -inf
    %1117 = vmax.xlane.f32.xlu0 %v1116
    %v1118 = vpop.xlane.xlu0 %1117
    %v1119 = vsel %vm1115, %v1052, -inf
    %1120 = vmax.xlane.f32.xlu0 %v1119
    %v1121 = vpop.xlane.xlu0 %1120
    %v1122 = vsel %vm1115, %v1053, -inf
    %1123 = vmax.xlane.f32.xlu0 %v1122
    %v1124 = vpop.xlane.xlu0 %1123
    %v1125 = vsel %vm1115, %v1054, -inf
    %1126 = vmax.xlane.f32.xlu0 %v1125
    %v1127 = vpop.xlane.xlu0 %1126
    %v1128 = vsel %vm1115, %v1055, -inf
    %1129 = vmax.xlane.f32.xlu0 %v1128
    %v1130 = vpop.xlane.xlu0 %1129
    %v1131 = vsel %vm1115, %v1056, -inf
    %1132 = vmax.xlane.f32.xlu0 %v1131
    %v1133 = vpop.xlane.xlu0 %1132
    %v1134 = vsel %vm1115, %v1057, -inf
    %1135 = vmax.xlane.f32.xlu0 %v1134
    %v1136 = vpop.xlane.xlu0 %1135
    %v1137 = vsel %vm1115, %v1058, -inf
    %1138 = vmax.xlane.f32.xlu0 %v1137
    %v1139 = vpop.xlane.xlu0 %1138
    %v1140 = vsel %vm1115, %v1059, -inf
    %1141 = vmax.xlane.f32.xlu0 %v1140
    %v1142 = vpop.xlane.xlu0 %1141
    %v1143 = vsel %vm1115, %v1060, -inf
    %1144 = vmax.xlane.f32.xlu0 %v1143
    %v1145 = vpop.xlane.xlu0 %1144
    %v1146 = vsel %vm1115, %v1061, -inf
    %1147 = vmax.xlane.f32.xlu0 %v1146
    %v1148 = vpop.xlane.xlu0 %1147
    %v1149 = vsel %vm1115, %v1062, -inf
    %1150 = vmax.xlane.f32.xlu0 %v1149
    %v1151 = vpop.xlane.xlu0 %1150
    %v1152 = vsel %vm1115, %v1063, -inf
    %1153 = vmax.xlane.f32.xlu0 %v1152
    %v1154 = vpop.xlane.xlu0 %1153
    %v1155 = vsel %vm1115, %v1064, -inf
    %1156 = vmax.xlane.f32.xlu0 %v1155
    %v1157 = vpop.xlane.xlu0 %1156
    %v1158 = vsel %vm1115, %v1065, -inf
    %1159 = vmax.xlane.f32.xlu0 %v1158
    %v1160 = vpop.xlane.xlu0 %1159
    %v1161 = vsel %vm1115, %v1066, -inf
    %1162 = vmax.xlane.f32.xlu0 %v1161
    %v1163 = vpop.xlane.xlu0 %1162
    %v1164 = vsel %vm1115, %v1067, -inf
    %1165 = vmax.xlane.f32.xlu0 %v1164
    %v1166 = vpop.xlane.xlu0 %1165
    %v1167 = vsel %vm1115, %v1068, -inf
    %1168 = vmax.xlane.f32.xlu0 %v1167
    %v1169 = vpop.xlane.xlu0 %1168
    %v1170 = vsel %vm1115, %v1069, -inf
    %1171 = vmax.xlane.f32.xlu0 %v1170
    %v1172 = vpop.xlane.xlu0 %1171
    %v1173 = vsel %vm1115, %v1070, -inf
    %1174 = vmax.xlane.f32.xlu0 %v1173
    %v1175 = vpop.xlane.xlu0 %1174
    %v1176 = vsel %vm1115, %v1071, -inf
    %1177 = vmax.xlane.f32.xlu0 %v1176
    %v1178 = vpop.xlane.xlu0 %1177
    %v1179 = vsel %vm1115, %v1072, -inf
    %1180 = vmax.xlane.f32.xlu0 %v1179
    %v1181 = vpop.xlane.xlu0 %1180
    %v1182 = vsel %vm1115, %v1073, -inf
    %1183 = vmax.xlane.f32.xlu0 %v1182
    %v1184 = vpop.xlane.xlu0 %1183
    %v1185 = vsel %vm1115, %v1074, -inf
    %1186 = vmax.xlane.f32.xlu0 %v1185
    %v1187 = vpop.xlane.xlu0 %1186
    %v1188 = vsel %vm1115, %v1075, -inf
    %1189 = vmax.xlane.f32.xlu0 %v1188
    %v1190 = vpop.xlane.xlu0 %1189
    %v1191 = vsel %vm1115, %v1076, -inf
    %1192 = vmax.xlane.f32.xlu0 %v1191
    %v1193 = vpop.xlane.xlu0 %1192
    %v1194 = vsel %vm1115, %v1077, -inf
    %1195 = vmax.xlane.f32.xlu0 %v1194
    %v1196 = vpop.xlane.xlu0 %1195
    %v1197 = vsel %vm1115, %v1078, -inf
    %1198 = vmax.xlane.f32.xlu0 %v1197
    %v1199 = vpop.xlane.xlu0 %1198
    %v1200 = vsel %vm1115, %v1079, -inf
    %1201 = vmax.xlane.f32.xlu0 %v1200
    %v1202 = vpop.xlane.xlu0 %1201
    %v1203 = vsel %vm1115, %v1080, -inf
    %1204 = vmax.xlane.f32.xlu0 %v1203
    %v1205 = vpop.xlane.xlu0 %1204
    %v1206 = vsel %vm1115, %v1081, -inf
    %1207 = vmax.xlane.f32.xlu0 %v1206
    %v1208 = vpop.xlane.xlu0 %1207
    %v1209 = vsel %vm1115, %v1082, -inf
    %1210 = vmax.xlane.f32.xlu0 %v1209
    %v1211 = vpop.xlane.xlu0 %1210
    %v1212 = vsel %vm1115, %v1083, -inf
    %1213 = vmax.xlane.f32.xlu0 %v1212
    %v1214 = vpop.xlane.xlu0 %1213
    %v1215 = vsel %vm1115, %v1084, -inf
    %1216 = vmax.xlane.f32.xlu0 %v1215
    %v1217 = vpop.xlane.xlu0 %1216
    %v1218 = vsel %vm1115, %v1085, -inf
    %1219 = vmax.xlane.f32.xlu0 %v1218
    %v1220 = vpop.xlane.xlu0 %1219
    %v1221 = vsel %vm1115, %v1086, -inf
    %1222 = vmax.xlane.f32.xlu0 %v1221
    %v1223 = vpop.xlane.xlu0 %1222
    %v1224 = vsel %vm1115, %v1087, -inf
    %1225 = vmax.xlane.f32.xlu0 %v1224
    %v1226 = vpop.xlane.xlu0 %1225
    %v1227 = vsel %vm1115, %v1088, -inf
    %1228 = vmax.xlane.f32.xlu0 %v1227
    %v1229 = vpop.xlane.xlu0 %1228
    %v1230 = vsel %vm1115, %v1089, -inf
    %1231 = vmax.xlane.f32.xlu0 %v1230
    %v1232 = vpop.xlane.xlu0 %1231
    %v1233 = vsel %vm1115, %v1090, -inf
    %1234 = vmax.xlane.f32.xlu0 %v1233
    %v1235 = vpop.xlane.xlu0 %1234
    %v1236 = vsel %vm1115, %v1091, -inf
    %1237 = vmax.xlane.f32.xlu0 %v1236
    %v1238 = vpop.xlane.xlu0 %1237
    %v1239 = vsel %vm1115, %v1092, -inf
    %1240 = vmax.xlane.f32.xlu0 %v1239
    %v1241 = vpop.xlane.xlu0 %1240
    %v1242 = vsel %vm1115, %v1093, -inf
    %1243 = vmax.xlane.f32.xlu0 %v1242
    %v1244 = vpop.xlane.xlu0 %1243
    %v1245 = vsel %vm1115, %v1094, -inf
    %1246 = vmax.xlane.f32.xlu0 %v1245
    %v1247 = vpop.xlane.xlu0 %1246
    %v1248 = vsel %vm1115, %v1095, -inf
    %1249 = vmax.xlane.f32.xlu0 %v1248
    %v1250 = vpop.xlane.xlu0 %1249
    %v1251 = vsel %vm1115, %v1096, -inf
    %1252 = vmax.xlane.f32.xlu0 %v1251
    %v1253 = vpop.xlane.xlu0 %1252
    %v1254 = vsel %vm1115, %v1097, -inf
    %1255 = vmax.xlane.f32.xlu0 %v1254
    %v1256 = vpop.xlane.xlu0 %1255
    %v1257 = vsel %vm1115, %v1098, -inf
    %1258 = vmax.xlane.f32.xlu0 %v1257
    %v1259 = vpop.xlane.xlu0 %1258
    %v1260 = vsel %vm1115, %v1099, -inf
    %1261 = vmax.xlane.f32.xlu0 %v1260
    %v1262 = vpop.xlane.xlu0 %1261
    %v1263 = vsel %vm1115, %v1100, -inf
    %1264 = vmax.xlane.f32.xlu0 %v1263
    %v1265 = vpop.xlane.xlu0 %1264
    %v1266 = vsel %vm1115, %v1101, -inf
    %1267 = vmax.xlane.f32.xlu0 %v1266
    %v1268 = vpop.xlane.xlu0 %1267
    %v1269 = vsel %vm1115, %v1102, -inf
    %1270 = vmax.xlane.f32.xlu0 %v1269
    %v1271 = vpop.xlane.xlu0 %1270
    %v1272 = vsel %vm1115, %v1103, -inf
    %1273 = vmax.xlane.f32.xlu0 %v1272
    %v1274 = vpop.xlane.xlu0 %1273
    %v1275 = vsel %vm1115, %v1104, -inf
    %1276 = vmax.xlane.f32.xlu0 %v1275
    %v1277 = vpop.xlane.xlu0 %1276
    %v1278 = vsel %vm1115, %v1105, -inf
    %1279 = vmax.xlane.f32.xlu0 %v1278
    %v1280 = vpop.xlane.xlu0 %1279
    %v1281 = vsel %vm1115, %v1106, -inf
    %1282 = vmax.xlane.f32.xlu0 %v1281
    %v1283 = vpop.xlane.xlu0 %1282
    %v1284 = vsel %vm1115, %v1107, -inf
    %1285 = vmax.xlane.f32.xlu0 %v1284
    %v1286 = vpop.xlane.xlu0 %1285
    %v1287 = vsel %vm1115, %v1108, -inf
    %1288 = vmax.xlane.f32.xlu0 %v1287
    %v1289 = vpop.xlane.xlu0 %1288
    %v1290 = vsel %vm1115, %v1109, -inf
    %1291 = vmax.xlane.f32.xlu0 %v1290
    %v1292 = vpop.xlane.xlu0 %1291
    %v1293 = vsel %vm1115, %v1110, -inf
    %1294 = vmax.xlane.f32.xlu0 %v1293
    %v1295 = vpop.xlane.xlu0 %1294
    %v1296 = vsel %vm1115, %v1111, -inf
    %1297 = vmax.xlane.f32.xlu0 %v1296
    %v1298 = vpop.xlane.xlu0 %1297
    %v1299 = vsel %vm1115, %v1112, -inf
    %1300 = vmax.xlane.f32.xlu0 %v1299
    %v1301 = vpop.xlane.xlu0 %1300
    %v1302 = vsel %vm1115, %v1113, -inf
    %1303 = vmax.xlane.f32.xlu0 %v1302
    %v1304 = vpop.xlane.xlu0 %1303
    %v1305 = vsel %vm1115, %v1114, -inf
    %1306 = vmax.xlane.f32.xlu0 %v1305
    %v1307 = vpop.xlane.xlu0 %1306
    %v1308 = vmax.f32 %v1118, 0.0
    %v1309 = vmax.f32 %v1121, 0.0
    %v1310 = vmax.f32 %v1124, 0.0
    %v1311 = vmax.f32 %v1127, 0.0
    %v1312 = vmax.f32 %v1130, 0.0
    %v1313 = vmax.f32 %v1133, 0.0
    %v1314 = vmax.f32 %v1136, 0.0
    %v1315 = vmax.f32 %v1139, 0.0
    %v1316 = vmax.f32 %v1142, 0.0
    %v1317 = vmax.f32 %v1145, 0.0
    %v1318 = vmax.f32 %v1148, 0.0
    %v1319 = vmax.f32 %v1151, 0.0
    %v1320 = vmax.f32 %v1154, 0.0
    %v1321 = vmax.f32 %v1157, 0.0
    %v1322 = vmax.f32 %v1160, 0.0
    %v1323 = vmax.f32 %v1163, 0.0
    %v1324 = vmax.f32 %v1166, 0.0
    %v1325 = vmax.f32 %v1169, 0.0
    %v1326 = vmax.f32 %v1172, 0.0
    %v1327 = vmax.f32 %v1175, 0.0
    %v1328 = vmax.f32 %v1178, 0.0
    %v1329 = vmax.f32 %v1181, 0.0
    %v1330 = vmax.f32 %v1184, 0.0
    %v1331 = vmax.f32 %v1187, 0.0
    %v1332 = vmax.f32 %v1190, 0.0
    %v1333 = vmax.f32 %v1193, 0.0
    %v1334 = vmax.f32 %v1196, 0.0
    %v1335 = vmax.f32 %v1199, 0.0
    %v1336 = vmax.f32 %v1202, 0.0
    %v1337 = vmax.f32 %v1205, 0.0
    %v1338 = vmax.f32 %v1208, 0.0
    %v1339 = vmax.f32 %v1211, 0.0
    %v1340 = vmax.f32 %v1214, 0.0
    %v1341 = vmax.f32 %v1217, 0.0
    %v1342 = vmax.f32 %v1220, 0.0
    %v1343 = vmax.f32 %v1223, 0.0
    %v1344 = vmax.f32 %v1226, 0.0
    %v1345 = vmax.f32 %v1229, 0.0
    %v1346 = vmax.f32 %v1232, 0.0
    %v1347 = vmax.f32 %v1235, 0.0
    %v1348 = vmax.f32 %v1238, 0.0
    %v1349 = vmax.f32 %v1241, 0.0
    %v1350 = vmax.f32 %v1244, 0.0
    %v1351 = vmax.f32 %v1247, 0.0
    %v1352 = vmax.f32 %v1250, 0.0
    %v1353 = vmax.f32 %v1253, 0.0
    %v1354 = vmax.f32 %v1256, 0.0
    %v1355 = vmax.f32 %v1259, 0.0
    %v1356 = vmax.f32 %v1262, 0.0
    %v1357 = vmax.f32 %v1265, 0.0
    %v1358 = vmax.f32 %v1268, 0.0
    %v1359 = vmax.f32 %v1271, 0.0
    %v1360 = vmax.f32 %v1274, 0.0
    %v1361 = vmax.f32 %v1277, 0.0
    %v1362 = vmax.f32 %v1280, 0.0
    %v1363 = vmax.f32 %v1283, 0.0
    %v1364 = vmax.f32 %v1286, 0.0
    %v1365 = vmax.f32 %v1289, 0.0
    %v1366 = vmax.f32 %v1292, 0.0
    %v1367 = vmax.f32 %v1295, 0.0
    %v1368 = vmax.f32 %v1298, 0.0
    %v1369 = vmax.f32 %v1301, 0.0
    %v1370 = vmax.f32 %v1304, 0.0
    %v1371 = vmax.f32 %v1307, 0.0
    %1372 = vxpose.xlu0.b32.start [1/16] %v838, 128
    %1373 = vxpose.xlu0.b32.cont [2/16] 0.0, 128
    %1374 = vxpose.xlu0.b32.cont [3/16] 0.0, 128
    %1375 = vxpose.xlu0.b32.cont [4/16] 0.0, 128
    %1376 = vxpose.xlu0.b32.cont [5/16] 0.0, 128
    %1377 = vxpose.xlu0.b32.cont [6/16] 0.0, 128
    %1378 = vxpose.xlu0.b32.cont [7/16] 0.0, 128
    %1379 = vxpose.xlu0.b32.cont [8/16] 0.0, 128
    %1380 = vxpose.xlu0.b32.cont [9/16] 0.0, 128
    %1381 = vxpose.xlu0.b32.cont [10/16] 0.0, 128
    %1382 = vxpose.xlu0.b32.cont [11/16] 0.0, 128
    %1383 = vxpose.xlu0.b32.cont [12/16] 0.0, 128
    %1384 = vxpose.xlu0.b32.cont [13/16] 0.0, 128
    %1385 = vxpose.xlu0.b32.cont [14/16] 0.0, 128
    %1386 = vxpose.xlu0.b32.cont [15/16] 0.0, 128
    %1387 = vxpose.xlu0.b32.end [16/16] 0.0, 128
    %v1388 = vpop.trf.xlu0
    %v1389 = vpop.trf.xlu0
    %v1390 = vpop.trf.xlu0
    %v1391 = vpop.trf.xlu0
    %v1392 = vpop.trf.xlu0
    %v1393 = vpop.trf.xlu0
    %v1394 = vpop.trf.xlu0
    %v1395 = vpop.trf.xlu0
    %v1396 = vpop.trf.xlu0
    %v1397 = vpop.trf.xlu0
    %v1398 = vpop.trf.xlu0
    %v1399 = vpop.trf.xlu0
    %v1400 = vpop.trf.xlu0
    %v1401 = vpop.trf.xlu0
    %v1402 = vpop.trf.xlu0
    %v1403 = vpop.trf.xlu0
    %v1406 = vcombine.high %v458, %v458
    %v1408 = vunpack.c.l.s4 1966171168
    %v1409 = vunpack.c.0.s8 %v1408
    %v1410 = vlaneseq
    %v1411 = vshrl.u32 %v1410, 7
    %v1412 = vsub.s32 %v1409, %v1411
    %v1413 = vrot.slane %v458, %v1412
    %v1415 = vunpack.c.l.s4 1966171168
    %v1416 = vunpack.c.0.s8 %v1415
    %v1417 = vlaneseq
    %v1418 = vshrl.u32 %v1417, 7
    %v1419 = vsub.s32 %v1416, %v1418
    %v1420 = vrot.slane %v1406, %v1419
    %v1421 = vcombine.high %v1413, %v1413
    %v1422 = vcombine.high %v1420, %v1420
    %v1424 = vunpack.c.l.s4 1966171168
    %v1425 = vunpack.c.0.s8 %v1424
    %v1426 = vlaneseq
    %v1427 = vshrl.u32 %v1426, 7
    %v1428 = vsub.s32 %v1425, %v1427
    %v1429 = vrot.slane %v1413, %v1428
    %v1431 = vunpack.c.l.s4 1966171168
    %v1432 = vunpack.c.0.s8 %v1431
    %v1433 = vlaneseq
    %v1434 = vshrl.u32 %v1433, 7
    %v1435 = vsub.s32 %v1432, %v1434
    %v1436 = vrot.slane %v1420, %v1435
    %v1438 = vunpack.c.l.s4 1966171168
    %v1439 = vunpack.c.0.s8 %v1438
    %v1440 = vlaneseq
    %v1441 = vshrl.u32 %v1440, 7
    %v1442 = vsub.s32 %v1439, %v1441
    %v1443 = vrot.slane %v1421, %v1442
    %v1445 = vunpack.c.l.s4 1966171168
    %v1446 = vunpack.c.0.s8 %v1445
    %v1447 = vlaneseq
    %v1448 = vshrl.u32 %v1447, 7
    %v1449 = vsub.s32 %v1446, %v1448
    %v1450 = vrot.slane %v1422, %v1449
    %v1451 = vcombine.high %v1429, %v1429
    %v1452 = vcombine.high %v1436, %v1436
    %v1453 = vcombine.high %v1443, %v1443
    %v1454 = vcombine.high %v1450, %v1450
    %v1455 = vcombine.high %v459, %v459
    %v1457 = vunpack.c.l.s4 1966171168
    %v1458 = vunpack.c.0.s8 %v1457
    %v1459 = vlaneseq
    %v1460 = vshrl.u32 %v1459, 7
    %v1461 = vsub.s32 %v1458, %v1460
    %v1462 = vrot.slane %v459, %v1461
    %v1464 = vunpack.c.l.s4 1966171168
    %v1465 = vunpack.c.0.s8 %v1464
    %v1466 = vlaneseq
    %v1467 = vshrl.u32 %v1466, 7
    %v1468 = vsub.s32 %v1465, %v1467
    %v1469 = vrot.slane %v1455, %v1468
    %v1470 = vcombine.high %v1462, %v1462
    %v1471 = vcombine.high %v1469, %v1469
    %v1473 = vunpack.c.l.s4 1966171168
    %v1474 = vunpack.c.0.s8 %v1473
    %v1475 = vlaneseq
    %v1476 = vshrl.u32 %v1475, 7
    %v1477 = vsub.s32 %v1474, %v1476
    %v1478 = vrot.slane %v1462, %v1477
    %v1480 = vunpack.c.l.s4 1966171168
    %v1481 = vunpack.c.0.s8 %v1480
    %v1482 = vlaneseq
    %v1483 = vshrl.u32 %v1482, 7
    %v1484 = vsub.s32 %v1481, %v1483
    %v1485 = vrot.slane %v1469, %v1484
    %v1487 = vunpack.c.l.s4 1966171168
    %v1488 = vunpack.c.0.s8 %v1487
    %v1489 = vlaneseq
    %v1490 = vshrl.u32 %v1489, 7
    %v1491 = vsub.s32 %v1488, %v1490
    %v1492 = vrot.slane %v1470, %v1491
    %v1494 = vunpack.c.l.s4 1966171168
    %v1495 = vunpack.c.0.s8 %v1494
    %v1496 = vlaneseq
    %v1497 = vshrl.u32 %v1496, 7
    %v1498 = vsub.s32 %v1495, %v1497
    %v1499 = vrot.slane %v1471, %v1498
    %v1500 = vcombine.high %v1478, %v1478
    %v1501 = vcombine.high %v1485, %v1485
    %v1502 = vcombine.high %v1492, %v1492
    %v1503 = vcombine.high %v1499, %v1499
    %v1504 = vlaneseq
    %v1505 = vshrl.u32 %v1504, 7
    %v1506 = vsub.s32 0, %v1505
    %v1507 = vrot.slane %v1429, %v1506
    %v1508 = vlaneseq
    %v1509 = vshrl.u32 %v1508, 7
    %v1510 = vsub.s32 0, %v1509
    %v1511 = vrot.slane %v1443, %v1510
    %v1512 = vlaneseq
    %v1513 = vshrl.u32 %v1512, 7
    %v1514 = vsub.s32 0, %v1513
    %v1515 = vrot.slane %v1451, %v1514
    %v1516 = vlaneseq
    %v1517 = vshrl.u32 %v1516, 7
    %v1518 = vsub.s32 0, %v1517
    %v1519 = vrot.slane %v1453, %v1518
    %v1520 = vlaneseq
    %v1521 = vshrl.u32 %v1520, 7
    %v1522 = vsub.s32 0, %v1521
    %v1523 = vrot.slane %v1436, %v1522
    %v1524 = vlaneseq
    %v1525 = vshrl.u32 %v1524, 7
    %v1526 = vsub.s32 0, %v1525
    %v1527 = vrot.slane %v1450, %v1526
    %v1528 = vlaneseq
    %v1529 = vshrl.u32 %v1528, 7
    %v1530 = vsub.s32 0, %v1529
    %v1531 = vrot.slane %v1452, %v1530
    %v1532 = vlaneseq
    %v1533 = vshrl.u32 %v1532, 7
    %v1534 = vsub.s32 0, %v1533
    %v1535 = vrot.slane %v1454, %v1534
    %v1536 = vlaneseq
    %v1537 = vshrl.u32 %v1536, 7
    %v1538 = vsub.s32 0, %v1537
    %v1539 = vrot.slane %v1478, %v1538
    %v1540 = vlaneseq
    %v1541 = vshrl.u32 %v1540, 7
    %v1542 = vsub.s32 0, %v1541
    %v1543 = vrot.slane %v1492, %v1542
    %v1544 = vlaneseq
    %v1545 = vshrl.u32 %v1544, 7
    %v1546 = vsub.s32 0, %v1545
    %v1547 = vrot.slane %v1500, %v1546
    %v1548 = vlaneseq
    %v1549 = vshrl.u32 %v1548, 7
    %v1550 = vsub.s32 0, %v1549
    %v1551 = vrot.slane %v1502, %v1550
    %v1552 = vlaneseq
    %v1553 = vshrl.u32 %v1552, 7
    %v1554 = vsub.s32 0, %v1553
    %v1555 = vrot.slane %v1485, %v1554
    %v1556 = vlaneseq
    %v1557 = vshrl.u32 %v1556, 7
    %v1558 = vsub.s32 0, %v1557
    %v1559 = vrot.slane %v1499, %v1558
    %v1560 = vlaneseq
    %v1561 = vshrl.u32 %v1560, 7
    %v1562 = vsub.s32 0, %v1561
    %v1563 = vrot.slane %v1501, %v1562
    %v1564 = vlaneseq
    %v1565 = vshrl.u32 %v1564, 7
    %v1566 = vsub.s32 0, %v1565
    %v1567 = vrot.slane %v1503, %v1566
    %v1584 = vmul.f32 %v1507, %v1388
    %v1585 = vmul.f32 %v1507, %v1389
    %v1586 = vmul.f32 %v1507, %v1390
    %v1587 = vmul.f32 %v1507, %v1391
    %v1588 = vmul.f32 %v1511, %v1388
    %v1589 = vmul.f32 %v1511, %v1389
    %v1590 = vmul.f32 %v1511, %v1390
    %v1591 = vmul.f32 %v1511, %v1391
    %v1592 = vmul.f32 %v1515, %v1388
    %v1593 = vmul.f32 %v1515, %v1389
    %v1594 = vmul.f32 %v1515, %v1390
    %v1595 = vmul.f32 %v1515, %v1391
    %v1596 = vmul.f32 %v1519, %v1388
    %v1597 = vmul.f32 %v1519, %v1389
    %v1598 = vmul.f32 %v1519, %v1390
    %v1599 = vmul.f32 %v1519, %v1391
    %v1600 = vmul.f32 %v1523, %v1388
    %v1601 = vmul.f32 %v1523, %v1389
    %v1602 = vmul.f32 %v1523, %v1390
    %v1603 = vmul.f32 %v1523, %v1391
    %v1604 = vmul.f32 %v1527, %v1388
    %v1605 = vmul.f32 %v1527, %v1389
    %v1606 = vmul.f32 %v1527, %v1390
    %v1607 = vmul.f32 %v1527, %v1391
    %v1608 = vmul.f32 %v1531, %v1388
    %v1609 = vmul.f32 %v1531, %v1389
    %v1610 = vmul.f32 %v1531, %v1390
    %v1611 = vmul.f32 %v1531, %v1391
    %v1612 = vmul.f32 %v1535, %v1388
    %v1613 = vmul.f32 %v1535, %v1389
    %v1614 = vmul.f32 %v1535, %v1390
    %v1615 = vmul.f32 %v1535, %v1391
    %v1616 = vmul.f32 %v1539, %v1388
    %v1617 = vmul.f32 %v1539, %v1389
    %v1618 = vmul.f32 %v1539, %v1390
    %v1619 = vmul.f32 %v1539, %v1391
    %v1620 = vmul.f32 %v1543, %v1388
    %v1621 = vmul.f32 %v1543, %v1389
    %v1622 = vmul.f32 %v1543, %v1390
    %v1623 = vmul.f32 %v1543, %v1391
    %v1624 = vmul.f32 %v1547, %v1388
    %v1625 = vmul.f32 %v1547, %v1389
    %v1626 = vmul.f32 %v1547, %v1390
    %v1627 = vmul.f32 %v1547, %v1391
    %v1628 = vmul.f32 %v1551, %v1388
    %v1629 = vmul.f32 %v1551, %v1389
    %v1630 = vmul.f32 %v1551, %v1390
    %v1631 = vmul.f32 %v1551, %v1391
    %v1632 = vmul.f32 %v1555, %v1388
    %v1633 = vmul.f32 %v1555, %v1389
    %v1634 = vmul.f32 %v1555, %v1390
    %v1635 = vmul.f32 %v1555, %v1391
    %v1636 = vmul.f32 %v1559, %v1388
    %v1637 = vmul.f32 %v1559, %v1389
    %v1638 = vmul.f32 %v1559, %v1390
    %v1639 = vmul.f32 %v1559, %v1391
    %v1640 = vmul.f32 %v1563, %v1388
    %v1641 = vmul.f32 %v1563, %v1389
    %v1642 = vmul.f32 %v1563, %v1390
    %v1643 = vmul.f32 %v1563, %v1391
    %v1644 = vmul.f32 %v1567, %v1388
    %v1645 = vmul.f32 %v1567, %v1389
    %v1646 = vmul.f32 %v1567, %v1390
    %v1647 = vmul.f32 %v1567, %v1391
    %vm1648 = vcmask 64512
    %v1649 = vsel %vm1648, %v1584, -inf
    %1650 = vmax.xlane.f32.xlu0 %v1649
    %v1651 = vpop.xlane.xlu0 %1650
    %v1652 = vsel %vm1648, %v1585, -inf
    %1653 = vmax.xlane.f32.xlu0 %v1652
    %v1654 = vpop.xlane.xlu0 %1653
    %v1655 = vsel %vm1648, %v1586, -inf
    %1656 = vmax.xlane.f32.xlu0 %v1655
    %v1657 = vpop.xlane.xlu0 %1656
    %v1658 = vsel %vm1648, %v1587, -inf
    %1659 = vmax.xlane.f32.xlu0 %v1658
    %v1660 = vpop.xlane.xlu0 %1659
    %v1661 = vsel %vm1648, %v1588, -inf
    %1662 = vmax.xlane.f32.xlu0 %v1661
    %v1663 = vpop.xlane.xlu0 %1662
    %v1664 = vsel %vm1648, %v1589, -inf
    %1665 = vmax.xlane.f32.xlu0 %v1664
    %v1666 = vpop.xlane.xlu0 %1665
    %v1667 = vsel %vm1648, %v1590, -inf
    %1668 = vmax.xlane.f32.xlu0 %v1667
    %v1669 = vpop.xlane.xlu0 %1668
    %v1670 = vsel %vm1648, %v1591, -inf
    %1671 = vmax.xlane.f32.xlu0 %v1670
    %v1672 = vpop.xlane.xlu0 %1671
    %v1673 = vsel %vm1648, %v1592, -inf
    %1674 = vmax.xlane.f32.xlu0 %v1673
    %v1675 = vpop.xlane.xlu0 %1674
    %v1676 = vsel %vm1648, %v1593, -inf
    %1677 = vmax.xlane.f32.xlu0 %v1676
    %v1678 = vpop.xlane.xlu0 %1677
    %v1679 = vsel %vm1648, %v1594, -inf
    %1680 = vmax.xlane.f32.xlu0 %v1679
    %v1681 = vpop.xlane.xlu0 %1680
    %v1682 = vsel %vm1648, %v1595, -inf
    %1683 = vmax.xlane.f32.xlu0 %v1682
    %v1684 = vpop.xlane.xlu0 %1683
    %v1685 = vsel %vm1648, %v1596, -inf
    %1686 = vmax.xlane.f32.xlu0 %v1685
    %v1687 = vpop.xlane.xlu0 %1686
    %v1688 = vsel %vm1648, %v1597, -inf
    %1689 = vmax.xlane.f32.xlu0 %v1688
    %v1690 = vpop.xlane.xlu0 %1689
    %v1691 = vsel %vm1648, %v1598, -inf
    %1692 = vmax.xlane.f32.xlu0 %v1691
    %v1693 = vpop.xlane.xlu0 %1692
    %v1694 = vsel %vm1648, %v1599, -inf
    %1695 = vmax.xlane.f32.xlu0 %v1694
    %v1696 = vpop.xlane.xlu0 %1695
    %v1697 = vsel %vm1648, %v1600, -inf
    %1698 = vmax.xlane.f32.xlu0 %v1697
    %v1699 = vpop.xlane.xlu0 %1698
    %v1700 = vsel %vm1648, %v1601, -inf
    %1701 = vmax.xlane.f32.xlu0 %v1700
    %v1702 = vpop.xlane.xlu0 %1701
    %v1703 = vsel %vm1648, %v1602, -inf
    %1704 = vmax.xlane.f32.xlu0 %v1703
    %v1705 = vpop.xlane.xlu0 %1704
    %v1706 = vsel %vm1648, %v1603, -inf
    %1707 = vmax.xlane.f32.xlu0 %v1706
    %v1708 = vpop.xlane.xlu0 %1707
    %v1709 = vsel %vm1648, %v1604, -inf
    %1710 = vmax.xlane.f32.xlu0 %v1709
    %v1711 = vpop.xlane.xlu0 %1710
    %v1712 = vsel %vm1648, %v1605, -inf
    %1713 = vmax.xlane.f32.xlu0 %v1712
    %v1714 = vpop.xlane.xlu0 %1713
    %v1715 = vsel %vm1648, %v1606, -inf
    %1716 = vmax.xlane.f32.xlu0 %v1715
    %v1717 = vpop.xlane.xlu0 %1716
    %v1718 = vsel %vm1648, %v1607, -inf
    %1719 = vmax.xlane.f32.xlu0 %v1718
    %v1720 = vpop.xlane.xlu0 %1719
    %v1721 = vsel %vm1648, %v1608, -inf
    %1722 = vmax.xlane.f32.xlu0 %v1721
    %v1723 = vpop.xlane.xlu0 %1722
    %v1724 = vsel %vm1648, %v1609, -inf
    %1725 = vmax.xlane.f32.xlu0 %v1724
    %v1726 = vpop.xlane.xlu0 %1725
    %v1727 = vsel %vm1648, %v1610, -inf
    %1728 = vmax.xlane.f32.xlu0 %v1727
    %v1729 = vpop.xlane.xlu0 %1728
    %v1730 = vsel %vm1648, %v1611, -inf
    %1731 = vmax.xlane.f32.xlu0 %v1730
    %v1732 = vpop.xlane.xlu0 %1731
    %v1733 = vsel %vm1648, %v1612, -inf
    %1734 = vmax.xlane.f32.xlu0 %v1733
    %v1735 = vpop.xlane.xlu0 %1734
    %v1736 = vsel %vm1648, %v1613, -inf
    %1737 = vmax.xlane.f32.xlu0 %v1736
    %v1738 = vpop.xlane.xlu0 %1737
    %v1739 = vsel %vm1648, %v1614, -inf
    %1740 = vmax.xlane.f32.xlu0 %v1739
    %v1741 = vpop.xlane.xlu0 %1740
    %v1742 = vsel %vm1648, %v1615, -inf
    %1743 = vmax.xlane.f32.xlu0 %v1742
    %v1744 = vpop.xlane.xlu0 %1743
    %v1745 = vsel %vm1648, %v1616, -inf
    %1746 = vmax.xlane.f32.xlu0 %v1745
    %v1747 = vpop.xlane.xlu0 %1746
    %v1748 = vsel %vm1648, %v1617, -inf
    %1749 = vmax.xlane.f32.xlu0 %v1748
    %v1750 = vpop.xlane.xlu0 %1749
    %v1751 = vsel %vm1648, %v1618, -inf
    %1752 = vmax.xlane.f32.xlu0 %v1751
    %v1753 = vpop.xlane.xlu0 %1752
    %v1754 = vsel %vm1648, %v1619, -inf
    %1755 = vmax.xlane.f32.xlu0 %v1754
    %v1756 = vpop.xlane.xlu0 %1755
    %v1757 = vsel %vm1648, %v1620, -inf
    %1758 = vmax.xlane.f32.xlu0 %v1757
    %v1759 = vpop.xlane.xlu0 %1758
    %v1760 = vsel %vm1648, %v1621, -inf
    %1761 = vmax.xlane.f32.xlu0 %v1760
    %v1762 = vpop.xlane.xlu0 %1761
    %v1763 = vsel %vm1648, %v1622, -inf
    %1764 = vmax.xlane.f32.xlu0 %v1763
    %v1765 = vpop.xlane.xlu0 %1764
    %v1766 = vsel %vm1648, %v1623, -inf
    %1767 = vmax.xlane.f32.xlu0 %v1766
    %v1768 = vpop.xlane.xlu0 %1767
    %v1769 = vsel %vm1648, %v1624, -inf
    %1770 = vmax.xlane.f32.xlu0 %v1769
    %v1771 = vpop.xlane.xlu0 %1770
    %v1772 = vsel %vm1648, %v1625, -inf
    %1773 = vmax.xlane.f32.xlu0 %v1772
    %v1774 = vpop.xlane.xlu0 %1773
    %v1775 = vsel %vm1648, %v1626, -inf
    %1776 = vmax.xlane.f32.xlu0 %v1775
    %v1777 = vpop.xlane.xlu0 %1776
    %v1778 = vsel %vm1648, %v1627, -inf
    %1779 = vmax.xlane.f32.xlu0 %v1778
    %v1780 = vpop.xlane.xlu0 %1779
    %v1781 = vsel %vm1648, %v1628, -inf
    %1782 = vmax.xlane.f32.xlu0 %v1781
    %v1783 = vpop.xlane.xlu0 %1782
    %v1784 = vsel %vm1648, %v1629, -inf
    %1785 = vmax.xlane.f32.xlu0 %v1784
    %v1786 = vpop.xlane.xlu0 %1785
    %v1787 = vsel %vm1648, %v1630, -inf
    %1788 = vmax.xlane.f32.xlu0 %v1787
    %v1789 = vpop.xlane.xlu0 %1788
    %v1790 = vsel %vm1648, %v1631, -inf
    %1791 = vmax.xlane.f32.xlu0 %v1790
    %v1792 = vpop.xlane.xlu0 %1791
    %v1793 = vsel %vm1648, %v1632, -inf
    %1794 = vmax.xlane.f32.xlu0 %v1793
    %v1795 = vpop.xlane.xlu0 %1794
    %v1796 = vsel %vm1648, %v1633, -inf
    %1797 = vmax.xlane.f32.xlu0 %v1796
    %v1798 = vpop.xlane.xlu0 %1797
    %v1799 = vsel %vm1648, %v1634, -inf
    %1800 = vmax.xlane.f32.xlu0 %v1799
    %v1801 = vpop.xlane.xlu0 %1800
    %v1802 = vsel %vm1648, %v1635, -inf
    %1803 = vmax.xlane.f32.xlu0 %v1802
    %v1804 = vpop.xlane.xlu0 %1803
    %v1805 = vsel %vm1648, %v1636, -inf
    %1806 = vmax.xlane.f32.xlu0 %v1805
    %v1807 = vpop.xlane.xlu0 %1806
    %v1808 = vsel %vm1648, %v1637, -inf
    %1809 = vmax.xlane.f32.xlu0 %v1808
    %v1810 = vpop.xlane.xlu0 %1809
    %v1811 = vsel %vm1648, %v1638, -inf
    %1812 = vmax.xlane.f32.xlu0 %v1811
    %v1813 = vpop.xlane.xlu0 %1812
    %v1814 = vsel %vm1648, %v1639, -inf
    %1815 = vmax.xlane.f32.xlu0 %v1814
    %v1816 = vpop.xlane.xlu0 %1815
    %v1817 = vsel %vm1648, %v1640, -inf
    %1818 = vmax.xlane.f32.xlu0 %v1817
    %v1819 = vpop.xlane.xlu0 %1818
    %v1820 = vsel %vm1648, %v1641, -inf
    %1821 = vmax.xlane.f32.xlu0 %v1820
    %v1822 = vpop.xlane.xlu0 %1821
    %v1823 = vsel %vm1648, %v1642, -inf
    %1824 = vmax.xlane.f32.xlu0 %v1823
    %v1825 = vpop.xlane.xlu0 %1824
    %v1826 = vsel %vm1648, %v1643, -inf
    %1827 = vmax.xlane.f32.xlu0 %v1826
    %v1828 = vpop.xlane.xlu0 %1827
    %v1829 = vsel %vm1648, %v1644, -inf
    %1830 = vmax.xlane.f32.xlu0 %v1829
    %v1831 = vpop.xlane.xlu0 %1830
    %v1832 = vsel %vm1648, %v1645, -inf
    %1833 = vmax.xlane.f32.xlu0 %v1832
    %v1834 = vpop.xlane.xlu0 %1833
    %v1835 = vsel %vm1648, %v1646, -inf
    %1836 = vmax.xlane.f32.xlu0 %v1835
    %v1837 = vpop.xlane.xlu0 %1836
    %v1838 = vsel %vm1648, %v1647, -inf
    %1839 = vmax.xlane.f32.xlu0 %v1838
    %v1840 = vpop.xlane.xlu0 %1839
    %v1841 = vmax.f32 %v1651, 0.0
    %v1842 = vmax.f32 %v1654, 0.0
    %v1843 = vmax.f32 %v1657, 0.0
    %v1844 = vmax.f32 %v1660, 0.0
    %v1845 = vmax.f32 %v1663, 0.0
    %v1846 = vmax.f32 %v1666, 0.0
    %v1847 = vmax.f32 %v1669, 0.0
    %v1848 = vmax.f32 %v1672, 0.0
    %v1849 = vmax.f32 %v1675, 0.0
    %v1850 = vmax.f32 %v1678, 0.0
    %v1851 = vmax.f32 %v1681, 0.0
    %v1852 = vmax.f32 %v1684, 0.0
    %v1853 = vmax.f32 %v1687, 0.0
    %v1854 = vmax.f32 %v1690, 0.0
    %v1855 = vmax.f32 %v1693, 0.0
    %v1856 = vmax.f32 %v1696, 0.0
    %v1857 = vmax.f32 %v1699, 0.0
    %v1858 = vmax.f32 %v1702, 0.0
    %v1859 = vmax.f32 %v1705, 0.0
    %v1860 = vmax.f32 %v1708, 0.0
    %v1861 = vmax.f32 %v1711, 0.0
    %v1862 = vmax.f32 %v1714, 0.0
    %v1863 = vmax.f32 %v1717, 0.0
    %v1864 = vmax.f32 %v1720, 0.0
    %v1865 = vmax.f32 %v1723, 0.0
    %v1866 = vmax.f32 %v1726, 0.0
    %v1867 = vmax.f32 %v1729, 0.0
    %v1868 = vmax.f32 %v1732, 0.0
    %v1869 = vmax.f32 %v1735, 0.0
    %v1870 = vmax.f32 %v1738, 0.0
    %v1871 = vmax.f32 %v1741, 0.0
    %v1872 = vmax.f32 %v1744, 0.0
    %v1873 = vmax.f32 %v1747, 0.0
    %v1874 = vmax.f32 %v1750, 0.0
    %v1875 = vmax.f32 %v1753, 0.0
    %v1876 = vmax.f32 %v1756, 0.0
    %v1877 = vmax.f32 %v1759, 0.0
    %v1878 = vmax.f32 %v1762, 0.0
    %v1879 = vmax.f32 %v1765, 0.0
    %v1880 = vmax.f32 %v1768, 0.0
    %v1881 = vmax.f32 %v1771, 0.0
    %v1882 = vmax.f32 %v1774, 0.0
    %v1883 = vmax.f32 %v1777, 0.0
    %v1884 = vmax.f32 %v1780, 0.0
    %v1885 = vmax.f32 %v1783, 0.0
    %v1886 = vmax.f32 %v1786, 0.0
    %v1887 = vmax.f32 %v1789, 0.0
    %v1888 = vmax.f32 %v1792, 0.0
    %v1889 = vmax.f32 %v1795, 0.0
    %v1890 = vmax.f32 %v1798, 0.0
    %v1891 = vmax.f32 %v1801, 0.0
    %v1892 = vmax.f32 %v1804, 0.0
    %v1893 = vmax.f32 %v1807, 0.0
    %v1894 = vmax.f32 %v1810, 0.0
    %v1895 = vmax.f32 %v1813, 0.0
    %v1896 = vmax.f32 %v1816, 0.0
    %v1897 = vmax.f32 %v1819, 0.0
    %v1898 = vmax.f32 %v1822, 0.0
    %v1899 = vmax.f32 %v1825, 0.0
    %v1900 = vmax.f32 %v1828, 0.0
    %v1901 = vmax.f32 %v1831, 0.0
    %v1902 = vmax.f32 %v1834, 0.0
    %v1903 = vmax.f32 %v1837, 0.0
    %v1904 = vmax.f32 %v1840, 0.0
    %v1905 = vadd.f32 %v1308, %v1841
    %v1906 = vadd.f32 %v1309, %v1842
    %v1907 = vadd.f32 %v1310, %v1843
    %v1908 = vadd.f32 %v1311, %v1844
    %v1909 = vadd.f32 %v1312, %v1845
    %v1910 = vadd.f32 %v1313, %v1846
    %v1911 = vadd.f32 %v1314, %v1847
    %v1912 = vadd.f32 %v1315, %v1848
    %v1913 = vadd.f32 %v1316, %v1849
    %v1914 = vadd.f32 %v1317, %v1850
    %v1915 = vadd.f32 %v1318, %v1851
    %v1916 = vadd.f32 %v1319, %v1852
    %v1917 = vadd.f32 %v1320, %v1853
    %v1918 = vadd.f32 %v1321, %v1854
    %v1919 = vadd.f32 %v1322, %v1855
    %v1920 = vadd.f32 %v1323, %v1856
    %v1921 = vadd.f32 %v1324, %v1857
    %v1922 = vadd.f32 %v1325, %v1858
    %v1923 = vadd.f32 %v1326, %v1859
    %v1924 = vadd.f32 %v1327, %v1860
    %v1925 = vadd.f32 %v1328, %v1861
    %v1926 = vadd.f32 %v1329, %v1862
    %v1927 = vadd.f32 %v1330, %v1863
    %v1928 = vadd.f32 %v1331, %v1864
    %v1929 = vadd.f32 %v1332, %v1865
    %v1930 = vadd.f32 %v1333, %v1866
    %v1931 = vadd.f32 %v1334, %v1867
    %v1932 = vadd.f32 %v1335, %v1868
    %v1933 = vadd.f32 %v1336, %v1869
    %v1934 = vadd.f32 %v1337, %v1870
    %v1935 = vadd.f32 %v1338, %v1871
    %v1936 = vadd.f32 %v1339, %v1872
    %v1937 = vadd.f32 %v1340, %v1873
    %v1938 = vadd.f32 %v1341, %v1874
    %v1939 = vadd.f32 %v1342, %v1875
    %v1940 = vadd.f32 %v1343, %v1876
    %v1941 = vadd.f32 %v1344, %v1877
    %v1942 = vadd.f32 %v1345, %v1878
    %v1943 = vadd.f32 %v1346, %v1879
    %v1944 = vadd.f32 %v1347, %v1880
    %v1945 = vadd.f32 %v1348, %v1881
    %v1946 = vadd.f32 %v1349, %v1882
    %v1947 = vadd.f32 %v1350, %v1883
    %v1948 = vadd.f32 %v1351, %v1884
    %v1949 = vadd.f32 %v1352, %v1885
    %v1950 = vadd.f32 %v1353, %v1886
    %v1951 = vadd.f32 %v1354, %v1887
    %v1952 = vadd.f32 %v1355, %v1888
    %v1953 = vadd.f32 %v1356, %v1889
    %v1954 = vadd.f32 %v1357, %v1890
    %v1955 = vadd.f32 %v1358, %v1891
    %v1956 = vadd.f32 %v1359, %v1892
    %v1957 = vadd.f32 %v1360, %v1893
    %v1958 = vadd.f32 %v1361, %v1894
    %v1959 = vadd.f32 %v1362, %v1895
    %v1960 = vadd.f32 %v1363, %v1896
    %v1961 = vadd.f32 %v1364, %v1897
    %v1962 = vadd.f32 %v1365, %v1898
    %v1963 = vadd.f32 %v1366, %v1899
    %v1964 = vadd.f32 %v1367, %v1900
    %v1965 = vadd.f32 %v1368, %v1901
    %v1966 = vadd.f32 %v1369, %v1902
    %v1967 = vadd.f32 %v1370, %v1903
    %v1968 = vadd.f32 %v1371, %v1904
    %v1969 = vpack.c.bf16 %v690, %v689
    %v1971 = vlaneseq
    %v1972 = vshrl.u32 %v1971, 7
    %v1973 = vsub.s32 0, %v1972
    %v1974 = vrot.slane %v488, %v1973
    %v1980 = vunpack.c.l.b16 %v484
    %v1981 = vunpack.c.l.b16 %v485
    %v1982 = vunpack.c.l.b16 %v486
    %v1983 = vunpack.c.l.b16 %v487
    %v1984 = vpack.c.b16 %v1981, %v1980
    %v1985 = vpack.c.b16 %v1983, %v1982
    %v1989 = vsel %vm781, %v1969, 0
    %1991 = vmatprep.subr.bf16.mxu0 0
    %1992 = vmatpush1.bf16.msra.mxu0 %v1984
    %1993 = vmatprep.subr.bf16.mxu0 0
    %1994 = vmatpush1.bf16.msra.mxu0 %v1985
    %1995 = vmatprep.subr.bf16.mxu0 0
    %1996 = vmatpush1.bf16.msra.mxu0 0
    %1997 = vmatprep.subr.bf16.mxu0 0
    %1998 = vmatpush1.bf16.msra.mxu0 0
    %1999 = vmatprep.subr.bf16.mxu0 0
    %2000 = vmatpush1.bf16.msra.mxu0 0
    %2001 = vmatprep.subr.bf16.mxu0 0
    %2002 = vmatpush1.bf16.msra.mxu0 0
    %2003 = vmatprep.subr.bf16.mxu0 0
    %2004 = vmatpush1.bf16.msra.mxu0 0
    %2005 = vmatprep.subr.bf16.mxu0 0
    %2006 = vmatpush1.bf16.msra.mxu0 0
    %2007 = vmatprep.subr.bf16.mxu0 0
    %2008 = vmatpush1.bf16.msra.mxu0 0
    %2009 = vmatprep.subr.bf16.mxu0 0
    %2010 = vmatpush1.bf16.msra.mxu0 0
    %2011 = vmatprep.subr.bf16.mxu0 0
    %2012 = vmatpush1.bf16.msra.mxu0 0
    %2013 = vmatprep.subr.bf16.mxu0 0
    %2014 = vmatpush1.bf16.msra.mxu0 0
    %2015 = vmatprep.subr.bf16.mxu0 0
    %2016 = vmatpush1.bf16.msra.mxu0 0
    %2017 = vmatprep.subr.bf16.mxu0 0
    %2018 = vmatpush1.bf16.msra.mxu0 0
    %2019 = vmatprep.subr.bf16.mxu0 0
    %2020 = vmatpush1.bf16.msra.mxu0 0
    %2021 = vmatprep.subr.bf16.mxu0 0
    %2022 = vmatpush1.bf16.msra.mxu0 0
    %2023 = vmatprep.mubr.bf16.mxu0 0
    %2024 = vmatmul.mubr.bf16.gmra.mrb[0].mxu0 %v1989
    %v2025 = vpop.f32.mrb[0].mxu0
    %v2026 = vadd.f32 %v1974, %v2025
    %v2027 = vpop.f32.mrb[0].mxu0
    %v2028 = vpop.f32.mrb[0].mxu0
    %v2029 = vadd.f32 %v1974, %v2028
    %v2030 = vpop.f32.mrb[0].mxu0
    %2031 = vdwg.mxu0
    %v2032 = vmul.f32 %v2026, 2.0
    %v2033 = vmul.f32 %v2029, 2.0
    %v2034 = vpack.c.bf16 %v1906, %v1905
    %v2035 = vpack.c.bf16 %v1908, %v1907
    %v2036 = vpack.c.bf16 %v1910, %v1909
    %v2037 = vpack.c.bf16 %v1912, %v1911
    %v2038 = vpack.c.bf16 %v1914, %v1913
    %v2039 = vpack.c.bf16 %v1916, %v1915
    %v2040 = vpack.c.bf16 %v1918, %v1917
    %v2041 = vpack.c.bf16 %v1920, %v1919
    %v2042 = vpack.c.bf16 %v1922, %v1921
    %v2043 = vpack.c.bf16 %v1924, %v1923
    %v2044 = vpack.c.bf16 %v1926, %v1925
    %v2045 = vpack.c.bf16 %v1928, %v1927
    %v2046 = vpack.c.bf16 %v1930, %v1929
    %v2047 = vpack.c.bf16 %v1932, %v1931
    %v2048 = vpack.c.bf16 %v1934, %v1933
    %v2049 = vpack.c.bf16 %v1936, %v1935
    %v2050 = vpack.c.bf16 %v1938, %v1937
    %v2051 = vpack.c.bf16 %v1940, %v1939
    %v2052 = vpack.c.bf16 %v1942, %v1941
    %v2053 = vpack.c.bf16 %v1944, %v1943
    %v2054 = vpack.c.bf16 %v1946, %v1945
    %v2055 = vpack.c.bf16 %v1948, %v1947
    %v2056 = vpack.c.bf16 %v1950, %v1949
    %v2057 = vpack.c.bf16 %v1952, %v1951
    %v2058 = vpack.c.bf16 %v1954, %v1953
    %v2059 = vpack.c.bf16 %v1956, %v1955
    %v2060 = vpack.c.bf16 %v1958, %v1957
    %v2061 = vpack.c.bf16 %v1960, %v1959
    %v2062 = vpack.c.bf16 %v1962, %v1961
    %v2063 = vpack.c.bf16 %v1964, %v1963
    %v2064 = vpack.c.bf16 %v1966, %v1965
    %v2065 = vpack.c.bf16 %v1968, %v1967
    %v2098 = vunpack.c.l.b16 %v2034
    %v2099 = vunpack.c.h.b16 %v2034
    %v2100 = vunpack.c.l.b16 %v2035
    %v2101 = vunpack.c.h.b16 %v2035
    %v2102 = vunpack.c.l.b16 %v2036
    %v2103 = vunpack.c.h.b16 %v2036
    %v2104 = vunpack.c.l.b16 %v2037
    %v2105 = vunpack.c.h.b16 %v2037
    %v2106 = vunpack.c.l.b16 %v2038
    %v2107 = vunpack.c.h.b16 %v2038
    %v2108 = vunpack.c.l.b16 %v2039
    %v2109 = vunpack.c.h.b16 %v2039
    %v2110 = vunpack.c.l.b16 %v2040
    %v2111 = vunpack.c.h.b16 %v2040
    %v2112 = vunpack.c.l.b16 %v2041
    %v2113 = vunpack.c.h.b16 %v2041
    %v2114 = vunpack.c.l.b16 %v2042
    %v2115 = vunpack.c.h.b16 %v2042
    %v2116 = vunpack.c.l.b16 %v2043
    %v2117 = vunpack.c.h.b16 %v2043
    %v2118 = vunpack.c.l.b16 %v2044
    %v2119 = vunpack.c.h.b16 %v2044
    %v2120 = vunpack.c.l.b16 %v2045
    %v2121 = vunpack.c.h.b16 %v2045
    %v2122 = vunpack.c.l.b16 %v2046
    %v2123 = vunpack.c.h.b16 %v2046
    %v2124 = vunpack.c.l.b16 %v2047
    %v2125 = vunpack.c.h.b16 %v2047
    %v2126 = vunpack.c.l.b16 %v2048
    %v2127 = vunpack.c.h.b16 %v2048
    %v2128 = vunpack.c.l.b16 %v2049
    %v2129 = vunpack.c.h.b16 %v2049
    %v2130 = vunpack.c.l.b16 %v2050
    %v2131 = vunpack.c.h.b16 %v2050
    %v2132 = vunpack.c.l.b16 %v2051
    %v2133 = vunpack.c.h.b16 %v2051
    %v2134 = vunpack.c.l.b16 %v2052
    %v2135 = vunpack.c.h.b16 %v2052
    %v2136 = vunpack.c.l.b16 %v2053
    %v2137 = vunpack.c.h.b16 %v2053
    %v2138 = vunpack.c.l.b16 %v2054
    %v2139 = vunpack.c.h.b16 %v2054
    %v2140 = vunpack.c.l.b16 %v2055
    %v2141 = vunpack.c.h.b16 %v2055
    %v2142 = vunpack.c.l.b16 %v2056
    %v2143 = vunpack.c.h.b16 %v2056
    %v2144 = vunpack.c.l.b16 %v2057
    %v2145 = vunpack.c.h.b16 %v2057
    %v2146 = vunpack.c.l.b16 %v2058
    %v2147 = vunpack.c.h.b16 %v2058
    %v2148 = vunpack.c.l.b16 %v2059
    %v2149 = vunpack.c.h.b16 %v2059
    %v2150 = vunpack.c.l.b16 %v2060
    %v2151 = vunpack.c.h.b16 %v2060
    %v2152 = vunpack.c.l.b16 %v2061
    %v2153 = vunpack.c.h.b16 %v2061
    %v2154 = vunpack.c.l.b16 %v2062
    %v2155 = vunpack.c.h.b16 %v2062
    %v2156 = vunpack.c.l.b16 %v2063
    %v2157 = vunpack.c.h.b16 %v2063
    %v2158 = vunpack.c.l.b16 %v2064
    %v2159 = vunpack.c.h.b16 %v2064
    %v2160 = vunpack.c.l.b16 %v2065
    %v2161 = vunpack.c.h.b16 %v2065
    %v2162 = vlaneseq
    %v2163 = vand.u32 %v2162, 127
    %v2164 = vlaneseq
    %v2165 = vshrl.u32 %v2164, 7
    %v2166 = vsub.s32 %v2163, %v2165
    %v2167 = vrot.slane %v2098, %v2166
    %v2168 = vadd.s32 %v2163, 4294967288
    %v2169 = vlaneseq
    %v2170 = vshrl.u32 %v2169, 7
    %v2171 = vsub.s32 %v2168, %v2170
    %v2172 = vrot.slane %v2099, %v2171
    %vm2173 = vcmask 130112
    %v2174 = vsel %vm2173, %v2172, %v2167
    %v2175 = vadd.s32 %v2163, 4294967280
    %v2176 = vlaneseq
    %v2177 = vshrl.u32 %v2176, 7
    %v2178 = vsub.s32 %v2175, %v2177
    %v2179 = vrot.slane %v2100, %v2178
    %vm2180 = vcmask 195712
    %v2181 = vsel %vm2180, %v2179, %v2174
    %v2182 = vadd.s32 %v2163, 4294967272
    %v2183 = vlaneseq
    %v2184 = vshrl.u32 %v2183, 7
    %v2185 = vsub.s32 %v2182, %v2184
    %v2186 = vrot.slane %v2101, %v2185
    %vm2187 = vcmask 261312
    %v2188 = vsel %vm2187, %v2186, %v2181
    %v2189 = vlaneseq
    %v2190 = vshrl.u32 %v2189, 7
    %v2191 = vsub.s32 %v2163, %v2190
    %v2192 = vrot.slane %v2102, %v2191
    %v2193 = vlaneseq
    %v2194 = vshrl.u32 %v2193, 7
    %v2195 = vsub.s32 %v2168, %v2194
    %v2196 = vrot.slane %v2103, %v2195
    %v2197 = vsel %vm2173, %v2196, %v2192
    %v2198 = vlaneseq
    %v2199 = vshrl.u32 %v2198, 7
    %v2200 = vsub.s32 %v2175, %v2199
    %v2201 = vrot.slane %v2104, %v2200
    %v2202 = vsel %vm2180, %v2201, %v2197
    %v2203 = vlaneseq
    %v2204 = vshrl.u32 %v2203, 7
    %v2205 = vsub.s32 %v2182, %v2204
    %v2206 = vrot.slane %v2105, %v2205
    %v2207 = vsel %vm2187, %v2206, %v2202
    %v2208 = vlaneseq
    %v2209 = vshrl.u32 %v2208, 7
    %v2210 = vsub.s32 %v2163, %v2209
    %v2211 = vrot.slane %v2106, %v2210
    %v2212 = vlaneseq
    %v2213 = vshrl.u32 %v2212, 7
    %v2214 = vsub.s32 %v2168, %v2213
    %v2215 = vrot.slane %v2107, %v2214
    %v2216 = vsel %vm2173, %v2215, %v2211
    %v2217 = vlaneseq
    %v2218 = vshrl.u32 %v2217, 7
    %v2219 = vsub.s32 %v2175, %v2218
    %v2220 = vrot.slane %v2108, %v2219
    %v2221 = vsel %vm2180, %v2220, %v2216
    %v2222 = vlaneseq
    %v2223 = vshrl.u32 %v2222, 7
    %v2224 = vsub.s32 %v2182, %v2223
    %v2225 = vrot.slane %v2109, %v2224
    %v2226 = vsel %vm2187, %v2225, %v2221
    %v2227 = vlaneseq
    %v2228 = vshrl.u32 %v2227, 7
    %v2229 = vsub.s32 %v2163, %v2228
    %v2230 = vrot.slane %v2110, %v2229
    %v2231 = vlaneseq
    %v2232 = vshrl.u32 %v2231, 7
    %v2233 = vsub.s32 %v2168, %v2232
    %v2234 = vrot.slane %v2111, %v2233
    %v2235 = vsel %vm2173, %v2234, %v2230
    %v2236 = vlaneseq
    %v2237 = vshrl.u32 %v2236, 7
    %v2238 = vsub.s32 %v2175, %v2237
    %v2239 = vrot.slane %v2112, %v2238
    %v2240 = vsel %vm2180, %v2239, %v2235
    %v2241 = vlaneseq
    %v2242 = vshrl.u32 %v2241, 7
    %v2243 = vsub.s32 %v2182, %v2242
    %v2244 = vrot.slane %v2113, %v2243
    %v2245 = vsel %vm2187, %v2244, %v2240
    %v2246 = vlaneseq
    %v2247 = vshrl.u32 %v2246, 7
    %v2248 = vsub.s32 %v2163, %v2247
    %v2249 = vrot.slane %v2114, %v2248
    %v2250 = vlaneseq
    %v2251 = vshrl.u32 %v2250, 7
    %v2252 = vsub.s32 %v2168, %v2251
    %v2253 = vrot.slane %v2115, %v2252
    %v2254 = vsel %vm2173, %v2253, %v2249
    %v2255 = vlaneseq
    %v2256 = vshrl.u32 %v2255, 7
    %v2257 = vsub.s32 %v2175, %v2256
    %v2258 = vrot.slane %v2116, %v2257
    %v2259 = vsel %vm2180, %v2258, %v2254
    %v2260 = vlaneseq
    %v2261 = vshrl.u32 %v2260, 7
    %v2262 = vsub.s32 %v2182, %v2261
    %v2263 = vrot.slane %v2117, %v2262
    %v2264 = vsel %vm2187, %v2263, %v2259
    %v2265 = vlaneseq
    %v2266 = vshrl.u32 %v2265, 7
    %v2267 = vsub.s32 %v2163, %v2266
    %v2268 = vrot.slane %v2118, %v2267
    %v2269 = vlaneseq
    %v2270 = vshrl.u32 %v2269, 7
    %v2271 = vsub.s32 %v2168, %v2270
    %v2272 = vrot.slane %v2119, %v2271
    %v2273 = vsel %vm2173, %v2272, %v2268
    %v2274 = vlaneseq
    %v2275 = vshrl.u32 %v2274, 7
    %v2276 = vsub.s32 %v2175, %v2275
    %v2277 = vrot.slane %v2120, %v2276
    %v2278 = vsel %vm2180, %v2277, %v2273
    %v2279 = vlaneseq
    %v2280 = vshrl.u32 %v2279, 7
    %v2281 = vsub.s32 %v2182, %v2280
    %v2282 = vrot.slane %v2121, %v2281
    %v2283 = vsel %vm2187, %v2282, %v2278
    %v2284 = vlaneseq
    %v2285 = vshrl.u32 %v2284, 7
    %v2286 = vsub.s32 %v2163, %v2285
    %v2287 = vrot.slane %v2122, %v2286
    %v2288 = vlaneseq
    %v2289 = vshrl.u32 %v2288, 7
    %v2290 = vsub.s32 %v2168, %v2289
    %v2291 = vrot.slane %v2123, %v2290
    %v2292 = vsel %vm2173, %v2291, %v2287
    %v2293 = vlaneseq
    %v2294 = vshrl.u32 %v2293, 7
    %v2295 = vsub.s32 %v2175, %v2294
    %v2296 = vrot.slane %v2124, %v2295
    %v2297 = vsel %vm2180, %v2296, %v2292
    %v2298 = vlaneseq
    %v2299 = vshrl.u32 %v2298, 7
    %v2300 = vsub.s32 %v2182, %v2299
    %v2301 = vrot.slane %v2125, %v2300
    %v2302 = vsel %vm2187, %v2301, %v2297
    %v2303 = vlaneseq
    %v2304 = vshrl.u32 %v2303, 7
    %v2305 = vsub.s32 %v2163, %v2304
    %v2306 = vrot.slane %v2126, %v2305
    %v2307 = vlaneseq
    %v2308 = vshrl.u32 %v2307, 7
    %v2309 = vsub.s32 %v2168, %v2308
    %v2310 = vrot.slane %v2127, %v2309
    %v2311 = vsel %vm2173, %v2310, %v2306
    %v2312 = vlaneseq
    %v2313 = vshrl.u32 %v2312, 7
    %v2314 = vsub.s32 %v2175, %v2313
    %v2315 = vrot.slane %v2128, %v2314
    %v2316 = vsel %vm2180, %v2315, %v2311
    %v2317 = vlaneseq
    %v2318 = vshrl.u32 %v2317, 7
    %v2319 = vsub.s32 %v2182, %v2318
    %v2320 = vrot.slane %v2129, %v2319
    %v2321 = vsel %vm2187, %v2320, %v2316
    %v2322 = vlaneseq
    %v2323 = vshrl.u32 %v2322, 7
    %v2324 = vsub.s32 %v2163, %v2323
    %v2325 = vrot.slane %v2130, %v2324
    %v2326 = vlaneseq
    %v2327 = vshrl.u32 %v2326, 7
    %v2328 = vsub.s32 %v2168, %v2327
    %v2329 = vrot.slane %v2131, %v2328
    %v2330 = vsel %vm2173, %v2329, %v2325
    %v2331 = vlaneseq
    %v2332 = vshrl.u32 %v2331, 7
    %v2333 = vsub.s32 %v2175, %v2332
    %v2334 = vrot.slane %v2132, %v2333
    %v2335 = vsel %vm2180, %v2334, %v2330
    %v2336 = vlaneseq
    %v2337 = vshrl.u32 %v2336, 7
    %v2338 = vsub.s32 %v2182, %v2337
    %v2339 = vrot.slane %v2133, %v2338
    %v2340 = vsel %vm2187, %v2339, %v2335
    %v2341 = vlaneseq
    %v2342 = vshrl.u32 %v2341, 7
    %v2343 = vsub.s32 %v2163, %v2342
    %v2344 = vrot.slane %v2134, %v2343
    %v2345 = vlaneseq
    %v2346 = vshrl.u32 %v2345, 7
    %v2347 = vsub.s32 %v2168, %v2346
    %v2348 = vrot.slane %v2135, %v2347
    %v2349 = vsel %vm2173, %v2348, %v2344
    %v2350 = vlaneseq
    %v2351 = vshrl.u32 %v2350, 7
    %v2352 = vsub.s32 %v2175, %v2351
    %v2353 = vrot.slane %v2136, %v2352
    %v2354 = vsel %vm2180, %v2353, %v2349
    %v2355 = vlaneseq
    %v2356 = vshrl.u32 %v2355, 7
    %v2357 = vsub.s32 %v2182, %v2356
    %v2358 = vrot.slane %v2137, %v2357
    %v2359 = vsel %vm2187, %v2358, %v2354
    %v2360 = vlaneseq
    %v2361 = vshrl.u32 %v2360, 7
    %v2362 = vsub.s32 %v2163, %v2361
    %v2363 = vrot.slane %v2138, %v2362
    %v2364 = vlaneseq
    %v2365 = vshrl.u32 %v2364, 7
    %v2366 = vsub.s32 %v2168, %v2365
    %v2367 = vrot.slane %v2139, %v2366
    %v2368 = vsel %vm2173, %v2367, %v2363
    %v2369 = vlaneseq
    %v2370 = vshrl.u32 %v2369, 7
    %v2371 = vsub.s32 %v2175, %v2370
    %v2372 = vrot.slane %v2140, %v2371
    %v2373 = vsel %vm2180, %v2372, %v2368
    %v2374 = vlaneseq
    %v2375 = vshrl.u32 %v2374, 7
    %v2376 = vsub.s32 %v2182, %v2375
    %v2377 = vrot.slane %v2141, %v2376
    %v2378 = vsel %vm2187, %v2377, %v2373
    %v2379 = vlaneseq
    %v2380 = vshrl.u32 %v2379, 7
    %v2381 = vsub.s32 %v2163, %v2380
    %v2382 = vrot.slane %v2142, %v2381
    %v2383 = vlaneseq
    %v2384 = vshrl.u32 %v2383, 7
    %v2385 = vsub.s32 %v2168, %v2384
    %v2386 = vrot.slane %v2143, %v2385
    %v2387 = vsel %vm2173, %v2386, %v2382
    %v2388 = vlaneseq
    %v2389 = vshrl.u32 %v2388, 7
    %v2390 = vsub.s32 %v2175, %v2389
    %v2391 = vrot.slane %v2144, %v2390
    %v2392 = vsel %vm2180, %v2391, %v2387
    %v2393 = vlaneseq
    %v2394 = vshrl.u32 %v2393, 7
    %v2395 = vsub.s32 %v2182, %v2394
    %v2396 = vrot.slane %v2145, %v2395
    %v2397 = vsel %vm2187, %v2396, %v2392
    %v2398 = vlaneseq
    %v2399 = vshrl.u32 %v2398, 7
    %v2400 = vsub.s32 %v2163, %v2399
    %v2401 = vrot.slane %v2146, %v2400
    %v2402 = vlaneseq
    %v2403 = vshrl.u32 %v2402, 7
    %v2404 = vsub.s32 %v2168, %v2403
    %v2405 = vrot.slane %v2147, %v2404
    %v2406 = vsel %vm2173, %v2405, %v2401
    %v2407 = vlaneseq
    %v2408 = vshrl.u32 %v2407, 7
    %v2409 = vsub.s32 %v2175, %v2408
    %v2410 = vrot.slane %v2148, %v2409
    %v2411 = vsel %vm2180, %v2410, %v2406
    %v2412 = vlaneseq
    %v2413 = vshrl.u32 %v2412, 7
    %v2414 = vsub.s32 %v2182, %v2413
    %v2415 = vrot.slane %v2149, %v2414
    %v2416 = vsel %vm2187, %v2415, %v2411
    %v2417 = vlaneseq
    %v2418 = vshrl.u32 %v2417, 7
    %v2419 = vsub.s32 %v2163, %v2418
    %v2420 = vrot.slane %v2150, %v2419
    %v2421 = vlaneseq
    %v2422 = vshrl.u32 %v2421, 7
    %v2423 = vsub.s32 %v2168, %v2422
    %v2424 = vrot.slane %v2151, %v2423
    %v2425 = vsel %vm2173, %v2424, %v2420
    %v2426 = vlaneseq
    %v2427 = vshrl.u32 %v2426, 7
    %v2428 = vsub.s32 %v2175, %v2427
    %v2429 = vrot.slane %v2152, %v2428
    %v2430 = vsel %vm2180, %v2429, %v2425
    %v2431 = vlaneseq
    %v2432 = vshrl.u32 %v2431, 7
    %v2433 = vsub.s32 %v2182, %v2432
    %v2434 = vrot.slane %v2153, %v2433
    %v2435 = vsel %vm2187, %v2434, %v2430
    %v2436 = vlaneseq
    %v2437 = vshrl.u32 %v2436, 7
    %v2438 = vsub.s32 %v2163, %v2437
    %v2439 = vrot.slane %v2154, %v2438
    %v2440 = vlaneseq
    %v2441 = vshrl.u32 %v2440, 7
    %v2442 = vsub.s32 %v2168, %v2441
    %v2443 = vrot.slane %v2155, %v2442
    %v2444 = vsel %vm2173, %v2443, %v2439
    %v2445 = vlaneseq
    %v2446 = vshrl.u32 %v2445, 7
    %v2447 = vsub.s32 %v2175, %v2446
    %v2448 = vrot.slane %v2156, %v2447
    %v2449 = vsel %vm2180, %v2448, %v2444
    %v2450 = vlaneseq
    %v2451 = vshrl.u32 %v2450, 7
    %v2452 = vsub.s32 %v2182, %v2451
    %v2453 = vrot.slane %v2157, %v2452
    %v2454 = vsel %vm2187, %v2453, %v2449
    %v2455 = vlaneseq
    %v2456 = vshrl.u32 %v2455, 7
    %v2457 = vsub.s32 %v2163, %v2456
    %v2458 = vrot.slane %v2158, %v2457
    %v2459 = vlaneseq
    %v2460 = vshrl.u32 %v2459, 7
    %v2461 = vsub.s32 %v2168, %v2460
    %v2462 = vrot.slane %v2159, %v2461
    %v2463 = vsel %vm2173, %v2462, %v2458
    %v2464 = vlaneseq
    %v2465 = vshrl.u32 %v2464, 7
    %v2466 = vsub.s32 %v2175, %v2465
    %v2467 = vrot.slane %v2160, %v2466
    %v2468 = vsel %vm2180, %v2467, %v2463
    %v2469 = vlaneseq
    %v2470 = vshrl.u32 %v2469, 7
    %v2471 = vsub.s32 %v2182, %v2470
    %v2472 = vrot.slane %v2161, %v2471
    %v2473 = vsel %vm2187, %v2472, %v2468
    %vm2474 = vcmask 1041409
    %v2475 = vsel %vm2474, %v2207, %v2188
    %vm2476 = vcmask 1042434
    %v2477 = vsel %vm2476, %v2226, %v2475
    %vm2478 = vcmask 1043459
    %v2479 = vsel %vm2478, %v2245, %v2477
    %vm2480 = vcmask 1044484
    %v2481 = vsel %vm2480, %v2264, %v2479
    %vm2482 = vcmask 1045509
    %v2483 = vsel %vm2482, %v2283, %v2481
    %vm2484 = vcmask 1046534
    %v2485 = vsel %vm2484, %v2302, %v2483
    %vm2486 = vcmask 1047559
    %v2487 = vsel %vm2486, %v2321, %v2485
    %v2488 = vsel %vm2474, %v2359, %v2340
    %v2489 = vsel %vm2476, %v2378, %v2488
    %v2490 = vsel %vm2478, %v2397, %v2489
    %v2491 = vsel %vm2480, %v2416, %v2490
    %v2492 = vsel %vm2482, %v2435, %v2491
    %v2493 = vsel %vm2484, %v2454, %v2492
    %v2494 = vsel %vm2486, %v2473, %v2493
    %v2495 = vpack.c.b16 %v2494, %v2487
    %v2500 = vunpack.c.l.b16 %v480
    %v2501 = vunpack.c.l.b16 %v481
    %v2502 = vunpack.c.l.b16 %v482
    %v2503 = vunpack.c.l.b16 %v483
    %v2504 = vpack.c.b16 %v2501, %v2500
    %v2505 = vpack.c.b16 %v2503, %v2502
    %v2509 = vsel %vm781, %v2495, 0
    %2511 = vmatprep.subr.bf16.mxu0 0
    %2512 = vmatpush1.bf16.msra.mxu0 %v2504
    %2513 = vmatprep.subr.bf16.mxu0 0
    %2514 = vmatpush1.bf16.msra.mxu0 %v2505
    %2515 = vmatprep.subr.bf16.mxu0 0
    %2516 = vmatpush1.bf16.msra.mxu0 0
    %2517 = vmatprep.subr.bf16.mxu0 0
    %2518 = vmatpush1.bf16.msra.mxu0 0
    %2519 = vmatprep.subr.bf16.mxu0 0
    %2520 = vmatpush1.bf16.msra.mxu0 0
    %2521 = vmatprep.subr.bf16.mxu0 0
    %2522 = vmatpush1.bf16.msra.mxu0 0
    %2523 = vmatprep.subr.bf16.mxu0 0
    %2524 = vmatpush1.bf16.msra.mxu0 0
    %2525 = vmatprep.subr.bf16.mxu0 0
    %2526 = vmatpush1.bf16.msra.mxu0 0
    %2527 = vmatprep.subr.bf16.mxu0 0
    %2528 = vmatpush1.bf16.msra.mxu0 0
    %2529 = vmatprep.subr.bf16.mxu0 0
    %2530 = vmatpush1.bf16.msra.mxu0 0
    %2531 = vmatprep.subr.bf16.mxu0 0
    %2532 = vmatpush1.bf16.msra.mxu0 0
    %2533 = vmatprep.subr.bf16.mxu0 0
    %2534 = vmatpush1.bf16.msra.mxu0 0
    %2535 = vmatprep.subr.bf16.mxu0 0
    %2536 = vmatpush1.bf16.msra.mxu0 0
    %2537 = vmatprep.subr.bf16.mxu0 0
    %2538 = vmatpush1.bf16.msra.mxu0 0
    %2539 = vmatprep.subr.bf16.mxu0 0
    %2540 = vmatpush1.bf16.msra.mxu0 0
    %2541 = vmatprep.subr.bf16.mxu0 0
    %2542 = vmatpush1.bf16.msra.mxu0 0
    %2543 = vmatprep.mubr.bf16.mxu0 0
    %2544 = vmatmul.mubr.bf16.gmra.mrb[0].mxu0 %v2509
    %v2545 = vpop.f32.mrb[0].mxu0
    %v2546 = vadd.f32 0.0, %v2545
    %v2547 = vpop.f32.mrb[0].mxu0
    %v2548 = vpop.f32.mrb[0].mxu0
    %v2549 = vadd.f32 0.0, %v2548
    %v2550 = vpop.f32.mrb[0].mxu0
    %2551 = vdwg.mxu0
    %v2552 = vadd.f32 %v2032, %v2546
    %v2553 = vadd.f32 %v2033, %v2549
    %v2554 = vmax.f32 %v2552, 0.0
    %v2555 = vmax.f32 %v2553, 0.0
    %v2557 = vlaneseq
    %v2558 = vshrl.u32 %v2557, 7
    %v2559 = vsub.s32 0, %v2558
    %v2560 = vrot.slane %v507, %v2559
    %v2566 = vunpack.c.l.b16 %v503
    %v2567 = vunpack.c.l.b16 %v504
    %v2568 = vunpack.c.l.b16 %v505
    %v2569 = vunpack.c.l.b16 %v506
    %v2570 = vpack.c.b16 %v2567, %v2566
    %v2571 = vpack.c.b16 %v2569, %v2568
    %2574 = vmatprep.subr.bf16.mxu0 0
    %2575 = vmatpush1.bf16.msra.mxu0 %v2570
    %2576 = vmatprep.subr.bf16.mxu0 0
    %2577 = vmatpush1.bf16.msra.mxu0 %v2571
    %2578 = vmatprep.subr.bf16.mxu0 0
    %2579 = vmatpush1.bf16.msra.mxu0 0
    %2580 = vmatprep.subr.bf16.mxu0 0
    %2581 = vmatpush1.bf16.msra.mxu0 0
    %2582 = vmatprep.subr.bf16.mxu0 0
    %2583 = vmatpush1.bf16.msra.mxu0 0
    %2584 = vmatprep.subr.bf16.mxu0 0
    %2585 = vmatpush1.bf16.msra.mxu0 0
    %2586 = vmatprep.subr.bf16.mxu0 0
    %2587 = vmatpush1.bf16.msra.mxu0 0
    %2588 = vmatprep.subr.bf16.mxu0 0
    %2589 = vmatpush1.bf16.msra.mxu0 0
    %2590 = vmatprep.subr.bf16.mxu0 0
    %2591 = vmatpush1.bf16.msra.mxu0 0
    %2592 = vmatprep.subr.bf16.mxu0 0
    %2593 = vmatpush1.bf16.msra.mxu0 0
    %2594 = vmatprep.subr.bf16.mxu0 0
    %2595 = vmatpush1.bf16.msra.mxu0 0
    %2596 = vmatprep.subr.bf16.mxu0 0
    %2597 = vmatpush1.bf16.msra.mxu0 0
    %2598 = vmatprep.subr.bf16.mxu0 0
    %2599 = vmatpush1.bf16.msra.mxu0 0
    %2600 = vmatprep.subr.bf16.mxu0 0
    %2601 = vmatpush1.bf16.msra.mxu0 0
    %2602 = vmatprep.subr.bf16.mxu0 0
    %2603 = vmatpush1.bf16.msra.mxu0 0
    %2604 = vmatprep.subr.bf16.mxu0 0
    %2605 = vmatpush1.bf16.msra.mxu0 0
    %2606 = vmatprep.mubr.bf16.mxu0 0
    %2607 = vmatmul.mubr.bf16.gmra.mrb[0].mxu0 %v783
    %v2608 = vpop.f32.mrb[0].mxu0
    %v2609 = vadd.f32 %v2560, %v2608
    %v2610 = vpop.f32.mrb[0].mxu0
    %v2611 = vpop.f32.mrb[0].mxu0
    %v2612 = vadd.f32 %v2560, %v2611
    %v2613 = vpop.f32.mrb[0].mxu0
    %2614 = vmatprep.mubr.bf16.mxu0 0
    %2615 = vmatmul.mubr.bf16.gmra.mrb[0].mxu0 %v786
    %v2616 = vpop.f32.mrb[0].mxu0
    %v2617 = vadd.f32 %v2560, %v2616
    %v2618 = vpop.f32.mrb[0].mxu0
    %v2619 = vpop.f32.mrb[0].mxu0
    %v2620 = vpop.f32.mrb[0].mxu0
    %2621 = vdwg.mxu0
    %v2622 = vmax.f32 %v2609, 0.0
    %v2623 = vmax.f32 %v2612, 0.0
    %v2624 = vmax.f32 %v2617, 0.0
    %2625 = vxpose.xlu0.b32.start [1/16] %v2622, 128
    %2626 = vxpose.xlu0.b32.cont [2/16] %v2623, 128
    %2627 = vxpose.xlu0.b32.cont [3/16] 0.0, 128
    %2628 = vxpose.xlu0.b32.cont [4/16] 0.0, 128
    %2629 = vxpose.xlu0.b32.cont [5/16] 0.0, 128
    %2630 = vxpose.xlu0.b32.cont [6/16] 0.0, 128
    %2631 = vxpose.xlu0.b32.cont [7/16] 0.0, 128
    %2632 = vxpose.xlu0.b32.cont [8/16] 0.0, 128
    %2633 = vxpose.xlu0.b32.cont [9/16] 0.0, 128
    %2634 = vxpose.xlu0.b32.cont [10/16] 0.0, 128
    %2635 = vxpose.xlu0.b32.cont [11/16] 0.0, 128
    %2636 = vxpose.xlu0.b32.cont [12/16] 0.0, 128
    %2637 = vxpose.xlu0.b32.cont [13/16] 0.0, 128
    %2638 = vxpose.xlu0.b32.cont [14/16] 0.0, 128
    %2639 = vxpose.xlu0.b32.cont [15/16] 0.0, 128
    %2640 = vxpose.xlu0.b32.end [16/16] 0.0, 128
    %v2641 = vpop.trf.xlu0
    %v2642 = vpop.trf.xlu0
    %v2643 = vpop.trf.xlu0
    %v2644 = vpop.trf.xlu0
    %v2645 = vpop.trf.xlu0
    %v2646 = vpop.trf.xlu0
    %v2647 = vpop.trf.xlu0
    %v2648 = vpop.trf.xlu0
    %v2649 = vpop.trf.xlu0
    %v2650 = vpop.trf.xlu0
    %v2651 = vpop.trf.xlu0
    %v2652 = vpop.trf.xlu0
    %v2653 = vpop.trf.xlu0
    %v2654 = vpop.trf.xlu0
    %v2655 = vpop.trf.xlu0
    %v2656 = vpop.trf.xlu0
    %v2657 = vmul.f32 %v974, %v2641
    %v2658 = vmul.f32 %v974, %v2642
    %v2659 = vmul.f32 %v974, %v2643
    %v2660 = vmul.f32 %v974, %v2644
    %v2661 = vmul.f32 %v978, %v2641
    %v2662 = vmul.f32 %v978, %v2642
    %v2663 = vmul.f32 %v978, %v2643
    %v2664 = vmul.f32 %v978, %v2644
    %v2665 = vmul.f32 %v982, %v2641
    %v2666 = vmul.f32 %v982, %v2642
    %v2667 = vmul.f32 %v982, %v2643
    %v2668 = vmul.f32 %v982, %v2644
    %v2669 = vmul.f32 %v986, %v2641
    %v2670 = vmul.f32 %v986, %v2642
    %v2671 = vmul.f32 %v986, %v2643
    %v2672 = vmul.f32 %v986, %v2644
    %v2673 = vmul.f32 %v990, %v2641
    %v2674 = vmul.f32 %v990, %v2642
    %v2675 = vmul.f32 %v990, %v2643
    %v2676 = vmul.f32 %v990, %v2644
    %v2677 = vmul.f32 %v994, %v2641
    %v2678 = vmul.f32 %v994, %v2642
    %v2679 = vmul.f32 %v994, %v2643
    %v2680 = vmul.f32 %v994, %v2644
    %v2681 = vmul.f32 %v998, %v2641
    %v2682 = vmul.f32 %v998, %v2642
    %v2683 = vmul.f32 %v998, %v2643
    %v2684 = vmul.f32 %v998, %v2644
    %v2685 = vmul.f32 %v1002, %v2641
    %v2686 = vmul.f32 %v1002, %v2642
    %v2687 = vmul.f32 %v1002, %v2643
    %v2688 = vmul.f32 %v1002, %v2644
    %v2689 = vmul.f32 %v1006, %v2641
    %v2690 = vmul.f32 %v1006, %v2642
    %v2691 = vmul.f32 %v1006, %v2643
    %v2692 = vmul.f32 %v1006, %v2644
    %v2693 = vmul.f32 %v1010, %v2641
    %v2694 = vmul.f32 %v1010, %v2642
    %v2695 = vmul.f32 %v1010, %v2643
    %v2696 = vmul.f32 %v1010, %v2644
    %v2697 = vmul.f32 %v1014, %v2641
    %v2698 = vmul.f32 %v1014, %v2642
    %v2699 = vmul.f32 %v1014, %v2643
    %v2700 = vmul.f32 %v1014, %v2644
    %v2701 = vmul.f32 %v1018, %v2641
    %v2702 = vmul.f32 %v1018, %v2642
    %v2703 = vmul.f32 %v1018, %v2643
    %v2704 = vmul.f32 %v1018, %v2644
    %v2705 = vmul.f32 %v1022, %v2641
    %v2706 = vmul.f32 %v1022, %v2642
    %v2707 = vmul.f32 %v1022, %v2643
    %v2708 = vmul.f32 %v1022, %v2644
    %v2709 = vmul.f32 %v1026, %v2641
    %v2710 = vmul.f32 %v1026, %v2642
    %v2711 = vmul.f32 %v1026, %v2643
    %v2712 = vmul.f32 %v1026, %v2644
    %v2713 = vmul.f32 %v1030, %v2641
    %v2714 = vmul.f32 %v1030, %v2642
    %v2715 = vmul.f32 %v1030, %v2643
    %v2716 = vmul.f32 %v1030, %v2644
    %v2717 = vmul.f32 %v1034, %v2641
    %v2718 = vmul.f32 %v1034, %v2642
    %v2719 = vmul.f32 %v1034, %v2643
    %v2720 = vmul.f32 %v1034, %v2644
    %v2721 = vsel %vm1115, %v2657, -inf
    %2722 = vmax.xlane.f32.xlu0 %v2721
    %v2723 = vpop.xlane.xlu0 %2722
    %v2724 = vsel %vm1115, %v2658, -inf
    %2725 = vmax.xlane.f32.xlu0 %v2724
    %v2726 = vpop.xlane.xlu0 %2725
    %v2727 = vsel %vm1115, %v2659, -inf
    %2728 = vmax.xlane.f32.xlu0 %v2727
    %v2729 = vpop.xlane.xlu0 %2728
    %v2730 = vsel %vm1115, %v2660, -inf
    %2731 = vmax.xlane.f32.xlu0 %v2730
    %v2732 = vpop.xlane.xlu0 %2731
    %v2733 = vsel %vm1115, %v2661, -inf
    %2734 = vmax.xlane.f32.xlu0 %v2733
    %v2735 = vpop.xlane.xlu0 %2734
    %v2736 = vsel %vm1115, %v2662, -inf
    %2737 = vmax.xlane.f32.xlu0 %v2736
    %v2738 = vpop.xlane.xlu0 %2737
    %v2739 = vsel %vm1115, %v2663, -inf
    %2740 = vmax.xlane.f32.xlu0 %v2739
    %v2741 = vpop.xlane.xlu0 %2740
    %v2742 = vsel %vm1115, %v2664, -inf
    %2743 = vmax.xlane.f32.xlu0 %v2742
    %v2744 = vpop.xlane.xlu0 %2743
    %v2745 = vsel %vm1115, %v2665, -inf
    %2746 = vmax.xlane.f32.xlu0 %v2745
    %v2747 = vpop.xlane.xlu0 %2746
    %v2748 = vsel %vm1115, %v2666, -inf
    %2749 = vmax.xlane.f32.xlu0 %v2748
    %v2750 = vpop.xlane.xlu0 %2749
    %v2751 = vsel %vm1115, %v2667, -inf
    %2752 = vmax.xlane.f32.xlu0 %v2751
    %v2753 = vpop.xlane.xlu0 %2752
    %v2754 = vsel %vm1115, %v2668, -inf
    %2755 = vmax.xlane.f32.xlu0 %v2754
    %v2756 = vpop.xlane.xlu0 %2755
    %v2757 = vsel %vm1115, %v2669, -inf
    %2758 = vmax.xlane.f32.xlu0 %v2757
    %v2759 = vpop.xlane.xlu0 %2758
    %v2760 = vsel %vm1115, %v2670, -inf
    %2761 = vmax.xlane.f32.xlu0 %v2760
    %v2762 = vpop.xlane.xlu0 %2761
    %v2763 = vsel %vm1115, %v2671, -inf
    %2764 = vmax.xlane.f32.xlu0 %v2763
    %v2765 = vpop.xlane.xlu0 %2764
    %v2766 = vsel %vm1115, %v2672, -inf
    %2767 = vmax.xlane.f32.xlu0 %v2766
    %v2768 = vpop.xlane.xlu0 %2767
    %v2769 = vsel %vm1115, %v2673, -inf
    %2770 = vmax.xlane.f32.xlu0 %v2769
    %v2771 = vpop.xlane.xlu0 %2770
    %v2772 = vsel %vm1115, %v2674, -inf
    %2773 = vmax.xlane.f32.xlu0 %v2772
    %v2774 = vpop.xlane.xlu0 %2773
    %v2775 = vsel %vm1115, %v2675, -inf
    %2776 = vmax.xlane.f32.xlu0 %v2775
    %v2777 = vpop.xlane.xlu0 %2776
    %v2778 = vsel %vm1115, %v2676, -inf
    %2779 = vmax.xlane.f32.xlu0 %v2778
    %v2780 = vpop.xlane.xlu0 %2779
    %v2781 = vsel %vm1115, %v2677, -inf
    %2782 = vmax.xlane.f32.xlu0 %v2781
    %v2783 = vpop.xlane.xlu0 %2782
    %v2784 = vsel %vm1115, %v2678, -inf
    %2785 = vmax.xlane.f32.xlu0 %v2784
    %v2786 = vpop.xlane.xlu0 %2785
    %v2787 = vsel %vm1115, %v2679, -inf
    %2788 = vmax.xlane.f32.xlu0 %v2787
    %v2789 = vpop.xlane.xlu0 %2788
    %v2790 = vsel %vm1115, %v2680, -inf
    %2791 = vmax.xlane.f32.xlu0 %v2790
    %v2792 = vpop.xlane.xlu0 %2791
    %v2793 = vsel %vm1115, %v2681, -inf
    %2794 = vmax.xlane.f32.xlu0 %v2793
    %v2795 = vpop.xlane.xlu0 %2794
    %v2796 = vsel %vm1115, %v2682, -inf
    %2797 = vmax.xlane.f32.xlu0 %v2796
    %v2798 = vpop.xlane.xlu0 %2797
    %v2799 = vsel %vm1115, %v2683, -inf
    %2800 = vmax.xlane.f32.xlu0 %v2799
    %v2801 = vpop.xlane.xlu0 %2800
    %v2802 = vsel %vm1115, %v2684, -inf
    %2803 = vmax.xlane.f32.xlu0 %v2802
    %v2804 = vpop.xlane.xlu0 %2803
    %v2805 = vsel %vm1115, %v2685, -inf
    %2806 = vmax.xlane.f32.xlu0 %v2805
    %v2807 = vpop.xlane.xlu0 %2806
    %v2808 = vsel %vm1115, %v2686, -inf
    %2809 = vmax.xlane.f32.xlu0 %v2808
    %v2810 = vpop.xlane.xlu0 %2809
    %v2811 = vsel %vm1115, %v2687, -inf
    %2812 = vmax.xlane.f32.xlu0 %v2811
    %v2813 = vpop.xlane.xlu0 %2812
    %v2814 = vsel %vm1115, %v2688, -inf
    %2815 = vmax.xlane.f32.xlu0 %v2814
    %v2816 = vpop.xlane.xlu0 %2815
    %v2817 = vsel %vm1115, %v2689, -inf
    %2818 = vmax.xlane.f32.xlu0 %v2817
    %v2819 = vpop.xlane.xlu0 %2818
    %v2820 = vsel %vm1115, %v2690, -inf
    %2821 = vmax.xlane.f32.xlu0 %v2820
    %v2822 = vpop.xlane.xlu0 %2821
    %v2823 = vsel %vm1115, %v2691, -inf
    %2824 = vmax.xlane.f32.xlu0 %v2823
    %v2825 = vpop.xlane.xlu0 %2824
    %v2826 = vsel %vm1115, %v2692, -inf
    %2827 = vmax.xlane.f32.xlu0 %v2826
    %v2828 = vpop.xlane.xlu0 %2827
    %v2829 = vsel %vm1115, %v2693, -inf
    %2830 = vmax.xlane.f32.xlu0 %v2829
    %v2831 = vpop.xlane.xlu0 %2830
    %v2832 = vsel %vm1115, %v2694, -inf
    %2833 = vmax.xlane.f32.xlu0 %v2832
    %v2834 = vpop.xlane.xlu0 %2833
    %v2835 = vsel %vm1115, %v2695, -inf
    %2836 = vmax.xlane.f32.xlu0 %v2835
    %v2837 = vpop.xlane.xlu0 %2836
    %v2838 = vsel %vm1115, %v2696, -inf
    %2839 = vmax.xlane.f32.xlu0 %v2838
    %v2840 = vpop.xlane.xlu0 %2839
    %v2841 = vsel %vm1115, %v2697, -inf
    %2842 = vmax.xlane.f32.xlu0 %v2841
    %v2843 = vpop.xlane.xlu0 %2842
    %v2844 = vsel %vm1115, %v2698, -inf
    %2845 = vmax.xlane.f32.xlu0 %v2844
    %v2846 = vpop.xlane.xlu0 %2845
    %v2847 = vsel %vm1115, %v2699, -inf
    %2848 = vmax.xlane.f32.xlu0 %v2847
    %v2849 = vpop.xlane.xlu0 %2848
    %v2850 = vsel %vm1115, %v2700, -inf
    %2851 = vmax.xlane.f32.xlu0 %v2850
    %v2852 = vpop.xlane.xlu0 %2851
    %v2853 = vsel %vm1115, %v2701, -inf
    %2854 = vmax.xlane.f32.xlu0 %v2853
    %v2855 = vpop.xlane.xlu0 %2854
    %v2856 = vsel %vm1115, %v2702, -inf
    %2857 = vmax.xlane.f32.xlu0 %v2856
    %v2858 = vpop.xlane.xlu0 %2857
    %v2859 = vsel %vm1115, %v2703, -inf
    %2860 = vmax.xlane.f32.xlu0 %v2859
    %v2861 = vpop.xlane.xlu0 %2860
    %v2862 = vsel %vm1115, %v2704, -inf
    %2863 = vmax.xlane.f32.xlu0 %v2862
    %v2864 = vpop.xlane.xlu0 %2863
    %v2865 = vsel %vm1115, %v2705, -inf
    %2866 = vmax.xlane.f32.xlu0 %v2865
    %v2867 = vpop.xlane.xlu0 %2866
    %v2868 = vsel %vm1115, %v2706, -inf
    %2869 = vmax.xlane.f32.xlu0 %v2868
    %v2870 = vpop.xlane.xlu0 %2869
    %v2871 = vsel %vm1115, %v2707, -inf
    %2872 = vmax.xlane.f32.xlu0 %v2871
    %v2873 = vpop.xlane.xlu0 %2872
    %v2874 = vsel %vm1115, %v2708, -inf
    %2875 = vmax.xlane.f32.xlu0 %v2874
    %v2876 = vpop.xlane.xlu0 %2875
    %v2877 = vsel %vm1115, %v2709, -inf
    %2878 = vmax.xlane.f32.xlu0 %v2877
    %v2879 = vpop.xlane.xlu0 %2878
    %v2880 = vsel %vm1115, %v2710, -inf
    %2881 = vmax.xlane.f32.xlu0 %v2880
    %v2882 = vpop.xlane.xlu0 %2881
    %v2883 = vsel %vm1115, %v2711, -inf
    %2884 = vmax.xlane.f32.xlu0 %v2883
    %v2885 = vpop.xlane.xlu0 %2884
    %v2886 = vsel %vm1115, %v2712, -inf
    %2887 = vmax.xlane.f32.xlu0 %v2886
    %v2888 = vpop.xlane.xlu0 %2887
    %v2889 = vsel %vm1115, %v2713, -inf
    %2890 = vmax.xlane.f32.xlu0 %v2889
    %v2891 = vpop.xlane.xlu0 %2890
    %v2892 = vsel %vm1115, %v2714, -inf
    %2893 = vmax.xlane.f32.xlu0 %v2892
    %v2894 = vpop.xlane.xlu0 %2893
    %v2895 = vsel %vm1115, %v2715, -inf
    %2896 = vmax.xlane.f32.xlu0 %v2895
    %v2897 = vpop.xlane.xlu0 %2896
    %v2898 = vsel %vm1115, %v2716, -inf
    %2899 = vmax.xlane.f32.xlu0 %v2898
    %v2900 = vpop.xlane.xlu0 %2899
    %v2901 = vsel %vm1115, %v2717, -inf
    %2902 = vmax.xlane.f32.xlu0 %v2901
    %v2903 = vpop.xlane.xlu0 %2902
    %v2904 = vsel %vm1115, %v2718, -inf
    %2905 = vmax.xlane.f32.xlu0 %v2904
    %v2906 = vpop.xlane.xlu0 %2905
    %v2907 = vsel %vm1115, %v2719, -inf
    %2908 = vmax.xlane.f32.xlu0 %v2907
    %v2909 = vpop.xlane.xlu0 %2908
    %v2910 = vsel %vm1115, %v2720, -inf
    %2911 = vmax.xlane.f32.xlu0 %v2910
    %v2912 = vpop.xlane.xlu0 %2911
    %v2913 = vmax.f32 %v2723, 0.0
    %v2914 = vmax.f32 %v2726, 0.0
    %v2915 = vmax.f32 %v2729, 0.0
    %v2916 = vmax.f32 %v2732, 0.0
    %v2917 = vmax.f32 %v2735, 0.0
    %v2918 = vmax.f32 %v2738, 0.0
    %v2919 = vmax.f32 %v2741, 0.0
    %v2920 = vmax.f32 %v2744, 0.0
    %v2921 = vmax.f32 %v2747, 0.0
    %v2922 = vmax.f32 %v2750, 0.0
    %v2923 = vmax.f32 %v2753, 0.0
    %v2924 = vmax.f32 %v2756, 0.0
    %v2925 = vmax.f32 %v2759, 0.0
    %v2926 = vmax.f32 %v2762, 0.0
    %v2927 = vmax.f32 %v2765, 0.0
    %v2928 = vmax.f32 %v2768, 0.0
    %v2929 = vmax.f32 %v2771, 0.0
    %v2930 = vmax.f32 %v2774, 0.0
    %v2931 = vmax.f32 %v2777, 0.0
    %v2932 = vmax.f32 %v2780, 0.0
    %v2933 = vmax.f32 %v2783, 0.0
    %v2934 = vmax.f32 %v2786, 0.0
    %v2935 = vmax.f32 %v2789, 0.0
    %v2936 = vmax.f32 %v2792, 0.0
    %v2937 = vmax.f32 %v2795, 0.0
    %v2938 = vmax.f32 %v2798, 0.0
    %v2939 = vmax.f32 %v2801, 0.0
    %v2940 = vmax.f32 %v2804, 0.0
    %v2941 = vmax.f32 %v2807, 0.0
    %v2942 = vmax.f32 %v2810, 0.0
    %v2943 = vmax.f32 %v2813, 0.0
    %v2944 = vmax.f32 %v2816, 0.0
    %v2945 = vmax.f32 %v2819, 0.0
    %v2946 = vmax.f32 %v2822, 0.0
    %v2947 = vmax.f32 %v2825, 0.0
    %v2948 = vmax.f32 %v2828, 0.0
    %v2949 = vmax.f32 %v2831, 0.0
    %v2950 = vmax.f32 %v2834, 0.0
    %v2951 = vmax.f32 %v2837, 0.0
    %v2952 = vmax.f32 %v2840, 0.0
    %v2953 = vmax.f32 %v2843, 0.0
    %v2954 = vmax.f32 %v2846, 0.0
    %v2955 = vmax.f32 %v2849, 0.0
    %v2956 = vmax.f32 %v2852, 0.0
    %v2957 = vmax.f32 %v2855, 0.0
    %v2958 = vmax.f32 %v2858, 0.0
    %v2959 = vmax.f32 %v2861, 0.0
    %v2960 = vmax.f32 %v2864, 0.0
    %v2961 = vmax.f32 %v2867, 0.0
    %v2962 = vmax.f32 %v2870, 0.0
    %v2963 = vmax.f32 %v2873, 0.0
    %v2964 = vmax.f32 %v2876, 0.0
    %v2965 = vmax.f32 %v2879, 0.0
    %v2966 = vmax.f32 %v2882, 0.0
    %v2967 = vmax.f32 %v2885, 0.0
    %v2968 = vmax.f32 %v2888, 0.0
    %v2969 = vmax.f32 %v2891, 0.0
    %v2970 = vmax.f32 %v2894, 0.0
    %v2971 = vmax.f32 %v2897, 0.0
    %v2972 = vmax.f32 %v2900, 0.0
    %v2973 = vmax.f32 %v2903, 0.0
    %v2974 = vmax.f32 %v2906, 0.0
    %v2975 = vmax.f32 %v2909, 0.0
    %v2976 = vmax.f32 %v2912, 0.0
    %2977 = vxpose.xlu0.b32.start [1/16] %v2624, 128
    %2978 = vxpose.xlu0.b32.cont [2/16] 0.0, 128
    %2979 = vxpose.xlu0.b32.cont [3/16] 0.0, 128
    %2980 = vxpose.xlu0.b32.cont [4/16] 0.0, 128
    %2981 = vxpose.xlu0.b32.cont [5/16] 0.0, 128
    %2982 = vxpose.xlu0.b32.cont [6/16] 0.0, 128
    %2983 = vxpose.xlu0.b32.cont [7/16] 0.0, 128
    %2984 = vxpose.xlu0.b32.cont [8/16] 0.0, 128
    %2985 = vxpose.xlu0.b32.cont [9/16] 0.0, 128
    %2986 = vxpose.xlu0.b32.cont [10/16] 0.0, 128
    %2987 = vxpose.xlu0.b32.cont [11/16] 0.0, 128
    %2988 = vxpose.xlu0.b32.cont [12/16] 0.0, 128
    %2989 = vxpose.xlu0.b32.cont [13/16] 0.0, 128
    %2990 = vxpose.xlu0.b32.cont [14/16] 0.0, 128
    %2991 = vxpose.xlu0.b32.cont [15/16] 0.0, 128
    %2992 = vxpose.xlu0.b32.end [16/16] 0.0, 128
    %v2993 = vpop.trf.xlu0
    %v2994 = vpop.trf.xlu0
    %v2995 = vpop.trf.xlu0
    %v2996 = vpop.trf.xlu0
    %v2997 = vpop.trf.xlu0
    %v2998 = vpop.trf.xlu0
    %v2999 = vpop.trf.xlu0
    %v3000 = vpop.trf.xlu0
    %v3001 = vpop.trf.xlu0
    %v3002 = vpop.trf.xlu0
    %v3003 = vpop.trf.xlu0
    %v3004 = vpop.trf.xlu0
    %v3005 = vpop.trf.xlu0
    %v3006 = vpop.trf.xlu0
    %v3007 = vpop.trf.xlu0
    %v3008 = vpop.trf.xlu0
    %v3009 = vmul.f32 %v1507, %v2993
    %v3010 = vmul.f32 %v1507, %v2994
    %v3011 = vmul.f32 %v1507, %v2995
    %v3012 = vmul.f32 %v1507, %v2996
    %v3013 = vmul.f32 %v1511, %v2993
    %v3014 = vmul.f32 %v1511, %v2994
    %v3015 = vmul.f32 %v1511, %v2995
    %v3016 = vmul.f32 %v1511, %v2996
    %v3017 = vmul.f32 %v1515, %v2993
    %v3018 = vmul.f32 %v1515, %v2994
    %v3019 = vmul.f32 %v1515, %v2995
    %v3020 = vmul.f32 %v1515, %v2996
    %v3021 = vmul.f32 %v1519, %v2993
    %v3022 = vmul.f32 %v1519, %v2994
    %v3023 = vmul.f32 %v1519, %v2995
    %v3024 = vmul.f32 %v1519, %v2996
    %v3025 = vmul.f32 %v1523, %v2993
    %v3026 = vmul.f32 %v1523, %v2994
    %v3027 = vmul.f32 %v1523, %v2995
    %v3028 = vmul.f32 %v1523, %v2996
    %v3029 = vmul.f32 %v1527, %v2993
    %v3030 = vmul.f32 %v1527, %v2994
    %v3031 = vmul.f32 %v1527, %v2995
    %v3032 = vmul.f32 %v1527, %v2996
    %v3033 = vmul.f32 %v1531, %v2993
    %v3034 = vmul.f32 %v1531, %v2994
    %v3035 = vmul.f32 %v1531, %v2995
    %v3036 = vmul.f32 %v1531, %v2996
    %v3037 = vmul.f32 %v1535, %v2993
    %v3038 = vmul.f32 %v1535, %v2994
    %v3039 = vmul.f32 %v1535, %v2995
    %v3040 = vmul.f32 %v1535, %v2996
    %v3041 = vmul.f32 %v1539, %v2993
    %v3042 = vmul.f32 %v1539, %v2994
    %v3043 = vmul.f32 %v1539, %v2995
    %v3044 = vmul.f32 %v1539, %v2996
    %v3045 = vmul.f32 %v1543, %v2993
    %v3046 = vmul.f32 %v1543, %v2994
    %v3047 = vmul.f32 %v1543, %v2995
    %v3048 = vmul.f32 %v1543, %v2996
    %v3049 = vmul.f32 %v1547, %v2993
    %v3050 = vmul.f32 %v1547, %v2994
    %v3051 = vmul.f32 %v1547, %v2995
    %v3052 = vmul.f32 %v1547, %v2996
    %v3053 = vmul.f32 %v1551, %v2993
    %v3054 = vmul.f32 %v1551, %v2994
    %v3055 = vmul.f32 %v1551, %v2995
    %v3056 = vmul.f32 %v1551, %v2996
    %v3057 = vmul.f32 %v1555, %v2993
    %v3058 = vmul.f32 %v1555, %v2994
    %v3059 = vmul.f32 %v1555, %v2995
    %v3060 = vmul.f32 %v1555, %v2996
    %v3061 = vmul.f32 %v1559, %v2993
    %v3062 = vmul.f32 %v1559, %v2994
    %v3063 = vmul.f32 %v1559, %v2995
    %v3064 = vmul.f32 %v1559, %v2996
    %v3065 = vmul.f32 %v1563, %v2993
    %v3066 = vmul.f32 %v1563, %v2994
    %v3067 = vmul.f32 %v1563, %v2995
    %v3068 = vmul.f32 %v1563, %v2996
    %v3069 = vmul.f32 %v1567, %v2993
    %v3070 = vmul.f32 %v1567, %v2994
    %v3071 = vmul.f32 %v1567, %v2995
    %v3072 = vmul.f32 %v1567, %v2996
    %v3073 = vsel %vm1648, %v3009, -inf
    %3074 = vmax.xlane.f32.xlu0 %v3073
    %v3075 = vpop.xlane.xlu0 %3074
    %v3076 = vsel %vm1648, %v3010, -inf
    %3077 = vmax.xlane.f32.xlu0 %v3076
    %v3078 = vpop.xlane.xlu0 %3077
    %v3079 = vsel %vm1648, %v3011, -inf
    %3080 = vmax.xlane.f32.xlu0 %v3079
    %v3081 = vpop.xlane.xlu0 %3080
    %v3082 = vsel %vm1648, %v3012, -inf
    %3083 = vmax.xlane.f32.xlu0 %v3082
    %v3084 = vpop.xlane.xlu0 %3083
    %v3085 = vsel %vm1648, %v3013, -inf
    %3086 = vmax.xlane.f32.xlu0 %v3085
    %v3087 = vpop.xlane.xlu0 %3086
    %v3088 = vsel %vm1648, %v3014, -inf
    %3089 = vmax.xlane.f32.xlu0 %v3088
    %v3090 = vpop.xlane.xlu0 %3089
    %v3091 = vsel %vm1648, %v3015, -inf
    %3092 = vmax.xlane.f32.xlu0 %v3091
    %v3093 = vpop.xlane.xlu0 %3092
    %v3094 = vsel %vm1648, %v3016, -inf
    %3095 = vmax.xlane.f32.xlu0 %v3094
    %v3096 = vpop.xlane.xlu0 %3095
    %v3097 = vsel %vm1648, %v3017, -inf
    %3098 = vmax.xlane.f32.xlu0 %v3097
    %v3099 = vpop.xlane.xlu0 %3098
    %v3100 = vsel %vm1648, %v3018, -inf
    %3101 = vmax.xlane.f32.xlu0 %v3100
    %v3102 = vpop.xlane.xlu0 %3101
    %v3103 = vsel %vm1648, %v3019, -inf
    %3104 = vmax.xlane.f32.xlu0 %v3103
    %v3105 = vpop.xlane.xlu0 %3104
    %v3106 = vsel %vm1648, %v3020, -inf
    %3107 = vmax.xlane.f32.xlu0 %v3106
    %v3108 = vpop.xlane.xlu0 %3107
    %v3109 = vsel %vm1648, %v3021, -inf
    %3110 = vmax.xlane.f32.xlu0 %v3109
    %v3111 = vpop.xlane.xlu0 %3110
    %v3112 = vsel %vm1648, %v3022, -inf
    %3113 = vmax.xlane.f32.xlu0 %v3112
    %v3114 = vpop.xlane.xlu0 %3113
    %v3115 = vsel %vm1648, %v3023, -inf
    %3116 = vmax.xlane.f32.xlu0 %v3115
    %v3117 = vpop.xlane.xlu0 %3116
    %v3118 = vsel %vm1648, %v3024, -inf
    %3119 = vmax.xlane.f32.xlu0 %v3118
    %v3120 = vpop.xlane.xlu0 %3119
    %v3121 = vsel %vm1648, %v3025, -inf
    %3122 = vmax.xlane.f32.xlu0 %v3121
    %v3123 = vpop.xlane.xlu0 %3122
    %v3124 = vsel %vm1648, %v3026, -inf
    %3125 = vmax.xlane.f32.xlu0 %v3124
    %v3126 = vpop.xlane.xlu0 %3125
    %v3127 = vsel %vm1648, %v3027, -inf
    %3128 = vmax.xlane.f32.xlu0 %v3127
    %v3129 = vpop.xlane.xlu0 %3128
    %v3130 = vsel %vm1648, %v3028, -inf
    %3131 = vmax.xlane.f32.xlu0 %v3130
    %v3132 = vpop.xlane.xlu0 %3131
    %v3133 = vsel %vm1648, %v3029, -inf
    %3134 = vmax.xlane.f32.xlu0 %v3133
    %v3135 = vpop.xlane.xlu0 %3134
    %v3136 = vsel %vm1648, %v3030, -inf
    %3137 = vmax.xlane.f32.xlu0 %v3136
    %v3138 = vpop.xlane.xlu0 %3137
    %v3139 = vsel %vm1648, %v3031, -inf
    %3140 = vmax.xlane.f32.xlu0 %v3139
    %v3141 = vpop.xlane.xlu0 %3140
    %v3142 = vsel %vm1648, %v3032, -inf
    %3143 = vmax.xlane.f32.xlu0 %v3142
    %v3144 = vpop.xlane.xlu0 %3143
    %v3145 = vsel %vm1648, %v3033, -inf
    %3146 = vmax.xlane.f32.xlu0 %v3145
    %v3147 = vpop.xlane.xlu0 %3146
    %v3148 = vsel %vm1648, %v3034, -inf
    %3149 = vmax.xlane.f32.xlu0 %v3148
    %v3150 = vpop.xlane.xlu0 %3149
    %v3151 = vsel %vm1648, %v3035, -inf
    %3152 = vmax.xlane.f32.xlu0 %v3151
    %v3153 = vpop.xlane.xlu0 %3152
    %v3154 = vsel %vm1648, %v3036, -inf
    %3155 = vmax.xlane.f32.xlu0 %v3154
    %v3156 = vpop.xlane.xlu0 %3155
    %v3157 = vsel %vm1648, %v3037, -inf
    %3158 = vmax.xlane.f32.xlu0 %v3157
    %v3159 = vpop.xlane.xlu0 %3158
    %v3160 = vsel %vm1648, %v3038, -inf
    %3161 = vmax.xlane.f32.xlu0 %v3160
    %v3162 = vpop.xlane.xlu0 %3161
    %v3163 = vsel %vm1648, %v3039, -inf
    %3164 = vmax.xlane.f32.xlu0 %v3163
    %v3165 = vpop.xlane.xlu0 %3164
    %v3166 = vsel %vm1648, %v3040, -inf
    %3167 = vmax.xlane.f32.xlu0 %v3166
    %v3168 = vpop.xlane.xlu0 %3167
    %v3169 = vsel %vm1648, %v3041, -inf
    %3170 = vmax.xlane.f32.xlu0 %v3169
    %v3171 = vpop.xlane.xlu0 %3170
    %v3172 = vsel %vm1648, %v3042, -inf
    %3173 = vmax.xlane.f32.xlu0 %v3172
    %v3174 = vpop.xlane.xlu0 %3173
    %v3175 = vsel %vm1648, %v3043, -inf
    %3176 = vmax.xlane.f32.xlu0 %v3175
    %v3177 = vpop.xlane.xlu0 %3176
    %v3178 = vsel %vm1648, %v3044, -inf
    %3179 = vmax.xlane.f32.xlu0 %v3178
    %v3180 = vpop.xlane.xlu0 %3179
    %v3181 = vsel %vm1648, %v3045, -inf
    %3182 = vmax.xlane.f32.xlu0 %v3181
    %v3183 = vpop.xlane.xlu0 %3182
    %v3184 = vsel %vm1648, %v3046, -inf
    %3185 = vmax.xlane.f32.xlu0 %v3184
    %v3186 = vpop.xlane.xlu0 %3185
    %v3187 = vsel %vm1648, %v3047, -inf
    %3188 = vmax.xlane.f32.xlu0 %v3187
    %v3189 = vpop.xlane.xlu0 %3188
    %v3190 = vsel %vm1648, %v3048, -inf
    %3191 = vmax.xlane.f32.xlu0 %v3190
    %v3192 = vpop.xlane.xlu0 %3191
    %v3193 = vsel %vm1648, %v3049, -inf
    %3194 = vmax.xlane.f32.xlu0 %v3193
    %v3195 = vpop.xlane.xlu0 %3194
    %v3196 = vsel %vm1648, %v3050, -inf
    %3197 = vmax.xlane.f32.xlu0 %v3196
    %v3198 = vpop.xlane.xlu0 %3197
    %v3199 = vsel %vm1648, %v3051, -inf
    %3200 = vmax.xlane.f32.xlu0 %v3199
    %v3201 = vpop.xlane.xlu0 %3200
    %v3202 = vsel %vm1648, %v3052, -inf
    %3203 = vmax.xlane.f32.xlu0 %v3202
    %v3204 = vpop.xlane.xlu0 %3203
    %v3205 = vsel %vm1648, %v3053, -inf
    %3206 = vmax.xlane.f32.xlu0 %v3205
    %v3207 = vpop.xlane.xlu0 %3206
    %v3208 = vsel %vm1648, %v3054, -inf
    %3209 = vmax.xlane.f32.xlu0 %v3208
    %v3210 = vpop.xlane.xlu0 %3209
    %v3211 = vsel %vm1648, %v3055, -inf
    %3212 = vmax.xlane.f32.xlu0 %v3211
    %v3213 = vpop.xlane.xlu0 %3212
    %v3214 = vsel %vm1648, %v3056, -inf
    %3215 = vmax.xlane.f32.xlu0 %v3214
    %v3216 = vpop.xlane.xlu0 %3215
    %v3217 = vsel %vm1648, %v3057, -inf
    %3218 = vmax.xlane.f32.xlu0 %v3217
    %v3219 = vpop.xlane.xlu0 %3218
    %v3220 = vsel %vm1648, %v3058, -inf
    %3221 = vmax.xlane.f32.xlu0 %v3220
    %v3222 = vpop.xlane.xlu0 %3221
    %v3223 = vsel %vm1648, %v3059, -inf
    %3224 = vmax.xlane.f32.xlu0 %v3223
    %v3225 = vpop.xlane.xlu0 %3224
    %v3226 = vsel %vm1648, %v3060, -inf
    %3227 = vmax.xlane.f32.xlu0 %v3226
    %v3228 = vpop.xlane.xlu0 %3227
    %v3229 = vsel %vm1648, %v3061, -inf
    %3230 = vmax.xlane.f32.xlu0 %v3229
    %v3231 = vpop.xlane.xlu0 %3230
    %v3232 = vsel %vm1648, %v3062, -inf
    %3233 = vmax.xlane.f32.xlu0 %v3232
    %v3234 = vpop.xlane.xlu0 %3233
    %v3235 = vsel %vm1648, %v3063, -inf
    %3236 = vmax.xlane.f32.xlu0 %v3235
    %v3237 = vpop.xlane.xlu0 %3236
    %v3238 = vsel %vm1648, %v3064, -inf
    %3239 = vmax.xlane.f32.xlu0 %v3238
    %v3240 = vpop.xlane.xlu0 %3239
    %v3241 = vsel %vm1648, %v3065, -inf
    %3242 = vmax.xlane.f32.xlu0 %v3241
    %v3243 = vpop.xlane.xlu0 %3242
    %v3244 = vsel %vm1648, %v3066, -inf
    %3245 = vmax.xlane.f32.xlu0 %v3244
    %v3246 = vpop.xlane.xlu0 %3245
    %v3247 = vsel %vm1648, %v3067, -inf
    %3248 = vmax.xlane.f32.xlu0 %v3247
    %v3249 = vpop.xlane.xlu0 %3248
    %v3250 = vsel %vm1648, %v3068, -inf
    %3251 = vmax.xlane.f32.xlu0 %v3250
    %v3252 = vpop.xlane.xlu0 %3251
    %v3253 = vsel %vm1648, %v3069, -inf
    %3254 = vmax.xlane.f32.xlu0 %v3253
    %v3255 = vpop.xlane.xlu0 %3254
    %v3256 = vsel %vm1648, %v3070, -inf
    %3257 = vmax.xlane.f32.xlu0 %v3256
    %v3258 = vpop.xlane.xlu0 %3257
    %v3259 = vsel %vm1648, %v3071, -inf
    %3260 = vmax.xlane.f32.xlu0 %v3259
    %v3261 = vpop.xlane.xlu0 %3260
    %v3262 = vsel %vm1648, %v3072, -inf
    %3263 = vmax.xlane.f32.xlu0 %v3262
    %v3264 = vpop.xlane.xlu0 %3263
    %v3265 = vmax.f32 %v3075, 0.0
    %v3266 = vmax.f32 %v3078, 0.0
    %v3267 = vmax.f32 %v3081, 0.0
    %v3268 = vmax.f32 %v3084, 0.0
    %v3269 = vmax.f32 %v3087, 0.0
    %v3270 = vmax.f32 %v3090, 0.0
    %v3271 = vmax.f32 %v3093, 0.0
    %v3272 = vmax.f32 %v3096, 0.0
    %v3273 = vmax.f32 %v3099, 0.0
    %v3274 = vmax.f32 %v3102, 0.0
    %v3275 = vmax.f32 %v3105, 0.0
    %v3276 = vmax.f32 %v3108, 0.0
    %v3277 = vmax.f32 %v3111, 0.0
    %v3278 = vmax.f32 %v3114, 0.0
    %v3279 = vmax.f32 %v3117, 0.0
    %v3280 = vmax.f32 %v3120, 0.0
    %v3281 = vmax.f32 %v3123, 0.0
    %v3282 = vmax.f32 %v3126, 0.0
    %v3283 = vmax.f32 %v3129, 0.0
    %v3284 = vmax.f32 %v3132, 0.0
    %v3285 = vmax.f32 %v3135, 0.0
    %v3286 = vmax.f32 %v3138, 0.0
    %v3287 = vmax.f32 %v3141, 0.0
    %v3288 = vmax.f32 %v3144, 0.0
    %v3289 = vmax.f32 %v3147, 0.0
    %v3290 = vmax.f32 %v3150, 0.0
    %v3291 = vmax.f32 %v3153, 0.0
    %v3292 = vmax.f32 %v3156, 0.0
    %v3293 = vmax.f32 %v3159, 0.0
    %v3294 = vmax.f32 %v3162, 0.0
    %v3295 = vmax.f32 %v3165, 0.0
    %v3296 = vmax.f32 %v3168, 0.0
    %v3297 = vmax.f32 %v3171, 0.0
    %v3298 = vmax.f32 %v3174, 0.0
    %v3299 = vmax.f32 %v3177, 0.0
    %v3300 = vmax.f32 %v3180, 0.0
    %v3301 = vmax.f32 %v3183, 0.0
    %v3302 = vmax.f32 %v3186, 0.0
    %v3303 = vmax.f32 %v3189, 0.0
    %v3304 = vmax.f32 %v3192, 0.0
    %v3305 = vmax.f32 %v3195, 0.0
    %v3306 = vmax.f32 %v3198, 0.0
    %v3307 = vmax.f32 %v3201, 0.0
    %v3308 = vmax.f32 %v3204, 0.0
    %v3309 = vmax.f32 %v3207, 0.0
    %v3310 = vmax.f32 %v3210, 0.0
    %v3311 = vmax.f32 %v3213, 0.0
    %v3312 = vmax.f32 %v3216, 0.0
    %v3313 = vmax.f32 %v3219, 0.0
    %v3314 = vmax.f32 %v3222, 0.0
    %v3315 = vmax.f32 %v3225, 0.0
    %v3316 = vmax.f32 %v3228, 0.0
    %v3317 = vmax.f32 %v3231, 0.0
    %v3318 = vmax.f32 %v3234, 0.0
    %v3319 = vmax.f32 %v3237, 0.0
    %v3320 = vmax.f32 %v3240, 0.0
    %v3321 = vmax.f32 %v3243, 0.0
    %v3322 = vmax.f32 %v3246, 0.0
    %v3323 = vmax.f32 %v3249, 0.0
    %v3324 = vmax.f32 %v3252, 0.0
    %v3325 = vmax.f32 %v3255, 0.0
    %v3326 = vmax.f32 %v3258, 0.0
    %v3327 = vmax.f32 %v3261, 0.0
    %v3328 = vmax.f32 %v3264, 0.0
    %v3329 = vadd.f32 %v2913, %v3265
    %v3330 = vadd.f32 %v2914, %v3266
    %v3331 = vadd.f32 %v2915, %v3267
    %v3332 = vadd.f32 %v2916, %v3268
    %v3333 = vadd.f32 %v2917, %v3269
    %v3334 = vadd.f32 %v2918, %v3270
    %v3335 = vadd.f32 %v2919, %v3271
    %v3336 = vadd.f32 %v2920, %v3272
    %v3337 = vadd.f32 %v2921, %v3273
    %v3338 = vadd.f32 %v2922, %v3274
    %v3339 = vadd.f32 %v2923, %v3275
    %v3340 = vadd.f32 %v2924, %v3276
    %v3341 = vadd.f32 %v2925, %v3277
    %v3342 = vadd.f32 %v2926, %v3278
    %v3343 = vadd.f32 %v2927, %v3279
    %v3344 = vadd.f32 %v2928, %v3280
    %v3345 = vadd.f32 %v2929, %v3281
    %v3346 = vadd.f32 %v2930, %v3282
    %v3347 = vadd.f32 %v2931, %v3283
    %v3348 = vadd.f32 %v2932, %v3284
    %v3349 = vadd.f32 %v2933, %v3285
    %v3350 = vadd.f32 %v2934, %v3286
    %v3351 = vadd.f32 %v2935, %v3287
    %v3352 = vadd.f32 %v2936, %v3288
    %v3353 = vadd.f32 %v2937, %v3289
    %v3354 = vadd.f32 %v2938, %v3290
    %v3355 = vadd.f32 %v2939, %v3291
    %v3356 = vadd.f32 %v2940, %v3292
    %v3357 = vadd.f32 %v2941, %v3293
    %v3358 = vadd.f32 %v2942, %v3294
    %v3359 = vadd.f32 %v2943, %v3295
    %v3360 = vadd.f32 %v2944, %v3296
    %v3361 = vadd.f32 %v2945, %v3297
    %v3362 = vadd.f32 %v2946, %v3298
    %v3363 = vadd.f32 %v2947, %v3299
    %v3364 = vadd.f32 %v2948, %v3300
    %v3365 = vadd.f32 %v2949, %v3301
    %v3366 = vadd.f32 %v2950, %v3302
    %v3367 = vadd.f32 %v2951, %v3303
    %v3368 = vadd.f32 %v2952, %v3304
    %v3369 = vadd.f32 %v2953, %v3305
    %v3370 = vadd.f32 %v2954, %v3306
    %v3371 = vadd.f32 %v2955, %v3307
    %v3372 = vadd.f32 %v2956, %v3308
    %v3373 = vadd.f32 %v2957, %v3309
    %v3374 = vadd.f32 %v2958, %v3310
    %v3375 = vadd.f32 %v2959, %v3311
    %v3376 = vadd.f32 %v2960, %v3312
    %v3377 = vadd.f32 %v2961, %v3313
    %v3378 = vadd.f32 %v2962, %v3314
    %v3379 = vadd.f32 %v2963, %v3315
    %v3380 = vadd.f32 %v2964, %v3316
    %v3381 = vadd.f32 %v2965, %v3317
    %v3382 = vadd.f32 %v2966, %v3318
    %v3383 = vadd.f32 %v2967, %v3319
    %v3384 = vadd.f32 %v2968, %v3320
    %v3385 = vadd.f32 %v2969, %v3321
    %v3386 = vadd.f32 %v2970, %v3322
    %v3387 = vadd.f32 %v2971, %v3323
    %v3388 = vadd.f32 %v2972, %v3324
    %v3389 = vadd.f32 %v2973, %v3325
    %v3390 = vadd.f32 %v2974, %v3326
    %v3391 = vadd.f32 %v2975, %v3327
    %v3392 = vadd.f32 %v2976, %v3328
    %v3393 = vpack.c.bf16 %v2555, %v2554
    %v3395 = vlaneseq
    %v3396 = vshrl.u32 %v3395, 7
    %v3397 = vsub.s32 0, %v3396
    %v3398 = vrot.slane %v516, %v3397
    %v3404 = vunpack.c.l.b16 %v512
    %v3405 = vunpack.c.l.b16 %v513
    %v3406 = vunpack.c.l.b16 %v514
    %v3407 = vunpack.c.l.b16 %v515
    %v3408 = vpack.c.b16 %v3405, %v3404
    %v3409 = vpack.c.b16 %v3407, %v3406
    %v3413 = vsel %vm781, %v3393, 0
    %3415 = vmatprep.subr.bf16.mxu0 0
    %3416 = vmatpush1.bf16.msra.mxu0 %v3408
    %3417 = vmatprep.subr.bf16.mxu0 0
    %3418 = vmatpush1.bf16.msra.mxu0 %v3409
    %3419 = vmatprep.subr.bf16.mxu0 0
    %3420 = vmatpush1.bf16.msra.mxu0 0
    %3421 = vmatprep.subr.bf16.mxu0 0
    %3422 = vmatpush1.bf16.msra.mxu0 0
    %3423 = vmatprep.subr.bf16.mxu0 0
    %3424 = vmatpush1.bf16.msra.mxu0 0
    %3425 = vmatprep.subr.bf16.mxu0 0
    %3426 = vmatpush1.bf16.msra.mxu0 0
    %3427 = vmatprep.subr.bf16.mxu0 0
    %3428 = vmatpush1.bf16.msra.mxu0 0
    %3429 = vmatprep.subr.bf16.mxu0 0
    %3430 = vmatpush1.bf16.msra.mxu0 0
    %3431 = vmatprep.subr.bf16.mxu0 0
    %3432 = vmatpush1.bf16.msra.mxu0 0
    %3433 = vmatprep.subr.bf16.mxu0 0
    %3434 = vmatpush1.bf16.msra.mxu0 0
    %3435 = vmatprep.subr.bf16.mxu0 0
    %3436 = vmatpush1.bf16.msra.mxu0 0
    %3437 = vmatprep.subr.bf16.mxu0 0
    %3438 = vmatpush1.bf16.msra.mxu0 0
    %3439 = vmatprep.subr.bf16.mxu0 0
    %3440 = vmatpush1.bf16.msra.mxu0 0
    %3441 = vmatprep.subr.bf16.mxu0 0
    %3442 = vmatpush1.bf16.msra.mxu0 0
    %3443 = vmatprep.subr.bf16.mxu0 0
    %3444 = vmatpush1.bf16.msra.mxu0 0
    %3445 = vmatprep.subr.bf16.mxu0 0
    %3446 = vmatpush1.bf16.msra.mxu0 0
    %3447 = vmatprep.mubr.bf16.mxu0 0
    %3448 = vmatmul.mubr.bf16.gmra.mrb[0].mxu0 %v3413
    %v3449 = vpop.f32.mrb[0].mxu0
    %v3450 = vadd.f32 %v3398, %v3449
    %v3451 = vpop.f32.mrb[0].mxu0
    %v3452 = vpop.f32.mrb[0].mxu0
    %v3453 = vadd.f32 %v3398, %v3452
    %v3454 = vpop.f32.mrb[0].mxu0
    %3455 = vdwg.mxu0
    %v3456 = vmul.f32 %v3450, 2.0
    %v3457 = vmul.f32 %v3453, 2.0
    %v3458 = vpack.c.bf16 %v3330, %v3329
    %v3459 = vpack.c.bf16 %v3332, %v3331
    %v3460 = vpack.c.bf16 %v3334, %v3333
    %v3461 = vpack.c.bf16 %v3336, %v3335
    %v3462 = vpack.c.bf16 %v3338, %v3337
    %v3463 = vpack.c.bf16 %v3340, %v3339
    %v3464 = vpack.c.bf16 %v3342, %v3341
    %v3465 = vpack.c.bf16 %v3344, %v3343
    %v3466 = vpack.c.bf16 %v3346, %v3345
    %v3467 = vpack.c.bf16 %v3348, %v3347
    %v3468 = vpack.c.bf16 %v3350, %v3349
    %v3469 = vpack.c.bf16 %v3352, %v3351
    %v3470 = vpack.c.bf16 %v3354, %v3353
    %v3471 = vpack.c.bf16 %v3356, %v3355
    %v3472 = vpack.c.bf16 %v3358, %v3357
    %v3473 = vpack.c.bf16 %v3360, %v3359
    %v3474 = vpack.c.bf16 %v3362, %v3361
    %v3475 = vpack.c.bf16 %v3364, %v3363
    %v3476 = vpack.c.bf16 %v3366, %v3365
    %v3477 = vpack.c.bf16 %v3368, %v3367
    %v3478 = vpack.c.bf16 %v3370, %v3369
    %v3479 = vpack.c.bf16 %v3372, %v3371
    %v3480 = vpack.c.bf16 %v3374, %v3373
    %v3481 = vpack.c.bf16 %v3376, %v3375
    %v3482 = vpack.c.bf16 %v3378, %v3377
    %v3483 = vpack.c.bf16 %v3380, %v3379
    %v3484 = vpack.c.bf16 %v3382, %v3381
    %v3485 = vpack.c.bf16 %v3384, %v3383
    %v3486 = vpack.c.bf16 %v3386, %v3385
    %v3487 = vpack.c.bf16 %v3388, %v3387
    %v3488 = vpack.c.bf16 %v3390, %v3389
    %v3489 = vpack.c.bf16 %v3392, %v3391
    %v3522 = vunpack.c.l.b16 %v3458
    %v3523 = vunpack.c.h.b16 %v3458
    %v3524 = vunpack.c.l.b16 %v3459
    %v3525 = vunpack.c.h.b16 %v3459
    %v3526 = vunpack.c.l.b16 %v3460
    %v3527 = vunpack.c.h.b16 %v3460
    %v3528 = vunpack.c.l.b16 %v3461
    %v3529 = vunpack.c.h.b16 %v3461
    %v3530 = vunpack.c.l.b16 %v3462
    %v3531 = vunpack.c.h.b16 %v3462
    %v3532 = vunpack.c.l.b16 %v3463
    %v3533 = vunpack.c.h.b16 %v3463
    %v3534 = vunpack.c.l.b16 %v3464
    %v3535 = vunpack.c.h.b16 %v3464
    %v3536 = vunpack.c.l.b16 %v3465
    %v3537 = vunpack.c.h.b16 %v3465
    %v3538 = vunpack.c.l.b16 %v3466
    %v3539 = vunpack.c.h.b16 %v3466
    %v3540 = vunpack.c.l.b16 %v3467
    %v3541 = vunpack.c.h.b16 %v3467
    %v3542 = vunpack.c.l.b16 %v3468
    %v3543 = vunpack.c.h.b16 %v3468
    %v3544 = vunpack.c.l.b16 %v3469
    %v3545 = vunpack.c.h.b16 %v3469
    %v3546 = vunpack.c.l.b16 %v3470
    %v3547 = vunpack.c.h.b16 %v3470
    %v3548 = vunpack.c.l.b16 %v3471
    %v3549 = vunpack.c.h.b16 %v3471
    %v3550 = vunpack.c.l.b16 %v3472
    %v3551 = vunpack.c.h.b16 %v3472
    %v3552 = vunpack.c.l.b16 %v3473
    %v3553 = vunpack.c.h.b16 %v3473
    %v3554 = vunpack.c.l.b16 %v3474
    %v3555 = vunpack.c.h.b16 %v3474
    %v3556 = vunpack.c.l.b16 %v3475
    %v3557 = vunpack.c.h.b16 %v3475
    %v3558 = vunpack.c.l.b16 %v3476
    %v3559 = vunpack.c.h.b16 %v3476
    %v3560 = vunpack.c.l.b16 %v3477
    %v3561 = vunpack.c.h.b16 %v3477
    %v3562 = vunpack.c.l.b16 %v3478
    %v3563 = vunpack.c.h.b16 %v3478
    %v3564 = vunpack.c.l.b16 %v3479
    %v3565 = vunpack.c.h.b16 %v3479
    %v3566 = vunpack.c.l.b16 %v3480
    %v3567 = vunpack.c.h.b16 %v3480
    %v3568 = vunpack.c.l.b16 %v3481
    %v3569 = vunpack.c.h.b16 %v3481
    %v3570 = vunpack.c.l.b16 %v3482
    %v3571 = vunpack.c.h.b16 %v3482
    %v3572 = vunpack.c.l.b16 %v3483
    %v3573 = vunpack.c.h.b16 %v3483
    %v3574 = vunpack.c.l.b16 %v3484
    %v3575 = vunpack.c.h.b16 %v3484
    %v3576 = vunpack.c.l.b16 %v3485
    %v3577 = vunpack.c.h.b16 %v3485
    %v3578 = vunpack.c.l.b16 %v3486
    %v3579 = vunpack.c.h.b16 %v3486
    %v3580 = vunpack.c.l.b16 %v3487
    %v3581 = vunpack.c.h.b16 %v3487
    %v3582 = vunpack.c.l.b16 %v3488
    %v3583 = vunpack.c.h.b16 %v3488
    %v3584 = vunpack.c.l.b16 %v3489
    %v3585 = vunpack.c.h.b16 %v3489
    %v3586 = vlaneseq
    %v3587 = vshrl.u32 %v3586, 7
    %v3588 = vsub.s32 %v2163, %v3587
    %v3589 = vrot.slane %v3522, %v3588
    %v3590 = vlaneseq
    %v3591 = vshrl.u32 %v3590, 7
    %v3592 = vsub.s32 %v2168, %v3591
    %v3593 = vrot.slane %v3523, %v3592
    %v3594 = vsel %vm2173, %v3593, %v3589
    %v3595 = vlaneseq
    %v3596 = vshrl.u32 %v3595, 7
    %v3597 = vsub.s32 %v2175, %v3596
    %v3598 = vrot.slane %v3524, %v3597
    %v3599 = vsel %vm2180, %v3598, %v3594
    %v3600 = vlaneseq
    %v3601 = vshrl.u32 %v3600, 7
    %v3602 = vsub.s32 %v2182, %v3601
    %v3603 = vrot.slane %v3525, %v3602
    %v3604 = vsel %vm2187, %v3603, %v3599
    %v3605 = vlaneseq
    %v3606 = vshrl.u32 %v3605, 7
    %v3607 = vsub.s32 %v2163, %v3606
    %v3608 = vrot.slane %v3526, %v3607
    %v3609 = vlaneseq
    %v3610 = vshrl.u32 %v3609, 7
    %v3611 = vsub.s32 %v2168, %v3610
    %v3612 = vrot.slane %v3527, %v3611
    %v3613 = vsel %vm2173, %v3612, %v3608
    %v3614 = vlaneseq
    %v3615 = vshrl.u32 %v3614, 7
    %v3616 = vsub.s32 %v2175, %v3615
    %v3617 = vrot.slane %v3528, %v3616
    %v3618 = vsel %vm2180, %v3617, %v3613
    %v3619 = vlaneseq
    %v3620 = vshrl.u32 %v3619, 7
    %v3621 = vsub.s32 %v2182, %v3620
    %v3622 = vrot.slane %v3529, %v3621
    %v3623 = vsel %vm2187, %v3622, %v3618
    %v3624 = vlaneseq
    %v3625 = vshrl.u32 %v3624, 7
    %v3626 = vsub.s32 %v2163, %v3625
    %v3627 = vrot.slane %v3530, %v3626
    %v3628 = vlaneseq
    %v3629 = vshrl.u32 %v3628, 7
    %v3630 = vsub.s32 %v2168, %v3629
    %v3631 = vrot.slane %v3531, %v3630
    %v3632 = vsel %vm2173, %v3631, %v3627
    %v3633 = vlaneseq
    %v3634 = vshrl.u32 %v3633, 7
    %v3635 = vsub.s32 %v2175, %v3634
    %v3636 = vrot.slane %v3532, %v3635
    %v3637 = vsel %vm2180, %v3636, %v3632
    %v3638 = vlaneseq
    %v3639 = vshrl.u32 %v3638, 7
    %v3640 = vsub.s32 %v2182, %v3639
    %v3641 = vrot.slane %v3533, %v3640
    %v3642 = vsel %vm2187, %v3641, %v3637
    %v3643 = vlaneseq
    %v3644 = vshrl.u32 %v3643, 7
    %v3645 = vsub.s32 %v2163, %v3644
    %v3646 = vrot.slane %v3534, %v3645
    %v3647 = vlaneseq
    %v3648 = vshrl.u32 %v3647, 7
    %v3649 = vsub.s32 %v2168, %v3648
    %v3650 = vrot.slane %v3535, %v3649
    %v3651 = vsel %vm2173, %v3650, %v3646
    %v3652 = vlaneseq
    %v3653 = vshrl.u32 %v3652, 7
    %v3654 = vsub.s32 %v2175, %v3653
    %v3655 = vrot.slane %v3536, %v3654
    %v3656 = vsel %vm2180, %v3655, %v3651
    %v3657 = vlaneseq
    %v3658 = vshrl.u32 %v3657, 7
    %v3659 = vsub.s32 %v2182, %v3658
    %v3660 = vrot.slane %v3537, %v3659
    %v3661 = vsel %vm2187, %v3660, %v3656
    %v3662 = vlaneseq
    %v3663 = vshrl.u32 %v3662, 7
    %v3664 = vsub.s32 %v2163, %v3663
    %v3665 = vrot.slane %v3538, %v3664
    %v3666 = vlaneseq
    %v3667 = vshrl.u32 %v3666, 7
    %v3668 = vsub.s32 %v2168, %v3667
    %v3669 = vrot.slane %v3539, %v3668
    %v3670 = vsel %vm2173, %v3669, %v3665
    %v3671 = vlaneseq
    %v3672 = vshrl.u32 %v3671, 7
    %v3673 = vsub.s32 %v2175, %v3672
    %v3674 = vrot.slane %v3540, %v3673
    %v3675 = vsel %vm2180, %v3674, %v3670
    %v3676 = vlaneseq
    %v3677 = vshrl.u32 %v3676, 7
    %v3678 = vsub.s32 %v2182, %v3677
    %v3679 = vrot.slane %v3541, %v3678
    %v3680 = vsel %vm2187, %v3679, %v3675
    %v3681 = vlaneseq
    %v3682 = vshrl.u32 %v3681, 7
    %v3683 = vsub.s32 %v2163, %v3682
    %v3684 = vrot.slane %v3542, %v3683
    %v3685 = vlaneseq
    %v3686 = vshrl.u32 %v3685, 7
    %v3687 = vsub.s32 %v2168, %v3686
    %v3688 = vrot.slane %v3543, %v3687
    %v3689 = vsel %vm2173, %v3688, %v3684
    %v3690 = vlaneseq
    %v3691 = vshrl.u32 %v3690, 7
    %v3692 = vsub.s32 %v2175, %v3691
    %v3693 = vrot.slane %v3544, %v3692
    %v3694 = vsel %vm2180, %v3693, %v3689
    %v3695 = vlaneseq
    %v3696 = vshrl.u32 %v3695, 7
    %v3697 = vsub.s32 %v2182, %v3696
    %v3698 = vrot.slane %v3545, %v3697
    %v3699 = vsel %vm2187, %v3698, %v3694
    %v3700 = vlaneseq
    %v3701 = vshrl.u32 %v3700, 7
    %v3702 = vsub.s32 %v2163, %v3701
    %v3703 = vrot.slane %v3546, %v3702
    %v3704 = vlaneseq
    %v3705 = vshrl.u32 %v3704, 7
    %v3706 = vsub.s32 %v2168, %v3705
    %v3707 = vrot.slane %v3547, %v3706
    %v3708 = vsel %vm2173, %v3707, %v3703
    %v3709 = vlaneseq
    %v3710 = vshrl.u32 %v3709, 7
    %v3711 = vsub.s32 %v2175, %v3710
    %v3712 = vrot.slane %v3548, %v3711
    %v3713 = vsel %vm2180, %v3712, %v3708
    %v3714 = vlaneseq
    %v3715 = vshrl.u32 %v3714, 7
    %v3716 = vsub.s32 %v2182, %v3715
    %v3717 = vrot.slane %v3549, %v3716
    %v3718 = vsel %vm2187, %v3717, %v3713
    %v3719 = vlaneseq
    %v3720 = vshrl.u32 %v3719, 7
    %v3721 = vsub.s32 %v2163, %v3720
    %v3722 = vrot.slane %v3550, %v3721
    %v3723 = vlaneseq
    %v3724 = vshrl.u32 %v3723, 7
    %v3725 = vsub.s32 %v2168, %v3724
    %v3726 = vrot.slane %v3551, %v3725
    %v3727 = vsel %vm2173, %v3726, %v3722
    %v3728 = vlaneseq
    %v3729 = vshrl.u32 %v3728, 7
    %v3730 = vsub.s32 %v2175, %v3729
    %v3731 = vrot.slane %v3552, %v3730
    %v3732 = vsel %vm2180, %v3731, %v3727
    %v3733 = vlaneseq
    %v3734 = vshrl.u32 %v3733, 7
    %v3735 = vsub.s32 %v2182, %v3734
    %v3736 = vrot.slane %v3553, %v3735
    %v3737 = vsel %vm2187, %v3736, %v3732
    %v3738 = vlaneseq
    %v3739 = vshrl.u32 %v3738, 7
    %v3740 = vsub.s32 %v2163, %v3739
    %v3741 = vrot.slane %v3554, %v3740
    %v3742 = vlaneseq
    %v3743 = vshrl.u32 %v3742, 7
    %v3744 = vsub.s32 %v2168, %v3743
    %v3745 = vrot.slane %v3555, %v3744
    %v3746 = vsel %vm2173, %v3745, %v3741
    %v3747 = vlaneseq
    %v3748 = vshrl.u32 %v3747, 7
    %v3749 = vsub.s32 %v2175, %v3748
    %v3750 = vrot.slane %v3556, %v3749
    %v3751 = vsel %vm2180, %v3750, %v3746
    %v3752 = vlaneseq
    %v3753 = vshrl.u32 %v3752, 7
    %v3754 = vsub.s32 %v2182, %v3753
    %v3755 = vrot.slane %v3557, %v3754
    %v3756 = vsel %vm2187, %v3755, %v3751
    %v3757 = vlaneseq
    %v3758 = vshrl.u32 %v3757, 7
    %v3759 = vsub.s32 %v2163, %v3758
    %v3760 = vrot.slane %v3558, %v3759
    %v3761 = vlaneseq
    %v3762 = vshrl.u32 %v3761, 7
    %v3763 = vsub.s32 %v2168, %v3762
    %v3764 = vrot.slane %v3559, %v3763
    %v3765 = vsel %vm2173, %v3764, %v3760
    %v3766 = vlaneseq
    %v3767 = vshrl.u32 %v3766, 7
    %v3768 = vsub.s32 %v2175, %v3767
    %v3769 = vrot.slane %v3560, %v3768
    %v3770 = vsel %vm2180, %v3769, %v3765
    %v3771 = vlaneseq
    %v3772 = vshrl.u32 %v3771, 7
    %v3773 = vsub.s32 %v2182, %v3772
    %v3774 = vrot.slane %v3561, %v3773
    %v3775 = vsel %vm2187, %v3774, %v3770
    %v3776 = vlaneseq
    %v3777 = vshrl.u32 %v3776, 7
    %v3778 = vsub.s32 %v2163, %v3777
    %v3779 = vrot.slane %v3562, %v3778
    %v3780 = vlaneseq
    %v3781 = vshrl.u32 %v3780, 7
    %v3782 = vsub.s32 %v2168, %v3781
    %v3783 = vrot.slane %v3563, %v3782
    %v3784 = vsel %vm2173, %v3783, %v3779
    %v3785 = vlaneseq
    %v3786 = vshrl.u32 %v3785, 7
    %v3787 = vsub.s32 %v2175, %v3786
    %v3788 = vrot.slane %v3564, %v3787
    %v3789 = vsel %vm2180, %v3788, %v3784
    %v3790 = vlaneseq
    %v3791 = vshrl.u32 %v3790, 7
    %v3792 = vsub.s32 %v2182, %v3791
    %v3793 = vrot.slane %v3565, %v3792
    %v3794 = vsel %vm2187, %v3793, %v3789
    %v3795 = vlaneseq
    %v3796 = vshrl.u32 %v3795, 7
    %v3797 = vsub.s32 %v2163, %v3796
    %v3798 = vrot.slane %v3566, %v3797
    %v3799 = vlaneseq
    %v3800 = vshrl.u32 %v3799, 7
    %v3801 = vsub.s32 %v2168, %v3800
    %v3802 = vrot.slane %v3567, %v3801
    %v3803 = vsel %vm2173, %v3802, %v3798
    %v3804 = vlaneseq
    %v3805 = vshrl.u32 %v3804, 7
    %v3806 = vsub.s32 %v2175, %v3805
    %v3807 = vrot.slane %v3568, %v3806
    %v3808 = vsel %vm2180, %v3807, %v3803
    %v3809 = vlaneseq
    %v3810 = vshrl.u32 %v3809, 7
    %v3811 = vsub.s32 %v2182, %v3810
    %v3812 = vrot.slane %v3569, %v3811
    %v3813 = vsel %vm2187, %v3812, %v3808
    %v3814 = vlaneseq
    %v3815 = vshrl.u32 %v3814, 7
    %v3816 = vsub.s32 %v2163, %v3815
    %v3817 = vrot.slane %v3570, %v3816
    %v3818 = vlaneseq
    %v3819 = vshrl.u32 %v3818, 7
    %v3820 = vsub.s32 %v2168, %v3819
    %v3821 = vrot.slane %v3571, %v3820
    %v3822 = vsel %vm2173, %v3821, %v3817
    %v3823 = vlaneseq
    %v3824 = vshrl.u32 %v3823, 7
    %v3825 = vsub.s32 %v2175, %v3824
    %v3826 = vrot.slane %v3572, %v3825
    %v3827 = vsel %vm2180, %v3826, %v3822
    %v3828 = vlaneseq
    %v3829 = vshrl.u32 %v3828, 7
    %v3830 = vsub.s32 %v2182, %v3829
    %v3831 = vrot.slane %v3573, %v3830
    %v3832 = vsel %vm2187, %v3831, %v3827
    %v3833 = vlaneseq
    %v3834 = vshrl.u32 %v3833, 7
    %v3835 = vsub.s32 %v2163, %v3834
    %v3836 = vrot.slane %v3574, %v3835
    %v3837 = vlaneseq
    %v3838 = vshrl.u32 %v3837, 7
    %v3839 = vsub.s32 %v2168, %v3838
    %v3840 = vrot.slane %v3575, %v3839
    %v3841 = vsel %vm2173, %v3840, %v3836
    %v3842 = vlaneseq
    %v3843 = vshrl.u32 %v3842, 7
    %v3844 = vsub.s32 %v2175, %v3843
    %v3845 = vrot.slane %v3576, %v3844
    %v3846 = vsel %vm2180, %v3845, %v3841
    %v3847 = vlaneseq
    %v3848 = vshrl.u32 %v3847, 7
    %v3849 = vsub.s32 %v2182, %v3848
    %v3850 = vrot.slane %v3577, %v3849
    %v3851 = vsel %vm2187, %v3850, %v3846
    %v3852 = vlaneseq
    %v3853 = vshrl.u32 %v3852, 7
    %v3854 = vsub.s32 %v2163, %v3853
    %v3855 = vrot.slane %v3578, %v3854
    %v3856 = vlaneseq
    %v3857 = vshrl.u32 %v3856, 7
    %v3858 = vsub.s32 %v2168, %v3857
    %v3859 = vrot.slane %v3579, %v3858
    %v3860 = vsel %vm2173, %v3859, %v3855
    %v3861 = vlaneseq
    %v3862 = vshrl.u32 %v3861, 7
    %v3863 = vsub.s32 %v2175, %v3862
    %v3864 = vrot.slane %v3580, %v3863
    %v3865 = vsel %vm2180, %v3864, %v3860
    %v3866 = vlaneseq
    %v3867 = vshrl.u32 %v3866, 7
    %v3868 = vsub.s32 %v2182, %v3867
    %v3869 = vrot.slane %v3581, %v3868
    %v3870 = vsel %vm2187, %v3869, %v3865
    %v3871 = vlaneseq
    %v3872 = vshrl.u32 %v3871, 7
    %v3873 = vsub.s32 %v2163, %v3872
    %v3874 = vrot.slane %v3582, %v3873
    %v3875 = vlaneseq
    %v3876 = vshrl.u32 %v3875, 7
    %v3877 = vsub.s32 %v2168, %v3876
    %v3878 = vrot.slane %v3583, %v3877
    %v3879 = vsel %vm2173, %v3878, %v3874
    %v3880 = vlaneseq
    %v3881 = vshrl.u32 %v3880, 7
    %v3882 = vsub.s32 %v2175, %v3881
    %v3883 = vrot.slane %v3584, %v3882
    %v3884 = vsel %vm2180, %v3883, %v3879
    %v3885 = vlaneseq
    %v3886 = vshrl.u32 %v3885, 7
    %v3887 = vsub.s32 %v2182, %v3886
    %v3888 = vrot.slane %v3585, %v3887
    %v3889 = vsel %vm2187, %v3888, %v3884
    %v3890 = vsel %vm2474, %v3623, %v3604
    %v3891 = vsel %vm2476, %v3642, %v3890
    %v3892 = vsel %vm2478, %v3661, %v3891
    %v3893 = vsel %vm2480, %v3680, %v3892
    %v3894 = vsel %vm2482, %v3699, %v3893
    %v3895 = vsel %vm2484, %v3718, %v3894
    %v3896 = vsel %vm2486, %v3737, %v3895
    %v3897 = vsel %vm2474, %v3775, %v3756
    %v3898 = vsel %vm2476, %v3794, %v3897
    %v3899 = vsel %vm2478, %v3813, %v3898
    %v3900 = vsel %vm2480, %v3832, %v3899
    %v3901 = vsel %vm2482, %v3851, %v3900
    %v3902 = vsel %vm2484, %v3870, %v3901
    %v3903 = vsel %vm2486, %v3889, %v3902
    %v3904 = vpack.c.b16 %v3903, %v3896
    %v3909 = vunpack.c.l.b16 %v508
    %v3910 = vunpack.c.l.b16 %v509
    %v3911 = vunpack.c.l.b16 %v510
    %v3912 = vunpack.c.l.b16 %v511
    %v3913 = vpack.c.b16 %v3910, %v3909
    %v3914 = vpack.c.b16 %v3912, %v3911
    %v3918 = vsel %vm781, %v3904, 0
    %3920 = vmatprep.subr.bf16.mxu0 0
    %3921 = vmatpush1.bf16.msra.mxu0 %v3913
    %3922 = vmatprep.subr.bf16.mxu0 0
    %3923 = vmatpush1.bf16.msra.mxu0 %v3914
    %3924 = vmatprep.subr.bf16.mxu0 0
    %3925 = vmatpush1.bf16.msra.mxu0 0
    %3926 = vmatprep.subr.bf16.mxu0 0
    %3927 = vmatpush1.bf16.msra.mxu0 0
    %3928 = vmatprep.subr.bf16.mxu0 0
    %3929 = vmatpush1.bf16.msra.mxu0 0
    %3930 = vmatprep.subr.bf16.mxu0 0
    %3931 = vmatpush1.bf16.msra.mxu0 0
    %3932 = vmatprep.subr.bf16.mxu0 0
    %3933 = vmatpush1.bf16.msra.mxu0 0
    %3934 = vmatprep.subr.bf16.mxu0 0
    %3935 = vmatpush1.bf16.msra.mxu0 0
    %3936 = vmatprep.subr.bf16.mxu0 0
    %3937 = vmatpush1.bf16.msra.mxu0 0
    %3938 = vmatprep.subr.bf16.mxu0 0
    %3939 = vmatpush1.bf16.msra.mxu0 0
    %3940 = vmatprep.subr.bf16.mxu0 0
    %3941 = vmatpush1.bf16.msra.mxu0 0
    %3942 = vmatprep.subr.bf16.mxu0 0
    %3943 = vmatpush1.bf16.msra.mxu0 0
    %3944 = vmatprep.subr.bf16.mxu0 0
    %3945 = vmatpush1.bf16.msra.mxu0 0
    %3946 = vmatprep.subr.bf16.mxu0 0
    %3947 = vmatpush1.bf16.msra.mxu0 0
    %3948 = vmatprep.subr.bf16.mxu0 0
    %3949 = vmatpush1.bf16.msra.mxu0 0
    %3950 = vmatprep.subr.bf16.mxu0 0
    %3951 = vmatpush1.bf16.msra.mxu0 0
    %3952 = vmatprep.mubr.bf16.mxu0 0
    %3953 = vmatmul.mubr.bf16.gmra.mrb[0].mxu0 %v3918
    %v3954 = vpop.f32.mrb[0].mxu0
    %v3955 = vadd.f32 0.0, %v3954
    %v3956 = vpop.f32.mrb[0].mxu0
    %v3957 = vpop.f32.mrb[0].mxu0
    %v3958 = vadd.f32 0.0, %v3957
    %v3959 = vpop.f32.mrb[0].mxu0
    %3960 = vdwg.mxu0
    %v3961 = vadd.f32 %v3456, %v3955
    %v3962 = vadd.f32 %v3457, %v3958
    %v3963 = vmax.f32 %v3961, 0.0
    %v3964 = vmax.f32 %v3962, 0.0
    %v3965 = vpack.c.bf16 %v3964, %v3963
    %v3967 = vlaneseq
    %v3968 = vshrl.u32 %v3967, 7
    %v3969 = vsub.s32 0, %v3968
    %v3970 = vrot.slane %v493, %v3969
    %v3976 = vunpack.c.l.b16 %v489
    %v3977 = vunpack.c.l.b16 %v490
    %v3978 = vunpack.c.l.b16 %v491
    %v3979 = vunpack.c.l.b16 %v492
    %v3980 = vpack.c.b16 %v3977, %v3976
    %v3981 = vpack.c.b16 %v3979, %v3978
    %v3985 = vsel %vm781, %v3965, 0
    %3987 = vmatprep.subr.bf16.mxu0 0
    %3988 = vmatpush1.bf16.msra.mxu0 %v3980
    %3989 = vmatprep.subr.bf16.mxu0 0
    %3990 = vmatpush1.bf16.msra.mxu0 %v3981
    %3991 = vmatprep.subr.bf16.mxu0 0
    %3992 = vmatpush1.bf16.msra.mxu0 0
    %3993 = vmatprep.subr.bf16.mxu0 0
    %3994 = vmatpush1.bf16.msra.mxu0 0
    %3995 = vmatprep.subr.bf16.mxu0 0
    %3996 = vmatpush1.bf16.msra.mxu0 0
    %3997 = vmatprep.subr.bf16.mxu0 0
    %3998 = vmatpush1.bf16.msra.mxu0 0
    %3999 = vmatprep.subr.bf16.mxu0 0
    %4000 = vmatpush1.bf16.msra.mxu0 0
    %4001 = vmatprep.subr.bf16.mxu0 0
    %4002 = vmatpush1.bf16.msra.mxu0 0
    %4003 = vmatprep.subr.bf16.mxu0 0
    %4004 = vmatpush1.bf16.msra.mxu0 0
    %4005 = vmatprep.subr.bf16.mxu0 0
    %4006 = vmatpush1.bf16.msra.mxu0 0
    %4007 = vmatprep.subr.bf16.mxu0 0
    %4008 = vmatpush1.bf16.msra.mxu0 0
    %4009 = vmatprep.subr.bf16.mxu0 0
    %4010 = vmatpush1.bf16.msra.mxu0 0
    %4011 = vmatprep.subr.bf16.mxu0 0
    %4012 = vmatpush1.bf16.msra.mxu0 0
    %4013 = vmatprep.subr.bf16.mxu0 0
    %4014 = vmatpush1.bf16.msra.mxu0 0
    %4015 = vmatprep.subr.bf16.mxu0 0
    %4016 = vmatpush1.bf16.msra.mxu0 0
    %4017 = vmatprep.subr.bf16.mxu0 0
    %4018 = vmatpush1.bf16.msra.mxu0 0
    %4019 = vmatprep.mubr.bf16.mxu0 0
    %4020 = vmatmul.mubr.bf16.gmra.mrb[0].mxu0 %v3985
    %v4021 = vpop.f32.mrb[0].mxu0
    %v4022 = vadd.f32 %v3970, %v4021
    %v4023 = vpop.f32.mrb[0].mxu0
    %v4024 = vpop.f32.mrb[0].mxu0
    %v4025 = vadd.f32 %v3970, %v4024
    %v4026 = vpop.f32.mrb[0].mxu0
    %4027 = vdwg.mxu0
    %v4028 = vmax.f32 %v4022, 0.0
    %v4029 = vmax.f32 %v4025, 0.0
    %4030 = vxpose.xlu0.b32.start [1/16] %v4028, 128
    %4031 = vxpose.xlu0.b32.cont [2/16] %v4029, 128
    %4032 = vxpose.xlu0.b32.cont [3/16] 0.0, 128
    %4033 = vxpose.xlu0.b32.cont [4/16] 0.0, 128
    %4034 = vxpose.xlu0.b32.cont [5/16] 0.0, 128
    %4035 = vxpose.xlu0.b32.cont [6/16] 0.0, 128
    %4036 = vxpose.xlu0.b32.cont [7/16] 0.0, 128
    %4037 = vxpose.xlu0.b32.cont [8/16] 0.0, 128
    %4038 = vxpose.xlu0.b32.cont [9/16] 0.0, 128
    %4039 = vxpose.xlu0.b32.cont [10/16] 0.0, 128
    %4040 = vxpose.xlu0.b32.cont [11/16] 0.0, 128
    %4041 = vxpose.xlu0.b32.cont [12/16] 0.0, 128
    %4042 = vxpose.xlu0.b32.cont [13/16] 0.0, 128
    %4043 = vxpose.xlu0.b32.cont [14/16] 0.0, 128
    %4044 = vxpose.xlu0.b32.cont [15/16] 0.0, 128
    %4045 = vxpose.xlu0.b32.end [16/16] 0.0, 128
    %v4046 = vpop.trf.xlu0
    %v4047 = vpop.trf.xlu0
    %v4048 = vpop.trf.xlu0
    %v4049 = vpop.trf.xlu0
    %v4050 = vpop.trf.xlu0
    %v4051 = vpop.trf.xlu0
    %v4052 = vpop.trf.xlu0
    %v4053 = vpop.trf.xlu0
    %v4054 = vpop.trf.xlu0
    %v4055 = vpop.trf.xlu0
    %v4056 = vpop.trf.xlu0
    %v4057 = vpop.trf.xlu0
    %v4058 = vpop.trf.xlu0
    %v4059 = vpop.trf.xlu0
    %v4060 = vpop.trf.xlu0
    %v4061 = vpop.trf.xlu0
    %v4064 = vcombine.high %v460, %v460
    %v4066 = vunpack.c.l.s4 1966171168
    %v4067 = vunpack.c.0.s8 %v4066
    %v4068 = vlaneseq
    %v4069 = vshrl.u32 %v4068, 7
    %v4070 = vsub.s32 %v4067, %v4069
    %v4071 = vrot.slane %v460, %v4070
    %v4073 = vunpack.c.l.s4 1966171168
    %v4074 = vunpack.c.0.s8 %v4073
    %v4075 = vlaneseq
    %v4076 = vshrl.u32 %v4075, 7
    %v4077 = vsub.s32 %v4074, %v4076
    %v4078 = vrot.slane %v4064, %v4077
    %v4079 = vcombine.high %v4071, %v4071
    %v4080 = vcombine.high %v4078, %v4078
    %v4082 = vunpack.c.l.s4 1966171168
    %v4083 = vunpack.c.0.s8 %v4082
    %v4084 = vlaneseq
    %v4085 = vshrl.u32 %v4084, 7
    %v4086 = vsub.s32 %v4083, %v4085
    %v4087 = vrot.slane %v4071, %v4086
    %v4089 = vunpack.c.l.s4 1966171168
    %v4090 = vunpack.c.0.s8 %v4089
    %v4091 = vlaneseq
    %v4092 = vshrl.u32 %v4091, 7
    %v4093 = vsub.s32 %v4090, %v4092
    %v4094 = vrot.slane %v4078, %v4093
    %v4096 = vunpack.c.l.s4 1966171168
    %v4097 = vunpack.c.0.s8 %v4096
    %v4098 = vlaneseq
    %v4099 = vshrl.u32 %v4098, 7
    %v4100 = vsub.s32 %v4097, %v4099
    %v4101 = vrot.slane %v4079, %v4100
    %v4103 = vunpack.c.l.s4 1966171168
    %v4104 = vunpack.c.0.s8 %v4103
    %v4105 = vlaneseq
    %v4106 = vshrl.u32 %v4105, 7
    %v4107 = vsub.s32 %v4104, %v4106
    %v4108 = vrot.slane %v4080, %v4107
    %v4109 = vcombine.high %v4087, %v4087
    %v4110 = vcombine.high %v4094, %v4094
    %v4111 = vcombine.high %v4101, %v4101
    %v4112 = vcombine.high %v4108, %v4108
    %v4113 = vcombine.high %v461, %v461
    %v4115 = vunpack.c.l.s4 1966171168
    %v4116 = vunpack.c.0.s8 %v4115
    %v4117 = vlaneseq
    %v4118 = vshrl.u32 %v4117, 7
    %v4119 = vsub.s32 %v4116, %v4118
    %v4120 = vrot.slane %v461, %v4119
    %v4122 = vunpack.c.l.s4 1966171168
    %v4123 = vunpack.c.0.s8 %v4122
    %v4124 = vlaneseq
    %v4125 = vshrl.u32 %v4124, 7
    %v4126 = vsub.s32 %v4123, %v4125
    %v4127 = vrot.slane %v4113, %v4126
    %v4128 = vcombine.high %v4120, %v4120
    %v4129 = vcombine.high %v4127, %v4127
    %v4131 = vunpack.c.l.s4 1966171168
    %v4132 = vunpack.c.0.s8 %v4131
    %v4133 = vlaneseq
    %v4134 = vshrl.u32 %v4133, 7
    %v4135 = vsub.s32 %v4132, %v4134
    %v4136 = vrot.slane %v4120, %v4135
    %v4138 = vunpack.c.l.s4 1966171168
    %v4139 = vunpack.c.0.s8 %v4138
    %v4140 = vlaneseq
    %v4141 = vshrl.u32 %v4140, 7
    %v4142 = vsub.s32 %v4139, %v4141
    %v4143 = vrot.slane %v4127, %v4142
    %v4145 = vunpack.c.l.s4 1966171168
    %v4146 = vunpack.c.0.s8 %v4145
    %v4147 = vlaneseq
    %v4148 = vshrl.u32 %v4147, 7
    %v4149 = vsub.s32 %v4146, %v4148
    %v4150 = vrot.slane %v4128, %v4149
    %v4152 = vunpack.c.l.s4 1966171168
    %v4153 = vunpack.c.0.s8 %v4152
    %v4154 = vlaneseq
    %v4155 = vshrl.u32 %v4154, 7
    %v4156 = vsub.s32 %v4153, %v4155
    %v4157 = vrot.slane %v4129, %v4156
    %v4158 = vcombine.high %v4136, %v4136
    %v4159 = vcombine.high %v4143, %v4143
    %v4160 = vcombine.high %v4150, %v4150
    %v4161 = vcombine.high %v4157, %v4157
    %v4162 = vlaneseq
    %v4163 = vshrl.u32 %v4162, 7
    %v4164 = vsub.s32 0, %v4163
    %v4165 = vrot.slane %v4087, %v4164
    %v4166 = vlaneseq
    %v4167 = vshrl.u32 %v4166, 7
    %v4168 = vsub.s32 0, %v4167
    %v4169 = vrot.slane %v4101, %v4168
    %v4170 = vlaneseq
    %v4171 = vshrl.u32 %v4170, 7
    %v4172 = vsub.s32 0, %v4171
    %v4173 = vrot.slane %v4109, %v4172
    %v4174 = vlaneseq
    %v4175 = vshrl.u32 %v4174, 7
    %v4176 = vsub.s32 0, %v4175
    %v4177 = vrot.slane %v4111, %v4176
    %v4178 = vlaneseq
    %v4179 = vshrl.u32 %v4178, 7
    %v4180 = vsub.s32 0, %v4179
    %v4181 = vrot.slane %v4094, %v4180
    %v4182 = vlaneseq
    %v4183 = vshrl.u32 %v4182, 7
    %v4184 = vsub.s32 0, %v4183
    %v4185 = vrot.slane %v4108, %v4184
    %v4186 = vlaneseq
    %v4187 = vshrl.u32 %v4186, 7
    %v4188 = vsub.s32 0, %v4187
    %v4189 = vrot.slane %v4110, %v4188
    %v4190 = vlaneseq
    %v4191 = vshrl.u32 %v4190, 7
    %v4192 = vsub.s32 0, %v4191
    %v4193 = vrot.slane %v4112, %v4192
    %v4194 = vlaneseq
    %v4195 = vshrl.u32 %v4194, 7
    %v4196 = vsub.s32 0, %v4195
    %v4197 = vrot.slane %v4136, %v4196
    %v4198 = vlaneseq
    %v4199 = vshrl.u32 %v4198, 7
    %v4200 = vsub.s32 0, %v4199
    %v4201 = vrot.slane %v4150, %v4200
    %v4202 = vlaneseq
    %v4203 = vshrl.u32 %v4202, 7
    %v4204 = vsub.s32 0, %v4203
    %v4205 = vrot.slane %v4158, %v4204
    %v4206 = vlaneseq
    %v4207 = vshrl.u32 %v4206, 7
    %v4208 = vsub.s32 0, %v4207
    %v4209 = vrot.slane %v4160, %v4208
    %v4210 = vlaneseq
    %v4211 = vshrl.u32 %v4210, 7
    %v4212 = vsub.s32 0, %v4211
    %v4213 = vrot.slane %v4143, %v4212
    %v4214 = vlaneseq
    %v4215 = vshrl.u32 %v4214, 7
    %v4216 = vsub.s32 0, %v4215
    %v4217 = vrot.slane %v4157, %v4216
    %v4218 = vlaneseq
    %v4219 = vshrl.u32 %v4218, 7
    %v4220 = vsub.s32 0, %v4219
    %v4221 = vrot.slane %v4159, %v4220
    %v4222 = vlaneseq
    %v4223 = vshrl.u32 %v4222, 7
    %v4224 = vsub.s32 0, %v4223
    %v4225 = vrot.slane %v4161, %v4224
    %v4242 = vmul.f32 %v4165, %v4046
    %v4243 = vmul.f32 %v4165, %v4047
    %v4244 = vmul.f32 %v4165, %v4048
    %v4245 = vmul.f32 %v4165, %v4049
    %v4246 = vmul.f32 %v4169, %v4046
    %v4247 = vmul.f32 %v4169, %v4047
    %v4248 = vmul.f32 %v4169, %v4048
    %v4249 = vmul.f32 %v4169, %v4049
    %v4250 = vmul.f32 %v4173, %v4046
    %v4251 = vmul.f32 %v4173, %v4047
    %v4252 = vmul.f32 %v4173, %v4048
    %v4253 = vmul.f32 %v4173, %v4049
    %v4254 = vmul.f32 %v4177, %v4046
    %v4255 = vmul.f32 %v4177, %v4047
    %v4256 = vmul.f32 %v4177, %v4048
    %v4257 = vmul.f32 %v4177, %v4049
    %v4258 = vmul.f32 %v4181, %v4046
    %v4259 = vmul.f32 %v4181, %v4047
    %v4260 = vmul.f32 %v4181, %v4048
    %v4261 = vmul.f32 %v4181, %v4049
    %v4262 = vmul.f32 %v4185, %v4046
    %v4263 = vmul.f32 %v4185, %v4047
    %v4264 = vmul.f32 %v4185, %v4048
    %v4265 = vmul.f32 %v4185, %v4049
    %v4266 = vmul.f32 %v4189, %v4046
    %v4267 = vmul.f32 %v4189, %v4047
    %v4268 = vmul.f32 %v4189, %v4048
    %v4269 = vmul.f32 %v4189, %v4049
    %v4270 = vmul.f32 %v4193, %v4046
    %v4271 = vmul.f32 %v4193, %v4047
    %v4272 = vmul.f32 %v4193, %v4048
    %v4273 = vmul.f32 %v4193, %v4049
    %v4274 = vmul.f32 %v4197, %v4046
    %v4275 = vmul.f32 %v4197, %v4047
    %v4276 = vmul.f32 %v4197, %v4048
    %v4277 = vmul.f32 %v4197, %v4049
    %v4278 = vmul.f32 %v4201, %v4046
    %v4279 = vmul.f32 %v4201, %v4047
    %v4280 = vmul.f32 %v4201, %v4048
    %v4281 = vmul.f32 %v4201, %v4049
    %v4282 = vmul.f32 %v4205, %v4046
    %v4283 = vmul.f32 %v4205, %v4047
    %v4284 = vmul.f32 %v4205, %v4048
    %v4285 = vmul.f32 %v4205, %v4049
    %v4286 = vmul.f32 %v4209, %v4046
    %v4287 = vmul.f32 %v4209, %v4047
    %v4288 = vmul.f32 %v4209, %v4048
    %v4289 = vmul.f32 %v4209, %v4049
    %v4290 = vmul.f32 %v4213, %v4046
    %v4291 = vmul.f32 %v4213, %v4047
    %v4292 = vmul.f32 %v4213, %v4048
    %v4293 = vmul.f32 %v4213, %v4049
    %v4294 = vmul.f32 %v4217, %v4046
    %v4295 = vmul.f32 %v4217, %v4047
    %v4296 = vmul.f32 %v4217, %v4048
    %v4297 = vmul.f32 %v4217, %v4049
    %v4298 = vmul.f32 %v4221, %v4046
    %v4299 = vmul.f32 %v4221, %v4047
    %v4300 = vmul.f32 %v4221, %v4048
    %v4301 = vmul.f32 %v4221, %v4049
    %v4302 = vmul.f32 %v4225, %v4046
    %v4303 = vmul.f32 %v4225, %v4047
    %v4304 = vmul.f32 %v4225, %v4048
    %v4305 = vmul.f32 %v4225, %v4049
    %v4306 = vsel %vm1115, %v4242, -inf
    %4307 = vmax.xlane.f32.xlu0 %v4306
    %v4308 = vpop.xlane.xlu0 %4307
    %v4309 = vsel %vm1115, %v4243, -inf
    %4310 = vmax.xlane.f32.xlu0 %v4309
    %v4311 = vpop.xlane.xlu0 %4310
    %v4312 = vsel %vm1115, %v4244, -inf
    %4313 = vmax.xlane.f32.xlu0 %v4312
    %v4314 = vpop.xlane.xlu0 %4313
    %v4315 = vsel %vm1115, %v4245, -inf
    %4316 = vmax.xlane.f32.xlu0 %v4315
    %v4317 = vpop.xlane.xlu0 %4316
    %v4318 = vsel %vm1115, %v4246, -inf
    %4319 = vmax.xlane.f32.xlu0 %v4318
    %v4320 = vpop.xlane.xlu0 %4319
    %v4321 = vsel %vm1115, %v4247, -inf
    %4322 = vmax.xlane.f32.xlu0 %v4321
    %v4323 = vpop.xlane.xlu0 %4322
    %v4324 = vsel %vm1115, %v4248, -inf
    %4325 = vmax.xlane.f32.xlu0 %v4324
    %v4326 = vpop.xlane.xlu0 %4325
    %v4327 = vsel %vm1115, %v4249, -inf
    %4328 = vmax.xlane.f32.xlu0 %v4327
    %v4329 = vpop.xlane.xlu0 %4328
    %v4330 = vsel %vm1115, %v4250, -inf
    %4331 = vmax.xlane.f32.xlu0 %v4330
    %v4332 = vpop.xlane.xlu0 %4331
    %v4333 = vsel %vm1115, %v4251, -inf
    %4334 = vmax.xlane.f32.xlu0 %v4333
    %v4335 = vpop.xlane.xlu0 %4334
    %v4336 = vsel %vm1115, %v4252, -inf
    %4337 = vmax.xlane.f32.xlu0 %v4336
    %v4338 = vpop.xlane.xlu0 %4337
    %v4339 = vsel %vm1115, %v4253, -inf
    %4340 = vmax.xlane.f32.xlu0 %v4339
    %v4341 = vpop.xlane.xlu0 %4340
    %v4342 = vsel %vm1115, %v4254, -inf
    %4343 = vmax.xlane.f32.xlu0 %v4342
    %v4344 = vpop.xlane.xlu0 %4343
    %v4345 = vsel %vm1115, %v4255, -inf
    %4346 = vmax.xlane.f32.xlu0 %v4345
    %v4347 = vpop.xlane.xlu0 %4346
    %v4348 = vsel %vm1115, %v4256, -inf
    %4349 = vmax.xlane.f32.xlu0 %v4348
    %v4350 = vpop.xlane.xlu0 %4349
    %v4351 = vsel %vm1115, %v4257, -inf
    %4352 = vmax.xlane.f32.xlu0 %v4351
    %v4353 = vpop.xlane.xlu0 %4352
    %v4354 = vsel %vm1115, %v4258, -inf
    %4355 = vmax.xlane.f32.xlu0 %v4354
    %v4356 = vpop.xlane.xlu0 %4355
    %v4357 = vsel %vm1115, %v4259, -inf
    %4358 = vmax.xlane.f32.xlu0 %v4357
    %v4359 = vpop.xlane.xlu0 %4358
    %v4360 = vsel %vm1115, %v4260, -inf
    %4361 = vmax.xlane.f32.xlu0 %v4360
    %v4362 = vpop.xlane.xlu0 %4361
    %v4363 = vsel %vm1115, %v4261, -inf
    %4364 = vmax.xlane.f32.xlu0 %v4363
    %v4365 = vpop.xlane.xlu0 %4364
    %v4366 = vsel %vm1115, %v4262, -inf
    %4367 = vmax.xlane.f32.xlu0 %v4366
    %v4368 = vpop.xlane.xlu0 %4367
    %v4369 = vsel %vm1115, %v4263, -inf
    %4370 = vmax.xlane.f32.xlu0 %v4369
    %v4371 = vpop.xlane.xlu0 %4370
    %v4372 = vsel %vm1115, %v4264, -inf
    %4373 = vmax.xlane.f32.xlu0 %v4372
    %v4374 = vpop.xlane.xlu0 %4373
    %v4375 = vsel %vm1115, %v4265, -inf
    %4376 = vmax.xlane.f32.xlu0 %v4375
    %v4377 = vpop.xlane.xlu0 %4376
    %v4378 = vsel %vm1115, %v4266, -inf
    %4379 = vmax.xlane.f32.xlu0 %v4378
    %v4380 = vpop.xlane.xlu0 %4379
    %v4381 = vsel %vm1115, %v4267, -inf
    %4382 = vmax.xlane.f32.xlu0 %v4381
    %v4383 = vpop.xlane.xlu0 %4382
    %v4384 = vsel %vm1115, %v4268, -inf
    %4385 = vmax.xlane.f32.xlu0 %v4384
    %v4386 = vpop.xlane.xlu0 %4385
    %v4387 = vsel %vm1115, %v4269, -inf
    %4388 = vmax.xlane.f32.xlu0 %v4387
    %v4389 = vpop.xlane.xlu0 %4388
    %v4390 = vsel %vm1115, %v4270, -inf
    %4391 = vmax.xlane.f32.xlu0 %v4390
    %v4392 = vpop.xlane.xlu0 %4391
    %v4393 = vsel %vm1115, %v4271, -inf
    %4394 = vmax.xlane.f32.xlu0 %v4393
    %v4395 = vpop.xlane.xlu0 %4394
    %v4396 = vsel %vm1115, %v4272, -inf
    %4397 = vmax.xlane.f32.xlu0 %v4396
    %v4398 = vpop.xlane.xlu0 %4397
    %v4399 = vsel %vm1115, %v4273, -inf
    %4400 = vmax.xlane.f32.xlu0 %v4399
    %v4401 = vpop.xlane.xlu0 %4400
    %v4402 = vsel %vm1115, %v4274, -inf
    %4403 = vmax.xlane.f32.xlu0 %v4402
    %v4404 = vpop.xlane.xlu0 %4403
    %v4405 = vsel %vm1115, %v4275, -inf
    %4406 = vmax.xlane.f32.xlu0 %v4405
    %v4407 = vpop.xlane.xlu0 %4406
    %v4408 = vsel %vm1115, %v4276, -inf
    %4409 = vmax.xlane.f32.xlu0 %v4408
    %v4410 = vpop.xlane.xlu0 %4409
    %v4411 = vsel %vm1115, %v4277, -inf
    %4412 = vmax.xlane.f32.xlu0 %v4411
    %v4413 = vpop.xlane.xlu0 %4412
    %v4414 = vsel %vm1115, %v4278, -inf
    %4415 = vmax.xlane.f32.xlu0 %v4414
    %v4416 = vpop.xlane.xlu0 %4415
    %v4417 = vsel %vm1115, %v4279, -inf
    %4418 = vmax.xlane.f32.xlu0 %v4417
    %v4419 = vpop.xlane.xlu0 %4418
    %v4420 = vsel %vm1115, %v4280, -inf
    %4421 = vmax.xlane.f32.xlu0 %v4420
    %v4422 = vpop.xlane.xlu0 %4421
    %v4423 = vsel %vm1115, %v4281, -inf
    %4424 = vmax.xlane.f32.xlu0 %v4423
    %v4425 = vpop.xlane.xlu0 %4424
    %v4426 = vsel %vm1115, %v4282, -inf
    %4427 = vmax.xlane.f32.xlu0 %v4426
    %v4428 = vpop.xlane.xlu0 %4427
    %v4429 = vsel %vm1115, %v4283, -inf
    %4430 = vmax.xlane.f32.xlu0 %v4429
    %v4431 = vpop.xlane.xlu0 %4430
    %v4432 = vsel %vm1115, %v4284, -inf
    %4433 = vmax.xlane.f32.xlu0 %v4432
    %v4434 = vpop.xlane.xlu0 %4433
    %v4435 = vsel %vm1115, %v4285, -inf
    %4436 = vmax.xlane.f32.xlu0 %v4435
    %v4437 = vpop.xlane.xlu0 %4436
    %v4438 = vsel %vm1115, %v4286, -inf
    %4439 = vmax.xlane.f32.xlu0 %v4438
    %v4440 = vpop.xlane.xlu0 %4439
    %v4441 = vsel %vm1115, %v4287, -inf
    %4442 = vmax.xlane.f32.xlu0 %v4441
    %v4443 = vpop.xlane.xlu0 %4442
    %v4444 = vsel %vm1115, %v4288, -inf
    %4445 = vmax.xlane.f32.xlu0 %v4444
    %v4446 = vpop.xlane.xlu0 %4445
    %v4447 = vsel %vm1115, %v4289, -inf
    %4448 = vmax.xlane.f32.xlu0 %v4447
    %v4449 = vpop.xlane.xlu0 %4448
    %v4450 = vsel %vm1115, %v4290, -inf
    %4451 = vmax.xlane.f32.xlu0 %v4450
    %v4452 = vpop.xlane.xlu0 %4451
    %v4453 = vsel %vm1115, %v4291, -inf
    %4454 = vmax.xlane.f32.xlu0 %v4453
    %v4455 = vpop.xlane.xlu0 %4454
    %v4456 = vsel %vm1115, %v4292, -inf
    %4457 = vmax.xlane.f32.xlu0 %v4456
    %v4458 = vpop.xlane.xlu0 %4457
    %v4459 = vsel %vm1115, %v4293, -inf
    %4460 = vmax.xlane.f32.xlu0 %v4459
    %v4461 = vpop.xlane.xlu0 %4460
    %v4462 = vsel %vm1115, %v4294, -inf
    %4463 = vmax.xlane.f32.xlu0 %v4462
    %v4464 = vpop.xlane.xlu0 %4463
    %v4465 = vsel %vm1115, %v4295, -inf
    %4466 = vmax.xlane.f32.xlu0 %v4465
    %v4467 = vpop.xlane.xlu0 %4466
    %v4468 = vsel %vm1115, %v4296, -inf
    %4469 = vmax.xlane.f32.xlu0 %v4468
    %v4470 = vpop.xlane.xlu0 %4469
    %v4471 = vsel %vm1115, %v4297, -inf
    %4472 = vmax.xlane.f32.xlu0 %v4471
    %v4473 = vpop.xlane.xlu0 %4472
    %v4474 = vsel %vm1115, %v4298, -inf
    %4475 = vmax.xlane.f32.xlu0 %v4474
    %v4476 = vpop.xlane.xlu0 %4475
    %v4477 = vsel %vm1115, %v4299, -inf
    %4478 = vmax.xlane.f32.xlu0 %v4477
    %v4479 = vpop.xlane.xlu0 %4478
    %v4480 = vsel %vm1115, %v4300, -inf
    %4481 = vmax.xlane.f32.xlu0 %v4480
    %v4482 = vpop.xlane.xlu0 %4481
    %v4483 = vsel %vm1115, %v4301, -inf
    %4484 = vmax.xlane.f32.xlu0 %v4483
    %v4485 = vpop.xlane.xlu0 %4484
    %v4486 = vsel %vm1115, %v4302, -inf
    %4487 = vmax.xlane.f32.xlu0 %v4486
    %v4488 = vpop.xlane.xlu0 %4487
    %v4489 = vsel %vm1115, %v4303, -inf
    %4490 = vmax.xlane.f32.xlu0 %v4489
    %v4491 = vpop.xlane.xlu0 %4490
    %v4492 = vsel %vm1115, %v4304, -inf
    %4493 = vmax.xlane.f32.xlu0 %v4492
    %v4494 = vpop.xlane.xlu0 %4493
    %v4495 = vsel %vm1115, %v4305, -inf
    %4496 = vmax.xlane.f32.xlu0 %v4495
    %v4497 = vpop.xlane.xlu0 %4496
    %v4498 = vmax.f32 %v4308, 0.0
    %v4499 = vmax.f32 %v4311, 0.0
    %v4500 = vmax.f32 %v4314, 0.0
    %v4501 = vmax.f32 %v4317, 0.0
    %v4502 = vmax.f32 %v4320, 0.0
    %v4503 = vmax.f32 %v4323, 0.0
    %v4504 = vmax.f32 %v4326, 0.0
    %v4505 = vmax.f32 %v4329, 0.0
    %v4506 = vmax.f32 %v4332, 0.0
    %v4507 = vmax.f32 %v4335, 0.0
    %v4508 = vmax.f32 %v4338, 0.0
    %v4509 = vmax.f32 %v4341, 0.0
    %v4510 = vmax.f32 %v4344, 0.0
    %v4511 = vmax.f32 %v4347, 0.0
    %v4512 = vmax.f32 %v4350, 0.0
    %v4513 = vmax.f32 %v4353, 0.0
    %v4514 = vmax.f32 %v4356, 0.0
    %v4515 = vmax.f32 %v4359, 0.0
    %v4516 = vmax.f32 %v4362, 0.0
    %v4517 = vmax.f32 %v4365, 0.0
    %v4518 = vmax.f32 %v4368, 0.0
    %v4519 = vmax.f32 %v4371, 0.0
    %v4520 = vmax.f32 %v4374, 0.0
    %v4521 = vmax.f32 %v4377, 0.0
    %v4522 = vmax.f32 %v4380, 0.0
    %v4523 = vmax.f32 %v4383, 0.0
    %v4524 = vmax.f32 %v4386, 0.0
    %v4525 = vmax.f32 %v4389, 0.0
    %v4526 = vmax.f32 %v4392, 0.0
    %v4527 = vmax.f32 %v4395, 0.0
    %v4528 = vmax.f32 %v4398, 0.0
    %v4529 = vmax.f32 %v4401, 0.0
    %v4530 = vmax.f32 %v4404, 0.0
    %v4531 = vmax.f32 %v4407, 0.0
    %v4532 = vmax.f32 %v4410, 0.0
    %v4533 = vmax.f32 %v4413, 0.0
    %v4534 = vmax.f32 %v4416, 0.0
    %v4535 = vmax.f32 %v4419, 0.0
    %v4536 = vmax.f32 %v4422, 0.0
    %v4537 = vmax.f32 %v4425, 0.0
    %v4538 = vmax.f32 %v4428, 0.0
    %v4539 = vmax.f32 %v4431, 0.0
    %v4540 = vmax.f32 %v4434, 0.0
    %v4541 = vmax.f32 %v4437, 0.0
    %v4542 = vmax.f32 %v4440, 0.0
    %v4543 = vmax.f32 %v4443, 0.0
    %v4544 = vmax.f32 %v4446, 0.0
    %v4545 = vmax.f32 %v4449, 0.0
    %v4546 = vmax.f32 %v4452, 0.0
    %v4547 = vmax.f32 %v4455, 0.0
    %v4548 = vmax.f32 %v4458, 0.0
    %v4549 = vmax.f32 %v4461, 0.0
    %v4550 = vmax.f32 %v4464, 0.0
    %v4551 = vmax.f32 %v4467, 0.0
    %v4552 = vmax.f32 %v4470, 0.0
    %v4553 = vmax.f32 %v4473, 0.0
    %v4554 = vmax.f32 %v4476, 0.0
    %v4555 = vmax.f32 %v4479, 0.0
    %v4556 = vmax.f32 %v4482, 0.0
    %v4557 = vmax.f32 %v4485, 0.0
    %v4558 = vmax.f32 %v4488, 0.0
    %v4559 = vmax.f32 %v4491, 0.0
    %v4560 = vmax.f32 %v4494, 0.0
    %v4561 = vmax.f32 %v4497, 0.0
    %v4563 = vcombine.high %v462, %v462
    %v4565 = vunpack.c.l.s4 1966171168
    %v4566 = vunpack.c.0.s8 %v4565
    %v4567 = vlaneseq
    %v4568 = vshrl.u32 %v4567, 7
    %v4569 = vsub.s32 %v4566, %v4568
    %v4570 = vrot.slane %v462, %v4569
    %v4572 = vunpack.c.l.s4 1966171168
    %v4573 = vunpack.c.0.s8 %v4572
    %v4574 = vlaneseq
    %v4575 = vshrl.u32 %v4574, 7
    %v4576 = vsub.s32 %v4573, %v4575
    %v4577 = vrot.slane %v4563, %v4576
    %v4578 = vcombine.high %v4570, %v4570
    %v4579 = vcombine.high %v4577, %v4577
    %v4581 = vunpack.c.l.s4 1966171168
    %v4582 = vunpack.c.0.s8 %v4581
    %v4583 = vlaneseq
    %v4584 = vshrl.u32 %v4583, 7
    %v4585 = vsub.s32 %v4582, %v4584
    %v4586 = vrot.slane %v4570, %v4585
    %v4588 = vunpack.c.l.s4 1966171168
    %v4589 = vunpack.c.0.s8 %v4588
    %v4590 = vlaneseq
    %v4591 = vshrl.u32 %v4590, 7
    %v4592 = vsub.s32 %v4589, %v4591
    %v4593 = vrot.slane %v4577, %v4592
    %v4595 = vunpack.c.l.s4 1966171168
    %v4596 = vunpack.c.0.s8 %v4595
    %v4597 = vlaneseq
    %v4598 = vshrl.u32 %v4597, 7
    %v4599 = vsub.s32 %v4596, %v4598
    %v4600 = vrot.slane %v4578, %v4599
    %v4602 = vunpack.c.l.s4 1966171168
    %v4603 = vunpack.c.0.s8 %v4602
    %v4604 = vlaneseq
    %v4605 = vshrl.u32 %v4604, 7
    %v4606 = vsub.s32 %v4603, %v4605
    %v4607 = vrot.slane %v4579, %v4606
    %v4608 = vcombine.high %v4586, %v4586
    %v4609 = vcombine.high %v4593, %v4593
    %v4610 = vcombine.high %v4600, %v4600
    %v4611 = vcombine.high %v4607, %v4607
    %v4612 = vlaneseq
    %v4613 = vshrl.u32 %v4612, 7
    %v4614 = vsub.s32 0, %v4613
    %v4615 = vrot.slane %v4586, %v4614
    %v4616 = vlaneseq
    %v4617 = vshrl.u32 %v4616, 7
    %v4618 = vsub.s32 0, %v4617
    %v4619 = vrot.slane %v4600, %v4618
    %v4620 = vlaneseq
    %v4621 = vshrl.u32 %v4620, 7
    %v4622 = vsub.s32 0, %v4621
    %v4623 = vrot.slane %v4608, %v4622
    %v4624 = vlaneseq
    %v4625 = vshrl.u32 %v4624, 7
    %v4626 = vsub.s32 0, %v4625
    %v4627 = vrot.slane %v4610, %v4626
    %v4628 = vlaneseq
    %v4629 = vshrl.u32 %v4628, 7
    %v4630 = vsub.s32 0, %v4629
    %v4631 = vrot.slane %v4593, %v4630
    %v4632 = vlaneseq
    %v4633 = vshrl.u32 %v4632, 7
    %v4634 = vsub.s32 0, %v4633
    %v4635 = vrot.slane %v4607, %v4634
    %v4636 = vlaneseq
    %v4637 = vshrl.u32 %v4636, 7
    %v4638 = vsub.s32 0, %v4637
    %v4639 = vrot.slane %v4609, %v4638
    %v4640 = vlaneseq
    %v4641 = vshrl.u32 %v4640, 7
    %v4642 = vsub.s32 0, %v4641
    %v4643 = vrot.slane %v4611, %v4642
    %v4652 = vmul.f32 %v4615, %v4046
    %v4653 = vmul.f32 %v4615, %v4047
    %v4654 = vmul.f32 %v4615, %v4048
    %v4655 = vmul.f32 %v4615, %v4049
    %v4656 = vmul.f32 %v4619, %v4046
    %v4657 = vmul.f32 %v4619, %v4047
    %v4658 = vmul.f32 %v4619, %v4048
    %v4659 = vmul.f32 %v4619, %v4049
    %v4660 = vmul.f32 %v4623, %v4046
    %v4661 = vmul.f32 %v4623, %v4047
    %v4662 = vmul.f32 %v4623, %v4048
    %v4663 = vmul.f32 %v4623, %v4049
    %v4664 = vmul.f32 %v4627, %v4046
    %v4665 = vmul.f32 %v4627, %v4047
    %v4666 = vmul.f32 %v4627, %v4048
    %v4667 = vmul.f32 %v4627, %v4049
    %v4668 = vmul.f32 %v4631, %v4046
    %v4669 = vmul.f32 %v4631, %v4047
    %v4670 = vmul.f32 %v4631, %v4048
    %v4671 = vmul.f32 %v4631, %v4049
    %v4672 = vmul.f32 %v4635, %v4046
    %v4673 = vmul.f32 %v4635, %v4047
    %v4674 = vmul.f32 %v4635, %v4048
    %v4675 = vmul.f32 %v4635, %v4049
    %v4676 = vmul.f32 %v4639, %v4046
    %v4677 = vmul.f32 %v4639, %v4047
    %v4678 = vmul.f32 %v4639, %v4048
    %v4679 = vmul.f32 %v4639, %v4049
    %v4680 = vmul.f32 %v4643, %v4046
    %v4681 = vmul.f32 %v4643, %v4047
    %v4682 = vmul.f32 %v4643, %v4048
    %v4683 = vmul.f32 %v4643, %v4049
    %v4684 = vsel %vm1115, %v4652, -inf
    %4685 = vmax.xlane.f32.xlu0 %v4684
    %v4686 = vpop.xlane.xlu0 %4685
    %v4687 = vsel %vm1115, %v4653, -inf
    %4688 = vmax.xlane.f32.xlu0 %v4687
    %v4689 = vpop.xlane.xlu0 %4688
    %v4690 = vsel %vm1115, %v4654, -inf
    %4691 = vmax.xlane.f32.xlu0 %v4690
    %v4692 = vpop.xlane.xlu0 %4691
    %v4693 = vsel %vm1115, %v4655, -inf
    %4694 = vmax.xlane.f32.xlu0 %v4693
    %v4695 = vpop.xlane.xlu0 %4694
    %v4696 = vsel %vm1115, %v4656, -inf
    %4697 = vmax.xlane.f32.xlu0 %v4696
    %v4698 = vpop.xlane.xlu0 %4697
    %v4699 = vsel %vm1115, %v4657, -inf
    %4700 = vmax.xlane.f32.xlu0 %v4699
    %v4701 = vpop.xlane.xlu0 %4700
    %v4702 = vsel %vm1115, %v4658, -inf
    %4703 = vmax.xlane.f32.xlu0 %v4702
    %v4704 = vpop.xlane.xlu0 %4703
    %v4705 = vsel %vm1115, %v4659, -inf
    %4706 = vmax.xlane.f32.xlu0 %v4705
    %v4707 = vpop.xlane.xlu0 %4706
    %v4708 = vsel %vm1115, %v4660, -inf
    %4709 = vmax.xlane.f32.xlu0 %v4708
    %v4710 = vpop.xlane.xlu0 %4709
    %v4711 = vsel %vm1115, %v4661, -inf
    %4712 = vmax.xlane.f32.xlu0 %v4711
    %v4713 = vpop.xlane.xlu0 %4712
    %v4714 = vsel %vm1115, %v4662, -inf
    %4715 = vmax.xlane.f32.xlu0 %v4714
    %v4716 = vpop.xlane.xlu0 %4715
    %v4717 = vsel %vm1115, %v4663, -inf
    %4718 = vmax.xlane.f32.xlu0 %v4717
    %v4719 = vpop.xlane.xlu0 %4718
    %v4720 = vsel %vm1115, %v4664, -inf
    %4721 = vmax.xlane.f32.xlu0 %v4720
    %v4722 = vpop.xlane.xlu0 %4721
    %v4723 = vsel %vm1115, %v4665, -inf
    %4724 = vmax.xlane.f32.xlu0 %v4723
    %v4725 = vpop.xlane.xlu0 %4724
    %v4726 = vsel %vm1115, %v4666, -inf
    %4727 = vmax.xlane.f32.xlu0 %v4726
    %v4728 = vpop.xlane.xlu0 %4727
    %v4729 = vsel %vm1115, %v4667, -inf
    %4730 = vmax.xlane.f32.xlu0 %v4729
    %v4731 = vpop.xlane.xlu0 %4730
    %v4732 = vsel %vm1115, %v4668, -inf
    %4733 = vmax.xlane.f32.xlu0 %v4732
    %v4734 = vpop.xlane.xlu0 %4733
    %v4735 = vsel %vm1115, %v4669, -inf
    %4736 = vmax.xlane.f32.xlu0 %v4735
    %v4737 = vpop.xlane.xlu0 %4736
    %v4738 = vsel %vm1115, %v4670, -inf
    %4739 = vmax.xlane.f32.xlu0 %v4738
    %v4740 = vpop.xlane.xlu0 %4739
    %v4741 = vsel %vm1115, %v4671, -inf
    %4742 = vmax.xlane.f32.xlu0 %v4741
    %v4743 = vpop.xlane.xlu0 %4742
    %v4744 = vsel %vm1115, %v4672, -inf
    %4745 = vmax.xlane.f32.xlu0 %v4744
    %v4746 = vpop.xlane.xlu0 %4745
    %v4747 = vsel %vm1115, %v4673, -inf
    %4748 = vmax.xlane.f32.xlu0 %v4747
    %v4749 = vpop.xlane.xlu0 %4748
    %v4750 = vsel %vm1115, %v4674, -inf
    %4751 = vmax.xlane.f32.xlu0 %v4750
    %v4752 = vpop.xlane.xlu0 %4751
    %v4753 = vsel %vm1115, %v4675, -inf
    %4754 = vmax.xlane.f32.xlu0 %v4753
    %v4755 = vpop.xlane.xlu0 %4754
    %v4756 = vsel %vm1115, %v4676, -inf
    %4757 = vmax.xlane.f32.xlu0 %v4756
    %v4758 = vpop.xlane.xlu0 %4757
    %v4759 = vsel %vm1115, %v4677, -inf
    %4760 = vmax.xlane.f32.xlu0 %v4759
    %v4761 = vpop.xlane.xlu0 %4760
    %v4762 = vsel %vm1115, %v4678, -inf
    %4763 = vmax.xlane.f32.xlu0 %v4762
    %v4764 = vpop.xlane.xlu0 %4763
    %v4765 = vsel %vm1115, %v4679, -inf
    %4766 = vmax.xlane.f32.xlu0 %v4765
    %v4767 = vpop.xlane.xlu0 %4766
    %v4768 = vsel %vm1115, %v4680, -inf
    %4769 = vmax.xlane.f32.xlu0 %v4768
    %v4770 = vpop.xlane.xlu0 %4769
    %v4771 = vsel %vm1115, %v4681, -inf
    %4772 = vmax.xlane.f32.xlu0 %v4771
    %v4773 = vpop.xlane.xlu0 %4772
    %v4774 = vsel %vm1115, %v4682, -inf
    %4775 = vmax.xlane.f32.xlu0 %v4774
    %v4776 = vpop.xlane.xlu0 %4775
    %v4777 = vsel %vm1115, %v4683, -inf
    %4778 = vmax.xlane.f32.xlu0 %v4777
    %v4779 = vpop.xlane.xlu0 %4778
    %v4780 = vmax.f32 %v4686, 0.0
    %v4781 = vmax.f32 %v4689, 0.0
    %v4782 = vmax.f32 %v4692, 0.0
    %v4783 = vmax.f32 %v4695, 0.0
    %v4784 = vmax.f32 %v4698, 0.0
    %v4785 = vmax.f32 %v4701, 0.0
    %v4786 = vmax.f32 %v4704, 0.0
    %v4787 = vmax.f32 %v4707, 0.0
    %v4788 = vmax.f32 %v4710, 0.0
    %v4789 = vmax.f32 %v4713, 0.0
    %v4790 = vmax.f32 %v4716, 0.0
    %v4791 = vmax.f32 %v4719, 0.0
    %v4792 = vmax.f32 %v4722, 0.0
    %v4793 = vmax.f32 %v4725, 0.0
    %v4794 = vmax.f32 %v4728, 0.0
    %v4795 = vmax.f32 %v4731, 0.0
    %v4796 = vmax.f32 %v4734, 0.0
    %v4797 = vmax.f32 %v4737, 0.0
    %v4798 = vmax.f32 %v4740, 0.0
    %v4799 = vmax.f32 %v4743, 0.0
    %v4800 = vmax.f32 %v4746, 0.0
    %v4801 = vmax.f32 %v4749, 0.0
    %v4802 = vmax.f32 %v4752, 0.0
    %v4803 = vmax.f32 %v4755, 0.0
    %v4804 = vmax.f32 %v4758, 0.0
    %v4805 = vmax.f32 %v4761, 0.0
    %v4806 = vmax.f32 %v4764, 0.0
    %v4807 = vmax.f32 %v4767, 0.0
    %v4808 = vmax.f32 %v4770, 0.0
    %v4809 = vmax.f32 %v4773, 0.0
    %v4810 = vmax.f32 %v4776, 0.0
    %v4811 = vmax.f32 %v4779, 0.0
    %v4876 = vlaneseq
    %v4877 = vshrl.u32 %v4876, 7
    %v4878 = vsub.s32 %v2163, %v4877
    %v4879 = vrot.slane %v4498, %v4878
    %v4880 = vlaneseq
    %v4881 = vshrl.u32 %v4880, 7
    %v4882 = vsub.s32 %v2168, %v4881
    %v4883 = vrot.slane %v4499, %v4882
    %v4884 = vsel %vm2173, %v4883, %v4879
    %v4885 = vlaneseq
    %v4886 = vshrl.u32 %v4885, 7
    %v4887 = vsub.s32 %v2175, %v4886
    %v4888 = vrot.slane %v4500, %v4887
    %v4889 = vsel %vm2180, %v4888, %v4884
    %v4890 = vlaneseq
    %v4891 = vshrl.u32 %v4890, 7
    %v4892 = vsub.s32 %v2182, %v4891
    %v4893 = vrot.slane %v4501, %v4892
    %v4894 = vsel %vm2187, %v4893, %v4889
    %v4895 = vlaneseq
    %v4896 = vshrl.u32 %v4895, 7
    %v4897 = vsub.s32 %v2163, %v4896
    %v4898 = vrot.slane %v4502, %v4897
    %v4899 = vlaneseq
    %v4900 = vshrl.u32 %v4899, 7
    %v4901 = vsub.s32 %v2168, %v4900
    %v4902 = vrot.slane %v4503, %v4901
    %v4903 = vsel %vm2173, %v4902, %v4898
    %v4904 = vlaneseq
    %v4905 = vshrl.u32 %v4904, 7
    %v4906 = vsub.s32 %v2175, %v4905
    %v4907 = vrot.slane %v4504, %v4906
    %v4908 = vsel %vm2180, %v4907, %v4903
    %v4909 = vlaneseq
    %v4910 = vshrl.u32 %v4909, 7
    %v4911 = vsub.s32 %v2182, %v4910
    %v4912 = vrot.slane %v4505, %v4911
    %v4913 = vsel %vm2187, %v4912, %v4908
    %v4914 = vlaneseq
    %v4915 = vshrl.u32 %v4914, 7
    %v4916 = vsub.s32 %v2163, %v4915
    %v4917 = vrot.slane %v4506, %v4916
    %v4918 = vlaneseq
    %v4919 = vshrl.u32 %v4918, 7
    %v4920 = vsub.s32 %v2168, %v4919
    %v4921 = vrot.slane %v4507, %v4920
    %v4922 = vsel %vm2173, %v4921, %v4917
    %v4923 = vlaneseq
    %v4924 = vshrl.u32 %v4923, 7
    %v4925 = vsub.s32 %v2175, %v4924
    %v4926 = vrot.slane %v4508, %v4925
    %v4927 = vsel %vm2180, %v4926, %v4922
    %v4928 = vlaneseq
    %v4929 = vshrl.u32 %v4928, 7
    %v4930 = vsub.s32 %v2182, %v4929
    %v4931 = vrot.slane %v4509, %v4930
    %v4932 = vsel %vm2187, %v4931, %v4927
    %v4933 = vlaneseq
    %v4934 = vshrl.u32 %v4933, 7
    %v4935 = vsub.s32 %v2163, %v4934
    %v4936 = vrot.slane %v4510, %v4935
    %v4937 = vlaneseq
    %v4938 = vshrl.u32 %v4937, 7
    %v4939 = vsub.s32 %v2168, %v4938
    %v4940 = vrot.slane %v4511, %v4939
    %v4941 = vsel %vm2173, %v4940, %v4936
    %v4942 = vlaneseq
    %v4943 = vshrl.u32 %v4942, 7
    %v4944 = vsub.s32 %v2175, %v4943
    %v4945 = vrot.slane %v4512, %v4944
    %v4946 = vsel %vm2180, %v4945, %v4941
    %v4947 = vlaneseq
    %v4948 = vshrl.u32 %v4947, 7
    %v4949 = vsub.s32 %v2182, %v4948
    %v4950 = vrot.slane %v4513, %v4949
    %v4951 = vsel %vm2187, %v4950, %v4946
    %v4952 = vlaneseq
    %v4953 = vshrl.u32 %v4952, 7
    %v4954 = vsub.s32 %v2163, %v4953
    %v4955 = vrot.slane %v4514, %v4954
    %v4956 = vlaneseq
    %v4957 = vshrl.u32 %v4956, 7
    %v4958 = vsub.s32 %v2168, %v4957
    %v4959 = vrot.slane %v4515, %v4958
    %v4960 = vsel %vm2173, %v4959, %v4955
    %v4961 = vlaneseq
    %v4962 = vshrl.u32 %v4961, 7
    %v4963 = vsub.s32 %v2175, %v4962
    %v4964 = vrot.slane %v4516, %v4963
    %v4965 = vsel %vm2180, %v4964, %v4960
    %v4966 = vlaneseq
    %v4967 = vshrl.u32 %v4966, 7
    %v4968 = vsub.s32 %v2182, %v4967
    %v4969 = vrot.slane %v4517, %v4968
    %v4970 = vsel %vm2187, %v4969, %v4965
    %v4971 = vlaneseq
    %v4972 = vshrl.u32 %v4971, 7
    %v4973 = vsub.s32 %v2163, %v4972
    %v4974 = vrot.slane %v4518, %v4973
    %v4975 = vlaneseq
    %v4976 = vshrl.u32 %v4975, 7
    %v4977 = vsub.s32 %v2168, %v4976
    %v4978 = vrot.slane %v4519, %v4977
    %v4979 = vsel %vm2173, %v4978, %v4974
    %v4980 = vlaneseq
    %v4981 = vshrl.u32 %v4980, 7
    %v4982 = vsub.s32 %v2175, %v4981
    %v4983 = vrot.slane %v4520, %v4982
    %v4984 = vsel %vm2180, %v4983, %v4979
    %v4985 = vlaneseq
    %v4986 = vshrl.u32 %v4985, 7
    %v4987 = vsub.s32 %v2182, %v4986
    %v4988 = vrot.slane %v4521, %v4987
    %v4989 = vsel %vm2187, %v4988, %v4984
    %v4990 = vlaneseq
    %v4991 = vshrl.u32 %v4990, 7
    %v4992 = vsub.s32 %v2163, %v4991
    %v4993 = vrot.slane %v4522, %v4992
    %v4994 = vlaneseq
    %v4995 = vshrl.u32 %v4994, 7
    %v4996 = vsub.s32 %v2168, %v4995
    %v4997 = vrot.slane %v4523, %v4996
    %v4998 = vsel %vm2173, %v4997, %v4993
    %v4999 = vlaneseq
    %v5000 = vshrl.u32 %v4999, 7
    %v5001 = vsub.s32 %v2175, %v5000
    %v5002 = vrot.slane %v4524, %v5001
    %v5003 = vsel %vm2180, %v5002, %v4998
    %v5004 = vlaneseq
    %v5005 = vshrl.u32 %v5004, 7
    %v5006 = vsub.s32 %v2182, %v5005
    %v5007 = vrot.slane %v4525, %v5006
    %v5008 = vsel %vm2187, %v5007, %v5003
    %v5009 = vlaneseq
    %v5010 = vshrl.u32 %v5009, 7
    %v5011 = vsub.s32 %v2163, %v5010
    %v5012 = vrot.slane %v4526, %v5011
    %v5013 = vlaneseq
    %v5014 = vshrl.u32 %v5013, 7
    %v5015 = vsub.s32 %v2168, %v5014
    %v5016 = vrot.slane %v4527, %v5015
    %v5017 = vsel %vm2173, %v5016, %v5012
    %v5018 = vlaneseq
    %v5019 = vshrl.u32 %v5018, 7
    %v5020 = vsub.s32 %v2175, %v5019
    %v5021 = vrot.slane %v4528, %v5020
    %v5022 = vsel %vm2180, %v5021, %v5017
    %v5023 = vlaneseq
    %v5024 = vshrl.u32 %v5023, 7
    %v5025 = vsub.s32 %v2182, %v5024
    %v5026 = vrot.slane %v4529, %v5025
    %v5027 = vsel %vm2187, %v5026, %v5022
    %v5028 = vlaneseq
    %v5029 = vshrl.u32 %v5028, 7
    %v5030 = vsub.s32 %v2163, %v5029
    %v5031 = vrot.slane %v4530, %v5030
    %v5032 = vlaneseq
    %v5033 = vshrl.u32 %v5032, 7
    %v5034 = vsub.s32 %v2168, %v5033
    %v5035 = vrot.slane %v4531, %v5034
    %v5036 = vsel %vm2173, %v5035, %v5031
    %v5037 = vlaneseq
    %v5038 = vshrl.u32 %v5037, 7
    %v5039 = vsub.s32 %v2175, %v5038
    %v5040 = vrot.slane %v4532, %v5039
    %v5041 = vsel %vm2180, %v5040, %v5036
    %v5042 = vlaneseq
    %v5043 = vshrl.u32 %v5042, 7
    %v5044 = vsub.s32 %v2182, %v5043
    %v5045 = vrot.slane %v4533, %v5044
    %v5046 = vsel %vm2187, %v5045, %v5041
    %v5047 = vlaneseq
    %v5048 = vshrl.u32 %v5047, 7
    %v5049 = vsub.s32 %v2163, %v5048
    %v5050 = vrot.slane %v4534, %v5049
    %v5051 = vlaneseq
    %v5052 = vshrl.u32 %v5051, 7
    %v5053 = vsub.s32 %v2168, %v5052
    %v5054 = vrot.slane %v4535, %v5053
    %v5055 = vsel %vm2173, %v5054, %v5050
    %v5056 = vlaneseq
    %v5057 = vshrl.u32 %v5056, 7
    %v5058 = vsub.s32 %v2175, %v5057
    %v5059 = vrot.slane %v4536, %v5058
    %v5060 = vsel %vm2180, %v5059, %v5055
    %v5061 = vlaneseq
    %v5062 = vshrl.u32 %v5061, 7
    %v5063 = vsub.s32 %v2182, %v5062
    %v5064 = vrot.slane %v4537, %v5063
    %v5065 = vsel %vm2187, %v5064, %v5060
    %v5066 = vlaneseq
    %v5067 = vshrl.u32 %v5066, 7
    %v5068 = vsub.s32 %v2163, %v5067
    %v5069 = vrot.slane %v4538, %v5068
    %v5070 = vlaneseq
    %v5071 = vshrl.u32 %v5070, 7
    %v5072 = vsub.s32 %v2168, %v5071
    %v5073 = vrot.slane %v4539, %v5072
    %v5074 = vsel %vm2173, %v5073, %v5069
    %v5075 = vlaneseq
    %v5076 = vshrl.u32 %v5075, 7
    %v5077 = vsub.s32 %v2175, %v5076
    %v5078 = vrot.slane %v4540, %v5077
    %v5079 = vsel %vm2180, %v5078, %v5074
    %v5080 = vlaneseq
    %v5081 = vshrl.u32 %v5080, 7
    %v5082 = vsub.s32 %v2182, %v5081
    %v5083 = vrot.slane %v4541, %v5082
    %v5084 = vsel %vm2187, %v5083, %v5079
    %v5085 = vlaneseq
    %v5086 = vshrl.u32 %v5085, 7
    %v5087 = vsub.s32 %v2163, %v5086
    %v5088 = vrot.slane %v4542, %v5087
    %v5089 = vlaneseq
    %v5090 = vshrl.u32 %v5089, 7
    %v5091 = vsub.s32 %v2168, %v5090
    %v5092 = vrot.slane %v4543, %v5091
    %v5093 = vsel %vm2173, %v5092, %v5088
    %v5094 = vlaneseq
    %v5095 = vshrl.u32 %v5094, 7
    %v5096 = vsub.s32 %v2175, %v5095
    %v5097 = vrot.slane %v4544, %v5096
    %v5098 = vsel %vm2180, %v5097, %v5093
    %v5099 = vlaneseq
    %v5100 = vshrl.u32 %v5099, 7
    %v5101 = vsub.s32 %v2182, %v5100
    %v5102 = vrot.slane %v4545, %v5101
    %v5103 = vsel %vm2187, %v5102, %v5098
    %v5104 = vlaneseq
    %v5105 = vshrl.u32 %v5104, 7
    %v5106 = vsub.s32 %v2163, %v5105
    %v5107 = vrot.slane %v4546, %v5106
    %v5108 = vlaneseq
    %v5109 = vshrl.u32 %v5108, 7
    %v5110 = vsub.s32 %v2168, %v5109
    %v5111 = vrot.slane %v4547, %v5110
    %v5112 = vsel %vm2173, %v5111, %v5107
    %v5113 = vlaneseq
    %v5114 = vshrl.u32 %v5113, 7
    %v5115 = vsub.s32 %v2175, %v5114
    %v5116 = vrot.slane %v4548, %v5115
    %v5117 = vsel %vm2180, %v5116, %v5112
    %v5118 = vlaneseq
    %v5119 = vshrl.u32 %v5118, 7
    %v5120 = vsub.s32 %v2182, %v5119
    %v5121 = vrot.slane %v4549, %v5120
    %v5122 = vsel %vm2187, %v5121, %v5117
    %v5123 = vlaneseq
    %v5124 = vshrl.u32 %v5123, 7
    %v5125 = vsub.s32 %v2163, %v5124
    %v5126 = vrot.slane %v4550, %v5125
    %v5127 = vlaneseq
    %v5128 = vshrl.u32 %v5127, 7
    %v5129 = vsub.s32 %v2168, %v5128
    %v5130 = vrot.slane %v4551, %v5129
    %v5131 = vsel %vm2173, %v5130, %v5126
    %v5132 = vlaneseq
    %v5133 = vshrl.u32 %v5132, 7
    %v5134 = vsub.s32 %v2175, %v5133
    %v5135 = vrot.slane %v4552, %v5134
    %v5136 = vsel %vm2180, %v5135, %v5131
    %v5137 = vlaneseq
    %v5138 = vshrl.u32 %v5137, 7
    %v5139 = vsub.s32 %v2182, %v5138
    %v5140 = vrot.slane %v4553, %v5139
    %v5141 = vsel %vm2187, %v5140, %v5136
    %v5142 = vlaneseq
    %v5143 = vshrl.u32 %v5142, 7
    %v5144 = vsub.s32 %v2163, %v5143
    %v5145 = vrot.slane %v4554, %v5144
    %v5146 = vlaneseq
    %v5147 = vshrl.u32 %v5146, 7
    %v5148 = vsub.s32 %v2168, %v5147
    %v5149 = vrot.slane %v4555, %v5148
    %v5150 = vsel %vm2173, %v5149, %v5145
    %v5151 = vlaneseq
    %v5152 = vshrl.u32 %v5151, 7
    %v5153 = vsub.s32 %v2175, %v5152
    %v5154 = vrot.slane %v4556, %v5153
    %v5155 = vsel %vm2180, %v5154, %v5150
    %v5156 = vlaneseq
    %v5157 = vshrl.u32 %v5156, 7
    %v5158 = vsub.s32 %v2182, %v5157
    %v5159 = vrot.slane %v4557, %v5158
    %v5160 = vsel %vm2187, %v5159, %v5155
    %v5161 = vlaneseq
    %v5162 = vshrl.u32 %v5161, 7
    %v5163 = vsub.s32 %v2163, %v5162
    %v5164 = vrot.slane %v4558, %v5163
    %v5165 = vlaneseq
    %v5166 = vshrl.u32 %v5165, 7
    %v5167 = vsub.s32 %v2168, %v5166
    %v5168 = vrot.slane %v4559, %v5167
    %v5169 = vsel %vm2173, %v5168, %v5164
    %v5170 = vlaneseq
    %v5171 = vshrl.u32 %v5170, 7
    %v5172 = vsub.s32 %v2175, %v5171
    %v5173 = vrot.slane %v4560, %v5172
    %v5174 = vsel %vm2180, %v5173, %v5169
    %v5175 = vlaneseq
    %v5176 = vshrl.u32 %v5175, 7
    %v5177 = vsub.s32 %v2182, %v5176
    %v5178 = vrot.slane %v4561, %v5177
    %v5179 = vsel %vm2187, %v5178, %v5174
    %v5180 = vsel %vm2474, %v4913, %v4894
    %v5181 = vsel %vm2476, %v4932, %v5180
    %v5182 = vsel %vm2478, %v4951, %v5181
    %v5183 = vsel %vm2480, %v4970, %v5182
    %v5184 = vsel %vm2482, %v4989, %v5183
    %v5185 = vsel %vm2484, %v5008, %v5184
    %v5186 = vsel %vm2486, %v5027, %v5185
    %v5187 = vsel %vm2474, %v5065, %v5046
    %v5188 = vsel %vm2476, %v5084, %v5187
    %v5189 = vsel %vm2478, %v5103, %v5188
    %v5190 = vsel %vm2480, %v5122, %v5189
    %v5191 = vsel %vm2482, %v5141, %v5190
    %v5192 = vsel %vm2484, %v5160, %v5191
    %v5193 = vsel %vm2486, %v5179, %v5192
    %v5228 = vlaneseq
    %v5229 = vshrl.u32 %v5228, 7
    %v5230 = vsub.s32 %v2163, %v5229
    %v5231 = vrot.slane %v4780, %v5230
    %v5232 = vlaneseq
    %v5233 = vshrl.u32 %v5232, 7
    %v5234 = vsub.s32 %v2168, %v5233
    %v5235 = vrot.slane %v4781, %v5234
    %v5236 = vsel %vm2173, %v5235, %v5231
    %v5237 = vlaneseq
    %v5238 = vshrl.u32 %v5237, 7
    %v5239 = vsub.s32 %v2175, %v5238
    %v5240 = vrot.slane %v4782, %v5239
    %v5241 = vsel %vm2180, %v5240, %v5236
    %v5242 = vlaneseq
    %v5243 = vshrl.u32 %v5242, 7
    %v5244 = vsub.s32 %v2182, %v5243
    %v5245 = vrot.slane %v4783, %v5244
    %v5246 = vsel %vm2187, %v5245, %v5241
    %v5247 = vlaneseq
    %v5248 = vshrl.u32 %v5247, 7
    %v5249 = vsub.s32 %v2163, %v5248
    %v5250 = vrot.slane %v4784, %v5249
    %v5251 = vlaneseq
    %v5252 = vshrl.u32 %v5251, 7
    %v5253 = vsub.s32 %v2168, %v5252
    %v5254 = vrot.slane %v4785, %v5253
    %v5255 = vsel %vm2173, %v5254, %v5250
    %v5256 = vlaneseq
    %v5257 = vshrl.u32 %v5256, 7
    %v5258 = vsub.s32 %v2175, %v5257
    %v5259 = vrot.slane %v4786, %v5258
    %v5260 = vsel %vm2180, %v5259, %v5255
    %v5261 = vlaneseq
    %v5262 = vshrl.u32 %v5261, 7
    %v5263 = vsub.s32 %v2182, %v5262
    %v5264 = vrot.slane %v4787, %v5263
    %v5265 = vsel %vm2187, %v5264, %v5260
    %v5266 = vlaneseq
    %v5267 = vshrl.u32 %v5266, 7
    %v5268 = vsub.s32 %v2163, %v5267
    %v5269 = vrot.slane %v4788, %v5268
    %v5270 = vlaneseq
    %v5271 = vshrl.u32 %v5270, 7
    %v5272 = vsub.s32 %v2168, %v5271
    %v5273 = vrot.slane %v4789, %v5272
    %v5274 = vsel %vm2173, %v5273, %v5269
    %v5275 = vlaneseq
    %v5276 = vshrl.u32 %v5275, 7
    %v5277 = vsub.s32 %v2175, %v5276
    %v5278 = vrot.slane %v4790, %v5277
    %v5279 = vsel %vm2180, %v5278, %v5274
    %v5280 = vlaneseq
    %v5281 = vshrl.u32 %v5280, 7
    %v5282 = vsub.s32 %v2182, %v5281
    %v5283 = vrot.slane %v4791, %v5282
    %v5284 = vsel %vm2187, %v5283, %v5279
    %v5285 = vlaneseq
    %v5286 = vshrl.u32 %v5285, 7
    %v5287 = vsub.s32 %v2163, %v5286
    %v5288 = vrot.slane %v4792, %v5287
    %v5289 = vlaneseq
    %v5290 = vshrl.u32 %v5289, 7
    %v5291 = vsub.s32 %v2168, %v5290
    %v5292 = vrot.slane %v4793, %v5291
    %v5293 = vsel %vm2173, %v5292, %v5288
    %v5294 = vlaneseq
    %v5295 = vshrl.u32 %v5294, 7
    %v5296 = vsub.s32 %v2175, %v5295
    %v5297 = vrot.slane %v4794, %v5296
    %v5298 = vsel %vm2180, %v5297, %v5293
    %v5299 = vlaneseq
    %v5300 = vshrl.u32 %v5299, 7
    %v5301 = vsub.s32 %v2182, %v5300
    %v5302 = vrot.slane %v4795, %v5301
    %v5303 = vsel %vm2187, %v5302, %v5298
    %v5304 = vlaneseq
    %v5305 = vshrl.u32 %v5304, 7
    %v5306 = vsub.s32 %v2163, %v5305
    %v5307 = vrot.slane %v4796, %v5306
    %v5308 = vlaneseq
    %v5309 = vshrl.u32 %v5308, 7
    %v5310 = vsub.s32 %v2168, %v5309
    %v5311 = vrot.slane %v4797, %v5310
    %v5312 = vsel %vm2173, %v5311, %v5307
    %v5313 = vlaneseq
    %v5314 = vshrl.u32 %v5313, 7
    %v5315 = vsub.s32 %v2175, %v5314
    %v5316 = vrot.slane %v4798, %v5315
    %v5317 = vsel %vm2180, %v5316, %v5312
    %v5318 = vlaneseq
    %v5319 = vshrl.u32 %v5318, 7
    %v5320 = vsub.s32 %v2182, %v5319
    %v5321 = vrot.slane %v4799, %v5320
    %v5322 = vsel %vm2187, %v5321, %v5317
    %v5323 = vlaneseq
    %v5324 = vshrl.u32 %v5323, 7
    %v5325 = vsub.s32 %v2163, %v5324
    %v5326 = vrot.slane %v4800, %v5325
    %v5327 = vlaneseq
    %v5328 = vshrl.u32 %v5327, 7
    %v5329 = vsub.s32 %v2168, %v5328
    %v5330 = vrot.slane %v4801, %v5329
    %v5331 = vsel %vm2173, %v5330, %v5326
    %v5332 = vlaneseq
    %v5333 = vshrl.u32 %v5332, 7
    %v5334 = vsub.s32 %v2175, %v5333
    %v5335 = vrot.slane %v4802, %v5334
    %v5336 = vsel %vm2180, %v5335, %v5331
    %v5337 = vlaneseq
    %v5338 = vshrl.u32 %v5337, 7
    %v5339 = vsub.s32 %v2182, %v5338
    %v5340 = vrot.slane %v4803, %v5339
    %v5341 = vsel %vm2187, %v5340, %v5336
    %v5342 = vlaneseq
    %v5343 = vshrl.u32 %v5342, 7
    %v5344 = vsub.s32 %v2163, %v5343
    %v5345 = vrot.slane %v4804, %v5344
    %v5346 = vlaneseq
    %v5347 = vshrl.u32 %v5346, 7
    %v5348 = vsub.s32 %v2168, %v5347
    %v5349 = vrot.slane %v4805, %v5348
    %v5350 = vsel %vm2173, %v5349, %v5345
    %v5351 = vlaneseq
    %v5352 = vshrl.u32 %v5351, 7
    %v5353 = vsub.s32 %v2175, %v5352
    %v5354 = vrot.slane %v4806, %v5353
    %v5355 = vsel %vm2180, %v5354, %v5350
    %v5356 = vlaneseq
    %v5357 = vshrl.u32 %v5356, 7
    %v5358 = vsub.s32 %v2182, %v5357
    %v5359 = vrot.slane %v4807, %v5358
    %v5360 = vsel %vm2187, %v5359, %v5355
    %v5361 = vlaneseq
    %v5362 = vshrl.u32 %v5361, 7
    %v5363 = vsub.s32 %v2163, %v5362
    %v5364 = vrot.slane %v4808, %v5363
    %v5365 = vlaneseq
    %v5366 = vshrl.u32 %v5365, 7
    %v5367 = vsub.s32 %v2168, %v5366
    %v5368 = vrot.slane %v4809, %v5367
    %v5369 = vsel %vm2173, %v5368, %v5364
    %v5370 = vlaneseq
    %v5371 = vshrl.u32 %v5370, 7
    %v5372 = vsub.s32 %v2175, %v5371
    %v5373 = vrot.slane %v4810, %v5372
    %v5374 = vsel %vm2180, %v5373, %v5369
    %v5375 = vlaneseq
    %v5376 = vshrl.u32 %v5375, 7
    %v5377 = vsub.s32 %v2182, %v5376
    %v5378 = vrot.slane %v4811, %v5377
    %v5379 = vsel %vm2187, %v5378, %v5374
    %v5380 = vsel %vm2474, %v5265, %v5246
    %v5381 = vsel %vm2476, %v5284, %v5380
    %v5382 = vsel %vm2478, %v5303, %v5381
    %v5383 = vsel %vm2480, %v5322, %v5382
    %v5384 = vsel %vm2482, %v5341, %v5383
    %v5385 = vsel %vm2484, %v5360, %v5384
    %v5386 = vsel %vm2486, %v5379, %v5385
    %v5389 = vlaneseq
    %v5390 = vshrl.u32 %v5389, 7
    %v5391 = vsub.s32 0, %v5390
    %v5392 = vrot.slane %v502, %v5391
    %v5398 = vunpack.c.l.b16 %v498
    %v5399 = vunpack.c.l.b16 %v499
    %v5400 = vunpack.c.l.b16 %v500
    %v5401 = vunpack.c.l.b16 %v501
    %v5402 = vpack.c.b16 %v5399, %v5398
    %v5403 = vpack.c.b16 %v5401, %v5400
    %5406 = vmatprep.subr.bf16.mxu0 0
    %5407 = vmatpush1.bf16.msra.mxu0 %v5402
    %5408 = vmatprep.subr.bf16.mxu0 0
    %5409 = vmatpush1.bf16.msra.mxu0 %v5403
    %5410 = vmatprep.subr.bf16.mxu0 0
    %5411 = vmatpush1.bf16.msra.mxu0 0
    %5412 = vmatprep.subr.bf16.mxu0 0
    %5413 = vmatpush1.bf16.msra.mxu0 0
    %5414 = vmatprep.subr.bf16.mxu0 0
    %5415 = vmatpush1.bf16.msra.mxu0 0
    %5416 = vmatprep.subr.bf16.mxu0 0
    %5417 = vmatpush1.bf16.msra.mxu0 0
    %5418 = vmatprep.subr.bf16.mxu0 0
    %5419 = vmatpush1.bf16.msra.mxu0 0
    %5420 = vmatprep.subr.bf16.mxu0 0
    %5421 = vmatpush1.bf16.msra.mxu0 0
    %5422 = vmatprep.subr.bf16.mxu0 0
    %5423 = vmatpush1.bf16.msra.mxu0 0
    %5424 = vmatprep.subr.bf16.mxu0 0
    %5425 = vmatpush1.bf16.msra.mxu0 0
    %5426 = vmatprep.subr.bf16.mxu0 0
    %5427 = vmatpush1.bf16.msra.mxu0 0
    %5428 = vmatprep.subr.bf16.mxu0 0
    %5429 = vmatpush1.bf16.msra.mxu0 0
    %5430 = vmatprep.subr.bf16.mxu0 0
    %5431 = vmatpush1.bf16.msra.mxu0 0
    %5432 = vmatprep.subr.bf16.mxu0 0
    %5433 = vmatpush1.bf16.msra.mxu0 0
    %5434 = vmatprep.subr.bf16.mxu0 0
    %5435 = vmatpush1.bf16.msra.mxu0 0
    %5436 = vmatprep.subr.bf16.mxu0 0
    %5437 = vmatpush1.bf16.msra.mxu0 0
    %5438 = vmatprep.mubr.bf16.mxu0 0
    %5439 = vmatmul.mubr.bf16.gmra.mrb[0].mxu0 %v783
    %v5440 = vpop.f32.mrb[0].mxu0
    %v5441 = vadd.f32 %v5392, %v5440
    %v5442 = vpop.f32.mrb[0].mxu0
    %v5443 = vpop.f32.mrb[0].mxu0
    %v5444 = vadd.f32 %v5392, %v5443
    %v5445 = vpop.f32.mrb[0].mxu0
    %5446 = vmatprep.mubr.bf16.mxu0 0
    %5447 = vmatmul.mubr.bf16.gmra.mrb[0].mxu0 %v786
    %v5448 = vpop.f32.mrb[0].mxu0
    %v5449 = vadd.f32 %v5392, %v5448
    %v5450 = vpop.f32.mrb[0].mxu0
    %v5451 = vpop.f32.mrb[0].mxu0
    %v5452 = vpop.f32.mrb[0].mxu0
    %5453 = vdwg.mxu0
    %v5454 = vpack.c.bf16 %v5193, %v5186
    %v5455 = vpack.c.bf16 %v5386, %v5386
    %v5460 = vunpack.c.l.b16 %v494
    %v5461 = vunpack.c.l.b16 %v495
    %v5462 = vunpack.c.l.b16 %v496
    %v5463 = vunpack.c.l.b16 %v497
    %v5464 = vpack.c.b16 %v5461, %v5460
    %v5465 = vpack.c.b16 %v5463, %v5462
    %v5469 = vsel %vm781, %v5454, 0
    %v5472 = vsel %vm781, %v5455, 0
    %5474 = vmatprep.subr.bf16.mxu0 0
    %5475 = vmatpush1.bf16.msra.mxu0 %v5464
    %5476 = vmatprep.subr.bf16.mxu0 0
    %5477 = vmatpush1.bf16.msra.mxu0 %v5465
    %5478 = vmatprep.subr.bf16.mxu0 0
    %5479 = vmatpush1.bf16.msra.mxu0 0
    %5480 = vmatprep.subr.bf16.mxu0 0
    %5481 = vmatpush1.bf16.msra.mxu0 0
    %5482 = vmatprep.subr.bf16.mxu0 0
    %5483 = vmatpush1.bf16.msra.mxu0 0
    %5484 = vmatprep.subr.bf16.mxu0 0
    %5485 = vmatpush1.bf16.msra.mxu0 0
    %5486 = vmatprep.subr.bf16.mxu0 0
    %5487 = vmatpush1.bf16.msra.mxu0 0
    %5488 = vmatprep.subr.bf16.mxu0 0
    %5489 = vmatpush1.bf16.msra.mxu0 0
    %5490 = vmatprep.subr.bf16.mxu0 0
    %5491 = vmatpush1.bf16.msra.mxu0 0
    %5492 = vmatprep.subr.bf16.mxu0 0
    %5493 = vmatpush1.bf16.msra.mxu0 0
    %5494 = vmatprep.subr.bf16.mxu0 0
    %5495 = vmatpush1.bf16.msra.mxu0 0
    %5496 = vmatprep.subr.bf16.mxu0 0
    %5497 = vmatpush1.bf16.msra.mxu0 0
    %5498 = vmatprep.subr.bf16.mxu0 0
    %5499 = vmatpush1.bf16.msra.mxu0 0
    %5500 = vmatprep.subr.bf16.mxu0 0
    %5501 = vmatpush1.bf16.msra.mxu0 0
    %5502 = vmatprep.subr.bf16.mxu0 0
    %5503 = vmatpush1.bf16.msra.mxu0 0
    %5504 = vmatprep.subr.bf16.mxu0 0
    %5505 = vmatpush1.bf16.msra.mxu0 0
    %5506 = vmatprep.mubr.bf16.mxu0 0
    %5507 = vmatmul.mubr.bf16.gmra.mrb[0].mxu0 %v5469
    %v5508 = vpop.f32.mrb[0].mxu0
    %v5509 = vadd.f32 0.0, %v5508
    %v5510 = vpop.f32.mrb[0].mxu0
    %v5511 = vpop.f32.mrb[0].mxu0
    %v5512 = vadd.f32 0.0, %v5511
    %v5513 = vpop.f32.mrb[0].mxu0
    %5514 = vmatprep.mubr.bf16.mxu0 0
    %5515 = vmatmul.mubr.bf16.gmra.mrb[0].mxu0 %v5472
    %v5516 = vpop.f32.mrb[0].mxu0
    %v5517 = vadd.f32 0.0, %v5516
    %v5518 = vpop.f32.mrb[0].mxu0
    %v5519 = vpop.f32.mrb[0].mxu0
    %v5520 = vpop.f32.mrb[0].mxu0
    %5521 = vdwg.mxu0
    %v5522 = vadd.f32 %v5441, %v5509
    %v5523 = vadd.f32 %v5444, %v5512
    %v5524 = vadd.f32 %v5449, %v5517
    %v5525 = vmax.f32 %v5522, 0.0
    %v5526 = vmax.f32 %v5523, 0.0
    %v5527 = vmax.f32 %v5524, 0.0
    %v5529 = vlaneseq
    %v5530 = vshrl.u32 %v5529, 7
    %v5531 = vsub.s32 0, %v5530
    %v5532 = vrot.slane %v521, %v5531
    %v5538 = vunpack.c.l.b16 %v517
    %v5539 = vunpack.c.l.b16 %v518
    %v5540 = vunpack.c.l.b16 %v519
    %v5541 = vunpack.c.l.b16 %v520
    %v5542 = vpack.c.b16 %v5539, %v5538
    %v5543 = vpack.c.b16 %v5541, %v5540
    %5546 = vmatprep.subr.bf16.mxu0 0
    %5547 = vmatpush1.bf16.msra.mxu0 %v5542
    %5548 = vmatprep.subr.bf16.mxu0 0
    %5549 = vmatpush1.bf16.msra.mxu0 %v5543
    %5550 = vmatprep.subr.bf16.mxu0 0
    %5551 = vmatpush1.bf16.msra.mxu0 0
    %5552 = vmatprep.subr.bf16.mxu0 0
    %5553 = vmatpush1.bf16.msra.mxu0 0
    %5554 = vmatprep.subr.bf16.mxu0 0
    %5555 = vmatpush1.bf16.msra.mxu0 0
    %5556 = vmatprep.subr.bf16.mxu0 0
    %5557 = vmatpush1.bf16.msra.mxu0 0
    %5558 = vmatprep.subr.bf16.mxu0 0
    %5559 = vmatpush1.bf16.msra.mxu0 0
    %5560 = vmatprep.subr.bf16.mxu0 0
    %5561 = vmatpush1.bf16.msra.mxu0 0
    %5562 = vmatprep.subr.bf16.mxu0 0
    %5563 = vmatpush1.bf16.msra.mxu0 0
    %5564 = vmatprep.subr.bf16.mxu0 0
    %5565 = vmatpush1.bf16.msra.mxu0 0
    %5566 = vmatprep.subr.bf16.mxu0 0
    %5567 = vmatpush1.bf16.msra.mxu0 0
    %5568 = vmatprep.subr.bf16.mxu0 0
    %5569 = vmatpush1.bf16.msra.mxu0 0
    %5570 = vmatprep.subr.bf16.mxu0 0
    %5571 = vmatpush1.bf16.msra.mxu0 0
    %5572 = vmatprep.subr.bf16.mxu0 0
    %5573 = vmatpush1.bf16.msra.mxu0 0
    %5574 = vmatprep.subr.bf16.mxu0 0
    %5575 = vmatpush1.bf16.msra.mxu0 0
    %5576 = vmatprep.subr.bf16.mxu0 0
    %5577 = vmatpush1.bf16.msra.mxu0 0
    %5578 = vmatprep.mubr.bf16.mxu0 0
    %5579 = vmatmul.mubr.bf16.gmra.mrb[0].mxu0 %v3985
    %v5580 = vpop.f32.mrb[0].mxu0
    %v5581 = vadd.f32 %v5532, %v5580
    %v5582 = vpop.f32.mrb[0].mxu0
    %v5583 = vpop.f32.mrb[0].mxu0
    %v5584 = vadd.f32 %v5532, %v5583
    %v5585 = vpop.f32.mrb[0].mxu0
    %5586 = vdwg.mxu0
    %v5587 = vmax.f32 %v5581, 0.0
    %v5588 = vmax.f32 %v5584, 0.0
    %5589 = vxpose.xlu0.b32.start [1/16] %v5587, 128
    %5590 = vxpose.xlu0.b32.cont [2/16] %v5588, 128
    %5591 = vxpose.xlu0.b32.cont [3/16] 0.0, 128
    %5592 = vxpose.xlu0.b32.cont [4/16] 0.0, 128
    %5593 = vxpose.xlu0.b32.cont [5/16] 0.0, 128
    %5594 = vxpose.xlu0.b32.cont [6/16] 0.0, 128
    %5595 = vxpose.xlu0.b32.cont [7/16] 0.0, 128
    %5596 = vxpose.xlu0.b32.cont [8/16] 0.0, 128
    %5597 = vxpose.xlu0.b32.cont [9/16] 0.0, 128
    %5598 = vxpose.xlu0.b32.cont [10/16] 0.0, 128
    %5599 = vxpose.xlu0.b32.cont [11/16] 0.0, 128
    %5600 = vxpose.xlu0.b32.cont [12/16] 0.0, 128
    %5601 = vxpose.xlu0.b32.cont [13/16] 0.0, 128
    %5602 = vxpose.xlu0.b32.cont [14/16] 0.0, 128
    %5603 = vxpose.xlu0.b32.cont [15/16] 0.0, 128
    %5604 = vxpose.xlu0.b32.end [16/16] 0.0, 128
    %v5605 = vpop.trf.xlu0
    %v5606 = vpop.trf.xlu0
    %v5607 = vpop.trf.xlu0
    %v5608 = vpop.trf.xlu0
    %v5609 = vpop.trf.xlu0
    %v5610 = vpop.trf.xlu0
    %v5611 = vpop.trf.xlu0
    %v5612 = vpop.trf.xlu0
    %v5613 = vpop.trf.xlu0
    %v5614 = vpop.trf.xlu0
    %v5615 = vpop.trf.xlu0
    %v5616 = vpop.trf.xlu0
    %v5617 = vpop.trf.xlu0
    %v5618 = vpop.trf.xlu0
    %v5619 = vpop.trf.xlu0
    %v5620 = vpop.trf.xlu0
    %v5621 = vmul.f32 %v4165, %v5605
    %v5622 = vmul.f32 %v4165, %v5606
    %v5623 = vmul.f32 %v4165, %v5607
    %v5624 = vmul.f32 %v4165, %v5608
    %v5625 = vmul.f32 %v4169, %v5605
    %v5626 = vmul.f32 %v4169, %v5606
    %v5627 = vmul.f32 %v4169, %v5607
    %v5628 = vmul.f32 %v4169, %v5608
    %v5629 = vmul.f32 %v4173, %v5605
    %v5630 = vmul.f32 %v4173, %v5606
    %v5631 = vmul.f32 %v4173, %v5607
    %v5632 = vmul.f32 %v4173, %v5608
    %v5633 = vmul.f32 %v4177, %v5605
    %v5634 = vmul.f32 %v4177, %v5606
    %v5635 = vmul.f32 %v4177, %v5607
    %v5636 = vmul.f32 %v4177, %v5608
    %v5637 = vmul.f32 %v4181, %v5605
    %v5638 = vmul.f32 %v4181, %v5606
    %v5639 = vmul.f32 %v4181, %v5607
    %v5640 = vmul.f32 %v4181, %v5608
    %v5641 = vmul.f32 %v4185, %v5605
    %v5642 = vmul.f32 %v4185, %v5606
    %v5643 = vmul.f32 %v4185, %v5607
    %v5644 = vmul.f32 %v4185, %v5608
    %v5645 = vmul.f32 %v4189, %v5605
    %v5646 = vmul.f32 %v4189, %v5606
    %v5647 = vmul.f32 %v4189, %v5607
    %v5648 = vmul.f32 %v4189, %v5608
    %v5649 = vmul.f32 %v4193, %v5605
    %v5650 = vmul.f32 %v4193, %v5606
    %v5651 = vmul.f32 %v4193, %v5607
    %v5652 = vmul.f32 %v4193, %v5608
    %v5653 = vmul.f32 %v4197, %v5605
    %v5654 = vmul.f32 %v4197, %v5606
    %v5655 = vmul.f32 %v4197, %v5607
    %v5656 = vmul.f32 %v4197, %v5608
    %v5657 = vmul.f32 %v4201, %v5605
    %v5658 = vmul.f32 %v4201, %v5606
    %v5659 = vmul.f32 %v4201, %v5607
    %v5660 = vmul.f32 %v4201, %v5608
    %v5661 = vmul.f32 %v4205, %v5605
    %v5662 = vmul.f32 %v4205, %v5606
    %v5663 = vmul.f32 %v4205, %v5607
    %v5664 = vmul.f32 %v4205, %v5608
    %v5665 = vmul.f32 %v4209, %v5605
    %v5666 = vmul.f32 %v4209, %v5606
    %v5667 = vmul.f32 %v4209, %v5607
    %v5668 = vmul.f32 %v4209, %v5608
    %v5669 = vmul.f32 %v4213, %v5605
    %v5670 = vmul.f32 %v4213, %v5606
    %v5671 = vmul.f32 %v4213, %v5607
    %v5672 = vmul.f32 %v4213, %v5608
    %v5673 = vmul.f32 %v4217, %v5605
    %v5674 = vmul.f32 %v4217, %v5606
    %v5675 = vmul.f32 %v4217, %v5607
    %v5676 = vmul.f32 %v4217, %v5608
    %v5677 = vmul.f32 %v4221, %v5605
    %v5678 = vmul.f32 %v4221, %v5606
    %v5679 = vmul.f32 %v4221, %v5607
    %v5680 = vmul.f32 %v4221, %v5608
    %v5681 = vmul.f32 %v4225, %v5605
    %v5682 = vmul.f32 %v4225, %v5606
    %v5683 = vmul.f32 %v4225, %v5607
    %v5684 = vmul.f32 %v4225, %v5608
    %v5685 = vsel %vm1115, %v5621, -inf
    %5686 = vmax.xlane.f32.xlu0 %v5685
    %v5687 = vpop.xlane.xlu0 %5686
    %v5688 = vsel %vm1115, %v5622, -inf
    %5689 = vmax.xlane.f32.xlu0 %v5688
    %v5690 = vpop.xlane.xlu0 %5689
    %v5691 = vsel %vm1115, %v5623, -inf
    %5692 = vmax.xlane.f32.xlu0 %v5691
    %v5693 = vpop.xlane.xlu0 %5692
    %v5694 = vsel %vm1115, %v5624, -inf
    %5695 = vmax.xlane.f32.xlu0 %v5694
    %v5696 = vpop.xlane.xlu0 %5695
    %v5697 = vsel %vm1115, %v5625, -inf
    %5698 = vmax.xlane.f32.xlu0 %v5697
    %v5699 = vpop.xlane.xlu0 %5698
    %v5700 = vsel %vm1115, %v5626, -inf
    %5701 = vmax.xlane.f32.xlu0 %v5700
    %v5702 = vpop.xlane.xlu0 %5701
    %v5703 = vsel %vm1115, %v5627, -inf
    %5704 = vmax.xlane.f32.xlu0 %v5703
    %v5705 = vpop.xlane.xlu0 %5704
    %v5706 = vsel %vm1115, %v5628, -inf
    %5707 = vmax.xlane.f32.xlu0 %v5706
    %v5708 = vpop.xlane.xlu0 %5707
    %v5709 = vsel %vm1115, %v5629, -inf
    %5710 = vmax.xlane.f32.xlu0 %v5709
    %v5711 = vpop.xlane.xlu0 %5710
    %v5712 = vsel %vm1115, %v5630, -inf
    %5713 = vmax.xlane.f32.xlu0 %v5712
    %v5714 = vpop.xlane.xlu0 %5713
    %v5715 = vsel %vm1115, %v5631, -inf
    %5716 = vmax.xlane.f32.xlu0 %v5715
    %v5717 = vpop.xlane.xlu0 %5716
    %v5718 = vsel %vm1115, %v5632, -inf
    %5719 = vmax.xlane.f32.xlu0 %v5718
    %v5720 = vpop.xlane.xlu0 %5719
    %v5721 = vsel %vm1115, %v5633, -inf
    %5722 = vmax.xlane.f32.xlu0 %v5721
    %v5723 = vpop.xlane.xlu0 %5722
    %v5724 = vsel %vm1115, %v5634, -inf
    %5725 = vmax.xlane.f32.xlu0 %v5724
    %v5726 = vpop.xlane.xlu0 %5725
    %v5727 = vsel %vm1115, %v5635, -inf
    %5728 = vmax.xlane.f32.xlu0 %v5727
    %v5729 = vpop.xlane.xlu0 %5728
    %v5730 = vsel %vm1115, %v5636, -inf
    %5731 = vmax.xlane.f32.xlu0 %v5730
    %v5732 = vpop.xlane.xlu0 %5731
    %v5733 = vsel %vm1115, %v5637, -inf
    %5734 = vmax.xlane.f32.xlu0 %v5733
    %v5735 = vpop.xlane.xlu0 %5734
    %v5736 = vsel %vm1115, %v5638, -inf
    %5737 = vmax.xlane.f32.xlu0 %v5736
    %v5738 = vpop.xlane.xlu0 %5737
    %v5739 = vsel %vm1115, %v5639, -inf
    %5740 = vmax.xlane.f32.xlu0 %v5739
    %v5741 = vpop.xlane.xlu0 %5740
    %v5742 = vsel %vm1115, %v5640, -inf
    %5743 = vmax.xlane.f32.xlu0 %v5742
    %v5744 = vpop.xlane.xlu0 %5743
    %v5745 = vsel %vm1115, %v5641, -inf
    %5746 = vmax.xlane.f32.xlu0 %v5745
    %v5747 = vpop.xlane.xlu0 %5746
    %v5748 = vsel %vm1115, %v5642, -inf
    %5749 = vmax.xlane.f32.xlu0 %v5748
    %v5750 = vpop.xlane.xlu0 %5749
    %v5751 = vsel %vm1115, %v5643, -inf
    %5752 = vmax.xlane.f32.xlu0 %v5751
    %v5753 = vpop.xlane.xlu0 %5752
    %v5754 = vsel %vm1115, %v5644, -inf
    %5755 = vmax.xlane.f32.xlu0 %v5754
    %v5756 = vpop.xlane.xlu0 %5755
    %v5757 = vsel %vm1115, %v5645, -inf
    %5758 = vmax.xlane.f32.xlu0 %v5757
    %v5759 = vpop.xlane.xlu0 %5758
    %v5760 = vsel %vm1115, %v5646, -inf
    %5761 = vmax.xlane.f32.xlu0 %v5760
    %v5762 = vpop.xlane.xlu0 %5761
    %v5763 = vsel %vm1115, %v5647, -inf
    %5764 = vmax.xlane.f32.xlu0 %v5763
    %v5765 = vpop.xlane.xlu0 %5764
    %v5766 = vsel %vm1115, %v5648, -inf
    %5767 = vmax.xlane.f32.xlu0 %v5766
    %v5768 = vpop.xlane.xlu0 %5767
    %v5769 = vsel %vm1115, %v5649, -inf
    %5770 = vmax.xlane.f32.xlu0 %v5769
    %v5771 = vpop.xlane.xlu0 %5770
    %v5772 = vsel %vm1115, %v5650, -inf
    %5773 = vmax.xlane.f32.xlu0 %v5772
    %v5774 = vpop.xlane.xlu0 %5773
    %v5775 = vsel %vm1115, %v5651, -inf
    %5776 = vmax.xlane.f32.xlu0 %v5775
    %v5777 = vpop.xlane.xlu0 %5776
    %v5778 = vsel %vm1115, %v5652, -inf
    %5779 = vmax.xlane.f32.xlu0 %v5778
    %v5780 = vpop.xlane.xlu0 %5779
    %v5781 = vsel %vm1115, %v5653, -inf
    %5782 = vmax.xlane.f32.xlu0 %v5781
    %v5783 = vpop.xlane.xlu0 %5782
    %v5784 = vsel %vm1115, %v5654, -inf
    %5785 = vmax.xlane.f32.xlu0 %v5784
    %v5786 = vpop.xlane.xlu0 %5785
    %v5787 = vsel %vm1115, %v5655, -inf
    %5788 = vmax.xlane.f32.xlu0 %v5787
    %v5789 = vpop.xlane.xlu0 %5788
    %v5790 = vsel %vm1115, %v5656, -inf
    %5791 = vmax.xlane.f32.xlu0 %v5790
    %v5792 = vpop.xlane.xlu0 %5791
    %v5793 = vsel %vm1115, %v5657, -inf
    %5794 = vmax.xlane.f32.xlu0 %v5793
    %v5795 = vpop.xlane.xlu0 %5794
    %v5796 = vsel %vm1115, %v5658, -inf
    %5797 = vmax.xlane.f32.xlu0 %v5796
    %v5798 = vpop.xlane.xlu0 %5797
    %v5799 = vsel %vm1115, %v5659, -inf
    %5800 = vmax.xlane.f32.xlu0 %v5799
    %v5801 = vpop.xlane.xlu0 %5800
    %v5802 = vsel %vm1115, %v5660, -inf
    %5803 = vmax.xlane.f32.xlu0 %v5802
    %v5804 = vpop.xlane.xlu0 %5803
    %v5805 = vsel %vm1115, %v5661, -inf
    %5806 = vmax.xlane.f32.xlu0 %v5805
    %v5807 = vpop.xlane.xlu0 %5806
    %v5808 = vsel %vm1115, %v5662, -inf
    %5809 = vmax.xlane.f32.xlu0 %v5808
    %v5810 = vpop.xlane.xlu0 %5809
    %v5811 = vsel %vm1115, %v5663, -inf
    %5812 = vmax.xlane.f32.xlu0 %v5811
    %v5813 = vpop.xlane.xlu0 %5812
    %v5814 = vsel %vm1115, %v5664, -inf
    %5815 = vmax.xlane.f32.xlu0 %v5814
    %v5816 = vpop.xlane.xlu0 %5815
    %v5817 = vsel %vm1115, %v5665, -inf
    %5818 = vmax.xlane.f32.xlu0 %v5817
    %v5819 = vpop.xlane.xlu0 %5818
    %v5820 = vsel %vm1115, %v5666, -inf
    %5821 = vmax.xlane.f32.xlu0 %v5820
    %v5822 = vpop.xlane.xlu0 %5821
    %v5823 = vsel %vm1115, %v5667, -inf
    %5824 = vmax.xlane.f32.xlu0 %v5823
    %v5825 = vpop.xlane.xlu0 %5824
    %v5826 = vsel %vm1115, %v5668, -inf
    %5827 = vmax.xlane.f32.xlu0 %v5826
    %v5828 = vpop.xlane.xlu0 %5827
    %v5829 = vsel %vm1115, %v5669, -inf
    %5830 = vmax.xlane.f32.xlu0 %v5829
    %v5831 = vpop.xlane.xlu0 %5830
    %v5832 = vsel %vm1115, %v5670, -inf
    %5833 = vmax.xlane.f32.xlu0 %v5832
    %v5834 = vpop.xlane.xlu0 %5833
    %v5835 = vsel %vm1115, %v5671, -inf
    %5836 = vmax.xlane.f32.xlu0 %v5835
    %v5837 = vpop.xlane.xlu0 %5836
    %v5838 = vsel %vm1115, %v5672, -inf
    %5839 = vmax.xlane.f32.xlu0 %v5838
    %v5840 = vpop.xlane.xlu0 %5839
    %v5841 = vsel %vm1115, %v5673, -inf
    %5842 = vmax.xlane.f32.xlu0 %v5841
    %v5843 = vpop.xlane.xlu0 %5842
    %v5844 = vsel %vm1115, %v5674, -inf
    %5845 = vmax.xlane.f32.xlu0 %v5844
    %v5846 = vpop.xlane.xlu0 %5845
    %v5847 = vsel %vm1115, %v5675, -inf
    %5848 = vmax.xlane.f32.xlu0 %v5847
    %v5849 = vpop.xlane.xlu0 %5848
    %v5850 = vsel %vm1115, %v5676, -inf
    %5851 = vmax.xlane.f32.xlu0 %v5850
    %v5852 = vpop.xlane.xlu0 %5851
    %v5853 = vsel %vm1115, %v5677, -inf
    %5854 = vmax.xlane.f32.xlu0 %v5853
    %v5855 = vpop.xlane.xlu0 %5854
    %v5856 = vsel %vm1115, %v5678, -inf
    %5857 = vmax.xlane.f32.xlu0 %v5856
    %v5858 = vpop.xlane.xlu0 %5857
    %v5859 = vsel %vm1115, %v5679, -inf
    %5860 = vmax.xlane.f32.xlu0 %v5859
    %v5861 = vpop.xlane.xlu0 %5860
    %v5862 = vsel %vm1115, %v5680, -inf
    %5863 = vmax.xlane.f32.xlu0 %v5862
    %v5864 = vpop.xlane.xlu0 %5863
    %v5865 = vsel %vm1115, %v5681, -inf
    %5866 = vmax.xlane.f32.xlu0 %v5865
    %v5867 = vpop.xlane.xlu0 %5866
    %v5868 = vsel %vm1115, %v5682, -inf
    %5869 = vmax.xlane.f32.xlu0 %v5868
    %v5870 = vpop.xlane.xlu0 %5869
    %v5871 = vsel %vm1115, %v5683, -inf
    %5872 = vmax.xlane.f32.xlu0 %v5871
    %v5873 = vpop.xlane.xlu0 %5872
    %v5874 = vsel %vm1115, %v5684, -inf
    %5875 = vmax.xlane.f32.xlu0 %v5874
    %v5876 = vpop.xlane.xlu0 %5875
    %v5877 = vmax.f32 %v5687, 0.0
    %v5878 = vmax.f32 %v5690, 0.0
    %v5879 = vmax.f32 %v5693, 0.0
    %v5880 = vmax.f32 %v5696, 0.0
    %v5881 = vmax.f32 %v5699, 0.0
    %v5882 = vmax.f32 %v5702, 0.0
    %v5883 = vmax.f32 %v5705, 0.0
    %v5884 = vmax.f32 %v5708, 0.0
    %v5885 = vmax.f32 %v5711, 0.0
    %v5886 = vmax.f32 %v5714, 0.0
    %v5887 = vmax.f32 %v5717, 0.0
    %v5888 = vmax.f32 %v5720, 0.0
    %v5889 = vmax.f32 %v5723, 0.0
    %v5890 = vmax.f32 %v5726, 0.0
    %v5891 = vmax.f32 %v5729, 0.0
    %v5892 = vmax.f32 %v5732, 0.0
    %v5893 = vmax.f32 %v5735, 0.0
    %v5894 = vmax.f32 %v5738, 0.0
    %v5895 = vmax.f32 %v5741, 0.0
    %v5896 = vmax.f32 %v5744, 0.0
    %v5897 = vmax.f32 %v5747, 0.0
    %v5898 = vmax.f32 %v5750, 0.0
    %v5899 = vmax.f32 %v5753, 0.0
    %v5900 = vmax.f32 %v5756, 0.0
    %v5901 = vmax.f32 %v5759, 0.0
    %v5902 = vmax.f32 %v5762, 0.0
    %v5903 = vmax.f32 %v5765, 0.0
    %v5904 = vmax.f32 %v5768, 0.0
    %v5905 = vmax.f32 %v5771, 0.0
    %v5906 = vmax.f32 %v5774, 0.0
    %v5907 = vmax.f32 %v5777, 0.0
    %v5908 = vmax.f32 %v5780, 0.0
    %v5909 = vmax.f32 %v5783, 0.0
    %v5910 = vmax.f32 %v5786, 0.0
    %v5911 = vmax.f32 %v5789, 0.0
    %v5912 = vmax.f32 %v5792, 0.0
    %v5913 = vmax.f32 %v5795, 0.0
    %v5914 = vmax.f32 %v5798, 0.0
    %v5915 = vmax.f32 %v5801, 0.0
    %v5916 = vmax.f32 %v5804, 0.0
    %v5917 = vmax.f32 %v5807, 0.0
    %v5918 = vmax.f32 %v5810, 0.0
    %v5919 = vmax.f32 %v5813, 0.0
    %v5920 = vmax.f32 %v5816, 0.0
    %v5921 = vmax.f32 %v5819, 0.0
    %v5922 = vmax.f32 %v5822, 0.0
    %v5923 = vmax.f32 %v5825, 0.0
    %v5924 = vmax.f32 %v5828, 0.0
    %v5925 = vmax.f32 %v5831, 0.0
    %v5926 = vmax.f32 %v5834, 0.0
    %v5927 = vmax.f32 %v5837, 0.0
    %v5928 = vmax.f32 %v5840, 0.0
    %v5929 = vmax.f32 %v5843, 0.0
    %v5930 = vmax.f32 %v5846, 0.0
    %v5931 = vmax.f32 %v5849, 0.0
    %v5932 = vmax.f32 %v5852, 0.0
    %v5933 = vmax.f32 %v5855, 0.0
    %v5934 = vmax.f32 %v5858, 0.0
    %v5935 = vmax.f32 %v5861, 0.0
    %v5936 = vmax.f32 %v5864, 0.0
    %v5937 = vmax.f32 %v5867, 0.0
    %v5938 = vmax.f32 %v5870, 0.0
    %v5939 = vmax.f32 %v5873, 0.0
    %v5940 = vmax.f32 %v5876, 0.0
    %v5941 = vmul.f32 %v4615, %v5605
    %v5942 = vmul.f32 %v4615, %v5606
    %v5943 = vmul.f32 %v4615, %v5607
    %v5944 = vmul.f32 %v4615, %v5608
    %v5945 = vmul.f32 %v4619, %v5605
    %v5946 = vmul.f32 %v4619, %v5606
    %v5947 = vmul.f32 %v4619, %v5607
    %v5948 = vmul.f32 %v4619, %v5608
    %v5949 = vmul.f32 %v4623, %v5605
    %v5950 = vmul.f32 %v4623, %v5606
    %v5951 = vmul.f32 %v4623, %v5607
    %v5952 = vmul.f32 %v4623, %v5608
    %v5953 = vmul.f32 %v4627, %v5605
    %v5954 = vmul.f32 %v4627, %v5606
    %v5955 = vmul.f32 %v4627, %v5607
    %v5956 = vmul.f32 %v4627, %v5608
    %v5957 = vmul.f32 %v4631, %v5605
    %v5958 = vmul.f32 %v4631, %v5606
    %v5959 = vmul.f32 %v4631, %v5607
    %v5960 = vmul.f32 %v4631, %v5608
    %v5961 = vmul.f32 %v4635, %v5605
    %v5962 = vmul.f32 %v4635, %v5606
    %v5963 = vmul.f32 %v4635, %v5607
    %v5964 = vmul.f32 %v4635, %v5608
    %v5965 = vmul.f32 %v4639, %v5605
    %v5966 = vmul.f32 %v4639, %v5606
    %v5967 = vmul.f32 %v4639, %v5607
    %v5968 = vmul.f32 %v4639, %v5608
    %v5969 = vmul.f32 %v4643, %v5605
    %v5970 = vmul.f32 %v4643, %v5606
    %v5971 = vmul.f32 %v4643, %v5607
    %v5972 = vmul.f32 %v4643, %v5608
    %v5973 = vsel %vm1115, %v5941, -inf
    %5974 = vmax.xlane.f32.xlu0 %v5973
    %v5975 = vpop.xlane.xlu0 %5974
    %v5976 = vsel %vm1115, %v5942, -inf
    %5977 = vmax.xlane.f32.xlu0 %v5976
    %v5978 = vpop.xlane.xlu0 %5977
    %v5979 = vsel %vm1115, %v5943, -inf
    %5980 = vmax.xlane.f32.xlu0 %v5979
    %v5981 = vpop.xlane.xlu0 %5980
    %v5982 = vsel %vm1115, %v5944, -inf
    %5983 = vmax.xlane.f32.xlu0 %v5982
    %v5984 = vpop.xlane.xlu0 %5983
    %v5985 = vsel %vm1115, %v5945, -inf
    %5986 = vmax.xlane.f32.xlu0 %v5985
    %v5987 = vpop.xlane.xlu0 %5986
    %v5988 = vsel %vm1115, %v5946, -inf
    %5989 = vmax.xlane.f32.xlu0 %v5988
    %v5990 = vpop.xlane.xlu0 %5989
    %v5991 = vsel %vm1115, %v5947, -inf
    %5992 = vmax.xlane.f32.xlu0 %v5991
    %v5993 = vpop.xlane.xlu0 %5992
    %v5994 = vsel %vm1115, %v5948, -inf
    %5995 = vmax.xlane.f32.xlu0 %v5994
    %v5996 = vpop.xlane.xlu0 %5995
    %v5997 = vsel %vm1115, %v5949, -inf
    %5998 = vmax.xlane.f32.xlu0 %v5997
    %v5999 = vpop.xlane.xlu0 %5998
    %v6000 = vsel %vm1115, %v5950, -inf
    %6001 = vmax.xlane.f32.xlu0 %v6000
    %v6002 = vpop.xlane.xlu0 %6001
    %v6003 = vsel %vm1115, %v5951, -inf
    %6004 = vmax.xlane.f32.xlu0 %v6003
    %v6005 = vpop.xlane.xlu0 %6004
    %v6006 = vsel %vm1115, %v5952, -inf
    %6007 = vmax.xlane.f32.xlu0 %v6006
    %v6008 = vpop.xlane.xlu0 %6007
    %v6009 = vsel %vm1115, %v5953, -inf
    %6010 = vmax.xlane.f32.xlu0 %v6009
    %v6011 = vpop.xlane.xlu0 %6010
    %v6012 = vsel %vm1115, %v5954, -inf
    %6013 = vmax.xlane.f32.xlu0 %v6012
    %v6014 = vpop.xlane.xlu0 %6013
    %v6015 = vsel %vm1115, %v5955, -inf
    %6016 = vmax.xlane.f32.xlu0 %v6015
    %v6017 = vpop.xlane.xlu0 %6016
    %v6018 = vsel %vm1115, %v5956, -inf
    %6019 = vmax.xlane.f32.xlu0 %v6018
    %v6020 = vpop.xlane.xlu0 %6019
    %v6021 = vsel %vm1115, %v5957, -inf
    %6022 = vmax.xlane.f32.xlu0 %v6021
    %v6023 = vpop.xlane.xlu0 %6022
    %v6024 = vsel %vm1115, %v5958, -inf
    %6025 = vmax.xlane.f32.xlu0 %v6024
    %v6026 = vpop.xlane.xlu0 %6025
    %v6027 = vsel %vm1115, %v5959, -inf
    %6028 = vmax.xlane.f32.xlu0 %v6027
    %v6029 = vpop.xlane.xlu0 %6028
    %v6030 = vsel %vm1115, %v5960, -inf
    %6031 = vmax.xlane.f32.xlu0 %v6030
    %v6032 = vpop.xlane.xlu0 %6031
    %v6033 = vsel %vm1115, %v5961, -inf
    %6034 = vmax.xlane.f32.xlu0 %v6033
    %v6035 = vpop.xlane.xlu0 %6034
    %v6036 = vsel %vm1115, %v5962, -inf
    %6037 = vmax.xlane.f32.xlu0 %v6036
    %v6038 = vpop.xlane.xlu0 %6037
    %v6039 = vsel %vm1115, %v5963, -inf
    %6040 = vmax.xlane.f32.xlu0 %v6039
    %v6041 = vpop.xlane.xlu0 %6040
    %v6042 = vsel %vm1115, %v5964, -inf
    %6043 = vmax.xlane.f32.xlu0 %v6042
    %v6044 = vpop.xlane.xlu0 %6043
    %v6045 = vsel %vm1115, %v5965, -inf
    %6046 = vmax.xlane.f32.xlu0 %v6045
    %v6047 = vpop.xlane.xlu0 %6046
    %v6048 = vsel %vm1115, %v5966, -inf
    %6049 = vmax.xlane.f32.xlu0 %v6048
    %v6050 = vpop.xlane.xlu0 %6049
    %v6051 = vsel %vm1115, %v5967, -inf
    %6052 = vmax.xlane.f32.xlu0 %v6051
    %v6053 = vpop.xlane.xlu0 %6052
    %v6054 = vsel %vm1115, %v5968, -inf
    %6055 = vmax.xlane.f32.xlu0 %v6054
    %v6056 = vpop.xlane.xlu0 %6055
    %v6057 = vsel %vm1115, %v5969, -inf
    %6058 = vmax.xlane.f32.xlu0 %v6057
    %v6059 = vpop.xlane.xlu0 %6058
    %v6060 = vsel %vm1115, %v5970, -inf
    %6061 = vmax.xlane.f32.xlu0 %v6060
    %v6062 = vpop.xlane.xlu0 %6061
    %v6063 = vsel %vm1115, %v5971, -inf
    %6064 = vmax.xlane.f32.xlu0 %v6063
    %v6065 = vpop.xlane.xlu0 %6064
    %v6066 = vsel %vm1115, %v5972, -inf
    %6067 = vmax.xlane.f32.xlu0 %v6066
    %v6068 = vpop.xlane.xlu0 %6067
    %v6069 = vmax.f32 %v5975, 0.0
    %v6070 = vmax.f32 %v5978, 0.0
    %v6071 = vmax.f32 %v5981, 0.0
    %v6072 = vmax.f32 %v5984, 0.0
    %v6073 = vmax.f32 %v5987, 0.0
    %v6074 = vmax.f32 %v5990, 0.0
    %v6075 = vmax.f32 %v5993, 0.0
    %v6076 = vmax.f32 %v5996, 0.0
    %v6077 = vmax.f32 %v5999, 0.0
    %v6078 = vmax.f32 %v6002, 0.0
    %v6079 = vmax.f32 %v6005, 0.0
    %v6080 = vmax.f32 %v6008, 0.0
    %v6081 = vmax.f32 %v6011, 0.0
    %v6082 = vmax.f32 %v6014, 0.0
    %v6083 = vmax.f32 %v6017, 0.0
    %v6084 = vmax.f32 %v6020, 0.0
    %v6085 = vmax.f32 %v6023, 0.0
    %v6086 = vmax.f32 %v6026, 0.0
    %v6087 = vmax.f32 %v6029, 0.0
    %v6088 = vmax.f32 %v6032, 0.0
    %v6089 = vmax.f32 %v6035, 0.0
    %v6090 = vmax.f32 %v6038, 0.0
    %v6091 = vmax.f32 %v6041, 0.0
    %v6092 = vmax.f32 %v6044, 0.0
    %v6093 = vmax.f32 %v6047, 0.0
    %v6094 = vmax.f32 %v6050, 0.0
    %v6095 = vmax.f32 %v6053, 0.0
    %v6096 = vmax.f32 %v6056, 0.0
    %v6097 = vmax.f32 %v6059, 0.0
    %v6098 = vmax.f32 %v6062, 0.0
    %v6099 = vmax.f32 %v6065, 0.0
    %v6100 = vmax.f32 %v6068, 0.0
    %v6165 = vlaneseq
    %v6166 = vshrl.u32 %v6165, 7
    %v6167 = vsub.s32 %v2163, %v6166
    %v6168 = vrot.slane %v5877, %v6167
    %v6169 = vlaneseq
    %v6170 = vshrl.u32 %v6169, 7
    %v6171 = vsub.s32 %v2168, %v6170
    %v6172 = vrot.slane %v5878, %v6171
    %v6173 = vsel %vm2173, %v6172, %v6168
    %v6174 = vlaneseq
    %v6175 = vshrl.u32 %v6174, 7
    %v6176 = vsub.s32 %v2175, %v6175
    %v6177 = vrot.slane %v5879, %v6176
    %v6178 = vsel %vm2180, %v6177, %v6173
    %v6179 = vlaneseq
    %v6180 = vshrl.u32 %v6179, 7
    %v6181 = vsub.s32 %v2182, %v6180
    %v6182 = vrot.slane %v5880, %v6181
    %v6183 = vsel %vm2187, %v6182, %v6178
    %v6184 = vlaneseq
    %v6185 = vshrl.u32 %v6184, 7
    %v6186 = vsub.s32 %v2163, %v6185
    %v6187 = vrot.slane %v5881, %v6186
    %v6188 = vlaneseq
    %v6189 = vshrl.u32 %v6188, 7
    %v6190 = vsub.s32 %v2168, %v6189
    %v6191 = vrot.slane %v5882, %v6190
    %v6192 = vsel %vm2173, %v6191, %v6187
    %v6193 = vlaneseq
    %v6194 = vshrl.u32 %v6193, 7
    %v6195 = vsub.s32 %v2175, %v6194
    %v6196 = vrot.slane %v5883, %v6195
    %v6197 = vsel %vm2180, %v6196, %v6192
    %v6198 = vlaneseq
    %v6199 = vshrl.u32 %v6198, 7
    %v6200 = vsub.s32 %v2182, %v6199
    %v6201 = vrot.slane %v5884, %v6200
    %v6202 = vsel %vm2187, %v6201, %v6197
    %v6203 = vlaneseq
    %v6204 = vshrl.u32 %v6203, 7
    %v6205 = vsub.s32 %v2163, %v6204
    %v6206 = vrot.slane %v5885, %v6205
    %v6207 = vlaneseq
    %v6208 = vshrl.u32 %v6207, 7
    %v6209 = vsub.s32 %v2168, %v6208
    %v6210 = vrot.slane %v5886, %v6209
    %v6211 = vsel %vm2173, %v6210, %v6206
    %v6212 = vlaneseq
    %v6213 = vshrl.u32 %v6212, 7
    %v6214 = vsub.s32 %v2175, %v6213
    %v6215 = vrot.slane %v5887, %v6214
    %v6216 = vsel %vm2180, %v6215, %v6211
    %v6217 = vlaneseq
    %v6218 = vshrl.u32 %v6217, 7
    %v6219 = vsub.s32 %v2182, %v6218
    %v6220 = vrot.slane %v5888, %v6219
    %v6221 = vsel %vm2187, %v6220, %v6216
    %v6222 = vlaneseq
    %v6223 = vshrl.u32 %v6222, 7
    %v6224 = vsub.s32 %v2163, %v6223
    %v6225 = vrot.slane %v5889, %v6224
    %v6226 = vlaneseq
    %v6227 = vshrl.u32 %v6226, 7
    %v6228 = vsub.s32 %v2168, %v6227
    %v6229 = vrot.slane %v5890, %v6228
    %v6230 = vsel %vm2173, %v6229, %v6225
    %v6231 = vlaneseq
    %v6232 = vshrl.u32 %v6231, 7
    %v6233 = vsub.s32 %v2175, %v6232
    %v6234 = vrot.slane %v5891, %v6233
    %v6235 = vsel %vm2180, %v6234, %v6230
    %v6236 = vlaneseq
    %v6237 = vshrl.u32 %v6236, 7
    %v6238 = vsub.s32 %v2182, %v6237
    %v6239 = vrot.slane %v5892, %v6238
    %v6240 = vsel %vm2187, %v6239, %v6235
    %v6241 = vlaneseq
    %v6242 = vshrl.u32 %v6241, 7
    %v6243 = vsub.s32 %v2163, %v6242
    %v6244 = vrot.slane %v5893, %v6243
    %v6245 = vlaneseq
    %v6246 = vshrl.u32 %v6245, 7
    %v6247 = vsub.s32 %v2168, %v6246
    %v6248 = vrot.slane %v5894, %v6247
    %v6249 = vsel %vm2173, %v6248, %v6244
    %v6250 = vlaneseq
    %v6251 = vshrl.u32 %v6250, 7
    %v6252 = vsub.s32 %v2175, %v6251
    %v6253 = vrot.slane %v5895, %v6252
    %v6254 = vsel %vm2180, %v6253, %v6249
    %v6255 = vlaneseq
    %v6256 = vshrl.u32 %v6255, 7
    %v6257 = vsub.s32 %v2182, %v6256
    %v6258 = vrot.slane %v5896, %v6257
    %v6259 = vsel %vm2187, %v6258, %v6254
    %v6260 = vlaneseq
    %v6261 = vshrl.u32 %v6260, 7
    %v6262 = vsub.s32 %v2163, %v6261
    %v6263 = vrot.slane %v5897, %v6262
    %v6264 = vlaneseq
    %v6265 = vshrl.u32 %v6264, 7
    %v6266 = vsub.s32 %v2168, %v6265
    %v6267 = vrot.slane %v5898, %v6266
    %v6268 = vsel %vm2173, %v6267, %v6263
    %v6269 = vlaneseq
    %v6270 = vshrl.u32 %v6269, 7
    %v6271 = vsub.s32 %v2175, %v6270
    %v6272 = vrot.slane %v5899, %v6271
    %v6273 = vsel %vm2180, %v6272, %v6268
    %v6274 = vlaneseq
    %v6275 = vshrl.u32 %v6274, 7
    %v6276 = vsub.s32 %v2182, %v6275
    %v6277 = vrot.slane %v5900, %v6276
    %v6278 = vsel %vm2187, %v6277, %v6273
    %v6279 = vlaneseq
    %v6280 = vshrl.u32 %v6279, 7
    %v6281 = vsub.s32 %v2163, %v6280
    %v6282 = vrot.slane %v5901, %v6281
    %v6283 = vlaneseq
    %v6284 = vshrl.u32 %v6283, 7
    %v6285 = vsub.s32 %v2168, %v6284
    %v6286 = vrot.slane %v5902, %v6285
    %v6287 = vsel %vm2173, %v6286, %v6282
    %v6288 = vlaneseq
    %v6289 = vshrl.u32 %v6288, 7
    %v6290 = vsub.s32 %v2175, %v6289
    %v6291 = vrot.slane %v5903, %v6290
    %v6292 = vsel %vm2180, %v6291, %v6287
    %v6293 = vlaneseq
    %v6294 = vshrl.u32 %v6293, 7
    %v6295 = vsub.s32 %v2182, %v6294
    %v6296 = vrot.slane %v5904, %v6295
    %v6297 = vsel %vm2187, %v6296, %v6292
    %v6298 = vlaneseq
    %v6299 = vshrl.u32 %v6298, 7
    %v6300 = vsub.s32 %v2163, %v6299
    %v6301 = vrot.slane %v5905, %v6300
    %v6302 = vlaneseq
    %v6303 = vshrl.u32 %v6302, 7
    %v6304 = vsub.s32 %v2168, %v6303
    %v6305 = vrot.slane %v5906, %v6304
    %v6306 = vsel %vm2173, %v6305, %v6301
    %v6307 = vlaneseq
    %v6308 = vshrl.u32 %v6307, 7
    %v6309 = vsub.s32 %v2175, %v6308
    %v6310 = vrot.slane %v5907, %v6309
    %v6311 = vsel %vm2180, %v6310, %v6306
    %v6312 = vlaneseq
    %v6313 = vshrl.u32 %v6312, 7
    %v6314 = vsub.s32 %v2182, %v6313
    %v6315 = vrot.slane %v5908, %v6314
    %v6316 = vsel %vm2187, %v6315, %v6311
    %v6317 = vlaneseq
    %v6318 = vshrl.u32 %v6317, 7
    %v6319 = vsub.s32 %v2163, %v6318
    %v6320 = vrot.slane %v5909, %v6319
    %v6321 = vlaneseq
    %v6322 = vshrl.u32 %v6321, 7
    %v6323 = vsub.s32 %v2168, %v6322
    %v6324 = vrot.slane %v5910, %v6323
    %v6325 = vsel %vm2173, %v6324, %v6320
    %v6326 = vlaneseq
    %v6327 = vshrl.u32 %v6326, 7
    %v6328 = vsub.s32 %v2175, %v6327
    %v6329 = vrot.slane %v5911, %v6328
    %v6330 = vsel %vm2180, %v6329, %v6325
    %v6331 = vlaneseq
    %v6332 = vshrl.u32 %v6331, 7
    %v6333 = vsub.s32 %v2182, %v6332
    %v6334 = vrot.slane %v5912, %v6333
    %v6335 = vsel %vm2187, %v6334, %v6330
    %v6336 = vlaneseq
    %v6337 = vshrl.u32 %v6336, 7
    %v6338 = vsub.s32 %v2163, %v6337
    %v6339 = vrot.slane %v5913, %v6338
    %v6340 = vlaneseq
    %v6341 = vshrl.u32 %v6340, 7
    %v6342 = vsub.s32 %v2168, %v6341
    %v6343 = vrot.slane %v5914, %v6342
    %v6344 = vsel %vm2173, %v6343, %v6339
    %v6345 = vlaneseq
    %v6346 = vshrl.u32 %v6345, 7
    %v6347 = vsub.s32 %v2175, %v6346
    %v6348 = vrot.slane %v5915, %v6347
    %v6349 = vsel %vm2180, %v6348, %v6344
    %v6350 = vlaneseq
    %v6351 = vshrl.u32 %v6350, 7
    %v6352 = vsub.s32 %v2182, %v6351
    %v6353 = vrot.slane %v5916, %v6352
    %v6354 = vsel %vm2187, %v6353, %v6349
    %v6355 = vlaneseq
    %v6356 = vshrl.u32 %v6355, 7
    %v6357 = vsub.s32 %v2163, %v6356
    %v6358 = vrot.slane %v5917, %v6357
    %v6359 = vlaneseq
    %v6360 = vshrl.u32 %v6359, 7
    %v6361 = vsub.s32 %v2168, %v6360
    %v6362 = vrot.slane %v5918, %v6361
    %v6363 = vsel %vm2173, %v6362, %v6358
    %v6364 = vlaneseq
    %v6365 = vshrl.u32 %v6364, 7
    %v6366 = vsub.s32 %v2175, %v6365
    %v6367 = vrot.slane %v5919, %v6366
    %v6368 = vsel %vm2180, %v6367, %v6363
    %v6369 = vlaneseq
    %v6370 = vshrl.u32 %v6369, 7
    %v6371 = vsub.s32 %v2182, %v6370
    %v6372 = vrot.slane %v5920, %v6371
    %v6373 = vsel %vm2187, %v6372, %v6368
    %v6374 = vlaneseq
    %v6375 = vshrl.u32 %v6374, 7
    %v6376 = vsub.s32 %v2163, %v6375
    %v6377 = vrot.slane %v5921, %v6376
    %v6378 = vlaneseq
    %v6379 = vshrl.u32 %v6378, 7
    %v6380 = vsub.s32 %v2168, %v6379
    %v6381 = vrot.slane %v5922, %v6380
    %v6382 = vsel %vm2173, %v6381, %v6377
    %v6383 = vlaneseq
    %v6384 = vshrl.u32 %v6383, 7
    %v6385 = vsub.s32 %v2175, %v6384
    %v6386 = vrot.slane %v5923, %v6385
    %v6387 = vsel %vm2180, %v6386, %v6382
    %v6388 = vlaneseq
    %v6389 = vshrl.u32 %v6388, 7
    %v6390 = vsub.s32 %v2182, %v6389
    %v6391 = vrot.slane %v5924, %v6390
    %v6392 = vsel %vm2187, %v6391, %v6387
    %v6393 = vlaneseq
    %v6394 = vshrl.u32 %v6393, 7
    %v6395 = vsub.s32 %v2163, %v6394
    %v6396 = vrot.slane %v5925, %v6395
    %v6397 = vlaneseq
    %v6398 = vshrl.u32 %v6397, 7
    %v6399 = vsub.s32 %v2168, %v6398
    %v6400 = vrot.slane %v5926, %v6399
    %v6401 = vsel %vm2173, %v6400, %v6396
    %v6402 = vlaneseq
    %v6403 = vshrl.u32 %v6402, 7
    %v6404 = vsub.s32 %v2175, %v6403
    %v6405 = vrot.slane %v5927, %v6404
    %v6406 = vsel %vm2180, %v6405, %v6401
    %v6407 = vlaneseq
    %v6408 = vshrl.u32 %v6407, 7
    %v6409 = vsub.s32 %v2182, %v6408
    %v6410 = vrot.slane %v5928, %v6409
    %v6411 = vsel %vm2187, %v6410, %v6406
    %v6412 = vlaneseq
    %v6413 = vshrl.u32 %v6412, 7
    %v6414 = vsub.s32 %v2163, %v6413
    %v6415 = vrot.slane %v5929, %v6414
    %v6416 = vlaneseq
    %v6417 = vshrl.u32 %v6416, 7
    %v6418 = vsub.s32 %v2168, %v6417
    %v6419 = vrot.slane %v5930, %v6418
    %v6420 = vsel %vm2173, %v6419, %v6415
    %v6421 = vlaneseq
    %v6422 = vshrl.u32 %v6421, 7
    %v6423 = vsub.s32 %v2175, %v6422
    %v6424 = vrot.slane %v5931, %v6423
    %v6425 = vsel %vm2180, %v6424, %v6420
    %v6426 = vlaneseq
    %v6427 = vshrl.u32 %v6426, 7
    %v6428 = vsub.s32 %v2182, %v6427
    %v6429 = vrot.slane %v5932, %v6428
    %v6430 = vsel %vm2187, %v6429, %v6425
    %v6431 = vlaneseq
    %v6432 = vshrl.u32 %v6431, 7
    %v6433 = vsub.s32 %v2163, %v6432
    %v6434 = vrot.slane %v5933, %v6433
    %v6435 = vlaneseq
    %v6436 = vshrl.u32 %v6435, 7
    %v6437 = vsub.s32 %v2168, %v6436
    %v6438 = vrot.slane %v5934, %v6437
    %v6439 = vsel %vm2173, %v6438, %v6434
    %v6440 = vlaneseq
    %v6441 = vshrl.u32 %v6440, 7
    %v6442 = vsub.s32 %v2175, %v6441
    %v6443 = vrot.slane %v5935, %v6442
    %v6444 = vsel %vm2180, %v6443, %v6439
    %v6445 = vlaneseq
    %v6446 = vshrl.u32 %v6445, 7
    %v6447 = vsub.s32 %v2182, %v6446
    %v6448 = vrot.slane %v5936, %v6447
    %v6449 = vsel %vm2187, %v6448, %v6444
    %v6450 = vlaneseq
    %v6451 = vshrl.u32 %v6450, 7
    %v6452 = vsub.s32 %v2163, %v6451
    %v6453 = vrot.slane %v5937, %v6452
    %v6454 = vlaneseq
    %v6455 = vshrl.u32 %v6454, 7
    %v6456 = vsub.s32 %v2168, %v6455
    %v6457 = vrot.slane %v5938, %v6456
    %v6458 = vsel %vm2173, %v6457, %v6453
    %v6459 = vlaneseq
    %v6460 = vshrl.u32 %v6459, 7
    %v6461 = vsub.s32 %v2175, %v6460
    %v6462 = vrot.slane %v5939, %v6461
    %v6463 = vsel %vm2180, %v6462, %v6458
    %v6464 = vlaneseq
    %v6465 = vshrl.u32 %v6464, 7
    %v6466 = vsub.s32 %v2182, %v6465
    %v6467 = vrot.slane %v5940, %v6466
    %v6468 = vsel %vm2187, %v6467, %v6463
    %v6469 = vsel %vm2474, %v6202, %v6183
    %v6470 = vsel %vm2476, %v6221, %v6469
    %v6471 = vsel %vm2478, %v6240, %v6470
    %v6472 = vsel %vm2480, %v6259, %v6471
    %v6473 = vsel %vm2482, %v6278, %v6472
    %v6474 = vsel %vm2484, %v6297, %v6473
    %v6475 = vsel %vm2486, %v6316, %v6474
    %v6476 = vsel %vm2474, %v6354, %v6335
    %v6477 = vsel %vm2476, %v6373, %v6476
    %v6478 = vsel %vm2478, %v6392, %v6477
    %v6479 = vsel %vm2480, %v6411, %v6478
    %v6480 = vsel %vm2482, %v6430, %v6479
    %v6481 = vsel %vm2484, %v6449, %v6480
    %v6482 = vsel %vm2486, %v6468, %v6481
    %v6517 = vlaneseq
    %v6518 = vshrl.u32 %v6517, 7
    %v6519 = vsub.s32 %v2163, %v6518
    %v6520 = vrot.slane %v6069, %v6519
    %v6521 = vlaneseq
    %v6522 = vshrl.u32 %v6521, 7
    %v6523 = vsub.s32 %v2168, %v6522
    %v6524 = vrot.slane %v6070, %v6523
    %v6525 = vsel %vm2173, %v6524, %v6520
    %v6526 = vlaneseq
    %v6527 = vshrl.u32 %v6526, 7
    %v6528 = vsub.s32 %v2175, %v6527
    %v6529 = vrot.slane %v6071, %v6528
    %v6530 = vsel %vm2180, %v6529, %v6525
    %v6531 = vlaneseq
    %v6532 = vshrl.u32 %v6531, 7
    %v6533 = vsub.s32 %v2182, %v6532
    %v6534 = vrot.slane %v6072, %v6533
    %v6535 = vsel %vm2187, %v6534, %v6530
    %v6536 = vlaneseq
    %v6537 = vshrl.u32 %v6536, 7
    %v6538 = vsub.s32 %v2163, %v6537
    %v6539 = vrot.slane %v6073, %v6538
    %v6540 = vlaneseq
    %v6541 = vshrl.u32 %v6540, 7
    %v6542 = vsub.s32 %v2168, %v6541
    %v6543 = vrot.slane %v6074, %v6542
    %v6544 = vsel %vm2173, %v6543, %v6539
    %v6545 = vlaneseq
    %v6546 = vshrl.u32 %v6545, 7
    %v6547 = vsub.s32 %v2175, %v6546
    %v6548 = vrot.slane %v6075, %v6547
    %v6549 = vsel %vm2180, %v6548, %v6544
    %v6550 = vlaneseq
    %v6551 = vshrl.u32 %v6550, 7
    %v6552 = vsub.s32 %v2182, %v6551
    %v6553 = vrot.slane %v6076, %v6552
    %v6554 = vsel %vm2187, %v6553, %v6549
    %v6555 = vlaneseq
    %v6556 = vshrl.u32 %v6555, 7
    %v6557 = vsub.s32 %v2163, %v6556
    %v6558 = vrot.slane %v6077, %v6557
    %v6559 = vlaneseq
    %v6560 = vshrl.u32 %v6559, 7
    %v6561 = vsub.s32 %v2168, %v6560
    %v6562 = vrot.slane %v6078, %v6561
    %v6563 = vsel %vm2173, %v6562, %v6558
    %v6564 = vlaneseq
    %v6565 = vshrl.u32 %v6564, 7
    %v6566 = vsub.s32 %v2175, %v6565
    %v6567 = vrot.slane %v6079, %v6566
    %v6568 = vsel %vm2180, %v6567, %v6563
    %v6569 = vlaneseq
    %v6570 = vshrl.u32 %v6569, 7
    %v6571 = vsub.s32 %v2182, %v6570
    %v6572 = vrot.slane %v6080, %v6571
    %v6573 = vsel %vm2187, %v6572, %v6568
    %v6574 = vlaneseq
    %v6575 = vshrl.u32 %v6574, 7
    %v6576 = vsub.s32 %v2163, %v6575
    %v6577 = vrot.slane %v6081, %v6576
    %v6578 = vlaneseq
    %v6579 = vshrl.u32 %v6578, 7
    %v6580 = vsub.s32 %v2168, %v6579
    %v6581 = vrot.slane %v6082, %v6580
    %v6582 = vsel %vm2173, %v6581, %v6577
    %v6583 = vlaneseq
    %v6584 = vshrl.u32 %v6583, 7
    %v6585 = vsub.s32 %v2175, %v6584
    %v6586 = vrot.slane %v6083, %v6585
    %v6587 = vsel %vm2180, %v6586, %v6582
    %v6588 = vlaneseq
    %v6589 = vshrl.u32 %v6588, 7
    %v6590 = vsub.s32 %v2182, %v6589
    %v6591 = vrot.slane %v6084, %v6590
    %v6592 = vsel %vm2187, %v6591, %v6587
    %v6593 = vlaneseq
    %v6594 = vshrl.u32 %v6593, 7
    %v6595 = vsub.s32 %v2163, %v6594
    %v6596 = vrot.slane %v6085, %v6595
    %v6597 = vlaneseq
    %v6598 = vshrl.u32 %v6597, 7
    %v6599 = vsub.s32 %v2168, %v6598
    %v6600 = vrot.slane %v6086, %v6599
    %v6601 = vsel %vm2173, %v6600, %v6596
    %v6602 = vlaneseq
    %v6603 = vshrl.u32 %v6602, 7
    %v6604 = vsub.s32 %v2175, %v6603
    %v6605 = vrot.slane %v6087, %v6604
    %v6606 = vsel %vm2180, %v6605, %v6601
    %v6607 = vlaneseq
    %v6608 = vshrl.u32 %v6607, 7
    %v6609 = vsub.s32 %v2182, %v6608
    %v6610 = vrot.slane %v6088, %v6609
    %v6611 = vsel %vm2187, %v6610, %v6606
    %v6612 = vlaneseq
    %v6613 = vshrl.u32 %v6612, 7
    %v6614 = vsub.s32 %v2163, %v6613
    %v6615 = vrot.slane %v6089, %v6614
    %v6616 = vlaneseq
    %v6617 = vshrl.u32 %v6616, 7
    %v6618 = vsub.s32 %v2168, %v6617
    %v6619 = vrot.slane %v6090, %v6618
    %v6620 = vsel %vm2173, %v6619, %v6615
    %v6621 = vlaneseq
    %v6622 = vshrl.u32 %v6621, 7
    %v6623 = vsub.s32 %v2175, %v6622
    %v6624 = vrot.slane %v6091, %v6623
    %v6625 = vsel %vm2180, %v6624, %v6620
    %v6626 = vlaneseq
    %v6627 = vshrl.u32 %v6626, 7
    %v6628 = vsub.s32 %v2182, %v6627
    %v6629 = vrot.slane %v6092, %v6628
    %v6630 = vsel %vm2187, %v6629, %v6625
    %v6631 = vlaneseq
    %v6632 = vshrl.u32 %v6631, 7
    %v6633 = vsub.s32 %v2163, %v6632
    %v6634 = vrot.slane %v6093, %v6633
    %v6635 = vlaneseq
    %v6636 = vshrl.u32 %v6635, 7
    %v6637 = vsub.s32 %v2168, %v6636
    %v6638 = vrot.slane %v6094, %v6637
    %v6639 = vsel %vm2173, %v6638, %v6634
    %v6640 = vlaneseq
    %v6641 = vshrl.u32 %v6640, 7
    %v6642 = vsub.s32 %v2175, %v6641
    %v6643 = vrot.slane %v6095, %v6642
    %v6644 = vsel %vm2180, %v6643, %v6639
    %v6645 = vlaneseq
    %v6646 = vshrl.u32 %v6645, 7
    %v6647 = vsub.s32 %v2182, %v6646
    %v6648 = vrot.slane %v6096, %v6647
    %v6649 = vsel %vm2187, %v6648, %v6644
    %v6650 = vlaneseq
    %v6651 = vshrl.u32 %v6650, 7
    %v6652 = vsub.s32 %v2163, %v6651
    %v6653 = vrot.slane %v6097, %v6652
    %v6654 = vlaneseq
    %v6655 = vshrl.u32 %v6654, 7
    %v6656 = vsub.s32 %v2168, %v6655
    %v6657 = vrot.slane %v6098, %v6656
    %v6658 = vsel %vm2173, %v6657, %v6653
    %v6659 = vlaneseq
    %v6660 = vshrl.u32 %v6659, 7
    %v6661 = vsub.s32 %v2175, %v6660
    %v6662 = vrot.slane %v6099, %v6661
    %v6663 = vsel %vm2180, %v6662, %v6658
    %v6664 = vlaneseq
    %v6665 = vshrl.u32 %v6664, 7
    %v6666 = vsub.s32 %v2182, %v6665
    %v6667 = vrot.slane %v6100, %v6666
    %v6668 = vsel %vm2187, %v6667, %v6663
    %v6669 = vsel %vm2474, %v6554, %v6535
    %v6670 = vsel %vm2476, %v6573, %v6669
    %v6671 = vsel %vm2478, %v6592, %v6670
    %v6672 = vsel %vm2480, %v6611, %v6671
    %v6673 = vsel %vm2482, %v6630, %v6672
    %v6674 = vsel %vm2484, %v6649, %v6673
    %v6675 = vsel %vm2486, %v6668, %v6674
    %v6677 = vpack.c.bf16 %v5526, %v5525
    %v6678 = vpack.c.bf16 %v5527, %v5527
    %v6680 = vlaneseq
    %v6681 = vshrl.u32 %v6680, 7
    %v6682 = vsub.s32 0, %v6681
    %v6683 = vrot.slane %v530, %v6682
    %v6689 = vunpack.c.l.b16 %v526
    %v6690 = vunpack.c.l.b16 %v527
    %v6691 = vunpack.c.l.b16 %v528
    %v6692 = vunpack.c.l.b16 %v529
    %v6693 = vpack.c.b16 %v6690, %v6689
    %v6694 = vpack.c.b16 %v6692, %v6691
    %v6698 = vsel %vm781, %v6677, 0
    %v6701 = vsel %vm781, %v6678, 0
    %6703 = vmatprep.subr.bf16.mxu0 0
    %6704 = vmatpush1.bf16.msra.mxu0 %v6693
    %6705 = vmatprep.subr.bf16.mxu0 0
    %6706 = vmatpush1.bf16.msra.mxu0 %v6694
    %6707 = vmatprep.subr.bf16.mxu0 0
    %6708 = vmatpush1.bf16.msra.mxu0 0
    %6709 = vmatprep.subr.bf16.mxu0 0
    %6710 = vmatpush1.bf16.msra.mxu0 0
    %6711 = vmatprep.subr.bf16.mxu0 0
    %6712 = vmatpush1.bf16.msra.mxu0 0
    %6713 = vmatprep.subr.bf16.mxu0 0
    %6714 = vmatpush1.bf16.msra.mxu0 0
    %6715 = vmatprep.subr.bf16.mxu0 0
    %6716 = vmatpush1.bf16.msra.mxu0 0
    %6717 = vmatprep.subr.bf16.mxu0 0
    %6718 = vmatpush1.bf16.msra.mxu0 0
    %6719 = vmatprep.subr.bf16.mxu0 0
    %6720 = vmatpush1.bf16.msra.mxu0 0
    %6721 = vmatprep.subr.bf16.mxu0 0
    %6722 = vmatpush1.bf16.msra.mxu0 0
    %6723 = vmatprep.subr.bf16.mxu0 0
    %6724 = vmatpush1.bf16.msra.mxu0 0
    %6725 = vmatprep.subr.bf16.mxu0 0
    %6726 = vmatpush1.bf16.msra.mxu0 0
    %6727 = vmatprep.subr.bf16.mxu0 0
    %6728 = vmatpush1.bf16.msra.mxu0 0
    %6729 = vmatprep.subr.bf16.mxu0 0
    %6730 = vmatpush1.bf16.msra.mxu0 0
    %6731 = vmatprep.subr.bf16.mxu0 0
    %6732 = vmatpush1.bf16.msra.mxu0 0
    %6733 = vmatprep.subr.bf16.mxu0 0
    %6734 = vmatpush1.bf16.msra.mxu0 0
    %6735 = vmatprep.mubr.bf16.mxu0 0
    %6736 = vmatmul.mubr.bf16.gmra.mrb[0].mxu0 %v6698
    %v6737 = vpop.f32.mrb[0].mxu0
    %v6738 = vadd.f32 %v6683, %v6737
    %v6739 = vpop.f32.mrb[0].mxu0
    %v6740 = vpop.f32.mrb[0].mxu0
    %v6741 = vadd.f32 %v6683, %v6740
    %v6742 = vpop.f32.mrb[0].mxu0
    %6743 = vmatprep.mubr.bf16.mxu0 0
    %6744 = vmatmul.mubr.bf16.gmra.mrb[0].mxu0 %v6701
    %v6745 = vpop.f32.mrb[0].mxu0
    %v6746 = vpop.f32.mrb[0].mxu0
    %v6747 = vpop.f32.mrb[0].mxu0
    %v6748 = vpop.f32.mrb[0].mxu0
    %6749 = vdwg.mxu0
    %v6750 = vpack.c.bf16 %v6482, %v6475
    %v6751 = vpack.c.bf16 %v6675, %v6675
    %v6756 = vunpack.c.l.b16 %v522
    %v6757 = vunpack.c.l.b16 %v523
    %v6758 = vunpack.c.l.b16 %v524
    %v6759 = vunpack.c.l.b16 %v525
    %v6760 = vpack.c.b16 %v6757, %v6756
    %v6761 = vpack.c.b16 %v6759, %v6758
    %v6765 = vsel %vm781, %v6750, 0
    %v6768 = vsel %vm781, %v6751, 0
    %6770 = vmatprep.subr.bf16.mxu0 0
    %6771 = vmatpush1.bf16.msra.mxu0 %v6760
    %6772 = vmatprep.subr.bf16.mxu0 0
    %6773 = vmatpush1.bf16.msra.mxu0 %v6761
    %6774 = vmatprep.subr.bf16.mxu0 0
    %6775 = vmatpush1.bf16.msra.mxu0 0
    %6776 = vmatprep.subr.bf16.mxu0 0
    %6777 = vmatpush1.bf16.msra.mxu0 0
    %6778 = vmatprep.subr.bf16.mxu0 0
    %6779 = vmatpush1.bf16.msra.mxu0 0
    %6780 = vmatprep.subr.bf16.mxu0 0
    %6781 = vmatpush1.bf16.msra.mxu0 0
    %6782 = vmatprep.subr.bf16.mxu0 0
    %6783 = vmatpush1.bf16.msra.mxu0 0
    %6784 = vmatprep.subr.bf16.mxu0 0
    %6785 = vmatpush1.bf16.msra.mxu0 0
    %6786 = vmatprep.subr.bf16.mxu0 0
    %6787 = vmatpush1.bf16.msra.mxu0 0
    %6788 = vmatprep.subr.bf16.mxu0 0
    %6789 = vmatpush1.bf16.msra.mxu0 0
    %6790 = vmatprep.subr.bf16.mxu0 0
    %6791 = vmatpush1.bf16.msra.mxu0 0
    %6792 = vmatprep.subr.bf16.mxu0 0
    %6793 = vmatpush1.bf16.msra.mxu0 0
    %6794 = vmatprep.subr.bf16.mxu0 0
    %6795 = vmatpush1.bf16.msra.mxu0 0
    %6796 = vmatprep.subr.bf16.mxu0 0
    %6797 = vmatpush1.bf16.msra.mxu0 0
    %6798 = vmatprep.subr.bf16.mxu0 0
    %6799 = vmatpush1.bf16.msra.mxu0 0
    %6800 = vmatprep.subr.bf16.mxu0 0
    %6801 = vmatpush1.bf16.msra.mxu0 0
    %6802 = vmatprep.mubr.bf16.mxu0 0
    %6803 = vmatmul.mubr.bf16.gmra.mrb[0].mxu0 %v6765
    %v6804 = vpop.f32.mrb[0].mxu0
    %v6805 = vadd.f32 0.0, %v6804
    %v6806 = vpop.f32.mrb[0].mxu0
    %v6807 = vpop.f32.mrb[0].mxu0
    %v6808 = vadd.f32 0.0, %v6807
    %v6809 = vpop.f32.mrb[0].mxu0
    %6810 = vmatprep.mubr.bf16.mxu0 0
    %6811 = vmatmul.mubr.bf16.gmra.mrb[0].mxu0 %v6768
    %v6812 = vpop.f32.mrb[0].mxu0
    %v6813 = vpop.f32.mrb[0].mxu0
    %v6814 = vpop.f32.mrb[0].mxu0
    %v6815 = vpop.f32.mrb[0].mxu0
    %6816 = vdwg.mxu0
    %v6817 = vadd.f32 %v6738, %v6805
    %v6818 = vadd.f32 %v6741, %v6808
    %v6819 = vmax.f32 %v6817, 0.0
    %v6820 = vmax.f32 %v6818, 0.0
    %v6821 = vpack.c.bf16 %v6820, %v6819
    %v6823 = vlaneseq
    %v6824 = vshrl.u32 %v6823, 7
    %v6825 = vsub.s32 0, %v6824
    %v6826 = vrot.slane %v535, %v6825
    %v6832 = vunpack.c.l.b16 %v531
    %v6833 = vunpack.c.l.b16 %v532
    %v6834 = vunpack.c.l.b16 %v533
    %v6835 = vunpack.c.l.b16 %v534
    %v6836 = vpack.c.b16 %v6833, %v6832
    %v6837 = vpack.c.b16 %v6835, %v6834
    %v6841 = vsel %vm781, %v6821, 0
    %6843 = vmatprep.subr.bf16.mxu0 0
    %6844 = vmatpush1.bf16.msra.mxu0 %v6836
    %6845 = vmatprep.subr.bf16.mxu0 0
    %6846 = vmatpush1.bf16.msra.mxu0 %v6837
    %6847 = vmatprep.subr.bf16.mxu0 0
    %6848 = vmatpush1.bf16.msra.mxu0 0
    %6849 = vmatprep.subr.bf16.mxu0 0
    %6850 = vmatpush1.bf16.msra.mxu0 0
    %6851 = vmatprep.subr.bf16.mxu0 0
    %6852 = vmatpush1.bf16.msra.mxu0 0
    %6853 = vmatprep.subr.bf16.mxu0 0
    %6854 = vmatpush1.bf16.msra.mxu0 0
    %6855 = vmatprep.subr.bf16.mxu0 0
    %6856 = vmatpush1.bf16.msra.mxu0 0
    %6857 = vmatprep.subr.bf16.mxu0 0
    %6858 = vmatpush1.bf16.msra.mxu0 0
    %6859 = vmatprep.subr.bf16.mxu0 0
    %6860 = vmatpush1.bf16.msra.mxu0 0
    %6861 = vmatprep.subr.bf16.mxu0 0
    %6862 = vmatpush1.bf16.msra.mxu0 0
    %6863 = vmatprep.subr.bf16.mxu0 0
    %6864 = vmatpush1.bf16.msra.mxu0 0
    %6865 = vmatprep.subr.bf16.mxu0 0
    %6866 = vmatpush1.bf16.msra.mxu0 0
    %6867 = vmatprep.subr.bf16.mxu0 0
    %6868 = vmatpush1.bf16.msra.mxu0 0
    %6869 = vmatprep.subr.bf16.mxu0 0
    %6870 = vmatpush1.bf16.msra.mxu0 0
    %6871 = vmatprep.subr.bf16.mxu0 0
    %6872 = vmatpush1.bf16.msra.mxu0 0
    %6873 = vmatprep.subr.bf16.mxu0 0
    %6874 = vmatpush1.bf16.msra.mxu0 0
    %6875 = vmatprep.mubr.bf16.mxu0 0
    %6876 = vmatmul.mubr.bf16.gmra.mrb[0].mxu0 %v6841
    %v6877 = vpop.f32.mrb[0].mxu0
    %v6878 = vadd.f32 %v6826, %v6877
    %v6879 = vpop.f32.mrb[0].mxu0
    %v6880 = vpop.f32.mrb[0].mxu0
    %v6881 = vadd.f32 %v6826, %v6880
    %v6882 = vpop.f32.mrb[0].mxu0
    %6883 = vdwg.mxu0
    %v6884 = vmax.f32 %v6878, 0.0
    %v6885 = vmax.f32 %v6881, 0.0
    %v6886 = vpack.c.bf16 %v6885, %v6884
    %v6888 = vsel %vm781, %v6886, 0
    %6890 = vmatprep.subr.bf16.mxu0 0
    %6891 = vmatpush1.bf16.msra.mxu0 %v6836
    %6892 = vmatprep.subr.bf16.mxu0 0
    %6893 = vmatpush1.bf16.msra.mxu0 %v6837
    %6894 = vmatprep.subr.bf16.mxu0 0
    %6895 = vmatpush1.bf16.msra.mxu0 0
    %6896 = vmatprep.subr.bf16.mxu0 0
    %6897 = vmatpush1.bf16.msra.mxu0 0
    %6898 = vmatprep.subr.bf16.mxu0 0
    %6899 = vmatpush1.bf16.msra.mxu0 0
    %6900 = vmatprep.subr.bf16.mxu0 0
    %6901 = vmatpush1.bf16.msra.mxu0 0
    %6902 = vmatprep.subr.bf16.mxu0 0
    %6903 = vmatpush1.bf16.msra.mxu0 0
    %6904 = vmatprep.subr.bf16.mxu0 0
    %6905 = vmatpush1.bf16.msra.mxu0 0
    %6906 = vmatprep.subr.bf16.mxu0 0
    %6907 = vmatpush1.bf16.msra.mxu0 0
    %6908 = vmatprep.subr.bf16.mxu0 0
    %6909 = vmatpush1.bf16.msra.mxu0 0
    %6910 = vmatprep.subr.bf16.mxu0 0
    %6911 = vmatpush1.bf16.msra.mxu0 0
    %6912 = vmatprep.subr.bf16.mxu0 0
    %6913 = vmatpush1.bf16.msra.mxu0 0
    %6914 = vmatprep.subr.bf16.mxu0 0
    %6915 = vmatpush1.bf16.msra.mxu0 0
    %6916 = vmatprep.subr.bf16.mxu0 0
    %6917 = vmatpush1.bf16.msra.mxu0 0
    %6918 = vmatprep.subr.bf16.mxu0 0
    %6919 = vmatpush1.bf16.msra.mxu0 0
    %6920 = vmatprep.subr.bf16.mxu0 0
    %6921 = vmatpush1.bf16.msra.mxu0 0
    %6922 = vmatprep.mubr.bf16.mxu0 0
    %6923 = vmatmul.mubr.bf16.gmra.mrb[0].mxu0 %v6888
    %v6924 = vpop.f32.mrb[0].mxu0
    %v6925 = vadd.f32 %v6826, %v6924
    %v6926 = vpop.f32.mrb[0].mxu0
    %v6927 = vpop.f32.mrb[0].mxu0
    %v6928 = vadd.f32 %v6826, %v6927
    %v6929 = vpop.f32.mrb[0].mxu0
    %6930 = vdwg.mxu0
    %v6931 = vmax.f32 %v6925, 0.0
    %v6932 = vmax.f32 %v6928, 0.0
    %v6934 = vlaneseq
    %v6935 = vshrl.u32 %v6934, 7
    %v6936 = vsub.s32 0, %v6935
    %v6937 = vrot.slane %v536, %v6936
    %v6939 = vmul.f32 %v6931, %v6937
    %v6940 = vmul.f32 %v6932, %v6937
    %v6941 = vsel %vm781, %v6939, 0.0
    %6942 = vadd.xlane.f32.xlu0 %v6941
    %v6943 = vpop.xlane.xlu0 %6942
    %v6944 = vsel %vm781, %v6940, 0.0
    %6945 = vadd.xlane.f32.xlu0 %v6944
    %v6946 = vpop.xlane.xlu0 %6945
    %v6948 = vlaneseq
    %v6949 = vshrl.u32 %v6948, 7
    %v6950 = vsub.s32 0, %v6949
    %v6951 = vrot.slane %v537, %v6950
    %v6953 = vadd.f32 %v6943, %v6951
    %v6954 = vadd.f32 %v6946, %v6951
    %6956 = vset.pattern.permute.xlu0 0
    %6957 = vperm.xlu0 %6956, %v6953
    %v6958 = vpop.permute.xlu0 %6957
    %6961 = vset.pattern.permute.xlu0 0
    %6962 = vperm.xlu0 %6961, %v6954
    %v6963 = vpop.permute.xlu0 %6962
    %6965 = vst [vmem:[#allocation39] sm:$0xff] %v6958
    %6966 = vst [vmem:[#allocation39 + $0x8] sm:$0xff] %v6963
    // Predicated region
    $region266: #{tpu_custom_call.1} parent=1 // pred_check
      _
    $region267: #{tpu_custom_call.1} parent=1 // pred_check_branch
      %6968 = sbr.rel (0) target = $region269
    $region268: #{tpu_custom_call.1} parent=1 // pred_region
      %s6970 = ssub.s32 256, 256
      %6971 = vsyncadd [#allocation5], %s6970
      %s6972 = sshll.u32 [#allocation39], 4
      %s6973 = int_to_ptr.vmem [resolvable:$true] %s6972
      %6978 = dma.vmem_to_hbm [thread:$0]  %s6973, 256, %s87, [#allocation5], 128, 128, 8
    $region269: #{tpu_custom_call.1} parent=1 // pred_fallthru
      _
    // Predicated region
    $region270: #{tpu_custom_call.1} parent=1 // pred_check
      _
    $region271: #{tpu_custom_call.1} parent=1 // pred_check_branch
      %6980 = sbr.rel (0) target = $region273
    $region272: #{tpu_custom_call.1} parent=1 // pred_region
      %6981 = dma.done [#allocation5], 256
    $region273: #{tpu_custom_call.1} parent=1 // pred_fallthru
      _
    %6982 = vsyncpa [#allocation4], 1
    %6983 = vsyncpa [#allocation7], 1
    %6984 = vsyncpa [#allocation10], 1
    %6985 = vsyncpa [#allocation13], 1
    %6986 = vsyncpa [#allocation16], 1
    %6987 = vsyncpa [#allocation19], 1
    %6988 = vsyncpa [#allocation22], 1
    %6989 = vsyncpa [#allocation25], 1
    %6990 = vsyncpa [#allocation28], 1
    %6991 = vsyncpa [#allocation31], 1
    %6992 = vsyncpa [#allocation34], 1
    %6993 = vsyncpa [#allocation37], 1
    %6994 = vsyncpa [#allocation5], 1

</llo_original>
